<compile_context>
chip_gen: v7x
topology: tpu7x:2x2x1
jax: 0.10.0
libtpu: 0.0.40
codegen_flags: <defaults>
</compile_context>

<pallas_src>
import jax
import jax.numpy as jnp
from jax.experimental import pallas as pl
from jax.experimental.pallas import tpu as pltpu


# ----------------------------------------------------------------------------
# Fused kernel: embedding lookup + bidirectional LSTM + masking + outputs
# ----------------------------------------------------------------------------
def _rnn_encoder_kernel(cap_ref, lens_ref, emb_ref,
                        wih_f_ref, whh_f_ref, b_f_ref,
                        wih_b_ref, whh_b_ref, b_b_ref,
                        h0_ref, c0_ref,
                        words_ref, sent_ref):
    # cap_ref:   (bb, 1, T)  int32 token ids
    # lens_ref:  (bb, 1, 1)  int32 caption lengths
    # emb_ref:   (ntoken, ninput)
    # w*_ref:    (ninput, 4H) / (H, 4H) / (1, 4H)  (PyTorch gate order i, f, g, o)
    # h0/c0_ref: (bb, 2, H)   initial states, dir 0 = forward, dir 1 = backward
    # words_ref: (bb, T, 2H)  per-step outputs (fwd | bwd), zero past cap_len
    # sent_ref:  (bb, 1, 2H)  final hidden states (fwd | bwd)
    bb, _, T = cap_ref.shape
    ntoken, _ = emb_ref.shape
    H = whh_f_ref.shape[0]

    ids = cap_ref[:, 0, :]                                    # (bb, T) int32
    lens = lens_ref[:, 0, :]                                  # (bb, 1) int32
    viota = jax.lax.broadcasted_iota(jnp.int32, (bb, ntoken), 1)
    emb_tab = emb_ref[...]

    # Embedding lookup as one-hot matmuls, all T timesteps kept in VMEM/vregs.
    xs = []
    for t in range(T):
        onehot = (ids[:, t:t + 1] == viota).astype(jnp.float32)   # (bb, ntoken)
        xs.append(jnp.dot(onehot, emb_tab,
                          preferred_element_type=jnp.float32))    # (bb, ninput)

    wih_f = wih_f_ref[...]; whh_f = whh_f_ref[...]; b_f = b_f_ref[...]
    wih_b = wih_b_ref[...]; whh_b = whh_b_ref[...]; b_b = b_b_ref[...]

    def lstm_cell(x, h, c, wih, whh, b):
        g = (jnp.dot(x, wih, preferred_element_type=jnp.float32)
             + jnp.dot(h, whh, preferred_element_type=jnp.float32) + b)
        i_g = jax.nn.sigmoid(g[:, 0 * H:1 * H])
        f_g = jax.nn.sigmoid(g[:, 1 * H:2 * H])
        g_g = jnp.tanh(g[:, 2 * H:3 * H])
        o_g = jax.nn.sigmoid(g[:, 3 * H:4 * H])
        c_new = f_g * c + i_g * g_g
        h_new = o_g * jnp.tanh(c_new)
        return h_new, c_new

    h_f = h0_ref[:, 0, :]; c_f = c0_ref[:, 0, :]
    h_b = h0_ref[:, 1, :]; c_b = c0_ref[:, 1, :]

    # Static unroll over time; forward & backward directions interleaved.
    for s in range(T):
        # ---- forward direction, timestep t_f = s
        t_f = s
        vf = (lens > t_f).astype(jnp.float32)                 # (bb, 1)
        hf_new, cf_new = lstm_cell(xs[t_f], h_f, c_f, wih_f, whh_f, b_f)
        h_f = vf * hf_new + (1.0 - vf) * h_f                  # freeze past cap_len
        c_f = vf * cf_new + (1.0 - vf) * c_f
        words_ref[:, t_f, 0:H] = (vf * hf_new).astype(words_ref.dtype)

        # ---- backward direction, timestep t_b = T - 1 - s
        t_b = T - 1 - s
        vb = (lens > t_b).astype(jnp.float32)
        hb_new, cb_new = lstm_cell(xs[t_b], h_b, c_b, wih_b, whh_b, b_b)
        h_b = vb * hb_new + (1.0 - vb) * h_b                  # stays at h0 until first valid step
        c_b = vb * cb_new + (1.0 - vb) * c_b
        words_ref[:, t_b, H:2 * H] = (vb * hb_new).astype(words_ref.dtype)

    # sent_emb = h_n.transpose(0,1).view(B, 2H) = [fwd_final | bwd_final]
    sent_ref[:, 0, 0:H] = h_f.astype(sent_ref.dtype)
    sent_ref[:, 0, H:2 * H] = h_b.astype(sent_ref.dtype)


# ----------------------------------------------------------------------------
# Wrapper
# ----------------------------------------------------------------------------
def rnn_encoder_forward(captions, cap_lens, hidden, params, batch_block=None):
    """captions: (B, T) int32; cap_lens: (B,) int32; hidden = (h0, c0) each (2, B, H)."""
    B, T = captions.shape
    ntoken, ninput = params["embedding"].shape
    H = params["whh_f"].shape[0]

    if batch_block is None:
        batch_block = B // 2 if (B % 2 == 0 and B >= 2) else B
    nb = B // batch_block

    cap3 = captions.astype(jnp.int32).reshape(B, 1, T)
    lens3 = cap_lens.astype(jnp.int32).reshape(B, 1, 1)
    h0b = jnp.transpose(hidden[0], (1, 0, 2))                 # (B, 2, H)
    c0b = jnp.transpose(hidden[1], (1, 0, 2))

    out_seq, sent = pl.pallas_call(
        _rnn_encoder_kernel,
        grid=(nb,),
        out_shape=(
            jax.ShapeDtypeStruct((B, T, 2 * H), jnp.float32),
            jax.ShapeDtypeStruct((B, 1, 2 * H), jnp.float32),
        ),
        in_specs=[
            pl.BlockSpec((batch_block, 1, T), lambda i: (i, 0, 0)),
            pl.BlockSpec((batch_block, 1, 1), lambda i: (i, 0, 0)),
            pl.BlockSpec((ntoken, ninput), lambda i: (0, 0)),
            pl.BlockSpec((ninput, 4 * H), lambda i: (0, 0)),
            pl.BlockSpec((H, 4 * H), lambda i: (0, 0)),
            pl.BlockSpec((1, 4 * H), lambda i: (0, 0)),
            pl.BlockSpec((ninput, 4 * H), lambda i: (0, 0)),
            pl.BlockSpec((H, 4 * H), lambda i: (0, 0)),
            pl.BlockSpec((1, 4 * H), lambda i: (0, 0)),
            pl.BlockSpec((batch_block, 2, H), lambda i: (i, 0, 0)),
            pl.BlockSpec((batch_block, 2, H), lambda i: (i, 0, 0)),
        ],
        out_specs=(
            pl.BlockSpec((batch_block, T, 2 * H), lambda i: (i, 0, 0)),
            pl.BlockSpec((batch_block, 1, 2 * H), lambda i: (i, 0, 0)),
        ),
        compiler_params=pltpu.CompilerParams(
            dimension_semantics=("parallel",)),
    )(cap3, lens3, params["embedding"],
      params["wih_f"], params["whh_f"], params["b_f"],
      params["wih_b"], params["whh_b"], params["b_b"],
      h0b, c0b)

    words_emb = jnp.transpose(out_seq, (0, 2, 1))             # (B, 2H, T)
    sent_emb = sent.reshape(B, 2 * H)                         # (B, 2H)
    return words_emb, sent_emb


# ----------------------------------------------------------------------------
# Parameter construction (deterministic, matches PyTorch init schemes)
# ----------------------------------------------------------------------------
def init_params(key, ntoken, ninput, nhid_dir):
    keys = jax.random.split(key, 9)
    p = {}
    initrange = 0.1                                            # encoder.weight.uniform_(-0.1, 0.1)
    p["embedding"] = jax.random.uniform(keys[0], (ntoken, ninput), jnp.float32,
                                        -initrange, initrange)
    bound = 1.0 / (float(nhid_dir) ** 0.5)                     # PyTorch LSTM default init

    def u(k, shape):
        return jax.random.uniform(k, shape, jnp.float32, -bound, bound)

    # Stored pre-transposed: (in, 4H) / (H, 4H); biases folded (b_ih + b_hh).
    p["wih_f"] = u(keys[1], (ninput, 4 * nhid_dir))
    p["whh_f"] = u(keys[2], (nhid_dir, 4 * nhid_dir))
    p["b_f"] = u(keys[3], (1, 4 * nhid_dir)) + u(keys[4], (1, 4 * nhid_dir))
    p["wih_b"] = u(keys[5], (ninput, 4 * nhid_dir))
    p["whh_b"] = u(keys[6], (nhid_dir, 4 * nhid_dir))
    p["b_b"] = u(keys[7], (1, 4 * nhid_dir)) + u(keys[8], (1, 4 * nhid_dir))
    return p


def init_hidden(B, H):
    # RNN_ENCODER.init_hidden for LSTM: zero (h0, c0) of shape (nlayers*num_dirs, B, H)
    return (jnp.zeros((2, B, H), jnp.float32), jnp.zeros((2, B, H), jnp.float32))


if __name__ == "__main__":
    key = jax.random.PRNGKey(0)
    k_cap, k_par = jax.random.split(key, 2)

    B, T = 4, 8                 # batch, cfg.TEXT.WORDS_NUM
    NTOKEN = 64                 # vocab size
    NINPUT = 32                 # embedding dim (small stand-in for 300)
    NHIDDEN = 64                # total hidden (bidirectional) -> 32 per direction
    H = NHIDDEN // 2

    captions = jax.random.randint(k_cap, (B, T), 0, NTOKEN, dtype=jnp.int32)
    cap_lens = jnp.array([8, 6, 5, 3], dtype=jnp.int32)
    params = init_params(k_par, NTOKEN, NINPUT, H)
    hidden = init_hidden(B, H)

    words_emb, sent_emb = rnn_encoder_forward(captions, cap_lens, hidden, params)
    words_emb, sent_emb = jax.block_until_ready((words_emb, sent_emb))

    assert words_emb.shape == (B, NHIDDEN, T), words_emb.shape
    assert sent_emb.shape == (B, NHIDDEN), sent_emb.shape
    assert bool(jnp.all(jnp.isfinite(words_emb)))
    assert bool(jnp.all(jnp.isfinite(sent_emb)))
    print("KERNEL_OK")
</pallas_src>

<mosaic_0001>
module attributes {stable_mosaic.version = 11 : i64} {
  func.func @_rnn_encoder_kernel(%arg0: i32, %arg1: memref<2x1x8xi32, #tpu.memory_space<vmem>>, %arg2: memref<2x1x1xi32, #tpu.memory_space<vmem>>, %arg3: memref<64x32xf32, #tpu.memory_space<vmem>>, %arg4: memref<32x128xf32, #tpu.memory_space<vmem>>, %arg5: memref<32x128xf32, #tpu.memory_space<vmem>>, %arg6: memref<1x128xf32, #tpu.memory_space<vmem>>, %arg7: memref<32x128xf32, #tpu.memory_space<vmem>>, %arg8: memref<32x128xf32, #tpu.memory_space<vmem>>, %arg9: memref<1x128xf32, #tpu.memory_space<vmem>>, %arg10: memref<2x2x32xf32, #tpu.memory_space<vmem>>, %arg11: memref<2x2x32xf32, #tpu.memory_space<vmem>>, %arg12: memref<2x8x64xf32, #tpu.memory_space<vmem>>, %arg13: memref<2x1x64xf32, #tpu.memory_space<vmem>>) attributes {dimension_semantics = [#tpu.dimension_semantics<parallel>], iteration_bounds = array<i64: 2>, scalar_prefetch = 0 : i64, scratch_operands = 0 : i64, tpu.core_type = #tpu.core_type<tc>, window_params = [{transform_indices = @transform_0, window_bounds = array<i64: 2, 1, 8>}, {transform_indices = @transform_1, window_bounds = array<i64: 2, 1, 1>}, {pipeline_mode = #tpu.pipeline_mode<synchronous>, transform_indices = @transform_2, window_bounds = array<i64: 64, 32>}, {pipeline_mode = #tpu.pipeline_mode<synchronous>, transform_indices = @transform_3, window_bounds = array<i64: 32, 128>}, {pipeline_mode = #tpu.pipeline_mode<synchronous>, transform_indices = @transform_4, window_bounds = array<i64: 32, 128>}, {pipeline_mode = #tpu.pipeline_mode<synchronous>, transform_indices = @transform_5, window_bounds = array<i64: 1, 128>}, {pipeline_mode = #tpu.pipeline_mode<synchronous>, transform_indices = @transform_6, window_bounds = array<i64: 32, 128>}, {pipeline_mode = #tpu.pipeline_mode<synchronous>, transform_indices = @transform_7, window_bounds = array<i64: 32, 128>}, {pipeline_mode = #tpu.pipeline_mode<synchronous>, transform_indices = @transform_8, window_bounds = array<i64: 1, 128>}, {transform_indices = @transform_9, window_bounds = array<i64: 2, 2, 32>}, {transform_indices = @transform_10, window_bounds = array<i64: 2, 2, 32>}, {transform_indices = @transform_11, window_bounds = array<i64: 2, 8, 64>}, {transform_indices = @transform_12, window_bounds = array<i64: 2, 1, 64>}]} {
    %c0 = arith.constant 0 : index
    %c0_0 = arith.constant 0 : index
    %c0_1 = arith.constant 0 : index
    %0 = vector.load %arg1[%c0, %c0_0, %c0_1] : memref<2x1x8xi32, #tpu.memory_space<vmem>>, vector<2x1x8xi32>
    %1 = vector.shape_cast %0 : vector<2x1x8xi32> to vector<2x8xi32>
    %c0_2 = arith.constant 0 : index
    %c0_3 = arith.constant 0 : index
    %c0_4 = arith.constant 0 : index
    %2 = vector.load %arg2[%c0_2, %c0_3, %c0_4] : memref<2x1x1xi32, #tpu.memory_space<vmem>>, vector<2x1x1xi32>
    %3 = vector.shape_cast %2 : vector<2x1x1xi32> to vector<2x1xi32>
    %4 = tpu.iota {dimensions = array<i32: 1>} : vector<2x64xi32>
    %c0_5 = arith.constant 0 : index
    %c0_6 = arith.constant 0 : index
    %5 = vector.load %arg3[%c0_5, %c0_6] : memref<64x32xf32, #tpu.memory_space<vmem>>, vector<64x32xf32>
    %6 = vector.extract_strided_slice %1 {offsets = [0, 0], sizes = [2, 1], strides = [1, 1]} : vector<2x8xi32> to vector<2x1xi32>
    %7 = vector.broadcast %6 : vector<2x1xi32> to vector<2x64xi32>
    %8 = arith.cmpi eq, %7, %4 : vector<2x64xi32>
    %9 = arith.extui %8 : vector<2x64xi1> to vector<2x64xi32>
    %10 = arith.sitofp %9 : vector<2x64xi32> to vector<2x64xf32>
    %cst = arith.constant dense<0.000000e+00> : vector<2x32xf32>
    %11 = tpu.matmul %10, %5, %cst {dimension_numbers = #tpu.dot_dimension_numbers<[1], [0], [0], [1], [0, 0, 1, 1], [], []>} : vector<2x64xf32>, vector<64x32xf32>, vector<2x32xf32> -> vector<2x32xf32>
    %12 = vector.extract_strided_slice %1 {offsets = [0, 1], sizes = [2, 1], strides = [1, 1]} : vector<2x8xi32> to vector<2x1xi32>
    %13 = vector.broadcast %12 : vector<2x1xi32> to vector<2x64xi32>
    %14 = arith.cmpi eq, %13, %4 : vector<2x64xi32>
    %15 = arith.extui %14 : vector<2x64xi1> to vector<2x64xi32>
    %16 = arith.sitofp %15 : vector<2x64xi32> to vector<2x64xf32>
    %cst_7 = arith.constant dense<0.000000e+00> : vector<2x32xf32>
    %17 = tpu.matmul %16, %5, %cst_7 {dimension_numbers = #tpu.dot_dimension_numbers<[1], [0], [0], [1], [0, 0, 1, 1], [], []>} : vector<2x64xf32>, vector<64x32xf32>, vector<2x32xf32> -> vector<2x32xf32>
    %18 = vector.extract_strided_slice %1 {offsets = [0, 2], sizes = [2, 1], strides = [1, 1]} : vector<2x8xi32> to vector<2x1xi32>
    %19 = vector.broadcast %18 : vector<2x1xi32> to vector<2x64xi32>
    %20 = arith.cmpi eq, %19, %4 : vector<2x64xi32>
    %21 = arith.extui %20 : vector<2x64xi1> to vector<2x64xi32>
    %22 = arith.sitofp %21 : vector<2x64xi32> to vector<2x64xf32>
    %cst_8 = arith.constant dense<0.000000e+00> : vector<2x32xf32>
    %23 = tpu.matmul %22, %5, %cst_8 {dimension_numbers = #tpu.dot_dimension_numbers<[1], [0], [0], [1], [0, 0, 1, 1], [], []>} : vector<2x64xf32>, vector<64x32xf32>, vector<2x32xf32> -> vector<2x32xf32>
    %24 = vector.extract_strided_slice %1 {offsets = [0, 3], sizes = [2, 1], strides = [1, 1]} : vector<2x8xi32> to vector<2x1xi32>
    %25 = vector.broadcast %24 : vector<2x1xi32> to vector<2x64xi32>
    %26 = arith.cmpi eq, %25, %4 : vector<2x64xi32>
    %27 = arith.extui %26 : vector<2x64xi1> to vector<2x64xi32>
    %28 = arith.sitofp %27 : vector<2x64xi32> to vector<2x64xf32>
    %cst_9 = arith.constant dense<0.000000e+00> : vector<2x32xf32>
    %29 = tpu.matmul %28, %5, %cst_9 {dimension_numbers = #tpu.dot_dimension_numbers<[1], [0], [0], [1], [0, 0, 1, 1], [], []>} : vector<2x64xf32>, vector<64x32xf32>, vector<2x32xf32> -> vector<2x32xf32>
    %30 = vector.extract_strided_slice %1 {offsets = [0, 4], sizes = [2, 1], strides = [1, 1]} : vector<2x8xi32> to vector<2x1xi32>
    %31 = vector.broadcast %30 : vector<2x1xi32> to vector<2x64xi32>
    %32 = arith.cmpi eq, %31, %4 : vector<2x64xi32>
    %33 = arith.extui %32 : vector<2x64xi1> to vector<2x64xi32>
    %34 = arith.sitofp %33 : vector<2x64xi32> to vector<2x64xf32>
    %cst_10 = arith.constant dense<0.000000e+00> : vector<2x32xf32>
    %35 = tpu.matmul %34, %5, %cst_10 {dimension_numbers = #tpu.dot_dimension_numbers<[1], [0], [0], [1], [0, 0, 1, 1], [], []>} : vector<2x64xf32>, vector<64x32xf32>, vector<2x32xf32> -> vector<2x32xf32>
    %36 = vector.extract_strided_slice %1 {offsets = [0, 5], sizes = [2, 1], strides = [1, 1]} : vector<2x8xi32> to vector<2x1xi32>
    %37 = vector.broadcast %36 : vector<2x1xi32> to vector<2x64xi32>
    %38 = arith.cmpi eq, %37, %4 : vector<2x64xi32>
    %39 = arith.extui %38 : vector<2x64xi1> to vector<2x64xi32>
    %40 = arith.sitofp %39 : vector<2x64xi32> to vector<2x64xf32>
    %cst_11 = arith.constant dense<0.000000e+00> : vector<2x32xf32>
    %41 = tpu.matmul %40, %5, %cst_11 {dimension_numbers = #tpu.dot_dimension_numbers<[1], [0], [0], [1], [0, 0, 1, 1], [], []>} : vector<2x64xf32>, vector<64x32xf32>, vector<2x32xf32> -> vector<2x32xf32>
    %42 = vector.extract_strided_slice %1 {offsets = [0, 6], sizes = [2, 1], strides = [1, 1]} : vector<2x8xi32> to vector<2x1xi32>
    %43 = vector.broadcast %42 : vector<2x1xi32> to vector<2x64xi32>
    %44 = arith.cmpi eq, %43, %4 : vector<2x64xi32>
    %45 = arith.extui %44 : vector<2x64xi1> to vector<2x64xi32>
    %46 = arith.sitofp %45 : vector<2x64xi32> to vector<2x64xf32>
    %cst_12 = arith.constant dense<0.000000e+00> : vector<2x32xf32>
    %47 = tpu.matmul %46, %5, %cst_12 {dimension_numbers = #tpu.dot_dimension_numbers<[1], [0], [0], [1], [0, 0, 1, 1], [], []>} : vector<2x64xf32>, vector<64x32xf32>, vector<2x32xf32> -> vector<2x32xf32>
    %48 = vector.extract_strided_slice %1 {offsets = [0, 7], sizes = [2, 1], strides = [1, 1]} : vector<2x8xi32> to vector<2x1xi32>
    %49 = vector.broadcast %48 : vector<2x1xi32> to vector<2x64xi32>
    %50 = arith.cmpi eq, %49, %4 : vector<2x64xi32>
    %51 = arith.extui %50 : vector<2x64xi1> to vector<2x64xi32>
    %52 = arith.sitofp %51 : vector<2x64xi32> to vector<2x64xf32>
    %cst_13 = arith.constant dense<0.000000e+00> : vector<2x32xf32>
    %53 = tpu.matmul %52, %5, %cst_13 {dimension_numbers = #tpu.dot_dimension_numbers<[1], [0], [0], [1], [0, 0, 1, 1], [], []>} : vector<2x64xf32>, vector<64x32xf32>, vector<2x32xf32> -> vector<2x32xf32>
    %c0_14 = arith.constant 0 : index
    %c0_15 = arith.constant 0 : index
    %54 = vector.load %arg4[%c0_14, %c0_15] : memref<32x128xf32, #tpu.memory_space<vmem>>, vector<32x128xf32>
    %c0_16 = arith.constant 0 : index
    %c0_17 = arith.constant 0 : index
    %55 = vector.load %arg5[%c0_16, %c0_17] : memref<32x128xf32, #tpu.memory_space<vmem>>, vector<32x128xf32>
    %c0_18 = arith.constant 0 : index
    %c0_19 = arith.constant 0 : index
    %56 = vector.load %arg6[%c0_18, %c0_19] : memref<1x128xf32, #tpu.memory_space<vmem>>, vector<1x128xf32>
    %c0_20 = arith.constant 0 : index
    %c0_21 = arith.constant 0 : index
    %57 = vector.load %arg7[%c0_20, %c0_21] : memref<32x128xf32, #tpu.memory_space<vmem>>, vector<32x128xf32>
    %c0_22 = arith.constant 0 : index
    %c0_23 = arith.constant 0 : index
    %58 = vector.load %arg8[%c0_22, %c0_23] : memref<32x128xf32, #tpu.memory_space<vmem>>, vector<32x128xf32>
    %c0_24 = arith.constant 0 : index
    %c0_25 = arith.constant 0 : index
    %59 = vector.load %arg9[%c0_24, %c0_25] : memref<1x128xf32, #tpu.memory_space<vmem>>, vector<1x128xf32>
    %c0_26 = arith.constant 0 : index
    %c0_27 = arith.constant 0 : index
    %c0_28 = arith.constant 0 : index
    %60 = vector.load %arg10[%c0_26, %c0_27, %c0_28] : memref<2x2x32xf32, #tpu.memory_space<vmem>>, vector<2x1x32xf32>
    %61 = vector.shape_cast %60 : vector<2x1x32xf32> to vector<2x32xf32>
    %c0_29 = arith.constant 0 : index
    %c0_30 = arith.constant 0 : index
    %c0_31 = arith.constant 0 : index
    %62 = vector.load %arg11[%c0_29, %c0_30, %c0_31] : memref<2x2x32xf32, #tpu.memory_space<vmem>>, vector<2x1x32xf32>
    %63 = vector.shape_cast %62 : vector<2x1x32xf32> to vector<2x32xf32>
    %c0_32 = arith.constant 0 : index
    %c1 = arith.constant 1 : index
    %c0_33 = arith.constant 0 : index
    %64 = vector.load %arg10[%c0_32, %c1, %c0_33] : memref<2x2x32xf32, #tpu.memory_space<vmem>>, vector<2x1x32xf32>
    %65 = vector.shape_cast %64 : vector<2x1x32xf32> to vector<2x32xf32>
    %c0_34 = arith.constant 0 : index
    %c1_35 = arith.constant 1 : index
    %c0_36 = arith.constant 0 : index
    %66 = vector.load %arg11[%c0_34, %c1_35, %c0_36] : memref<2x2x32xf32, #tpu.memory_space<vmem>>, vector<2x1x32xf32>
    %67 = vector.shape_cast %66 : vector<2x1x32xf32> to vector<2x32xf32>
    %c0_i32 = arith.constant 0 : i32
    %68 = vector.broadcast %c0_i32 : i32 to vector<2x1xi32>
    %69 = arith.cmpi sgt, %3, %68 : vector<2x1xi32>
    %70 = arith.extui %69 : vector<2x1xi1> to vector<2x1xi32>
    %71 = arith.sitofp %70 : vector<2x1xi32> to vector<2x1xf32>
    %cst_37 = arith.constant dense<0.000000e+00> : vector<2x128xf32>
    %72 = tpu.matmul %11, %54, %cst_37 {dimension_numbers = #tpu.dot_dimension_numbers<[1], [0], [0], [1], [0, 0, 1, 1], [], []>} : vector<2x32xf32>, vector<32x128xf32>, vector<2x128xf32> -> vector<2x128xf32>
    %cst_38 = arith.constant dense<0.000000e+00> : vector<2x128xf32>
    %73 = tpu.matmul %61, %55, %cst_38 {dimension_numbers = #tpu.dot_dimension_numbers<[1], [0], [0], [1], [0, 0, 1, 1], [], []>} : vector<2x32xf32>, vector<32x128xf32>, vector<2x128xf32> -> vector<2x128xf32>
    %74 = arith.addf %72, %73 : vector<2x128xf32>
    %75 = vector.broadcast %56 : vector<1x128xf32> to vector<2x128xf32>
    %76 = arith.addf %74, %75 : vector<2x128xf32>
    %77 = vector.extract_strided_slice %76 {offsets = [0, 0], sizes = [2, 32], strides = [1, 1]} : vector<2x128xf32> to vector<2x32xf32>
    %78 = arith.negf %77 : vector<2x32xf32>
    %79 = math.exp %78 : vector<2x32xf32>
    %cst_39 = arith.constant 1.000000e+00 : f32
    %80 = vector.broadcast %cst_39 : f32 to vector<2x32xf32>
    %81 = arith.addf %80, %79 : vector<2x32xf32>
    %82 = arith.divf %80, %81 : vector<2x32xf32>
    %83 = vector.extract_strided_slice %76 {offsets = [0, 32], sizes = [2, 32], strides = [1, 1]} : vector<2x128xf32> to vector<2x32xf32>
    %84 = arith.negf %83 : vector<2x32xf32>
    %85 = math.exp %84 : vector<2x32xf32>
    %cst_40 = arith.constant 1.000000e+00 : f32
    %86 = vector.broadcast %cst_40 : f32 to vector<2x32xf32>
    %87 = arith.addf %86, %85 : vector<2x32xf32>
    %88 = arith.divf %86, %87 : vector<2x32xf32>
    %89 = vector.extract_strided_slice %76 {offsets = [0, 64], sizes = [2, 32], strides = [1, 1]} : vector<2x128xf32> to vector<2x32xf32>
    %90 = math.tanh %89 : vector<2x32xf32>
    %91 = vector.extract_strided_slice %76 {offsets = [0, 96], sizes = [2, 32], strides = [1, 1]} : vector<2x128xf32> to vector<2x32xf32>
    %92 = arith.negf %91 : vector<2x32xf32>
    %93 = math.exp %92 : vector<2x32xf32>
    %cst_41 = arith.constant 1.000000e+00 : f32
    %94 = vector.broadcast %cst_41 : f32 to vector<2x32xf32>
    %95 = arith.addf %94, %93 : vector<2x32xf32>
    %96 = arith.divf %94, %95 : vector<2x32xf32>
    %97 = arith.mulf %88, %63 : vector<2x32xf32>
    %98 = arith.mulf %82, %90 : vector<2x32xf32>
    %99 = arith.addf %97, %98 : vector<2x32xf32>
    %100 = math.tanh %99 : vector<2x32xf32>
    %101 = arith.mulf %96, %100 : vector<2x32xf32>
    %102 = vector.broadcast %71 : vector<2x1xf32> to vector<2x32xf32>
    %103 = arith.mulf %102, %101 : vector<2x32xf32>
    %cst_42 = arith.constant 1.000000e+00 : f32
    %104 = vector.broadcast %cst_42 : f32 to vector<2x1xf32>
    %105 = arith.subf %104, %71 : vector<2x1xf32>
    %106 = vector.broadcast %105 : vector<2x1xf32> to vector<2x32xf32>
    %107 = arith.mulf %106, %61 : vector<2x32xf32>
    %108 = arith.addf %103, %107 : vector<2x32xf32>
    %109 = vector.broadcast %71 : vector<2x1xf32> to vector<2x32xf32>
    %110 = arith.mulf %109, %99 : vector<2x32xf32>
    %cst_43 = arith.constant 1.000000e+00 : f32
    %111 = vector.broadcast %cst_43 : f32 to vector<2x1xf32>
    %112 = arith.subf %111, %71 : vector<2x1xf32>
    %113 = vector.broadcast %112 : vector<2x1xf32> to vector<2x32xf32>
    %114 = arith.mulf %113, %63 : vector<2x32xf32>
    %115 = arith.addf %110, %114 : vector<2x32xf32>
    %116 = vector.broadcast %71 : vector<2x1xf32> to vector<2x32xf32>
    %117 = arith.mulf %116, %101 : vector<2x32xf32>
    %c0_44 = arith.constant 0 : index
    %c0_45 = arith.constant 0 : index
    %c0_46 = arith.constant 0 : index
    %118 = vector.load %arg12[%c0_44, %c0_45, %c0_46] : memref<2x8x64xf32, #tpu.memory_space<vmem>>, vector<2x1x32xf32>
    %119 = vector.shape_cast %118 : vector<2x1x32xf32> to vector<2x32xf32>
    %120 = vector.shape_cast %117 : vector<2x32xf32> to vector<2x1x32xf32>
    tpu.vector_store %arg12[%c0_44, %c0_45, %c0_46], %120 {strides = array<i32>} : memref<2x8x64xf32, #tpu.memory_space<vmem>>, vector<2x1x32xf32>,
    %c7_i32 = arith.constant 7 : i32
    %121 = vector.broadcast %c7_i32 : i32 to vector<2x1xi32>
    %122 = arith.cmpi sgt, %3, %121 : vector<2x1xi32>
    %123 = arith.extui %122 : vector<2x1xi1> to vector<2x1xi32>
    %124 = arith.sitofp %123 : vector<2x1xi32> to vector<2x1xf32>
    %cst_47 = arith.constant dense<0.000000e+00> : vector<2x128xf32>
    %125 = tpu.matmul %53, %57, %cst_47 {dimension_numbers = #tpu.dot_dimension_numbers<[1], [0], [0], [1], [0, 0, 1, 1], [], []>} : vector<2x32xf32>, vector<32x128xf32>, vector<2x128xf32> -> vector<2x128xf32>
    %cst_48 = arith.constant dense<0.000000e+00> : vector<2x128xf32>
    %126 = tpu.matmul %65, %58, %cst_48 {dimension_numbers = #tpu.dot_dimension_numbers<[1], [0], [0], [1], [0, 0, 1, 1], [], []>} : vector<2x32xf32>, vector<32x128xf32>, vector<2x128xf32> -> vector<2x128xf32>
    %127 = arith.addf %125, %126 : vector<2x128xf32>
    %128 = vector.broadcast %59 : vector<1x128xf32> to vector<2x128xf32>
    %129 = arith.addf %127, %128 : vector<2x128xf32>
    %130 = vector.extract_strided_slice %129 {offsets = [0, 0], sizes = [2, 32], strides = [1, 1]} : vector<2x128xf32> to vector<2x32xf32>
    %131 = arith.negf %130 : vector<2x32xf32>
    %132 = math.exp %131 : vector<2x32xf32>
    %cst_49 = arith.constant 1.000000e+00 : f32
    %133 = vector.broadcast %cst_49 : f32 to vector<2x32xf32>
    %134 = arith.addf %133, %132 : vector<2x32xf32>
    %135 = arith.divf %133, %134 : vector<2x32xf32>
    %136 = vector.extract_strided_slice %129 {offsets = [0, 32], sizes = [2, 32], strides = [1, 1]} : vector<2x128xf32> to vector<2x32xf32>
    %137 = arith.negf %136 : vector<2x32xf32>
    %138 = math.exp %137 : vector<2x32xf32>
    %cst_50 = arith.constant 1.000000e+00 : f32
    %139 = vector.broadcast %cst_50 : f32 to vector<2x32xf32>
    %140 = arith.addf %139, %138 : vector<2x32xf32>
    %141 = arith.divf %139, %140 : vector<2x32xf32>
    %142 = vector.extract_strided_slice %129 {offsets = [0, 64], sizes = [2, 32], strides = [1, 1]} : vector<2x128xf32> to vector<2x32xf32>
    %143 = math.tanh %142 : vector<2x32xf32>
    %144 = vector.extract_strided_slice %129 {offsets = [0, 96], sizes = [2, 32], strides = [1, 1]} : vector<2x128xf32> to vector<2x32xf32>
    %145 = arith.negf %144 : vector<2x32xf32>
    %146 = math.exp %145 : vector<2x32xf32>
    %cst_51 = arith.constant 1.000000e+00 : f32
    %147 = vector.broadcast %cst_51 : f32 to vector<2x32xf32>
    %148 = arith.addf %147, %146 : vector<2x32xf32>
    %149 = arith.divf %147, %148 : vector<2x32xf32>
    %150 = arith.mulf %141, %67 : vector<2x32xf32>
    %151 = arith.mulf %135, %143 : vector<2x32xf32>
    %152 = arith.addf %150, %151 : vector<2x32xf32>
    %153 = math.tanh %152 : vector<2x32xf32>
    %154 = arith.mulf %149, %153 : vector<2x32xf32>
    %155 = vector.broadcast %124 : vector<2x1xf32> to vector<2x32xf32>
    %156 = arith.mulf %155, %154 : vector<2x32xf32>
    %cst_52 = arith.constant 1.000000e+00 : f32
    %157 = vector.broadcast %cst_52 : f32 to vector<2x1xf32>
    %158 = arith.subf %157, %124 : vector<2x1xf32>
    %159 = vector.broadcast %158 : vector<2x1xf32> to vector<2x32xf32>
    %160 = arith.mulf %159, %65 : vector<2x32xf32>
    %161 = arith.addf %156, %160 : vector<2x32xf32>
    %162 = vector.broadcast %124 : vector<2x1xf32> to vector<2x32xf32>
    %163 = arith.mulf %162, %152 : vector<2x32xf32>
    %cst_53 = arith.constant 1.000000e+00 : f32
    %164 = vector.broadcast %cst_53 : f32 to vector<2x1xf32>
    %165 = arith.subf %164, %124 : vector<2x1xf32>
    %166 = vector.broadcast %165 : vector<2x1xf32> to vector<2x32xf32>
    %167 = arith.mulf %166, %67 : vector<2x32xf32>
    %168 = arith.addf %163, %167 : vector<2x32xf32>
    %169 = vector.broadcast %124 : vector<2x1xf32> to vector<2x32xf32>
    %170 = arith.mulf %169, %154 : vector<2x32xf32>
    %c0_54 = arith.constant 0 : index
    %c7 = arith.constant 7 : index
    %c32 = arith.constant 32 : index
    %171 = vector.load %arg12[%c0_54, %c7, %c32] : memref<2x8x64xf32, #tpu.memory_space<vmem>>, vector<2x1x32xf32>
    %172 = vector.shape_cast %171 : vector<2x1x32xf32> to vector<2x32xf32>
    %173 = vector.shape_cast %170 : vector<2x32xf32> to vector<2x1x32xf32>
    tpu.vector_store %arg12[%c0_54, %c7, %c32], %173 {strides = array<i32>} : memref<2x8x64xf32, #tpu.memory_space<vmem>>, vector<2x1x32xf32>,
    %c1_i32 = arith.constant 1 : i32
    %174 = vector.broadcast %c1_i32 : i32 to vector<2x1xi32>
    %175 = arith.cmpi sgt, %3, %174 : vector<2x1xi32>
    %176 = arith.extui %175 : vector<2x1xi1> to vector<2x1xi32>
    %177 = arith.sitofp %176 : vector<2x1xi32> to vector<2x1xf32>
    %cst_55 = arith.constant dense<0.000000e+00> : vector<2x128xf32>
    %178 = tpu.matmul %17, %54, %cst_55 {dimension_numbers = #tpu.dot_dimension_numbers<[1], [0], [0], [1], [0, 0, 1, 1], [], []>} : vector<2x32xf32>, vector<32x128xf32>, vector<2x128xf32> -> vector<2x128xf32>
    %cst_56 = arith.constant dense<0.000000e+00> : vector<2x128xf32>
    %179 = tpu.matmul %108, %55, %cst_56 {dimension_numbers = #tpu.dot_dimension_numbers<[1], [0], [0], [1], [0, 0, 1, 1], [], []>} : vector<2x32xf32>, vector<32x128xf32>, vector<2x128xf32> -> vector<2x128xf32>
    %180 = arith.addf %178, %179 : vector<2x128xf32>
    %181 = vector.broadcast %56 : vector<1x128xf32> to vector<2x128xf32>
    %182 = arith.addf %180, %181 : vector<2x128xf32>
    %183 = vector.extract_strided_slice %182 {offsets = [0, 0], sizes = [2, 32], strides = [1, 1]} : vector<2x128xf32> to vector<2x32xf32>
    %184 = arith.negf %183 : vector<2x32xf32>
    %185 = math.exp %184 : vector<2x32xf32>
    %cst_57 = arith.constant 1.000000e+00 : f32
    %186 = vector.broadcast %cst_57 : f32 to vector<2x32xf32>
    %187 = arith.addf %186, %185 : vector<2x32xf32>
    %188 = arith.divf %186, %187 : vector<2x32xf32>
    %189 = vector.extract_strided_slice %182 {offsets = [0, 32], sizes = [2, 32], strides = [1, 1]} : vector<2x128xf32> to vector<2x32xf32>
    %190 = arith.negf %189 : vector<2x32xf32>
    %191 = math.exp %190 : vector<2x32xf32>
    %cst_58 = arith.constant 1.000000e+00 : f32
    %192 = vector.broadcast %cst_58 : f32 to vector<2x32xf32>
    %193 = arith.addf %192, %191 : vector<2x32xf32>
    %194 = arith.divf %192, %193 : vector<2x32xf32>
    %195 = vector.extract_strided_slice %182 {offsets = [0, 64], sizes = [2, 32], strides = [1, 1]} : vector<2x128xf32> to vector<2x32xf32>
    %196 = math.tanh %195 : vector<2x32xf32>
    %197 = vector.extract_strided_slice %182 {offsets = [0, 96], sizes = [2, 32], strides = [1, 1]} : vector<2x128xf32> to vector<2x32xf32>
    %198 = arith.negf %197 : vector<2x32xf32>
    %199 = math.exp %198 : vector<2x32xf32>
    %cst_59 = arith.constant 1.000000e+00 : f32
    %200 = vector.broadcast %cst_59 : f32 to vector<2x32xf32>
    %201 = arith.addf %200, %199 : vector<2x32xf32>
    %202 = arith.divf %200, %201 : vector<2x32xf32>
    %203 = arith.mulf %194, %115 : vector<2x32xf32>
    %204 = arith.mulf %188, %196 : vector<2x32xf32>
    %205 = arith.addf %203, %204 : vector<2x32xf32>
    %206 = math.tanh %205 : vector<2x32xf32>
    %207 = arith.mulf %202, %206 : vector<2x32xf32>
    %208 = vector.broadcast %177 : vector<2x1xf32> to vector<2x32xf32>
    %209 = arith.mulf %208, %207 : vector<2x32xf32>
    %cst_60 = arith.constant 1.000000e+00 : f32
    %210 = vector.broadcast %cst_60 : f32 to vector<2x1xf32>
    %211 = arith.subf %210, %177 : vector<2x1xf32>
    %212 = vector.broadcast %211 : vector<2x1xf32> to vector<2x32xf32>
    %213 = arith.mulf %212, %108 : vector<2x32xf32>
    %214 = arith.addf %209, %213 : vector<2x32xf32>
    %215 = vector.broadcast %177 : vector<2x1xf32> to vector<2x32xf32>
    %216 = arith.mulf %215, %205 : vector<2x32xf32>
    %cst_61 = arith.constant 1.000000e+00 : f32
    %217 = vector.broadcast %cst_61 : f32 to vector<2x1xf32>
    %218 = arith.subf %217, %177 : vector<2x1xf32>
    %219 = vector.broadcast %218 : vector<2x1xf32> to vector<2x32xf32>
    %220 = arith.mulf %219, %115 : vector<2x32xf32>
    %221 = arith.addf %216, %220 : vector<2x32xf32>
    %222 = vector.broadcast %177 : vector<2x1xf32> to vector<2x32xf32>
    %223 = arith.mulf %222, %207 : vector<2x32xf32>
    %c0_62 = arith.constant 0 : index
    %c1_63 = arith.constant 1 : index
    %c0_64 = arith.constant 0 : index
    %224 = vector.load %arg12[%c0_62, %c1_63, %c0_64] : memref<2x8x64xf32, #tpu.memory_space<vmem>>, vector<2x1x32xf32>
    %225 = vector.shape_cast %224 : vector<2x1x32xf32> to vector<2x32xf32>
    %226 = vector.shape_cast %223 : vector<2x32xf32> to vector<2x1x32xf32>
    tpu.vector_store %arg12[%c0_62, %c1_63, %c0_64], %226 {strides = array<i32>} : memref<2x8x64xf32, #tpu.memory_space<vmem>>, vector<2x1x32xf32>,
    %c6_i32 = arith.constant 6 : i32
    %227 = vector.broadcast %c6_i32 : i32 to vector<2x1xi32>
    %228 = arith.cmpi sgt, %3, %227 : vector<2x1xi32>
    %229 = arith.extui %228 : vector<2x1xi1> to vector<2x1xi32>
    %230 = arith.sitofp %229 : vector<2x1xi32> to vector<2x1xf32>
    %cst_65 = arith.constant dense<0.000000e+00> : vector<2x128xf32>
    %231 = tpu.matmul %47, %57, %cst_65 {dimension_numbers = #tpu.dot_dimension_numbers<[1], [0], [0], [1], [0, 0, 1, 1], [], []>} : vector<2x32xf32>, vector<32x128xf32>, vector<2x128xf32> -> vector<2x128xf32>
    %cst_66 = arith.constant dense<0.000000e+00> : vector<2x128xf32>
    %232 = tpu.matmul %161, %58, %cst_66 {dimension_numbers = #tpu.dot_dimension_numbers<[1], [0], [0], [1], [0, 0, 1, 1], [], []>} : vector<2x32xf32>, vector<32x128xf32>, vector<2x128xf32> -> vector<2x128xf32>
    %233 = arith.addf %231, %232 : vector<2x128xf32>
    %234 = vector.broadcast %59 : vector<1x128xf32> to vector<2x128xf32>
    %235 = arith.addf %233, %234 : vector<2x128xf32>
    %236 = vector.extract_strided_slice %235 {offsets = [0, 0], sizes = [2, 32], strides = [1, 1]} : vector<2x128xf32> to vector<2x32xf32>
    %237 = arith.negf %236 : vector<2x32xf32>
    %238 = math.exp %237 : vector<2x32xf32>
    %cst_67 = arith.constant 1.000000e+00 : f32
    %239 = vector.broadcast %cst_67 : f32 to vector<2x32xf32>
    %240 = arith.addf %239, %238 : vector<2x32xf32>
    %241 = arith.divf %239, %240 : vector<2x32xf32>
    %242 = vector.extract_strided_slice %235 {offsets = [0, 32], sizes = [2, 32], strides = [1, 1]} : vector<2x128xf32> to vector<2x32xf32>
    %243 = arith.negf %242 : vector<2x32xf32>
    %244 = math.exp %243 : vector<2x32xf32>
    %cst_68 = arith.constant 1.000000e+00 : f32
    %245 = vector.broadcast %cst_68 : f32 to vector<2x32xf32>
    %246 = arith.addf %245, %244 : vector<2x32xf32>
    %247 = arith.divf %245, %246 : vector<2x32xf32>
    %248 = vector.extract_strided_slice %235 {offsets = [0, 64], sizes = [2, 32], strides = [1, 1]} : vector<2x128xf32> to vector<2x32xf32>
    %249 = math.tanh %248 : vector<2x32xf32>
    %250 = vector.extract_strided_slice %235 {offsets = [0, 96], sizes = [2, 32], strides = [1, 1]} : vector<2x128xf32> to vector<2x32xf32>
    %251 = arith.negf %250 : vector<2x32xf32>
    %252 = math.exp %251 : vector<2x32xf32>
    %cst_69 = arith.constant 1.000000e+00 : f32
    %253 = vector.broadcast %cst_69 : f32 to vector<2x32xf32>
    %254 = arith.addf %253, %252 : vector<2x32xf32>
    %255 = arith.divf %253, %254 : vector<2x32xf32>
    %256 = arith.mulf %247, %168 : vector<2x32xf32>
    %257 = arith.mulf %241, %249 : vector<2x32xf32>
    %258 = arith.addf %256, %257 : vector<2x32xf32>
    %259 = math.tanh %258 : vector<2x32xf32>
    %260 = arith.mulf %255, %259 : vector<2x32xf32>
    %261 = vector.broadcast %230 : vector<2x1xf32> to vector<2x32xf32>
    %262 = arith.mulf %261, %260 : vector<2x32xf32>
    %cst_70 = arith.constant 1.000000e+00 : f32
    %263 = vector.broadcast %cst_70 : f32 to vector<2x1xf32>
    %264 = arith.subf %263, %230 : vector<2x1xf32>
    %265 = vector.broadcast %264 : vector<2x1xf32> to vector<2x32xf32>
    %266 = arith.mulf %265, %161 : vector<2x32xf32>
    %267 = arith.addf %262, %266 : vector<2x32xf32>
    %268 = vector.broadcast %230 : vector<2x1xf32> to vector<2x32xf32>
    %269 = arith.mulf %268, %258 : vector<2x32xf32>
    %cst_71 = arith.constant 1.000000e+00 : f32
    %270 = vector.broadcast %cst_71 : f32 to vector<2x1xf32>
    %271 = arith.subf %270, %230 : vector<2x1xf32>
    %272 = vector.broadcast %271 : vector<2x1xf32> to vector<2x32xf32>
    %273 = arith.mulf %272, %168 : vector<2x32xf32>
    %274 = arith.addf %269, %273 : vector<2x32xf32>
    %275 = vector.broadcast %230 : vector<2x1xf32> to vector<2x32xf32>
    %276 = arith.mulf %275, %260 : vector<2x32xf32>
    %c0_72 = arith.constant 0 : index
    %c6 = arith.constant 6 : index
    %c32_73 = arith.constant 32 : index
    %277 = vector.load %arg12[%c0_72, %c6, %c32_73] : memref<2x8x64xf32, #tpu.memory_space<vmem>>, vector<2x1x32xf32>
    %278 = vector.shape_cast %277 : vector<2x1x32xf32> to vector<2x32xf32>
    %279 = vector.shape_cast %276 : vector<2x32xf32> to vector<2x1x32xf32>
    tpu.vector_store %arg12[%c0_72, %c6, %c32_73], %279 {strides = array<i32>} : memref<2x8x64xf32, #tpu.memory_space<vmem>>, vector<2x1x32xf32>,
    %c2_i32 = arith.constant 2 : i32
    %280 = vector.broadcast %c2_i32 : i32 to vector<2x1xi32>
    %281 = arith.cmpi sgt, %3, %280 : vector<2x1xi32>
    %282 = arith.extui %281 : vector<2x1xi1> to vector<2x1xi32>
    %283 = arith.sitofp %282 : vector<2x1xi32> to vector<2x1xf32>
    %cst_74 = arith.constant dense<0.000000e+00> : vector<2x128xf32>
    %284 = tpu.matmul %23, %54, %cst_74 {dimension_numbers = #tpu.dot_dimension_numbers<[1], [0], [0], [1], [0, 0, 1, 1], [], []>} : vector<2x32xf32>, vector<32x128xf32>, vector<2x128xf32> -> vector<2x128xf32>
    %cst_75 = arith.constant dense<0.000000e+00> : vector<2x128xf32>
    %285 = tpu.matmul %214, %55, %cst_75 {dimension_numbers = #tpu.dot_dimension_numbers<[1], [0], [0], [1], [0, 0, 1, 1], [], []>} : vector<2x32xf32>, vector<32x128xf32>, vector<2x128xf32> -> vector<2x128xf32>
    %286 = arith.addf %284, %285 : vector<2x128xf32>
    %287 = vector.broadcast %56 : vector<1x128xf32> to vector<2x128xf32>
    %288 = arith.addf %286, %287 : vector<2x128xf32>
    %289 = vector.extract_strided_slice %288 {offsets = [0, 0], sizes = [2, 32], strides = [1, 1]} : vector<2x128xf32> to vector<2x32xf32>
    %290 = arith.negf %289 : vector<2x32xf32>
    %291 = math.exp %290 : vector<2x32xf32>
    %cst_76 = arith.constant 1.000000e+00 : f32
    %292 = vector.broadcast %cst_76 : f32 to vector<2x32xf32>
    %293 = arith.addf %292, %291 : vector<2x32xf32>
    %294 = arith.divf %292, %293 : vector<2x32xf32>
    %295 = vector.extract_strided_slice %288 {offsets = [0, 32], sizes = [2, 32], strides = [1, 1]} : vector<2x128xf32> to vector<2x32xf32>
    %296 = arith.negf %295 : vector<2x32xf32>
    %297 = math.exp %296 : vector<2x32xf32>
    %cst_77 = arith.constant 1.000000e+00 : f32
    %298 = vector.broadcast %cst_77 : f32 to vector<2x32xf32>
    %299 = arith.addf %298, %297 : vector<2x32xf32>
    %300 = arith.divf %298, %299 : vector<2x32xf32>
    %301 = vector.extract_strided_slice %288 {offsets = [0, 64], sizes = [2, 32], strides = [1, 1]} : vector<2x128xf32> to vector<2x32xf32>
    %302 = math.tanh %301 : vector<2x32xf32>
    %303 = vector.extract_strided_slice %288 {offsets = [0, 96], sizes = [2, 32], strides = [1, 1]} : vector<2x128xf32> to vector<2x32xf32>
    %304 = arith.negf %303 : vector<2x32xf32>
    %305 = math.exp %304 : vector<2x32xf32>
    %cst_78 = arith.constant 1.000000e+00 : f32
    %306 = vector.broadcast %cst_78 : f32 to vector<2x32xf32>
    %307 = arith.addf %306, %305 : vector<2x32xf32>
    %308 = arith.divf %306, %307 : vector<2x32xf32>
    %309 = arith.mulf %300, %221 : vector<2x32xf32>
    %310 = arith.mulf %294, %302 : vector<2x32xf32>
    %311 = arith.addf %309, %310 : vector<2x32xf32>
    %312 = math.tanh %311 : vector<2x32xf32>
    %313 = arith.mulf %308, %312 : vector<2x32xf32>
    %314 = vector.broadcast %283 : vector<2x1xf32> to vector<2x32xf32>
    %315 = arith.mulf %314, %313 : vector<2x32xf32>
    %cst_79 = arith.constant 1.000000e+00 : f32
    %316 = vector.broadcast %cst_79 : f32 to vector<2x1xf32>
    %317 = arith.subf %316, %283 : vector<2x1xf32>
    %318 = vector.broadcast %317 : vector<2x1xf32> to vector<2x32xf32>
    %319 = arith.mulf %318, %214 : vector<2x32xf32>
    %320 = arith.addf %315, %319 : vector<2x32xf32>
    %321 = vector.broadcast %283 : vector<2x1xf32> to vector<2x32xf32>
    %322 = arith.mulf %321, %311 : vector<2x32xf32>
    %cst_80 = arith.constant 1.000000e+00 : f32
    %323 = vector.broadcast %cst_80 : f32 to vector<2x1xf32>
    %324 = arith.subf %323, %283 : vector<2x1xf32>
    %325 = vector.broadcast %324 : vector<2x1xf32> to vector<2x32xf32>
    %326 = arith.mulf %325, %221 : vector<2x32xf32>
    %327 = arith.addf %322, %326 : vector<2x32xf32>
    %328 = vector.broadcast %283 : vector<2x1xf32> to vector<2x32xf32>
    %329 = arith.mulf %328, %313 : vector<2x32xf32>
    %c0_81 = arith.constant 0 : index
    %c2 = arith.constant 2 : index
    %c0_82 = arith.constant 0 : index
    %330 = vector.load %arg12[%c0_81, %c2, %c0_82] : memref<2x8x64xf32, #tpu.memory_space<vmem>>, vector<2x1x32xf32>
    %331 = vector.shape_cast %330 : vector<2x1x32xf32> to vector<2x32xf32>
    %332 = vector.shape_cast %329 : vector<2x32xf32> to vector<2x1x32xf32>
    tpu.vector_store %arg12[%c0_81, %c2, %c0_82], %332 {strides = array<i32>} : memref<2x8x64xf32, #tpu.memory_space<vmem>>, vector<2x1x32xf32>,
    %c5_i32 = arith.constant 5 : i32
    %333 = vector.broadcast %c5_i32 : i32 to vector<2x1xi32>
    %334 = arith.cmpi sgt, %3, %333 : vector<2x1xi32>
    %335 = arith.extui %334 : vector<2x1xi1> to vector<2x1xi32>
    %336 = arith.sitofp %335 : vector<2x1xi32> to vector<2x1xf32>
    %cst_83 = arith.constant dense<0.000000e+00> : vector<2x128xf32>
    %337 = tpu.matmul %41, %57, %cst_83 {dimension_numbers = #tpu.dot_dimension_numbers<[1], [0], [0], [1], [0, 0, 1, 1], [], []>} : vector<2x32xf32>, vector<32x128xf32>, vector<2x128xf32> -> vector<2x128xf32>
    %cst_84 = arith.constant dense<0.000000e+00> : vector<2x128xf32>
    %338 = tpu.matmul %267, %58, %cst_84 {dimension_numbers = #tpu.dot_dimension_numbers<[1], [0], [0], [1], [0, 0, 1, 1], [], []>} : vector<2x32xf32>, vector<32x128xf32>, vector<2x128xf32> -> vector<2x128xf32>
    %339 = arith.addf %337, %338 : vector<2x128xf32>
    %340 = vector.broadcast %59 : vector<1x128xf32> to vector<2x128xf32>
    %341 = arith.addf %339, %340 : vector<2x128xf32>
    %342 = vector.extract_strided_slice %341 {offsets = [0, 0], sizes = [2, 32], strides = [1, 1]} : vector<2x128xf32> to vector<2x32xf32>
    %343 = arith.negf %342 : vector<2x32xf32>
    %344 = math.exp %343 : vector<2x32xf32>
    %cst_85 = arith.constant 1.000000e+00 : f32
    %345 = vector.broadcast %cst_85 : f32 to vector<2x32xf32>
    %346 = arith.addf %345, %344 : vector<2x32xf32>
    %347 = arith.divf %345, %346 : vector<2x32xf32>
    %348 = vector.extract_strided_slice %341 {offsets = [0, 32], sizes = [2, 32], strides = [1, 1]} : vector<2x128xf32> to vector<2x32xf32>
    %349 = arith.negf %348 : vector<2x32xf32>
    %350 = math.exp %349 : vector<2x32xf32>
    %cst_86 = arith.constant 1.000000e+00 : f32
    %351 = vector.broadcast %cst_86 : f32 to vector<2x32xf32>
    %352 = arith.addf %351, %350 : vector<2x32xf32>
    %353 = arith.divf %351, %352 : vector<2x32xf32>
    %354 = vector.extract_strided_slice %341 {offsets = [0, 64], sizes = [2, 32], strides = [1, 1]} : vector<2x128xf32> to vector<2x32xf32>
    %355 = math.tanh %354 : vector<2x32xf32>
    %356 = vector.extract_strided_slice %341 {offsets = [0, 96], sizes = [2, 32], strides = [1, 1]} : vector<2x128xf32> to vector<2x32xf32>
    %357 = arith.negf %356 : vector<2x32xf32>
    %358 = math.exp %357 : vector<2x32xf32>
    %cst_87 = arith.constant 1.000000e+00 : f32
    %359 = vector.broadcast %cst_87 : f32 to vector<2x32xf32>
    %360 = arith.addf %359, %358 : vector<2x32xf32>
    %361 = arith.divf %359, %360 : vector<2x32xf32>
    %362 = arith.mulf %353, %274 : vector<2x32xf32>
    %363 = arith.mulf %347, %355 : vector<2x32xf32>
    %364 = arith.addf %362, %363 : vector<2x32xf32>
    %365 = math.tanh %364 : vector<2x32xf32>
    %366 = arith.mulf %361, %365 : vector<2x32xf32>
    %367 = vector.broadcast %336 : vector<2x1xf32> to vector<2x32xf32>
    %368 = arith.mulf %367, %366 : vector<2x32xf32>
    %cst_88 = arith.constant 1.000000e+00 : f32
    %369 = vector.broadcast %cst_88 : f32 to vector<2x1xf32>
    %370 = arith.subf %369, %336 : vector<2x1xf32>
    %371 = vector.broadcast %370 : vector<2x1xf32> to vector<2x32xf32>
    %372 = arith.mulf %371, %267 : vector<2x32xf32>
    %373 = arith.addf %368, %372 : vector<2x32xf32>
    %374 = vector.broadcast %336 : vector<2x1xf32> to vector<2x32xf32>
    %375 = arith.mulf %374, %364 : vector<2x32xf32>
    %cst_89 = arith.constant 1.000000e+00 : f32
    %376 = vector.broadcast %cst_89 : f32 to vector<2x1xf32>
    %377 = arith.subf %376, %336 : vector<2x1xf32>
    %378 = vector.broadcast %377 : vector<2x1xf32> to vector<2x32xf32>
    %379 = arith.mulf %378, %274 : vector<2x32xf32>
    %380 = arith.addf %375, %379 : vector<2x32xf32>
    %381 = vector.broadcast %336 : vector<2x1xf32> to vector<2x32xf32>
    %382 = arith.mulf %381, %366 : vector<2x32xf32>
    %c0_90 = arith.constant 0 : index
    %c5 = arith.constant 5 : index
    %c32_91 = arith.constant 32 : index
    %383 = vector.load %arg12[%c0_90, %c5, %c32_91] : memref<2x8x64xf32, #tpu.memory_space<vmem>>, vector<2x1x32xf32>
    %384 = vector.shape_cast %383 : vector<2x1x32xf32> to vector<2x32xf32>
    %385 = vector.shape_cast %382 : vector<2x32xf32> to vector<2x1x32xf32>
    tpu.vector_store %arg12[%c0_90, %c5, %c32_91], %385 {strides = array<i32>} : memref<2x8x64xf32, #tpu.memory_space<vmem>>, vector<2x1x32xf32>,
    %c3_i32 = arith.constant 3 : i32
    %386 = vector.broadcast %c3_i32 : i32 to vector<2x1xi32>
    %387 = arith.cmpi sgt, %3, %386 : vector<2x1xi32>
    %388 = arith.extui %387 : vector<2x1xi1> to vector<2x1xi32>
    %389 = arith.sitofp %388 : vector<2x1xi32> to vector<2x1xf32>
    %cst_92 = arith.constant dense<0.000000e+00> : vector<2x128xf32>
    %390 = tpu.matmul %29, %54, %cst_92 {dimension_numbers = #tpu.dot_dimension_numbers<[1], [0], [0], [1], [0, 0, 1, 1], [], []>} : vector<2x32xf32>, vector<32x128xf32>, vector<2x128xf32> -> vector<2x128xf32>
    %cst_93 = arith.constant dense<0.000000e+00> : vector<2x128xf32>
    %391 = tpu.matmul %320, %55, %cst_93 {dimension_numbers = #tpu.dot_dimension_numbers<[1], [0], [0], [1], [0, 0, 1, 1], [], []>} : vector<2x32xf32>, vector<32x128xf32>, vector<2x128xf32> -> vector<2x128xf32>
    %392 = arith.addf %390, %391 : vector<2x128xf32>
    %393 = vector.broadcast %56 : vector<1x128xf32> to vector<2x128xf32>
    %394 = arith.addf %392, %393 : vector<2x128xf32>
    %395 = vector.extract_strided_slice %394 {offsets = [0, 0], sizes = [2, 32], strides = [1, 1]} : vector<2x128xf32> to vector<2x32xf32>
    %396 = arith.negf %395 : vector<2x32xf32>
    %397 = math.exp %396 : vector<2x32xf32>
    %cst_94 = arith.constant 1.000000e+00 : f32
    %398 = vector.broadcast %cst_94 : f32 to vector<2x32xf32>
    %399 = arith.addf %398, %397 : vector<2x32xf32>
    %400 = arith.divf %398, %399 : vector<2x32xf32>
    %401 = vector.extract_strided_slice %394 {offsets = [0, 32], sizes = [2, 32], strides = [1, 1]} : vector<2x128xf32> to vector<2x32xf32>
    %402 = arith.negf %401 : vector<2x32xf32>
    %403 = math.exp %402 : vector<2x32xf32>
    %cst_95 = arith.constant 1.000000e+00 : f32
    %404 = vector.broadcast %cst_95 : f32 to vector<2x32xf32>
    %405 = arith.addf %404, %403 : vector<2x32xf32>
    %406 = arith.divf %404, %405 : vector<2x32xf32>
    %407 = vector.extract_strided_slice %394 {offsets = [0, 64], sizes = [2, 32], strides = [1, 1]} : vector<2x128xf32> to vector<2x32xf32>
    %408 = math.tanh %407 : vector<2x32xf32>
    %409 = vector.extract_strided_slice %394 {offsets = [0, 96], sizes = [2, 32], strides = [1, 1]} : vector<2x128xf32> to vector<2x32xf32>
    %410 = arith.negf %409 : vector<2x32xf32>
    %411 = math.exp %410 : vector<2x32xf32>
    %cst_96 = arith.constant 1.000000e+00 : f32
    %412 = vector.broadcast %cst_96 : f32 to vector<2x32xf32>
    %413 = arith.addf %412, %411 : vector<2x32xf32>
    %414 = arith.divf %412, %413 : vector<2x32xf32>
    %415 = arith.mulf %406, %327 : vector<2x32xf32>
    %416 = arith.mulf %400, %408 : vector<2x32xf32>
    %417 = arith.addf %415, %416 : vector<2x32xf32>
    %418 = math.tanh %417 : vector<2x32xf32>
    %419 = arith.mulf %414, %418 : vector<2x32xf32>
    %420 = vector.broadcast %389 : vector<2x1xf32> to vector<2x32xf32>
    %421 = arith.mulf %420, %419 : vector<2x32xf32>
    %cst_97 = arith.constant 1.000000e+00 : f32
    %422 = vector.broadcast %cst_97 : f32 to vector<2x1xf32>
    %423 = arith.subf %422, %389 : vector<2x1xf32>
    %424 = vector.broadcast %423 : vector<2x1xf32> to vector<2x32xf32>
    %425 = arith.mulf %424, %320 : vector<2x32xf32>
    %426 = arith.addf %421, %425 : vector<2x32xf32>
    %427 = vector.broadcast %389 : vector<2x1xf32> to vector<2x32xf32>
    %428 = arith.mulf %427, %417 : vector<2x32xf32>
    %cst_98 = arith.constant 1.000000e+00 : f32
    %429 = vector.broadcast %cst_98 : f32 to vector<2x1xf32>
    %430 = arith.subf %429, %389 : vector<2x1xf32>
    %431 = vector.broadcast %430 : vector<2x1xf32> to vector<2x32xf32>
    %432 = arith.mulf %431, %327 : vector<2x32xf32>
    %433 = arith.addf %428, %432 : vector<2x32xf32>
    %434 = vector.broadcast %389 : vector<2x1xf32> to vector<2x32xf32>
    %435 = arith.mulf %434, %419 : vector<2x32xf32>
    %c0_99 = arith.constant 0 : index
    %c3 = arith.constant 3 : index
    %c0_100 = arith.constant 0 : index
    %436 = vector.load %arg12[%c0_99, %c3, %c0_100] : memref<2x8x64xf32, #tpu.memory_space<vmem>>, vector<2x1x32xf32>
    %437 = vector.shape_cast %436 : vector<2x1x32xf32> to vector<2x32xf32>
    %438 = vector.shape_cast %435 : vector<2x32xf32> to vector<2x1x32xf32>
    tpu.vector_store %arg12[%c0_99, %c3, %c0_100], %438 {strides = array<i32>} : memref<2x8x64xf32, #tpu.memory_space<vmem>>, vector<2x1x32xf32>,
    %c4_i32 = arith.constant 4 : i32
    %439 = vector.broadcast %c4_i32 : i32 to vector<2x1xi32>
    %440 = arith.cmpi sgt, %3, %439 : vector<2x1xi32>
    %441 = arith.extui %440 : vector<2x1xi1> to vector<2x1xi32>
    %442 = arith.sitofp %441 : vector<2x1xi32> to vector<2x1xf32>
    %cst_101 = arith.constant dense<0.000000e+00> : vector<2x128xf32>
    %443 = tpu.matmul %35, %57, %cst_101 {dimension_numbers = #tpu.dot_dimension_numbers<[1], [0], [0], [1], [0, 0, 1, 1], [], []>} : vector<2x32xf32>, vector<32x128xf32>, vector<2x128xf32> -> vector<2x128xf32>
    %cst_102 = arith.constant dense<0.000000e+00> : vector<2x128xf32>
    %444 = tpu.matmul %373, %58, %cst_102 {dimension_numbers = #tpu.dot_dimension_numbers<[1], [0], [0], [1], [0, 0, 1, 1], [], []>} : vector<2x32xf32>, vector<32x128xf32>, vector<2x128xf32> -> vector<2x128xf32>
    %445 = arith.addf %443, %444 : vector<2x128xf32>
    %446 = vector.broadcast %59 : vector<1x128xf32> to vector<2x128xf32>
    %447 = arith.addf %445, %446 : vector<2x128xf32>
    %448 = vector.extract_strided_slice %447 {offsets = [0, 0], sizes = [2, 32], strides = [1, 1]} : vector<2x128xf32> to vector<2x32xf32>
    %449 = arith.negf %448 : vector<2x32xf32>
    %450 = math.exp %449 : vector<2x32xf32>
    %cst_103 = arith.constant 1.000000e+00 : f32
    %451 = vector.broadcast %cst_103 : f32 to vector<2x32xf32>
    %452 = arith.addf %451, %450 : vector<2x32xf32>
    %453 = arith.divf %451, %452 : vector<2x32xf32>
    %454 = vector.extract_strided_slice %447 {offsets = [0, 32], sizes = [2, 32], strides = [1, 1]} : vector<2x128xf32> to vector<2x32xf32>
    %455 = arith.negf %454 : vector<2x32xf32>
    %456 = math.exp %455 : vector<2x32xf32>
    %cst_104 = arith.constant 1.000000e+00 : f32
    %457 = vector.broadcast %cst_104 : f32 to vector<2x32xf32>
    %458 = arith.addf %457, %456 : vector<2x32xf32>
    %459 = arith.divf %457, %458 : vector<2x32xf32>
    %460 = vector.extract_strided_slice %447 {offsets = [0, 64], sizes = [2, 32], strides = [1, 1]} : vector<2x128xf32> to vector<2x32xf32>
    %461 = math.tanh %460 : vector<2x32xf32>
    %462 = vector.extract_strided_slice %447 {offsets = [0, 96], sizes = [2, 32], strides = [1, 1]} : vector<2x128xf32> to vector<2x32xf32>
    %463 = arith.negf %462 : vector<2x32xf32>
    %464 = math.exp %463 : vector<2x32xf32>
    %cst_105 = arith.constant 1.000000e+00 : f32
    %465 = vector.broadcast %cst_105 : f32 to vector<2x32xf32>
    %466 = arith.addf %465, %464 : vector<2x32xf32>
    %467 = arith.divf %465, %466 : vector<2x32xf32>
    %468 = arith.mulf %459, %380 : vector<2x32xf32>
    %469 = arith.mulf %453, %461 : vector<2x32xf32>
    %470 = arith.addf %468, %469 : vector<2x32xf32>
    %471 = math.tanh %470 : vector<2x32xf32>
    %472 = arith.mulf %467, %471 : vector<2x32xf32>
    %473 = vector.broadcast %442 : vector<2x1xf32> to vector<2x32xf32>
    %474 = arith.mulf %473, %472 : vector<2x32xf32>
    %cst_106 = arith.constant 1.000000e+00 : f32
    %475 = vector.broadcast %cst_106 : f32 to vector<2x1xf32>
    %476 = arith.subf %475, %442 : vector<2x1xf32>
    %477 = vector.broadcast %476 : vector<2x1xf32> to vector<2x32xf32>
    %478 = arith.mulf %477, %373 : vector<2x32xf32>
    %479 = arith.addf %474, %478 : vector<2x32xf32>
    %480 = vector.broadcast %442 : vector<2x1xf32> to vector<2x32xf32>
    %481 = arith.mulf %480, %470 : vector<2x32xf32>
    %cst_107 = arith.constant 1.000000e+00 : f32
    %482 = vector.broadcast %cst_107 : f32 to vector<2x1xf32>
    %483 = arith.subf %482, %442 : vector<2x1xf32>
    %484 = vector.broadcast %483 : vector<2x1xf32> to vector<2x32xf32>
    %485 = arith.mulf %484, %380 : vector<2x32xf32>
    %486 = arith.addf %481, %485 : vector<2x32xf32>
    %487 = vector.broadcast %442 : vector<2x1xf32> to vector<2x32xf32>
    %488 = arith.mulf %487, %472 : vector<2x32xf32>
    %c0_108 = arith.constant 0 : index
    %c4 = arith.constant 4 : index
    %c32_109 = arith.constant 32 : index
    %489 = vector.load %arg12[%c0_108, %c4, %c32_109] : memref<2x8x64xf32, #tpu.memory_space<vmem>>, vector<2x1x32xf32>
    %490 = vector.shape_cast %489 : vector<2x1x32xf32> to vector<2x32xf32>
    %491 = vector.shape_cast %488 : vector<2x32xf32> to vector<2x1x32xf32>
    tpu.vector_store %arg12[%c0_108, %c4, %c32_109], %491 {strides = array<i32>} : memref<2x8x64xf32, #tpu.memory_space<vmem>>, vector<2x1x32xf32>,
    %c4_i32_110 = arith.constant 4 : i32
    %492 = vector.broadcast %c4_i32_110 : i32 to vector<2x1xi32>
    %493 = arith.cmpi sgt, %3, %492 : vector<2x1xi32>
    %494 = arith.extui %493 : vector<2x1xi1> to vector<2x1xi32>
    %495 = arith.sitofp %494 : vector<2x1xi32> to vector<2x1xf32>
    %cst_111 = arith.constant dense<0.000000e+00> : vector<2x128xf32>
    %496 = tpu.matmul %35, %54, %cst_111 {dimension_numbers = #tpu.dot_dimension_numbers<[1], [0], [0], [1], [0, 0, 1, 1], [], []>} : vector<2x32xf32>, vector<32x128xf32>, vector<2x128xf32> -> vector<2x128xf32>
    %cst_112 = arith.constant dense<0.000000e+00> : vector<2x128xf32>
    %497 = tpu.matmul %426, %55, %cst_112 {dimension_numbers = #tpu.dot_dimension_numbers<[1], [0], [0], [1], [0, 0, 1, 1], [], []>} : vector<2x32xf32>, vector<32x128xf32>, vector<2x128xf32> -> vector<2x128xf32>
    %498 = arith.addf %496, %497 : vector<2x128xf32>
    %499 = vector.broadcast %56 : vector<1x128xf32> to vector<2x128xf32>
    %500 = arith.addf %498, %499 : vector<2x128xf32>
    %501 = vector.extract_strided_slice %500 {offsets = [0, 0], sizes = [2, 32], strides = [1, 1]} : vector<2x128xf32> to vector<2x32xf32>
    %502 = arith.negf %501 : vector<2x32xf32>
    %503 = math.exp %502 : vector<2x32xf32>
    %cst_113 = arith.constant 1.000000e+00 : f32
    %504 = vector.broadcast %cst_113 : f32 to vector<2x32xf32>
    %505 = arith.addf %504, %503 : vector<2x32xf32>
    %506 = arith.divf %504, %505 : vector<2x32xf32>
    %507 = vector.extract_strided_slice %500 {offsets = [0, 32], sizes = [2, 32], strides = [1, 1]} : vector<2x128xf32> to vector<2x32xf32>
    %508 = arith.negf %507 : vector<2x32xf32>
    %509 = math.exp %508 : vector<2x32xf32>
    %cst_114 = arith.constant 1.000000e+00 : f32
    %510 = vector.broadcast %cst_114 : f32 to vector<2x32xf32>
    %511 = arith.addf %510, %509 : vector<2x32xf32>
    %512 = arith.divf %510, %511 : vector<2x32xf32>
    %513 = vector.extract_strided_slice %500 {offsets = [0, 64], sizes = [2, 32], strides = [1, 1]} : vector<2x128xf32> to vector<2x32xf32>
    %514 = math.tanh %513 : vector<2x32xf32>
    %515 = vector.extract_strided_slice %500 {offsets = [0, 96], sizes = [2, 32], strides = [1, 1]} : vector<2x128xf32> to vector<2x32xf32>
    %516 = arith.negf %515 : vector<2x32xf32>
    %517 = math.exp %516 : vector<2x32xf32>
    %cst_115 = arith.constant 1.000000e+00 : f32
    %518 = vector.broadcast %cst_115 : f32 to vector<2x32xf32>
    %519 = arith.addf %518, %517 : vector<2x32xf32>
    %520 = arith.divf %518, %519 : vector<2x32xf32>
    %521 = arith.mulf %512, %433 : vector<2x32xf32>
    %522 = arith.mulf %506, %514 : vector<2x32xf32>
    %523 = arith.addf %521, %522 : vector<2x32xf32>
    %524 = math.tanh %523 : vector<2x32xf32>
    %525 = arith.mulf %520, %524 : vector<2x32xf32>
    %526 = vector.broadcast %495 : vector<2x1xf32> to vector<2x32xf32>
    %527 = arith.mulf %526, %525 : vector<2x32xf32>
    %cst_116 = arith.constant 1.000000e+00 : f32
    %528 = vector.broadcast %cst_116 : f32 to vector<2x1xf32>
    %529 = arith.subf %528, %495 : vector<2x1xf32>
    %530 = vector.broadcast %529 : vector<2x1xf32> to vector<2x32xf32>
    %531 = arith.mulf %530, %426 : vector<2x32xf32>
    %532 = arith.addf %527, %531 : vector<2x32xf32>
    %533 = vector.broadcast %495 : vector<2x1xf32> to vector<2x32xf32>
    %534 = arith.mulf %533, %523 : vector<2x32xf32>
    %cst_117 = arith.constant 1.000000e+00 : f32
    %535 = vector.broadcast %cst_117 : f32 to vector<2x1xf32>
    %536 = arith.subf %535, %495 : vector<2x1xf32>
    %537 = vector.broadcast %536 : vector<2x1xf32> to vector<2x32xf32>
    %538 = arith.mulf %537, %433 : vector<2x32xf32>
    %539 = arith.addf %534, %538 : vector<2x32xf32>
    %540 = vector.broadcast %495 : vector<2x1xf32> to vector<2x32xf32>
    %541 = arith.mulf %540, %525 : vector<2x32xf32>
    %c0_118 = arith.constant 0 : index
    %c4_119 = arith.constant 4 : index
    %c0_120 = arith.constant 0 : index
    %542 = vector.load %arg12[%c0_118, %c4_119, %c0_120] : memref<2x8x64xf32, #tpu.memory_space<vmem>>, vector<2x1x32xf32>
    %543 = vector.shape_cast %542 : vector<2x1x32xf32> to vector<2x32xf32>
    %544 = vector.shape_cast %541 : vector<2x32xf32> to vector<2x1x32xf32>
    tpu.vector_store %arg12[%c0_118, %c4_119, %c0_120], %544 {strides = array<i32>} : memref<2x8x64xf32, #tpu.memory_space<vmem>>, vector<2x1x32xf32>,
    %c3_i32_121 = arith.constant 3 : i32
    %545 = vector.broadcast %c3_i32_121 : i32 to vector<2x1xi32>
    %546 = arith.cmpi sgt, %3, %545 : vector<2x1xi32>
    %547 = arith.extui %546 : vector<2x1xi1> to vector<2x1xi32>
    %548 = arith.sitofp %547 : vector<2x1xi32> to vector<2x1xf32>
    %cst_122 = arith.constant dense<0.000000e+00> : vector<2x128xf32>
    %549 = tpu.matmul %29, %57, %cst_122 {dimension_numbers = #tpu.dot_dimension_numbers<[1], [0], [0], [1], [0, 0, 1, 1], [], []>} : vector<2x32xf32>, vector<32x128xf32>, vector<2x128xf32> -> vector<2x128xf32>
    %cst_123 = arith.constant dense<0.000000e+00> : vector<2x128xf32>
    %550 = tpu.matmul %479, %58, %cst_123 {dimension_numbers = #tpu.dot_dimension_numbers<[1], [0], [0], [1], [0, 0, 1, 1], [], []>} : vector<2x32xf32>, vector<32x128xf32>, vector<2x128xf32> -> vector<2x128xf32>
    %551 = arith.addf %549, %550 : vector<2x128xf32>
    %552 = vector.broadcast %59 : vector<1x128xf32> to vector<2x128xf32>
    %553 = arith.addf %551, %552 : vector<2x128xf32>
    %554 = vector.extract_strided_slice %553 {offsets = [0, 0], sizes = [2, 32], strides = [1, 1]} : vector<2x128xf32> to vector<2x32xf32>
    %555 = arith.negf %554 : vector<2x32xf32>
    %556 = math.exp %555 : vector<2x32xf32>
    %cst_124 = arith.constant 1.000000e+00 : f32
    %557 = vector.broadcast %cst_124 : f32 to vector<2x32xf32>
    %558 = arith.addf %557, %556 : vector<2x32xf32>
    %559 = arith.divf %557, %558 : vector<2x32xf32>
    %560 = vector.extract_strided_slice %553 {offsets = [0, 32], sizes = [2, 32], strides = [1, 1]} : vector<2x128xf32> to vector<2x32xf32>
    %561 = arith.negf %560 : vector<2x32xf32>
    %562 = math.exp %561 : vector<2x32xf32>
    %cst_125 = arith.constant 1.000000e+00 : f32
    %563 = vector.broadcast %cst_125 : f32 to vector<2x32xf32>
    %564 = arith.addf %563, %562 : vector<2x32xf32>
    %565 = arith.divf %563, %564 : vector<2x32xf32>
    %566 = vector.extract_strided_slice %553 {offsets = [0, 64], sizes = [2, 32], strides = [1, 1]} : vector<2x128xf32> to vector<2x32xf32>
    %567 = math.tanh %566 : vector<2x32xf32>
    %568 = vector.extract_strided_slice %553 {offsets = [0, 96], sizes = [2, 32], strides = [1, 1]} : vector<2x128xf32> to vector<2x32xf32>
    %569 = arith.negf %568 : vector<2x32xf32>
    %570 = math.exp %569 : vector<2x32xf32>
    %cst_126 = arith.constant 1.000000e+00 : f32
    %571 = vector.broadcast %cst_126 : f32 to vector<2x32xf32>
    %572 = arith.addf %571, %570 : vector<2x32xf32>
    %573 = arith.divf %571, %572 : vector<2x32xf32>
    %574 = arith.mulf %565, %486 : vector<2x32xf32>
    %575 = arith.mulf %559, %567 : vector<2x32xf32>
    %576 = arith.addf %574, %575 : vector<2x32xf32>
    %577 = math.tanh %576 : vector<2x32xf32>
    %578 = arith.mulf %573, %577 : vector<2x32xf32>
    %579 = vector.broadcast %548 : vector<2x1xf32> to vector<2x32xf32>
    %580 = arith.mulf %579, %578 : vector<2x32xf32>
    %cst_127 = arith.constant 1.000000e+00 : f32
    %581 = vector.broadcast %cst_127 : f32 to vector<2x1xf32>
    %582 = arith.subf %581, %548 : vector<2x1xf32>
    %583 = vector.broadcast %582 : vector<2x1xf32> to vector<2x32xf32>
    %584 = arith.mulf %583, %479 : vector<2x32xf32>
    %585 = arith.addf %580, %584 : vector<2x32xf32>
    %586 = vector.broadcast %548 : vector<2x1xf32> to vector<2x32xf32>
    %587 = arith.mulf %586, %576 : vector<2x32xf32>
    %cst_128 = arith.constant 1.000000e+00 : f32
    %588 = vector.broadcast %cst_128 : f32 to vector<2x1xf32>
    %589 = arith.subf %588, %548 : vector<2x1xf32>
    %590 = vector.broadcast %589 : vector<2x1xf32> to vector<2x32xf32>
    %591 = arith.mulf %590, %486 : vector<2x32xf32>
    %592 = arith.addf %587, %591 : vector<2x32xf32>
    %593 = vector.broadcast %548 : vector<2x1xf32> to vector<2x32xf32>
    %594 = arith.mulf %593, %578 : vector<2x32xf32>
    %c0_129 = arith.constant 0 : index
    %c3_130 = arith.constant 3 : index
    %c32_131 = arith.constant 32 : index
    %595 = vector.load %arg12[%c0_129, %c3_130, %c32_131] : memref<2x8x64xf32, #tpu.memory_space<vmem>>, vector<2x1x32xf32>
    %596 = vector.shape_cast %595 : vector<2x1x32xf32> to vector<2x32xf32>
    %597 = vector.shape_cast %594 : vector<2x32xf32> to vector<2x1x32xf32>
    tpu.vector_store %arg12[%c0_129, %c3_130, %c32_131], %597 {strides = array<i32>} : memref<2x8x64xf32, #tpu.memory_space<vmem>>, vector<2x1x32xf32>,
    %c5_i32_132 = arith.constant 5 : i32
    %598 = vector.broadcast %c5_i32_132 : i32 to vector<2x1xi32>
    %599 = arith.cmpi sgt, %3, %598 : vector<2x1xi32>
    %600 = arith.extui %599 : vector<2x1xi1> to vector<2x1xi32>
    %601 = arith.sitofp %600 : vector<2x1xi32> to vector<2x1xf32>
    %cst_133 = arith.constant dense<0.000000e+00> : vector<2x128xf32>
    %602 = tpu.matmul %41, %54, %cst_133 {dimension_numbers = #tpu.dot_dimension_numbers<[1], [0], [0], [1], [0, 0, 1, 1], [], []>} : vector<2x32xf32>, vector<32x128xf32>, vector<2x128xf32> -> vector<2x128xf32>
    %cst_134 = arith.constant dense<0.000000e+00> : vector<2x128xf32>
    %603 = tpu.matmul %532, %55, %cst_134 {dimension_numbers = #tpu.dot_dimension_numbers<[1], [0], [0], [1], [0, 0, 1, 1], [], []>} : vector<2x32xf32>, vector<32x128xf32>, vector<2x128xf32> -> vector<2x128xf32>
    %604 = arith.addf %602, %603 : vector<2x128xf32>
    %605 = vector.broadcast %56 : vector<1x128xf32> to vector<2x128xf32>
    %606 = arith.addf %604, %605 : vector<2x128xf32>
    %607 = vector.extract_strided_slice %606 {offsets = [0, 0], sizes = [2, 32], strides = [1, 1]} : vector<2x128xf32> to vector<2x32xf32>
    %608 = arith.negf %607 : vector<2x32xf32>
    %609 = math.exp %608 : vector<2x32xf32>
    %cst_135 = arith.constant 1.000000e+00 : f32
    %610 = vector.broadcast %cst_135 : f32 to vector<2x32xf32>
    %611 = arith.addf %610, %609 : vector<2x32xf32>
    %612 = arith.divf %610, %611 : vector<2x32xf32>
    %613 = vector.extract_strided_slice %606 {offsets = [0, 32], sizes = [2, 32], strides = [1, 1]} : vector<2x128xf32> to vector<2x32xf32>
    %614 = arith.negf %613 : vector<2x32xf32>
    %615 = math.exp %614 : vector<2x32xf32>
    %cst_136 = arith.constant 1.000000e+00 : f32
    %616 = vector.broadcast %cst_136 : f32 to vector<2x32xf32>
    %617 = arith.addf %616, %615 : vector<2x32xf32>
    %618 = arith.divf %616, %617 : vector<2x32xf32>
    %619 = vector.extract_strided_slice %606 {offsets = [0, 64], sizes = [2, 32], strides = [1, 1]} : vector<2x128xf32> to vector<2x32xf32>
    %620 = math.tanh %619 : vector<2x32xf32>
    %621 = vector.extract_strided_slice %606 {offsets = [0, 96], sizes = [2, 32], strides = [1, 1]} : vector<2x128xf32> to vector<2x32xf32>
    %622 = arith.negf %621 : vector<2x32xf32>
    %623 = math.exp %622 : vector<2x32xf32>
    %cst_137 = arith.constant 1.000000e+00 : f32
    %624 = vector.broadcast %cst_137 : f32 to vector<2x32xf32>
    %625 = arith.addf %624, %623 : vector<2x32xf32>
    %626 = arith.divf %624, %625 : vector<2x32xf32>
    %627 = arith.mulf %618, %539 : vector<2x32xf32>
    %628 = arith.mulf %612, %620 : vector<2x32xf32>
    %629 = arith.addf %627, %628 : vector<2x32xf32>
    %630 = math.tanh %629 : vector<2x32xf32>
    %631 = arith.mulf %626, %630 : vector<2x32xf32>
    %632 = vector.broadcast %601 : vector<2x1xf32> to vector<2x32xf32>
    %633 = arith.mulf %632, %631 : vector<2x32xf32>
    %cst_138 = arith.constant 1.000000e+00 : f32
    %634 = vector.broadcast %cst_138 : f32 to vector<2x1xf32>
    %635 = arith.subf %634, %601 : vector<2x1xf32>
    %636 = vector.broadcast %635 : vector<2x1xf32> to vector<2x32xf32>
    %637 = arith.mulf %636, %532 : vector<2x32xf32>
    %638 = arith.addf %633, %637 : vector<2x32xf32>
    %639 = vector.broadcast %601 : vector<2x1xf32> to vector<2x32xf32>
    %640 = arith.mulf %639, %629 : vector<2x32xf32>
    %cst_139 = arith.constant 1.000000e+00 : f32
    %641 = vector.broadcast %cst_139 : f32 to vector<2x1xf32>
    %642 = arith.subf %641, %601 : vector<2x1xf32>
    %643 = vector.broadcast %642 : vector<2x1xf32> to vector<2x32xf32>
    %644 = arith.mulf %643, %539 : vector<2x32xf32>
    %645 = arith.addf %640, %644 : vector<2x32xf32>
    %646 = vector.broadcast %601 : vector<2x1xf32> to vector<2x32xf32>
    %647 = arith.mulf %646, %631 : vector<2x32xf32>
    %c0_140 = arith.constant 0 : index
    %c5_141 = arith.constant 5 : index
    %c0_142 = arith.constant 0 : index
    %648 = vector.load %arg12[%c0_140, %c5_141, %c0_142] : memref<2x8x64xf32, #tpu.memory_space<vmem>>, vector<2x1x32xf32>
    %649 = vector.shape_cast %648 : vector<2x1x32xf32> to vector<2x32xf32>
    %650 = vector.shape_cast %647 : vector<2x32xf32> to vector<2x1x32xf32>
    tpu.vector_store %arg12[%c0_140, %c5_141, %c0_142], %650 {strides = array<i32>} : memref<2x8x64xf32, #tpu.memory_space<vmem>>, vector<2x1x32xf32>,
    %c2_i32_143 = arith.constant 2 : i32
    %651 = vector.broadcast %c2_i32_143 : i32 to vector<2x1xi32>
    %652 = arith.cmpi sgt, %3, %651 : vector<2x1xi32>
    %653 = arith.extui %652 : vector<2x1xi1> to vector<2x1xi32>
    %654 = arith.sitofp %653 : vector<2x1xi32> to vector<2x1xf32>
    %cst_144 = arith.constant dense<0.000000e+00> : vector<2x128xf32>
    %655 = tpu.matmul %23, %57, %cst_144 {dimension_numbers = #tpu.dot_dimension_numbers<[1], [0], [0], [1], [0, 0, 1, 1], [], []>} : vector<2x32xf32>, vector<32x128xf32>, vector<2x128xf32> -> vector<2x128xf32>
    %cst_145 = arith.constant dense<0.000000e+00> : vector<2x128xf32>
    %656 = tpu.matmul %585, %58, %cst_145 {dimension_numbers = #tpu.dot_dimension_numbers<[1], [0], [0], [1], [0, 0, 1, 1], [], []>} : vector<2x32xf32>, vector<32x128xf32>, vector<2x128xf32> -> vector<2x128xf32>
    %657 = arith.addf %655, %656 : vector<2x128xf32>
    %658 = vector.broadcast %59 : vector<1x128xf32> to vector<2x128xf32>
    %659 = arith.addf %657, %658 : vector<2x128xf32>
    %660 = vector.extract_strided_slice %659 {offsets = [0, 0], sizes = [2, 32], strides = [1, 1]} : vector<2x128xf32> to vector<2x32xf32>
    %661 = arith.negf %660 : vector<2x32xf32>
    %662 = math.exp %661 : vector<2x32xf32>
    %cst_146 = arith.constant 1.000000e+00 : f32
    %663 = vector.broadcast %cst_146 : f32 to vector<2x32xf32>
    %664 = arith.addf %663, %662 : vector<2x32xf32>
    %665 = arith.divf %663, %664 : vector<2x32xf32>
    %666 = vector.extract_strided_slice %659 {offsets = [0, 32], sizes = [2, 32], strides = [1, 1]} : vector<2x128xf32> to vector<2x32xf32>
    %667 = arith.negf %666 : vector<2x32xf32>
    %668 = math.exp %667 : vector<2x32xf32>
    %cst_147 = arith.constant 1.000000e+00 : f32
    %669 = vector.broadcast %cst_147 : f32 to vector<2x32xf32>
    %670 = arith.addf %669, %668 : vector<2x32xf32>
    %671 = arith.divf %669, %670 : vector<2x32xf32>
    %672 = vector.extract_strided_slice %659 {offsets = [0, 64], sizes = [2, 32], strides = [1, 1]} : vector<2x128xf32> to vector<2x32xf32>
    %673 = math.tanh %672 : vector<2x32xf32>
    %674 = vector.extract_strided_slice %659 {offsets = [0, 96], sizes = [2, 32], strides = [1, 1]} : vector<2x128xf32> to vector<2x32xf32>
    %675 = arith.negf %674 : vector<2x32xf32>
    %676 = math.exp %675 : vector<2x32xf32>
    %cst_148 = arith.constant 1.000000e+00 : f32
    %677 = vector.broadcast %cst_148 : f32 to vector<2x32xf32>
    %678 = arith.addf %677, %676 : vector<2x32xf32>
    %679 = arith.divf %677, %678 : vector<2x32xf32>
    %680 = arith.mulf %671, %592 : vector<2x32xf32>
    %681 = arith.mulf %665, %673 : vector<2x32xf32>
    %682 = arith.addf %680, %681 : vector<2x32xf32>
    %683 = math.tanh %682 : vector<2x32xf32>
    %684 = arith.mulf %679, %683 : vector<2x32xf32>
    %685 = vector.broadcast %654 : vector<2x1xf32> to vector<2x32xf32>
    %686 = arith.mulf %685, %684 : vector<2x32xf32>
    %cst_149 = arith.constant 1.000000e+00 : f32
    %687 = vector.broadcast %cst_149 : f32 to vector<2x1xf32>
    %688 = arith.subf %687, %654 : vector<2x1xf32>
    %689 = vector.broadcast %688 : vector<2x1xf32> to vector<2x32xf32>
    %690 = arith.mulf %689, %585 : vector<2x32xf32>
    %691 = arith.addf %686, %690 : vector<2x32xf32>
    %692 = vector.broadcast %654 : vector<2x1xf32> to vector<2x32xf32>
    %693 = arith.mulf %692, %682 : vector<2x32xf32>
    %cst_150 = arith.constant 1.000000e+00 : f32
    %694 = vector.broadcast %cst_150 : f32 to vector<2x1xf32>
    %695 = arith.subf %694, %654 : vector<2x1xf32>
    %696 = vector.broadcast %695 : vector<2x1xf32> to vector<2x32xf32>
    %697 = arith.mulf %696, %592 : vector<2x32xf32>
    %698 = arith.addf %693, %697 : vector<2x32xf32>
    %699 = vector.broadcast %654 : vector<2x1xf32> to vector<2x32xf32>
    %700 = arith.mulf %699, %684 : vector<2x32xf32>
    %c0_151 = arith.constant 0 : index
    %c2_152 = arith.constant 2 : index
    %c32_153 = arith.constant 32 : index
    %701 = vector.load %arg12[%c0_151, %c2_152, %c32_153] : memref<2x8x64xf32, #tpu.memory_space<vmem>>, vector<2x1x32xf32>
    %702 = vector.shape_cast %701 : vector<2x1x32xf32> to vector<2x32xf32>
    %703 = vector.shape_cast %700 : vector<2x32xf32> to vector<2x1x32xf32>
    tpu.vector_store %arg12[%c0_151, %c2_152, %c32_153], %703 {strides = array<i32>} : memref<2x8x64xf32, #tpu.memory_space<vmem>>, vector<2x1x32xf32>,
    %c6_i32_154 = arith.constant 6 : i32
    %704 = vector.broadcast %c6_i32_154 : i32 to vector<2x1xi32>
    %705 = arith.cmpi sgt, %3, %704 : vector<2x1xi32>
    %706 = arith.extui %705 : vector<2x1xi1> to vector<2x1xi32>
    %707 = arith.sitofp %706 : vector<2x1xi32> to vector<2x1xf32>
    %cst_155 = arith.constant dense<0.000000e+00> : vector<2x128xf32>
    %708 = tpu.matmul %47, %54, %cst_155 {dimension_numbers = #tpu.dot_dimension_numbers<[1], [0], [0], [1], [0, 0, 1, 1], [], []>} : vector<2x32xf32>, vector<32x128xf32>, vector<2x128xf32> -> vector<2x128xf32>
    %cst_156 = arith.constant dense<0.000000e+00> : vector<2x128xf32>
    %709 = tpu.matmul %638, %55, %cst_156 {dimension_numbers = #tpu.dot_dimension_numbers<[1], [0], [0], [1], [0, 0, 1, 1], [], []>} : vector<2x32xf32>, vector<32x128xf32>, vector<2x128xf32> -> vector<2x128xf32>
    %710 = arith.addf %708, %709 : vector<2x128xf32>
    %711 = vector.broadcast %56 : vector<1x128xf32> to vector<2x128xf32>
    %712 = arith.addf %710, %711 : vector<2x128xf32>
    %713 = vector.extract_strided_slice %712 {offsets = [0, 0], sizes = [2, 32], strides = [1, 1]} : vector<2x128xf32> to vector<2x32xf32>
    %714 = arith.negf %713 : vector<2x32xf32>
    %715 = math.exp %714 : vector<2x32xf32>
    %cst_157 = arith.constant 1.000000e+00 : f32
    %716 = vector.broadcast %cst_157 : f32 to vector<2x32xf32>
    %717 = arith.addf %716, %715 : vector<2x32xf32>
    %718 = arith.divf %716, %717 : vector<2x32xf32>
    %719 = vector.extract_strided_slice %712 {offsets = [0, 32], sizes = [2, 32], strides = [1, 1]} : vector<2x128xf32> to vector<2x32xf32>
    %720 = arith.negf %719 : vector<2x32xf32>
    %721 = math.exp %720 : vector<2x32xf32>
    %cst_158 = arith.constant 1.000000e+00 : f32
    %722 = vector.broadcast %cst_158 : f32 to vector<2x32xf32>
    %723 = arith.addf %722, %721 : vector<2x32xf32>
    %724 = arith.divf %722, %723 : vector<2x32xf32>
    %725 = vector.extract_strided_slice %712 {offsets = [0, 64], sizes = [2, 32], strides = [1, 1]} : vector<2x128xf32> to vector<2x32xf32>
    %726 = math.tanh %725 : vector<2x32xf32>
    %727 = vector.extract_strided_slice %712 {offsets = [0, 96], sizes = [2, 32], strides = [1, 1]} : vector<2x128xf32> to vector<2x32xf32>
    %728 = arith.negf %727 : vector<2x32xf32>
    %729 = math.exp %728 : vector<2x32xf32>
    %cst_159 = arith.constant 1.000000e+00 : f32
    %730 = vector.broadcast %cst_159 : f32 to vector<2x32xf32>
    %731 = arith.addf %730, %729 : vector<2x32xf32>
    %732 = arith.divf %730, %731 : vector<2x32xf32>
    %733 = arith.mulf %724, %645 : vector<2x32xf32>
    %734 = arith.mulf %718, %726 : vector<2x32xf32>
    %735 = arith.addf %733, %734 : vector<2x32xf32>
    %736 = math.tanh %735 : vector<2x32xf32>
    %737 = arith.mulf %732, %736 : vector<2x32xf32>
    %738 = vector.broadcast %707 : vector<2x1xf32> to vector<2x32xf32>
    %739 = arith.mulf %738, %737 : vector<2x32xf32>
    %cst_160 = arith.constant 1.000000e+00 : f32
    %740 = vector.broadcast %cst_160 : f32 to vector<2x1xf32>
    %741 = arith.subf %740, %707 : vector<2x1xf32>
    %742 = vector.broadcast %741 : vector<2x1xf32> to vector<2x32xf32>
    %743 = arith.mulf %742, %638 : vector<2x32xf32>
    %744 = arith.addf %739, %743 : vector<2x32xf32>
    %745 = vector.broadcast %707 : vector<2x1xf32> to vector<2x32xf32>
    %746 = arith.mulf %745, %735 : vector<2x32xf32>
    %cst_161 = arith.constant 1.000000e+00 : f32
    %747 = vector.broadcast %cst_161 : f32 to vector<2x1xf32>
    %748 = arith.subf %747, %707 : vector<2x1xf32>
    %749 = vector.broadcast %748 : vector<2x1xf32> to vector<2x32xf32>
    %750 = arith.mulf %749, %645 : vector<2x32xf32>
    %751 = arith.addf %746, %750 : vector<2x32xf32>
    %752 = vector.broadcast %707 : vector<2x1xf32> to vector<2x32xf32>
    %753 = arith.mulf %752, %737 : vector<2x32xf32>
    %c0_162 = arith.constant 0 : index
    %c6_163 = arith.constant 6 : index
    %c0_164 = arith.constant 0 : index
    %754 = vector.load %arg12[%c0_162, %c6_163, %c0_164] : memref<2x8x64xf32, #tpu.memory_space<vmem>>, vector<2x1x32xf32>
    %755 = vector.shape_cast %754 : vector<2x1x32xf32> to vector<2x32xf32>
    %756 = vector.shape_cast %753 : vector<2x32xf32> to vector<2x1x32xf32>
    tpu.vector_store %arg12[%c0_162, %c6_163, %c0_164], %756 {strides = array<i32>} : memref<2x8x64xf32, #tpu.memory_space<vmem>>, vector<2x1x32xf32>,
    %c1_i32_165 = arith.constant 1 : i32
    %757 = vector.broadcast %c1_i32_165 : i32 to vector<2x1xi32>
    %758 = arith.cmpi sgt, %3, %757 : vector<2x1xi32>
    %759 = arith.extui %758 : vector<2x1xi1> to vector<2x1xi32>
    %760 = arith.sitofp %759 : vector<2x1xi32> to vector<2x1xf32>
    %cst_166 = arith.constant dense<0.000000e+00> : vector<2x128xf32>
    %761 = tpu.matmul %17, %57, %cst_166 {dimension_numbers = #tpu.dot_dimension_numbers<[1], [0], [0], [1], [0, 0, 1, 1], [], []>} : vector<2x32xf32>, vector<32x128xf32>, vector<2x128xf32> -> vector<2x128xf32>
    %cst_167 = arith.constant dense<0.000000e+00> : vector<2x128xf32>
    %762 = tpu.matmul %691, %58, %cst_167 {dimension_numbers = #tpu.dot_dimension_numbers<[1], [0], [0], [1], [0, 0, 1, 1], [], []>} : vector<2x32xf32>, vector<32x128xf32>, vector<2x128xf32> -> vector<2x128xf32>
    %763 = arith.addf %761, %762 : vector<2x128xf32>
    %764 = vector.broadcast %59 : vector<1x128xf32> to vector<2x128xf32>
    %765 = arith.addf %763, %764 : vector<2x128xf32>
    %766 = vector.extract_strided_slice %765 {offsets = [0, 0], sizes = [2, 32], strides = [1, 1]} : vector<2x128xf32> to vector<2x32xf32>
    %767 = arith.negf %766 : vector<2x32xf32>
    %768 = math.exp %767 : vector<2x32xf32>
    %cst_168 = arith.constant 1.000000e+00 : f32
    %769 = vector.broadcast %cst_168 : f32 to vector<2x32xf32>
    %770 = arith.addf %769, %768 : vector<2x32xf32>
    %771 = arith.divf %769, %770 : vector<2x32xf32>
    %772 = vector.extract_strided_slice %765 {offsets = [0, 32], sizes = [2, 32], strides = [1, 1]} : vector<2x128xf32> to vector<2x32xf32>
    %773 = arith.negf %772 : vector<2x32xf32>
    %774 = math.exp %773 : vector<2x32xf32>
    %cst_169 = arith.constant 1.000000e+00 : f32
    %775 = vector.broadcast %cst_169 : f32 to vector<2x32xf32>
    %776 = arith.addf %775, %774 : vector<2x32xf32>
    %777 = arith.divf %775, %776 : vector<2x32xf32>
    %778 = vector.extract_strided_slice %765 {offsets = [0, 64], sizes = [2, 32], strides = [1, 1]} : vector<2x128xf32> to vector<2x32xf32>
    %779 = math.tanh %778 : vector<2x32xf32>
    %780 = vector.extract_strided_slice %765 {offsets = [0, 96], sizes = [2, 32], strides = [1, 1]} : vector<2x128xf32> to vector<2x32xf32>
    %781 = arith.negf %780 : vector<2x32xf32>
    %782 = math.exp %781 : vector<2x32xf32>
    %cst_170 = arith.constant 1.000000e+00 : f32
    %783 = vector.broadcast %cst_170 : f32 to vector<2x32xf32>
    %784 = arith.addf %783, %782 : vector<2x32xf32>
    %785 = arith.divf %783, %784 : vector<2x32xf32>
    %786 = arith.mulf %777, %698 : vector<2x32xf32>
    %787 = arith.mulf %771, %779 : vector<2x32xf32>
    %788 = arith.addf %786, %787 : vector<2x32xf32>
    %789 = math.tanh %788 : vector<2x32xf32>
    %790 = arith.mulf %785, %789 : vector<2x32xf32>
    %791 = vector.broadcast %760 : vector<2x1xf32> to vector<2x32xf32>
    %792 = arith.mulf %791, %790 : vector<2x32xf32>
    %cst_171 = arith.constant 1.000000e+00 : f32
    %793 = vector.broadcast %cst_171 : f32 to vector<2x1xf32>
    %794 = arith.subf %793, %760 : vector<2x1xf32>
    %795 = vector.broadcast %794 : vector<2x1xf32> to vector<2x32xf32>
    %796 = arith.mulf %795, %691 : vector<2x32xf32>
    %797 = arith.addf %792, %796 : vector<2x32xf32>
    %798 = vector.broadcast %760 : vector<2x1xf32> to vector<2x32xf32>
    %799 = arith.mulf %798, %788 : vector<2x32xf32>
    %cst_172 = arith.constant 1.000000e+00 : f32
    %800 = vector.broadcast %cst_172 : f32 to vector<2x1xf32>
    %801 = arith.subf %800, %760 : vector<2x1xf32>
    %802 = vector.broadcast %801 : vector<2x1xf32> to vector<2x32xf32>
    %803 = arith.mulf %802, %698 : vector<2x32xf32>
    %804 = arith.addf %799, %803 : vector<2x32xf32>
    %805 = vector.broadcast %760 : vector<2x1xf32> to vector<2x32xf32>
    %806 = arith.mulf %805, %790 : vector<2x32xf32>
    %c0_173 = arith.constant 0 : index
    %c1_174 = arith.constant 1 : index
    %c32_175 = arith.constant 32 : index
    %807 = vector.load %arg12[%c0_173, %c1_174, %c32_175] : memref<2x8x64xf32, #tpu.memory_space<vmem>>, vector<2x1x32xf32>
    %808 = vector.shape_cast %807 : vector<2x1x32xf32> to vector<2x32xf32>
    %809 = vector.shape_cast %806 : vector<2x32xf32> to vector<2x1x32xf32>
    tpu.vector_store %arg12[%c0_173, %c1_174, %c32_175], %809 {strides = array<i32>} : memref<2x8x64xf32, #tpu.memory_space<vmem>>, vector<2x1x32xf32>,
    %c7_i32_176 = arith.constant 7 : i32
    %810 = vector.broadcast %c7_i32_176 : i32 to vector<2x1xi32>
    %811 = arith.cmpi sgt, %3, %810 : vector<2x1xi32>
    %812 = arith.extui %811 : vector<2x1xi1> to vector<2x1xi32>
    %813 = arith.sitofp %812 : vector<2x1xi32> to vector<2x1xf32>
    %cst_177 = arith.constant dense<0.000000e+00> : vector<2x128xf32>
    %814 = tpu.matmul %53, %54, %cst_177 {dimension_numbers = #tpu.dot_dimension_numbers<[1], [0], [0], [1], [0, 0, 1, 1], [], []>} : vector<2x32xf32>, vector<32x128xf32>, vector<2x128xf32> -> vector<2x128xf32>
    %cst_178 = arith.constant dense<0.000000e+00> : vector<2x128xf32>
    %815 = tpu.matmul %744, %55, %cst_178 {dimension_numbers = #tpu.dot_dimension_numbers<[1], [0], [0], [1], [0, 0, 1, 1], [], []>} : vector<2x32xf32>, vector<32x128xf32>, vector<2x128xf32> -> vector<2x128xf32>
    %816 = arith.addf %814, %815 : vector<2x128xf32>
    %817 = vector.broadcast %56 : vector<1x128xf32> to vector<2x128xf32>
    %818 = arith.addf %816, %817 : vector<2x128xf32>
    %819 = vector.extract_strided_slice %818 {offsets = [0, 0], sizes = [2, 32], strides = [1, 1]} : vector<2x128xf32> to vector<2x32xf32>
    %820 = arith.negf %819 : vector<2x32xf32>
    %821 = math.exp %820 : vector<2x32xf32>
    %cst_179 = arith.constant 1.000000e+00 : f32
    %822 = vector.broadcast %cst_179 : f32 to vector<2x32xf32>
    %823 = arith.addf %822, %821 : vector<2x32xf32>
    %824 = arith.divf %822, %823 : vector<2x32xf32>
    %825 = vector.extract_strided_slice %818 {offsets = [0, 32], sizes = [2, 32], strides = [1, 1]} : vector<2x128xf32> to vector<2x32xf32>
    %826 = arith.negf %825 : vector<2x32xf32>
    %827 = math.exp %826 : vector<2x32xf32>
    %cst_180 = arith.constant 1.000000e+00 : f32
    %828 = vector.broadcast %cst_180 : f32 to vector<2x32xf32>
    %829 = arith.addf %828, %827 : vector<2x32xf32>
    %830 = arith.divf %828, %829 : vector<2x32xf32>
    %831 = vector.extract_strided_slice %818 {offsets = [0, 64], sizes = [2, 32], strides = [1, 1]} : vector<2x128xf32> to vector<2x32xf32>
    %832 = math.tanh %831 : vector<2x32xf32>
    %833 = vector.extract_strided_slice %818 {offsets = [0, 96], sizes = [2, 32], strides = [1, 1]} : vector<2x128xf32> to vector<2x32xf32>
    %834 = arith.negf %833 : vector<2x32xf32>
    %835 = math.exp %834 : vector<2x32xf32>
    %cst_181 = arith.constant 1.000000e+00 : f32
    %836 = vector.broadcast %cst_181 : f32 to vector<2x32xf32>
    %837 = arith.addf %836, %835 : vector<2x32xf32>
    %838 = arith.divf %836, %837 : vector<2x32xf32>
    %839 = arith.mulf %830, %751 : vector<2x32xf32>
    %840 = arith.mulf %824, %832 : vector<2x32xf32>
    %841 = arith.addf %839, %840 : vector<2x32xf32>
    %842 = math.tanh %841 : vector<2x32xf32>
    %843 = arith.mulf %838, %842 : vector<2x32xf32>
    %844 = vector.broadcast %813 : vector<2x1xf32> to vector<2x32xf32>
    %845 = arith.mulf %844, %843 : vector<2x32xf32>
    %cst_182 = arith.constant 1.000000e+00 : f32
    %846 = vector.broadcast %cst_182 : f32 to vector<2x1xf32>
    %847 = arith.subf %846, %813 : vector<2x1xf32>
    %848 = vector.broadcast %847 : vector<2x1xf32> to vector<2x32xf32>
    %849 = arith.mulf %848, %744 : vector<2x32xf32>
    %850 = arith.addf %845, %849 : vector<2x32xf32>
    %851 = vector.broadcast %813 : vector<2x1xf32> to vector<2x32xf32>
    %852 = arith.mulf %851, %843 : vector<2x32xf32>
    %c0_183 = arith.constant 0 : index
    %c7_184 = arith.constant 7 : index
    %c0_185 = arith.constant 0 : index
    %853 = vector.load %arg12[%c0_183, %c7_184, %c0_185] : memref<2x8x64xf32, #tpu.memory_space<vmem>>, vector<2x1x32xf32>
    %854 = vector.shape_cast %853 : vector<2x1x32xf32> to vector<2x32xf32>
    %855 = vector.shape_cast %852 : vector<2x32xf32> to vector<2x1x32xf32>
    tpu.vector_store %arg12[%c0_183, %c7_184, %c0_185], %855 {strides = array<i32>} : memref<2x8x64xf32, #tpu.memory_space<vmem>>, vector<2x1x32xf32>,
    %c0_i32_186 = arith.constant 0 : i32
    %856 = vector.broadcast %c0_i32_186 : i32 to vector<2x1xi32>
    %857 = arith.cmpi sgt, %3, %856 : vector<2x1xi32>
    %858 = arith.extui %857 : vector<2x1xi1> to vector<2x1xi32>
    %859 = arith.sitofp %858 : vector<2x1xi32> to vector<2x1xf32>
    %cst_187 = arith.constant dense<0.000000e+00> : vector<2x128xf32>
    %860 = tpu.matmul %11, %57, %cst_187 {dimension_numbers = #tpu.dot_dimension_numbers<[1], [0], [0], [1], [0, 0, 1, 1], [], []>} : vector<2x32xf32>, vector<32x128xf32>, vector<2x128xf32> -> vector<2x128xf32>
    %cst_188 = arith.constant dense<0.000000e+00> : vector<2x128xf32>
    %861 = tpu.matmul %797, %58, %cst_188 {dimension_numbers = #tpu.dot_dimension_numbers<[1], [0], [0], [1], [0, 0, 1, 1], [], []>} : vector<2x32xf32>, vector<32x128xf32>, vector<2x128xf32> -> vector<2x128xf32>
    %862 = arith.addf %860, %861 : vector<2x128xf32>
    %863 = vector.broadcast %59 : vector<1x128xf32> to vector<2x128xf32>
    %864 = arith.addf %862, %863 : vector<2x128xf32>
    %865 = vector.extract_strided_slice %864 {offsets = [0, 0], sizes = [2, 32], strides = [1, 1]} : vector<2x128xf32> to vector<2x32xf32>
    %866 = arith.negf %865 : vector<2x32xf32>
    %867 = math.exp %866 : vector<2x32xf32>
    %cst_189 = arith.constant 1.000000e+00 : f32
    %868 = vector.broadcast %cst_189 : f32 to vector<2x32xf32>
    %869 = arith.addf %868, %867 : vector<2x32xf32>
    %870 = arith.divf %868, %869 : vector<2x32xf32>
    %871 = vector.extract_strided_slice %864 {offsets = [0, 32], sizes = [2, 32], strides = [1, 1]} : vector<2x128xf32> to vector<2x32xf32>
    %872 = arith.negf %871 : vector<2x32xf32>
    %873 = math.exp %872 : vector<2x32xf32>
    %cst_190 = arith.constant 1.000000e+00 : f32
    %874 = vector.broadcast %cst_190 : f32 to vector<2x32xf32>
    %875 = arith.addf %874, %873 : vector<2x32xf32>
    %876 = arith.divf %874, %875 : vector<2x32xf32>
    %877 = vector.extract_strided_slice %864 {offsets = [0, 64], sizes = [2, 32], strides = [1, 1]} : vector<2x128xf32> to vector<2x32xf32>
    %878 = math.tanh %877 : vector<2x32xf32>
    %879 = vector.extract_strided_slice %864 {offsets = [0, 96], sizes = [2, 32], strides = [1, 1]} : vector<2x128xf32> to vector<2x32xf32>
    %880 = arith.negf %879 : vector<2x32xf32>
    %881 = math.exp %880 : vector<2x32xf32>
    %cst_191 = arith.constant 1.000000e+00 : f32
    %882 = vector.broadcast %cst_191 : f32 to vector<2x32xf32>
    %883 = arith.addf %882, %881 : vector<2x32xf32>
    %884 = arith.divf %882, %883 : vector<2x32xf32>
    %885 = arith.mulf %876, %804 : vector<2x32xf32>
    %886 = arith.mulf %870, %878 : vector<2x32xf32>
    %887 = arith.addf %885, %886 : vector<2x32xf32>
    %888 = math.tanh %887 : vector<2x32xf32>
    %889 = arith.mulf %884, %888 : vector<2x32xf32>
    %890 = vector.broadcast %859 : vector<2x1xf32> to vector<2x32xf32>
    %891 = arith.mulf %890, %889 : vector<2x32xf32>
    %cst_192 = arith.constant 1.000000e+00 : f32
    %892 = vector.broadcast %cst_192 : f32 to vector<2x1xf32>
    %893 = arith.subf %892, %859 : vector<2x1xf32>
    %894 = vector.broadcast %893 : vector<2x1xf32> to vector<2x32xf32>
    %895 = arith.mulf %894, %797 : vector<2x32xf32>
    %896 = arith.addf %891, %895 : vector<2x32xf32>
    %897 = vector.broadcast %859 : vector<2x1xf32> to vector<2x32xf32>
    %898 = arith.mulf %897, %889 : vector<2x32xf32>
    %c0_193 = arith.constant 0 : index
    %c0_194 = arith.constant 0 : index
    %c32_195 = arith.constant 32 : index
    %899 = vector.load %arg12[%c0_193, %c0_194, %c32_195] : memref<2x8x64xf32, #tpu.memory_space<vmem>>, vector<2x1x32xf32>
    %900 = vector.shape_cast %899 : vector<2x1x32xf32> to vector<2x32xf32>
    %901 = vector.shape_cast %898 : vector<2x32xf32> to vector<2x1x32xf32>
    tpu.vector_store %arg12[%c0_193, %c0_194, %c32_195], %901 {strides = array<i32>} : memref<2x8x64xf32, #tpu.memory_space<vmem>>, vector<2x1x32xf32>,
    %c0_196 = arith.constant 0 : index
    %c0_197 = arith.constant 0 : index
    %c0_198 = arith.constant 0 : index
    %902 = vector.load %arg13[%c0_196, %c0_197, %c0_198] : memref<2x1x64xf32, #tpu.memory_space<vmem>>, vector<2x1x32xf32>
    %903 = vector.shape_cast %902 : vector<2x1x32xf32> to vector<2x32xf32>
    %904 = vector.shape_cast %850 : vector<2x32xf32> to vector<2x1x32xf32>
    tpu.vector_store %arg13[%c0_196, %c0_197, %c0_198], %904 {strides = array<i32>} : memref<2x1x64xf32, #tpu.memory_space<vmem>>, vector<2x1x32xf32>,
    %c0_199 = arith.constant 0 : index
    %c0_200 = arith.constant 0 : index
    %c32_201 = arith.constant 32 : index
    %905 = vector.load %arg13[%c0_199, %c0_200, %c32_201] : memref<2x1x64xf32, #tpu.memory_space<vmem>>, vector<2x1x32xf32>
    %906 = vector.shape_cast %905 : vector<2x1x32xf32> to vector<2x32xf32>
    %907 = vector.shape_cast %896 : vector<2x32xf32> to vector<2x1x32xf32>
    tpu.vector_store %arg13[%c0_199, %c0_200, %c32_201], %907 {strides = array<i32>} : memref<2x1x64xf32, #tpu.memory_space<vmem>>, vector<2x1x32xf32>,
    return
  }
  func.func @transform_0(%arg0: i32) -> (i32, i32, i32) {
    %c0_i32 = arith.constant 0 : i32
    %c0_i32_0 = arith.constant 0 : i32
    %c0_i32_1 = arith.constant 0 : i32
    return %arg0, %c0_i32, %c0_i32_0 : i32, i32, i32
  }
  func.func @transform_1(%arg0: i32) -> (i32, i32, i32) {
    %c0_i32 = arith.constant 0 : i32
    %c0_i32_0 = arith.constant 0 : i32
    %c0_i32_1 = arith.constant 0 : i32
    return %arg0, %c0_i32, %c0_i32_0 : i32, i32, i32
  }
  func.func @transform_2(%arg0: i32) -> (i32, i32) {
    %c0_i32 = arith.constant 0 : i32
    %c0_i32_0 = arith.constant 0 : i32
    %c0_i32_1 = arith.constant 0 : i32
    return %c0_i32, %c0_i32_0 : i32, i32
  }
  func.func @transform_3(%arg0: i32) -> (i32, i32) {
    %c0_i32 = arith.constant 0 : i32
    %c0_i32_0 = arith.constant 0 : i32
    %c0_i32_1 = arith.constant 0 : i32
    return %c0_i32, %c0_i32_0 : i32, i32
  }
  func.func @transform_4(%arg0: i32) -> (i32, i32) {
    %c0_i32 = arith.constant 0 : i32
    %c0_i32_0 = arith.constant 0 : i32
    %c0_i32_1 = arith.constant 0 : i32
    return %c0_i32, %c0_i32_0 : i32, i32
  }
  func.func @transform_5(%arg0: i32) -> (i32, i32) {
    %c0_i32 = arith.constant 0 : i32
    %c0_i32_0 = arith.constant 0 : i32
    %c0_i32_1 = arith.constant 0 : i32
    return %c0_i32, %c0_i32_0 : i32, i32
  }
  func.func @transform_6(%arg0: i32) -> (i32, i32) {
    %c0_i32 = arith.constant 0 : i32
    %c0_i32_0 = arith.constant 0 : i32
    %c0_i32_1 = arith.constant 0 : i32
    return %c0_i32, %c0_i32_0 : i32, i32
  }
  func.func @transform_7(%arg0: i32) -> (i32, i32) {
    %c0_i32 = arith.constant 0 : i32
    %c0_i32_0 = arith.constant 0 : i32
    %c0_i32_1 = arith.constant 0 : i32
    return %c0_i32, %c0_i32_0 : i32, i32
  }
  func.func @transform_8(%arg0: i32) -> (i32, i32) {
    %c0_i32 = arith.constant 0 : i32
    %c0_i32_0 = arith.constant 0 : i32
    %c0_i32_1 = arith.constant 0 : i32
    return %c0_i32, %c0_i32_0 : i32, i32
  }
  func.func @transform_9(%arg0: i32) -> (i32, i32, i32) {
    %c0_i32 = arith.constant 0 : i32
    %c0_i32_0 = arith.constant 0 : i32
    %c0_i32_1 = arith.constant 0 : i32
    return %arg0, %c0_i32, %c0_i32_0 : i32, i32, i32
  }
  func.func @transform_10(%arg0: i32) -> (i32, i32, i32) {
    %c0_i32 = arith.constant 0 : i32
    %c0_i32_0 = arith.constant 0 : i32
    %c0_i32_1 = arith.constant 0 : i32
    return %arg0, %c0_i32, %c0_i32_0 : i32, i32, i32
  }
  func.func @transform_11(%arg0: i32) -> (i32, i32, i32) {
    %c0_i32 = arith.constant 0 : i32
    %c0_i32_0 = arith.constant 0 : i32
    %c0_i32_1 = arith.constant 0 : i32
    return %arg0, %c0_i32, %c0_i32_0 : i32, i32, i32
  }
  func.func @transform_12(%arg0: i32) -> (i32, i32, i32) {
    %c0_i32 = arith.constant 0 : i32
    %c0_i32_0 = arith.constant 0 : i32
    %c0_i32_1 = arith.constant 0 : i32
    return %arg0, %c0_i32, %c0_i32_0 : i32, i32, i32
  }
}

</mosaic_0001>

<llo_original>
// kernel: tpu_custom_call.1
$region0: #{tpu_custom_call.1}
  #allocation0 [shape = 'u32[]', space=smem, size = 0x4, offset = 0x4, fixed_abs, tag = 'smem constant byte address 0x4 - core index']
  #allocation1 [shape = 'u32[144,128]{1,0:T(1,128)}', space=vmem, size = 0x12000, scoped, tag = 'internal scratch']
  %s0 = inlined_call_operand.hbm [shape: s32[4,1,8], index: 0, kind: input, shape index: {}]
  %s1 = inlined_call_operand.vmem [shape: s32[4,1,1], index: 1, kind: input, shape index: {}]
  %s2 = inlined_call_operand.vmem [shape: f32[64,32], index: 2, kind: input, shape index: {}]
  %s3 = inlined_call_operand.vmem [shape: f32[32,128], index: 3, kind: input, shape index: {}]
  %s4 = inlined_call_operand.vmem [shape: f32[32,128], index: 4, kind: input, shape index: {}]
  %s5 = inlined_call_operand.vmem [shape: f32[1,128], index: 5, kind: input, shape index: {}]
  %s6 = inlined_call_operand.vmem [shape: f32[32,128], index: 6, kind: input, shape index: {}]
  %s7 = inlined_call_operand.hbm [shape: f32[32,128], index: 7, kind: input, shape index: {}]
  %s8 = inlined_call_operand.vmem [shape: f32[1,128], index: 8, kind: input, shape index: {}]
  %s9 = inlined_call_operand.vmem [shape: f32[4,2,32], index: 9, kind: input, shape index: {}]
  %s10 = inlined_call_operand.vmem [shape: f32[4,2,32], index: 10, kind: input, shape index: {}]
  %s11 = inlined_call_operand.hbm [shape: f32[4,8,64], index: 11, kind: output, shape index: {0}]
  %s12 = inlined_call_operand.hbm [shape: f32[4,1,64], index: 12, kind: output, shape index: {1}]
  %13 = xla_tuple %s11, %s12
  %s14 = sld [smem:[#allocation0]]
  $region93: #{tpu_custom_call.1} parent=0
    _
  %s16 = ssub.s32 1, %s14
  %s17 = scalar_select 0, %s16, %s14
  $region1: #{tpu_custom_call.1} parent=0
    #allocation2 [shape = 'u8[2048]{0}', space=vmem, size = 0x800, scoped, tag = 'input window, operand 0']
    #allocation3 [shape = 's32[2]{0}', space=sflag, size = 0x8, scoped, tag = 'scoped memory for tpu_custom_call.1']
    #allocation4 [shape = 's32[2]{0}', space=sflag, size = 0x8, scoped, tag = 'scoped memory for tpu_custom_call.1']
    #allocation5 [shape = 'u8[16384]{0}', space=vmem, size = 0x4000, scoped, tag = 'input window, operand 7, single buffered']
    #allocation6 [shape = 's32[1]{0}', space=sflag, size = 0x4, scoped, tag = 'scoped memory for tpu_custom_call.1']
    #allocation7 [shape = 'u8[16384]{0}', space=vmem, size = 0x4000, scoped, tag = 'output window, operand 0']
    #allocation8 [shape = 'u8[2048]{0}', space=vmem, size = 0x800, scoped, tag = 'output window, operand 1']
    #allocation9 [shape = 's32[2]{0}', space=sflag, size = 0x8, scoped, tag = 'scoped memory for tpu_custom_call.1']
    %18 = vsyncpa [#allocation3], 0
    %s19 = scalar_lea.sflag [#allocation3], 1
    %20 = vsyncpa %s19, 0
    %21 = vsyncpa [#allocation6], 0
    %22 = vsyncpa [#allocation4], 0
    %s23 = scalar_lea.sflag [#allocation4], 1
    %24 = vsyncpa %s23, 0
    %25 = vsyncpa [#allocation9], 0
    %s26 = scalar_lea.sflag [#allocation9], 1
    %27 = vsyncpa %s26, 0
    loop: start=0, step=1, limit=4
    $region2: #{tpu_custom_call.1} parent=1 // loop_pre_header
      _
    $region3: #{tpu_custom_call.1} parent=1 // loop_header
      %s29 = sphi 0, %s33
      %p30 = scmp.ge.s32.totalorder %s29, 4
      %s39 = sphi 0, %s41
      %s42 = sphi 0, %s39
      %s43 = sphi 0, %s42
      %s59 = sphi 0, %s43
      %s65 = sphi 0, %s67
      %s68 = sphi 0, %s65
      %s69 = sphi 0, %s68
      %s85 = sphi 0, %s69
      %s89 = sphi 0, %s89
      %s91 = sphi 0, %s89
      %s92 = sphi 0, %s91
      %s106 = sphi 0, %s92
      %s110 = sphi 0, %s110
      %s112 = sphi 0, %s110
      %s113 = sphi 0, %s112
      %s127 = sphi 0, %s113
      %s131 = sphi 0, %s131
      %s133 = sphi 0, %s131
      %s134 = sphi 0, %s133
      %s148 = sphi 0, %s134
      %s152 = sphi 0, %s152
      %s154 = sphi 0, %s152
      %s155 = sphi 0, %s154
      %s169 = sphi 0, %s155
      %s173 = sphi 0, %s173
      %s175 = sphi 0, %s173
      %s176 = sphi 0, %s175
      %s190 = sphi 0, %s176
      %s194 = sphi 0, %s194
      %s196 = sphi 0, %s194
      %s197 = sphi 0, %s196
      %s211 = sphi 0, %s197
      %s215 = sphi 0, %s215
      %s217 = sphi 0, %s215
      %s218 = sphi 0, %s217
      %s232 = sphi 0, %s218
      %s238 = sphi 0, %s240
      %s241 = sphi 0, %s238
      %s242 = sphi 0, %s241
      %s258 = sphi 0, %s242
      %s264 = sphi 0, %s266
      %s267 = sphi 0, %s264
      %s268 = sphi 0, %s267
      %s284 = sphi 0, %s268
      %s290 = sphi 0, %s292
      %s293 = sphi 0, %s290
      %s294 = sphi 0, %s293
      %s310 = sphi 0, %s294
      %s316 = sphi 0, %s318
      %s319 = sphi 0, %s316
      %s320 = sphi 0, %s319
      %s336 = sphi 0, %s320
    $region4: #{tpu_custom_call.1} parent=1 // loop_header_branch
      %32 = sbr.rel (%p30) target = $region8
    $region5: #{tpu_custom_call.1} parent=1 // loop_body
      %s34 = ssub.s32 %s29, 1
      %s35 = ssub.s32 %s29, 2
      %s36 = sadd.s32 %s29, 1
      %s37 = ssub.s32 %s29, %s36
      %p38 = scmp.eq.s32.totalorder %s37, 0
      %s40 = sadd.s32 %s39, 1
      %s41 = scalar_select %p38, %s39, %s40
      %p44 = pneg %p38
      %p45 = scmp.eq.s32.totalorder %s29, 1
      %p46 = por %p44, %p45
      %p47 = scmp.ne.s32.totalorder %s39, %s42
      %p48 = scmp.eq.s32.totalorder %s29, 0
      %p49 = por %p47, %p48
      %p50 = scmp.ne.s32.totalorder %s39, %s42
      %p51 = scmp.eq.s32.totalorder %s34, 1
      %p52 = por %p50, %p51
      %p53 = scmp.ne.s32.totalorder %s42, %s43
      %p54 = scmp.eq.s32.totalorder %s34, 0
      %p55 = por %p53, %p54
      %p56 = scmp.ne.s32.totalorder %s42, %s43
      %p57 = scmp.eq.s32.totalorder %s35, 1
      %p58 = por %p56, %p57
      %p60 = scmp.ne.s32.totalorder %s43, %s59
      %p61 = scmp.eq.s32.totalorder %s35, 0
      %p62 = por %p60, %p61
      %s63 = ssub.s32 %s29, %s36
      %p64 = scmp.eq.s32.totalorder %s63, 0
      %s66 = sadd.s32 %s65, 1
      %s67 = scalar_select %p64, %s65, %s66
      %p70 = pneg %p64
      %p71 = scmp.eq.s32.totalorder %s29, 1
      %p72 = por %p70, %p71
      %p73 = scmp.ne.s32.totalorder %s65, %s68
      %p74 = scmp.eq.s32.totalorder %s29, 0
      %p75 = por %p73, %p74
      %p76 = scmp.ne.s32.totalorder %s65, %s68
      %p77 = scmp.eq.s32.totalorder %s34, 1
      %p78 = por %p76, %p77
      %p79 = scmp.ne.s32.totalorder %s68, %s69
      %p80 = scmp.eq.s32.totalorder %s34, 0
      %p81 = por %p79, %p80
      %p82 = scmp.ne.s32.totalorder %s68, %s69
      %p83 = scmp.eq.s32.totalorder %s35, 1
      %p84 = por %p82, %p83
      %p86 = scmp.ne.s32.totalorder %s69, %s85
      %p87 = scmp.eq.s32.totalorder %s35, 0
      %p88 = por %p86, %p87
      %s90 = sadd.s32 %s89, 1
      %p93 = scmp.eq.s32.totalorder %s29, 1
      %p94 = scmp.ne.s32.totalorder %s89, %s91
      %p95 = scmp.eq.s32.totalorder %s29, 0
      %p96 = por %p94, %p95
      %p97 = scmp.ne.s32.totalorder %s89, %s91
      %p98 = scmp.eq.s32.totalorder %s34, 1
      %p99 = por %p97, %p98
      %p100 = scmp.ne.s32.totalorder %s91, %s92
      %p101 = scmp.eq.s32.totalorder %s34, 0
      %p102 = por %p100, %p101
      %p103 = scmp.ne.s32.totalorder %s91, %s92
      %p104 = scmp.eq.s32.totalorder %s35, 1
      %p105 = por %p103, %p104
      %p107 = scmp.ne.s32.totalorder %s92, %s106
      %p108 = scmp.eq.s32.totalorder %s35, 0
      %p109 = por %p107, %p108
      %s111 = sadd.s32 %s110, 1
      %p114 = scmp.eq.s32.totalorder %s29, 1
      %p115 = scmp.ne.s32.totalorder %s110, %s112
      %p116 = scmp.eq.s32.totalorder %s29, 0
      %p117 = por %p115, %p116
      %p118 = scmp.ne.s32.totalorder %s110, %s112
      %p119 = scmp.eq.s32.totalorder %s34, 1
      %p120 = por %p118, %p119
      %p121 = scmp.ne.s32.totalorder %s112, %s113
      %p122 = scmp.eq.s32.totalorder %s34, 0
      %p123 = por %p121, %p122
      %p124 = scmp.ne.s32.totalorder %s112, %s113
      %p125 = scmp.eq.s32.totalorder %s35, 1
      %p126 = por %p124, %p125
      %p128 = scmp.ne.s32.totalorder %s113, %s127
      %p129 = scmp.eq.s32.totalorder %s35, 0
      %p130 = por %p128, %p129
      %s132 = sadd.s32 %s131, 1
      %p135 = scmp.eq.s32.totalorder %s29, 1
      %p136 = scmp.ne.s32.totalorder %s131, %s133
      %p137 = scmp.eq.s32.totalorder %s29, 0
      %p138 = por %p136, %p137
      %p139 = scmp.ne.s32.totalorder %s131, %s133
      %p140 = scmp.eq.s32.totalorder %s34, 1
      %p141 = por %p139, %p140
      %p142 = scmp.ne.s32.totalorder %s133, %s134
      %p143 = scmp.eq.s32.totalorder %s34, 0
      %p144 = por %p142, %p143
      %p145 = scmp.ne.s32.totalorder %s133, %s134
      %p146 = scmp.eq.s32.totalorder %s35, 1
      %p147 = por %p145, %p146
      %p149 = scmp.ne.s32.totalorder %s134, %s148
      %p150 = scmp.eq.s32.totalorder %s35, 0
      %p151 = por %p149, %p150
      %s153 = sadd.s32 %s152, 1
      %p156 = scmp.eq.s32.totalorder %s29, 1
      %p157 = scmp.ne.s32.totalorder %s152, %s154
      %p158 = scmp.eq.s32.totalorder %s29, 0
      %p159 = por %p157, %p158
      %p160 = scmp.ne.s32.totalorder %s152, %s154
      %p161 = scmp.eq.s32.totalorder %s34, 1
      %p162 = por %p160, %p161
      %p163 = scmp.ne.s32.totalorder %s154, %s155
      %p164 = scmp.eq.s32.totalorder %s34, 0
      %p165 = por %p163, %p164
      %p166 = scmp.ne.s32.totalorder %s154, %s155
      %p167 = scmp.eq.s32.totalorder %s35, 1
      %p168 = por %p166, %p167
      %p170 = scmp.ne.s32.totalorder %s155, %s169
      %p171 = scmp.eq.s32.totalorder %s35, 0
      %p172 = por %p170, %p171
      %s174 = sadd.s32 %s173, 1
      %p177 = scmp.eq.s32.totalorder %s29, 1
      %p178 = scmp.ne.s32.totalorder %s173, %s175
      %p179 = scmp.eq.s32.totalorder %s29, 0
      %p180 = por %p178, %p179
      %p181 = scmp.ne.s32.totalorder %s173, %s175
      %p182 = scmp.eq.s32.totalorder %s34, 1
      %p183 = por %p181, %p182
      %p184 = scmp.ne.s32.totalorder %s175, %s176
      %p185 = scmp.eq.s32.totalorder %s34, 0
      %p186 = por %p184, %p185
      %p187 = scmp.ne.s32.totalorder %s175, %s176
      %p188 = scmp.eq.s32.totalorder %s35, 1
      %p189 = por %p187, %p188
      %p191 = scmp.ne.s32.totalorder %s176, %s190
      %p192 = scmp.eq.s32.totalorder %s35, 0
      %p193 = por %p191, %p192
      %s195 = sadd.s32 %s194, 1
      %p198 = scmp.eq.s32.totalorder %s29, 1
      %p199 = scmp.ne.s32.totalorder %s194, %s196
      %p200 = scmp.eq.s32.totalorder %s29, 0
      %p201 = por %p199, %p200
      %p202 = scmp.ne.s32.totalorder %s194, %s196
      %p203 = scmp.eq.s32.totalorder %s34, 1
      %p204 = por %p202, %p203
      %p205 = scmp.ne.s32.totalorder %s196, %s197
      %p206 = scmp.eq.s32.totalorder %s34, 0
      %p207 = por %p205, %p206
      %p208 = scmp.ne.s32.totalorder %s196, %s197
      %p209 = scmp.eq.s32.totalorder %s35, 1
      %p210 = por %p208, %p209
      %p212 = scmp.ne.s32.totalorder %s197, %s211
      %p213 = scmp.eq.s32.totalorder %s35, 0
      %p214 = por %p212, %p213
      %s216 = sadd.s32 %s215, 1
      %p219 = scmp.eq.s32.totalorder %s29, 1
      %p220 = scmp.ne.s32.totalorder %s215, %s217
      %p221 = scmp.eq.s32.totalorder %s29, 0
      %p222 = por %p220, %p221
      %p223 = scmp.ne.s32.totalorder %s215, %s217
      %p224 = scmp.eq.s32.totalorder %s34, 1
      %p225 = por %p223, %p224
      %p226 = scmp.ne.s32.totalorder %s217, %s218
      %p227 = scmp.eq.s32.totalorder %s34, 0
      %p228 = por %p226, %p227
      %p229 = scmp.ne.s32.totalorder %s217, %s218
      %p230 = scmp.eq.s32.totalorder %s35, 1
      %p231 = por %p229, %p230
      %p233 = scmp.ne.s32.totalorder %s218, %s232
      %p234 = scmp.eq.s32.totalorder %s35, 0
      %p235 = por %p233, %p234
      %s236 = ssub.s32 %s29, %s36
      %p237 = scmp.eq.s32.totalorder %s236, 0
      %s239 = sadd.s32 %s238, 1
      %s240 = scalar_select %p237, %s238, %s239
      %p243 = pneg %p237
      %p244 = scmp.eq.s32.totalorder %s29, 1
      %p245 = por %p243, %p244
      %p246 = scmp.ne.s32.totalorder %s238, %s241
      %p247 = scmp.eq.s32.totalorder %s29, 0
      %p248 = por %p246, %p247
      %p249 = scmp.ne.s32.totalorder %s238, %s241
      %p250 = scmp.eq.s32.totalorder %s34, 1
      %p251 = por %p249, %p250
      %p252 = scmp.ne.s32.totalorder %s241, %s242
      %p253 = scmp.eq.s32.totalorder %s34, 0
      %p254 = por %p252, %p253
      %p255 = scmp.ne.s32.totalorder %s241, %s242
      %p256 = scmp.eq.s32.totalorder %s35, 1
      %p257 = por %p255, %p256
      %p259 = scmp.ne.s32.totalorder %s242, %s258
      %p260 = scmp.eq.s32.totalorder %s35, 0
      %p261 = por %p259, %p260
      %s262 = ssub.s32 %s29, %s36
      %p263 = scmp.eq.s32.totalorder %s262, 0
      %s265 = sadd.s32 %s264, 1
      %s266 = scalar_select %p263, %s264, %s265
      %p269 = pneg %p263
      %p270 = scmp.eq.s32.totalorder %s29, 1
      %p271 = por %p269, %p270
      %p272 = scmp.ne.s32.totalorder %s264, %s267
      %p273 = scmp.eq.s32.totalorder %s29, 0
      %p274 = por %p272, %p273
      %p275 = scmp.ne.s32.totalorder %s264, %s267
      %p276 = scmp.eq.s32.totalorder %s34, 1
      %p277 = por %p275, %p276
      %p278 = scmp.ne.s32.totalorder %s267, %s268
      %p279 = scmp.eq.s32.totalorder %s34, 0
      %p280 = por %p278, %p279
      %p281 = scmp.ne.s32.totalorder %s267, %s268
      %p282 = scmp.eq.s32.totalorder %s35, 1
      %p283 = por %p281, %p282
      %p285 = scmp.ne.s32.totalorder %s268, %s284
      %p286 = scmp.eq.s32.totalorder %s35, 0
      %p287 = por %p285, %p286
      %s288 = ssub.s32 %s29, %s36
      %p289 = scmp.eq.s32.totalorder %s288, 0
      %s291 = sadd.s32 %s290, 1
      %s292 = scalar_select %p289, %s290, %s291
      %p295 = pneg %p289
      %p296 = scmp.eq.s32.totalorder %s29, 1
      %p297 = por %p295, %p296
      %p298 = scmp.ne.s32.totalorder %s290, %s293
      %p299 = scmp.eq.s32.totalorder %s29, 0
      %p300 = por %p298, %p299
      %p301 = scmp.ne.s32.totalorder %s290, %s293
      %p302 = scmp.eq.s32.totalorder %s34, 1
      %p303 = por %p301, %p302
      %p304 = scmp.ne.s32.totalorder %s293, %s294
      %p305 = scmp.eq.s32.totalorder %s34, 0
      %p306 = por %p304, %p305
      %p307 = scmp.ne.s32.totalorder %s293, %s294
      %p308 = scmp.eq.s32.totalorder %s35, 1
      %p309 = por %p307, %p308
      %p311 = scmp.ne.s32.totalorder %s294, %s310
      %p312 = scmp.eq.s32.totalorder %s35, 0
      %p313 = por %p311, %p312
      %s314 = ssub.s32 %s29, %s36
      %p315 = scmp.eq.s32.totalorder %s314, 0
      %s317 = sadd.s32 %s316, 1
      %s318 = scalar_select %p315, %s316, %s317
      %p321 = pneg %p315
      %p322 = scmp.eq.s32.totalorder %s29, 1
      %p323 = por %p321, %p322
      %p324 = scmp.ne.s32.totalorder %s316, %s319
      %p325 = scmp.eq.s32.totalorder %s29, 0
      %p326 = por %p324, %p325
      %p327 = scmp.ne.s32.totalorder %s316, %s319
      %p328 = scmp.eq.s32.totalorder %s34, 1
      %p329 = por %p327, %p328
      %p330 = scmp.ne.s32.totalorder %s319, %s320
      %p331 = scmp.eq.s32.totalorder %s34, 0
      %p332 = por %p330, %p331
      %p333 = scmp.ne.s32.totalorder %s319, %s320
      %p334 = scmp.eq.s32.totalorder %s35, 1
      %p335 = por %p333, %p334
      %p337 = scmp.ne.s32.totalorder %s320, %s336
      %p338 = scmp.eq.s32.totalorder %s35, 0
      %p339 = por %p337, %p338
      %p340 = scmp.le.s32.totalorder 1, %s29
      %p341 = scmp.lt.s32.totalorder %s29, 3
      %p342 = pnand %p340, %p341
      %p343 = pneg %p342
      // Predicated region
      $region9: #{tpu_custom_call.1} parent=5 // pred_check
        _
      $region10: #{tpu_custom_call.1} parent=5 // pred_check_branch
        %345 = sbr.rel (%p342) target = $region12
      $region11: #{tpu_custom_call.1} parent=5 // pred_region
        %s346 = ssub.s32 %s29, 1
        // Predicated region
        $region13: #{tpu_custom_call.1} parent=11 // pred_check
          %p347 = pneg %p102
        $region14: #{tpu_custom_call.1} parent=11 // pred_check_branch
          %349 = sbr.rel (%p347) target = $region16
        $region15: #{tpu_custom_call.1} parent=11 // pred_region
          _
        $region16: #{tpu_custom_call.1} parent=11 // pred_fallthru
          _
        // Predicated region
        $region17: #{tpu_custom_call.1} parent=11 // pred_check
          %p350 = pneg %p123
        $region18: #{tpu_custom_call.1} parent=11 // pred_check_branch
          %352 = sbr.rel (%p350) target = $region20
        $region19: #{tpu_custom_call.1} parent=11 // pred_region
          _
        $region20: #{tpu_custom_call.1} parent=11 // pred_fallthru
          _
        // Predicated region
        $region21: #{tpu_custom_call.1} parent=11 // pred_check
          %p353 = pneg %p144
        $region22: #{tpu_custom_call.1} parent=11 // pred_check_branch
          %355 = sbr.rel (%p353) target = $region24
        $region23: #{tpu_custom_call.1} parent=11 // pred_region
          _
        $region24: #{tpu_custom_call.1} parent=11 // pred_fallthru
          _
        // Predicated region
        $region25: #{tpu_custom_call.1} parent=11 // pred_check
          %p356 = pneg %p165
        $region26: #{tpu_custom_call.1} parent=11 // pred_check_branch
          %358 = sbr.rel (%p356) target = $region28
        $region27: #{tpu_custom_call.1} parent=11 // pred_region
          _
        $region28: #{tpu_custom_call.1} parent=11 // pred_fallthru
          _
        // Predicated region
        $region29: #{tpu_custom_call.1} parent=11 // pred_check
          %p359 = pneg %p186
        $region30: #{tpu_custom_call.1} parent=11 // pred_check_branch
          %361 = sbr.rel (%p359) target = $region32
        $region31: #{tpu_custom_call.1} parent=11 // pred_region
          _
        $region32: #{tpu_custom_call.1} parent=11 // pred_fallthru
          _
        // Predicated region
        $region33: #{tpu_custom_call.1} parent=11 // pred_check
          %p362 = pneg %p207
        $region34: #{tpu_custom_call.1} parent=11 // pred_check_branch
          %364 = sbr.rel (%p362) target = $region36
        $region35: #{tpu_custom_call.1} parent=11 // pred_region
          %s366 = ssub.s32 512, 512
          %367 = vsyncadd [#allocation6], %s366
          %s368 = sshll.u32 [#allocation5], 4
          %s369 = int_to_ptr.vmem [resolvable:$true] %s368
          %374 = dma.hbm_to_vmem [thread:$0]  %s7, 512, %s369, [#allocation6], 128, 128, 8
        $region36: #{tpu_custom_call.1} parent=11 // pred_fallthru
          _
        // Predicated region
        $region37: #{tpu_custom_call.1} parent=11 // pred_check
          %p375 = pneg %p228
        $region38: #{tpu_custom_call.1} parent=11 // pred_check_branch
          %377 = sbr.rel (%p375) target = $region40
        $region39: #{tpu_custom_call.1} parent=11 // pred_region
          _
        $region40: #{tpu_custom_call.1} parent=11 // pred_fallthru
          _
      $region12: #{tpu_custom_call.1} parent=5 // pred_fallthru
        _
      %p378 = scmp.lt.s32.totalorder %s29, 2
      // Predicated region
      $region41: #{tpu_custom_call.1} parent=5 // pred_check
        %p379 = pneg %p378
      $region42: #{tpu_custom_call.1} parent=5 // pred_check_branch
        %381 = sbr.rel (%p379) target = $region44
      $region43: #{tpu_custom_call.1} parent=5 // pred_region
        // Predicated region
        $region45: #{tpu_custom_call.1} parent=43 // pred_check
          %p382 = pneg %p49
        $region46: #{tpu_custom_call.1} parent=43 // pred_check_branch
          %384 = sbr.rel (%p382) target = $region48
        $region47: #{tpu_custom_call.1} parent=43 // pred_region
          %s385 = sand.u32 %s39, 1
          %s386 = scalar_lea.sflag [#allocation3], %s385
          %s387 = sand.u32 %s39, 1
          %s388 = smul.addr %s387, 2
          %s389 = scalar_lea.vmem [#allocation2], %s388
          %s390 = smul.u32 2, %s29
          %s392 = ssub.s32 32, 32
          %393 = vsyncadd %s386, %s392
          %s394 = smul.addr %s390, 16
          %s395 = scalar_lea.hbm %s0, %s394
          %s396 = sshll.u32 %s389, 4
          %s397 = int_to_ptr.vmem [resolvable:$true] %s396
          %402 = dma.hbm_to_vmem [thread:$0]  %s395, 32, %s397, %s386, 16, 16, 1
        $region48: #{tpu_custom_call.1} parent=43 // pred_fallthru
          _
        // Predicated region
        $region49: #{tpu_custom_call.1} parent=43 // pred_check
          %p403 = pneg %p75
        $region50: #{tpu_custom_call.1} parent=43 // pred_check_branch
          %405 = sbr.rel (%p403) target = $region52
        $region51: #{tpu_custom_call.1} parent=43 // pred_region
          %s406 = smul.u32 2, %s29
          %p407 = scmp.lt.s32.totalorder %s406, 3
          %s408 = scalar_select %p407, %s406, 3
          %s409 = scalar_lea.vmem %s1, %s408
          %s410 = smul.u32 2, %s29
        $region52: #{tpu_custom_call.1} parent=43 // pred_fallthru
          _
        // Predicated region
        $region53: #{tpu_custom_call.1} parent=43 // pred_check
          %p411 = pneg %p248
        $region54: #{tpu_custom_call.1} parent=43 // pred_check_branch
          %413 = sbr.rel (%p411) target = $region56
        $region55: #{tpu_custom_call.1} parent=43 // pred_region
          %s414 = smul.u32 2, %s29
          %p415 = scmp.lt.s32.totalorder %s414, 3
          %s416 = scalar_select %p415, %s414, 3
          %s417 = smul.addr %s416, 2
          %s418 = scalar_lea.vmem %s9, %s417
          %s419 = smul.u32 2, %s29
        $region56: #{tpu_custom_call.1} parent=43 // pred_fallthru
          _
        // Predicated region
        $region57: #{tpu_custom_call.1} parent=43 // pred_check
          %p420 = pneg %p274
        $region58: #{tpu_custom_call.1} parent=43 // pred_check_branch
          %422 = sbr.rel (%p420) target = $region60
        $region59: #{tpu_custom_call.1} parent=43 // pred_region
          %s423 = smul.u32 2, %s29
          %p424 = scmp.lt.s32.totalorder %s423, 3
          %s425 = scalar_select %p424, %s423, 3
          %s426 = smul.addr %s425, 2
          %s427 = scalar_lea.vmem %s10, %s426
          %s428 = smul.u32 2, %s29
        $region60: #{tpu_custom_call.1} parent=43 // pred_fallthru
          _
      $region44: #{tpu_custom_call.1} parent=5 // pred_fallthru
        _
      %p429 = scmp.le.s32.totalorder 1, %s29
      %p430 = scmp.lt.s32.totalorder %s29, 3
      %p431 = pnand %p429, %p430
      %p432 = pneg %p431
      // Predicated region
      $region61: #{tpu_custom_call.1} parent=5 // pred_check
        _
      $region62: #{tpu_custom_call.1} parent=5 // pred_check_branch
        %434 = sbr.rel (%p431) target = $region64
      $region63: #{tpu_custom_call.1} parent=5 // pred_region
        %s435 = ssub.s32 %s29, 1
        %s436 = sand.u32 %s42, 1
        %s437 = scalar_lea.sflag [#allocation3], %s436
        %s438 = sand.u32 %s42, 1
        %s439 = smul.addr %s438, 2
        %s440 = scalar_lea.vmem [#allocation2], %s439
        // Predicated region
        $region65: #{tpu_custom_call.1} parent=63 // pred_check
          %p441 = pneg %p55
        $region66: #{tpu_custom_call.1} parent=63 // pred_check_branch
          %443 = sbr.rel (%p441) target = $region68
        $region67: #{tpu_custom_call.1} parent=63 // pred_region
          %444 = dma.done %s437, 32
        $region68: #{tpu_custom_call.1} parent=63 // pred_fallthru
          _
        // Predicated region
        $region69: #{tpu_custom_call.1} parent=63 // pred_check
          %p445 = pneg %p207
        $region70: #{tpu_custom_call.1} parent=63 // pred_check_branch
          %447 = sbr.rel (%p445) target = $region72
        $region71: #{tpu_custom_call.1} parent=63 // pred_region
          %448 = dma.done [#allocation6], 512
        $region72: #{tpu_custom_call.1} parent=63 // pred_fallthru
          _
        %s449 = sand.u32 %s42, 1
        %s450 = scalar_lea.sflag [#allocation3], %s449
        %s451 = sand.u32 %s42, 1
        %s452 = smul.addr %s451, 2
        %s453 = scalar_lea.vmem [#allocation2], %s452
        %p454 = pneg %p55
        %p455 = pneg %p52
        %s456 = smul.u32 2, %s34
        %p457 = scmp.lt.s32.totalorder %s456, 3
        %s458 = scalar_select %p457, %s456, 3
        %s459 = scalar_lea.vmem %s1, %s458
        %p460 = pneg %p81
        %p461 = pneg %p78
        %p462 = pneg %p102
        %p463 = pneg %p99
        %p464 = pneg %p123
        %p465 = pneg %p120
        %p466 = pneg %p144
        %p467 = pneg %p141
        %p468 = pneg %p165
        %p469 = pneg %p162
        %p470 = pneg %p186
        %p471 = pneg %p183
        %p472 = pneg %p207
        %p473 = pneg %p204
        %p474 = pneg %p228
        %p475 = pneg %p225
        %s476 = smul.u32 2, %s34
        %p477 = scmp.lt.s32.totalorder %s476, 3
        %s478 = scalar_select %p477, %s476, 3
        %s479 = smul.addr %s478, 2
        %s480 = scalar_lea.vmem %s9, %s479
        %p481 = pneg %p254
        %p482 = pneg %p251
        %s483 = smul.u32 2, %s34
        %p484 = scmp.lt.s32.totalorder %s483, 3
        %s485 = scalar_select %p484, %s483, 3
        %s486 = smul.addr %s485, 2
        %s487 = scalar_lea.vmem %s10, %s486
        %p488 = pneg %p280
        %p489 = pneg %p277
        %p490 = pneg %p306
        %p491 = pneg %p303
        %s492 = sand.u32 %s293, 1
        %s493 = scalar_lea.sflag [#allocation4], %s492
        %s494 = sand.u32 %s293, 1
        %s495 = smul.addr %s494, 16
        %s496 = scalar_lea.vmem [#allocation7], %s495
        %p497 = pneg %p332
        %p498 = pneg %p329
        %s499 = sand.u32 %s319, 1
        %s500 = scalar_lea.sflag [#allocation9], %s499
        %s501 = sand.u32 %s319, 1
        %s502 = smul.addr %s501, 2
        %s503 = scalar_lea.vmem [#allocation8], %s502
        %s504 = smul.u32 2, %s34
        %s505 = smul.u32 2, %s34
        %p506 = scmp.lt.s32.totalorder %s505, 3
        %s507 = scalar_select %p506, %s505, 3
        %s508 = scalar_lea.vmem %s1, %s507
        %s509 = smul.u32 2, %s34
        %s510 = smul.u32 2, %s34
        %p511 = scmp.lt.s32.totalorder %s510, 3
        %s512 = scalar_select %p511, %s510, 3
        %s513 = smul.addr %s512, 2
        %s514 = scalar_lea.vmem %s9, %s513
        %s515 = smul.u32 2, %s34
        %s516 = smul.u32 2, %s34
        %p517 = scmp.lt.s32.totalorder %s516, 3
        %s518 = scalar_select %p517, %s516, 3
        %s519 = smul.addr %s518, 2
        %s520 = scalar_lea.vmem %s10, %s519
        %s521 = smul.u32 2, %s34
        %s522 = smul.u32 2, %s34
        %s523 = smul.u32 2, %s34
        %v524 = vld [vmem:[%s440] sm:$0x1]
        %v525 = vld [vmem:[%s440 + $0x1] sm:$0x1]
        %v526 = vld [vmem:[%s508] sm:$0x1]
        %v527 = vld [vmem:[%s508 + $0x1] sm:$0x1]
        %v528 = vlaneseq
        %v529 = vand.u32 %v528, 127
        %v530 = vld [vmem:[%s2] sm:$0xff]
        %v531 = vld [vmem:[%s2 + $0x8] sm:$0xff]
        %v532 = vld [vmem:[%s2 + $0x10] sm:$0xff]
        %v533 = vld [vmem:[%s2 + $0x18] sm:$0xff]
        %v534 = vld [vmem:[%s2 + $0x20] sm:$0xff]
        %v535 = vld [vmem:[%s2 + $0x28] sm:$0xff]
        %v536 = vld [vmem:[%s2 + $0x30] sm:$0xff]
        %v537 = vld [vmem:[%s2 + $0x38] sm:$0xff]
        %538 = vset.pattern.permute.xlu0 0
        %539 = vperm.xlu0 %538, %v524
        %v540 = vpop.permute.xlu0 %539
        %v541 = vlaneseq
        %v542 = vshrl.u32 %v541, 7
        %v543 = vsub.s32 0, %v542
        %v544 = vrot.slane %v540, %v543
        %545 = vset.pattern.permute.xlu0 0
        %546 = vperm.xlu0 %545, %v525
        %v547 = vpop.permute.xlu0 %546
        %v548 = vlaneseq
        %v549 = vshrl.u32 %v548, 7
        %v550 = vsub.s32 0, %v549
        %v551 = vrot.slane %v547, %v550
        %v553 = vunpack.c.l.s4 1966171168
        %v554 = vunpack.c.0.s8 %v553
        %v555 = vlaneseq
        %v556 = vshrl.u32 %v555, 7
        %v557 = vsub.s32 %v554, %v556
        %v558 = vrot.slane %v529, %v557
        %v559 = vcombine.high %v558, %v558
        %v561 = vunpack.c.l.s4 1966171168
        %v562 = vunpack.c.0.s8 %v561
        %v563 = vlaneseq
        %v564 = vshrl.u32 %v563, 7
        %v565 = vsub.s32 %v562, %v564
        %v566 = vrot.slane %v558, %v565
        %v568 = vunpack.c.l.s4 1966171168
        %v569 = vunpack.c.0.s8 %v568
        %v570 = vlaneseq
        %v571 = vshrl.u32 %v570, 7
        %v572 = vsub.s32 %v569, %v571
        %v573 = vrot.slane %v559, %v572
        %vm574 = vcmp.eq.s32.totalorder %v544, %v566
        %vm575 = vcmp.eq.s32.totalorder %v551, %v573
        %v576 = vsel %vm574, 1, 0
        %v577 = vsel %vm575, 1, 0
        %v578 = vcvt.s32.f32 %v576
        %v579 = vcvt.s32.f32 %v577
        %v582 = vcombine.low %v578, %v579
        %v584 = vunpack.c.l.s4 1966171168
        %v585 = vunpack.c.0.s8 %v584
        %v586 = vlaneseq
        %v587 = vshrl.u32 %v586, 7
        %v588 = vsub.s32 %v585, %v587
        %v589 = vrot.slane %v582, %v588
        %v591 = vunpack.c.l.s4 1966171168
        %v592 = vunpack.c.0.s8 %v591
        %v593 = vlaneseq
        %v594 = vshrl.u32 %v593, 7
        %v595 = vsub.s32 %v592, %v594
        %v596 = vrot.slane %v589, %v595
        %vm597 = vcmask 523264
        %v598 = vsel %vm597, %v596, 0
        %600 = vmatprep.subr.mxu0 0.0
        %601 = vmatpush1.msra.mxu0 %v530
        %602 = vmatprep.subr.mxu0 0.0
        %603 = vmatpush1.msra.mxu0 %v531
        %604 = vmatprep.subr.mxu0 0.0
        %605 = vmatpush1.msra.mxu0 %v532
        %606 = vmatprep.subr.mxu0 0.0
        %607 = vmatpush1.msra.mxu0 %v533
        %608 = vmatprep.subr.mxu0 0.0
        %609 = vmatpush1.msra.mxu0 %v534
        %610 = vmatprep.subr.mxu0 0.0
        %611 = vmatpush1.msra.mxu0 %v535
        %612 = vmatprep.subr.mxu0 0.0
        %613 = vmatpush1.msra.mxu0 %v536
        %614 = vmatprep.subr.mxu0 0.0
        %615 = vmatpush1.msra.mxu0 %v537
        %616 = vmatprep.subr.mxu0 0.0
        %617 = vmatpush1.msra.mxu0 0.0
        %618 = vmatprep.subr.mxu0 0.0
        %619 = vmatpush1.msra.mxu0 0.0
        %620 = vmatprep.subr.mxu0 0.0
        %621 = vmatpush1.msra.mxu0 0.0
        %622 = vmatprep.subr.mxu0 0.0
        %623 = vmatpush1.msra.mxu0 0.0
        %624 = vmatprep.subr.mxu0 0.0
        %625 = vmatpush1.msra.mxu0 0.0
        %626 = vmatprep.subr.mxu0 0.0
        %627 = vmatpush1.msra.mxu0 0.0
        %628 = vmatprep.subr.mxu0 0.0
        %629 = vmatpush1.msra.mxu0 0.0
        %630 = vmatprep.subr.mxu0 0.0
        %631 = vmatpush1.msra.mxu0 0.0
        %632 = vmatprep.subr.mxu0 0.0
        %633 = vmatpush1.msra.mxu0 0.0
        %634 = vmatprep.subr.mxu0 0.0
        %635 = vmatpush1.msra.mxu0 0.0
        %636 = vmatprep.subr.mxu0 0.0
        %637 = vmatpush1.msra.mxu0 0.0
        %638 = vmatprep.subr.mxu0 0.0
        %639 = vmatpush1.msra.mxu0 0.0
        %640 = vmatprep.subr.mxu0 0.0
        %641 = vmatpush1.msra.mxu0 0.0
        %642 = vmatprep.subr.mxu0 0.0
        %643 = vmatpush1.msra.mxu0 0.0
        %644 = vmatprep.subr.mxu0 0.0
        %645 = vmatpush1.msra.mxu0 0.0
        %646 = vmatprep.subr.mxu0 0.0
        %647 = vmatpush1.msra.mxu0 0.0
        %648 = vmatprep.subr.mxu0 0.0
        %649 = vmatpush1.msra.mxu0 0.0
        %650 = vmatprep.subr.mxu0 0.0
        %651 = vmatpush1.msra.mxu0 0.0
        %652 = vmatprep.subr.mxu0 0.0
        %653 = vmatpush1.msra.mxu0 0.0
        %654 = vmatprep.subr.mxu0 0.0
        %655 = vmatpush1.msra.mxu0 0.0
        %656 = vmatprep.subr.mxu0 0.0
        %657 = vmatpush1.msra.mxu0 0.0
        %658 = vmatprep.subr.mxu0 0.0
        %659 = vmatpush1.msra.mxu0 0.0
        %660 = vmatprep.subr.mxu0 0.0
        %661 = vmatpush1.msra.mxu0 0.0
        %662 = vmatprep.subr.mxu0 0.0
        %663 = vmatpush1.msra.mxu0 0.0
        %664 = vmatprep.mubr.f32.mxu0 0.0
        %665 = vmatmul.mubr.f32.gmra.mrb[0].mxu0 %v598
        %v666 = vpop.f32.mrb[0].mxu0
        %v667 = vadd.f32 0.0, %v666
        %v668 = vpop.f32.mrb[0].mxu0
        %669 = vdwg.mxu0
        %670 = vset.pattern.permute.xlu0 1
        %671 = vperm.xlu0 %670, %v524
        %v672 = vpop.permute.xlu0 %671
        %v673 = vlaneseq
        %v674 = vshrl.u32 %v673, 7
        %v675 = vsub.s32 0, %v674
        %v676 = vrot.slane %v672, %v675
        %677 = vset.pattern.permute.xlu0 1
        %678 = vperm.xlu0 %677, %v525
        %v679 = vpop.permute.xlu0 %678
        %v680 = vlaneseq
        %v681 = vshrl.u32 %v680, 7
        %v682 = vsub.s32 0, %v681
        %v683 = vrot.slane %v679, %v682
        %vm684 = vcmp.eq.s32.totalorder %v676, %v566
        %vm685 = vcmp.eq.s32.totalorder %v683, %v573
        %v686 = vsel %vm684, 1, 0
        %v687 = vsel %vm685, 1, 0
        %v688 = vcvt.s32.f32 %v686
        %v689 = vcvt.s32.f32 %v687
        %v692 = vcombine.low %v688, %v689
        %v694 = vunpack.c.l.s4 1966171168
        %v695 = vunpack.c.0.s8 %v694
        %v696 = vlaneseq
        %v697 = vshrl.u32 %v696, 7
        %v698 = vsub.s32 %v695, %v697
        %v699 = vrot.slane %v692, %v698
        %v701 = vunpack.c.l.s4 1966171168
        %v702 = vunpack.c.0.s8 %v701
        %v703 = vlaneseq
        %v704 = vshrl.u32 %v703, 7
        %v705 = vsub.s32 %v702, %v704
        %v706 = vrot.slane %v699, %v705
        %v707 = vsel %vm597, %v706, 0
        %709 = vmatprep.subr.mxu0 0.0
        %710 = vmatpush1.msra.mxu0 %v530
        %711 = vmatprep.subr.mxu0 0.0
        %712 = vmatpush1.msra.mxu0 %v531
        %713 = vmatprep.subr.mxu0 0.0
        %714 = vmatpush1.msra.mxu0 %v532
        %715 = vmatprep.subr.mxu0 0.0
        %716 = vmatpush1.msra.mxu0 %v533
        %717 = vmatprep.subr.mxu0 0.0
        %718 = vmatpush1.msra.mxu0 %v534
        %719 = vmatprep.subr.mxu0 0.0
        %720 = vmatpush1.msra.mxu0 %v535
        %721 = vmatprep.subr.mxu0 0.0
        %722 = vmatpush1.msra.mxu0 %v536
        %723 = vmatprep.subr.mxu0 0.0
        %724 = vmatpush1.msra.mxu0 %v537
        %725 = vmatprep.subr.mxu0 0.0
        %726 = vmatpush1.msra.mxu0 0.0
        %727 = vmatprep.subr.mxu0 0.0
        %728 = vmatpush1.msra.mxu0 0.0
        %729 = vmatprep.subr.mxu0 0.0
        %730 = vmatpush1.msra.mxu0 0.0
        %731 = vmatprep.subr.mxu0 0.0
        %732 = vmatpush1.msra.mxu0 0.0
        %733 = vmatprep.subr.mxu0 0.0
        %734 = vmatpush1.msra.mxu0 0.0
        %735 = vmatprep.subr.mxu0 0.0
        %736 = vmatpush1.msra.mxu0 0.0
        %737 = vmatprep.subr.mxu0 0.0
        %738 = vmatpush1.msra.mxu0 0.0
        %739 = vmatprep.subr.mxu0 0.0
        %740 = vmatpush1.msra.mxu0 0.0
        %741 = vmatprep.subr.mxu0 0.0
        %742 = vmatpush1.msra.mxu0 0.0
        %743 = vmatprep.subr.mxu0 0.0
        %744 = vmatpush1.msra.mxu0 0.0
        %745 = vmatprep.subr.mxu0 0.0
        %746 = vmatpush1.msra.mxu0 0.0
        %747 = vmatprep.subr.mxu0 0.0
        %748 = vmatpush1.msra.mxu0 0.0
        %749 = vmatprep.subr.mxu0 0.0
        %750 = vmatpush1.msra.mxu0 0.0
        %751 = vmatprep.subr.mxu0 0.0
        %752 = vmatpush1.msra.mxu0 0.0
        %753 = vmatprep.subr.mxu0 0.0
        %754 = vmatpush1.msra.mxu0 0.0
        %755 = vmatprep.subr.mxu0 0.0
        %756 = vmatpush1.msra.mxu0 0.0
        %757 = vmatprep.subr.mxu0 0.0
        %758 = vmatpush1.msra.mxu0 0.0
        %759 = vmatprep.subr.mxu0 0.0
        %760 = vmatpush1.msra.mxu0 0.0
        %761 = vmatprep.subr.mxu0 0.0
        %762 = vmatpush1.msra.mxu0 0.0
        %763 = vmatprep.subr.mxu0 0.0
        %764 = vmatpush1.msra.mxu0 0.0
        %765 = vmatprep.subr.mxu0 0.0
        %766 = vmatpush1.msra.mxu0 0.0
        %767 = vmatprep.subr.mxu0 0.0
        %768 = vmatpush1.msra.mxu0 0.0
        %769 = vmatprep.subr.mxu0 0.0
        %770 = vmatpush1.msra.mxu0 0.0
        %771 = vmatprep.subr.mxu0 0.0
        %772 = vmatpush1.msra.mxu0 0.0
        %773 = vmatprep.mubr.f32.mxu0 0.0
        %774 = vmatmul.mubr.f32.gmra.mrb[0].mxu0 %v707
        %v775 = vpop.f32.mrb[0].mxu0
        %v776 = vadd.f32 0.0, %v775
        %v777 = vpop.f32.mrb[0].mxu0
        %778 = vdwg.mxu0
        %779 = vset.pattern.permute.xlu0 2
        %780 = vperm.xlu0 %779, %v524
        %v781 = vpop.permute.xlu0 %780
        %v782 = vlaneseq
        %v783 = vshrl.u32 %v782, 7
        %v784 = vsub.s32 0, %v783
        %v785 = vrot.slane %v781, %v784
        %786 = vset.pattern.permute.xlu0 2
        %787 = vperm.xlu0 %786, %v525
        %v788 = vpop.permute.xlu0 %787
        %v789 = vlaneseq
        %v790 = vshrl.u32 %v789, 7
        %v791 = vsub.s32 0, %v790
        %v792 = vrot.slane %v788, %v791
        %vm793 = vcmp.eq.s32.totalorder %v785, %v566
        %vm794 = vcmp.eq.s32.totalorder %v792, %v573
        %v795 = vsel %vm793, 1, 0
        %v796 = vsel %vm794, 1, 0
        %v797 = vcvt.s32.f32 %v795
        %v798 = vcvt.s32.f32 %v796
        %v801 = vcombine.low %v797, %v798
        %v803 = vunpack.c.l.s4 1966171168
        %v804 = vunpack.c.0.s8 %v803
        %v805 = vlaneseq
        %v806 = vshrl.u32 %v805, 7
        %v807 = vsub.s32 %v804, %v806
        %v808 = vrot.slane %v801, %v807
        %v810 = vunpack.c.l.s4 1966171168
        %v811 = vunpack.c.0.s8 %v810
        %v812 = vlaneseq
        %v813 = vshrl.u32 %v812, 7
        %v814 = vsub.s32 %v811, %v813
        %v815 = vrot.slane %v808, %v814
        %v816 = vsel %vm597, %v815, 0
        %818 = vmatprep.subr.mxu0 0.0
        %819 = vmatpush1.msra.mxu0 %v530
        %820 = vmatprep.subr.mxu0 0.0
        %821 = vmatpush1.msra.mxu0 %v531
        %822 = vmatprep.subr.mxu0 0.0
        %823 = vmatpush1.msra.mxu0 %v532
        %824 = vmatprep.subr.mxu0 0.0
        %825 = vmatpush1.msra.mxu0 %v533
        %826 = vmatprep.subr.mxu0 0.0
        %827 = vmatpush1.msra.mxu0 %v534
        %828 = vmatprep.subr.mxu0 0.0
        %829 = vmatpush1.msra.mxu0 %v535
        %830 = vmatprep.subr.mxu0 0.0
        %831 = vmatpush1.msra.mxu0 %v536
        %832 = vmatprep.subr.mxu0 0.0
        %833 = vmatpush1.msra.mxu0 %v537
        %834 = vmatprep.subr.mxu0 0.0
        %835 = vmatpush1.msra.mxu0 0.0
        %836 = vmatprep.subr.mxu0 0.0
        %837 = vmatpush1.msra.mxu0 0.0
        %838 = vmatprep.subr.mxu0 0.0
        %839 = vmatpush1.msra.mxu0 0.0
        %840 = vmatprep.subr.mxu0 0.0
        %841 = vmatpush1.msra.mxu0 0.0
        %842 = vmatprep.subr.mxu0 0.0
        %843 = vmatpush1.msra.mxu0 0.0
        %844 = vmatprep.subr.mxu0 0.0
        %845 = vmatpush1.msra.mxu0 0.0
        %846 = vmatprep.subr.mxu0 0.0
        %847 = vmatpush1.msra.mxu0 0.0
        %848 = vmatprep.subr.mxu0 0.0
        %849 = vmatpush1.msra.mxu0 0.0
        %850 = vmatprep.subr.mxu0 0.0
        %851 = vmatpush1.msra.mxu0 0.0
        %852 = vmatprep.subr.mxu0 0.0
        %853 = vmatpush1.msra.mxu0 0.0
        %854 = vmatprep.subr.mxu0 0.0
        %855 = vmatpush1.msra.mxu0 0.0
        %856 = vmatprep.subr.mxu0 0.0
        %857 = vmatpush1.msra.mxu0 0.0
        %858 = vmatprep.subr.mxu0 0.0
        %859 = vmatpush1.msra.mxu0 0.0
        %860 = vmatprep.subr.mxu0 0.0
        %861 = vmatpush1.msra.mxu0 0.0
        %862 = vmatprep.subr.mxu0 0.0
        %863 = vmatpush1.msra.mxu0 0.0
        %864 = vmatprep.subr.mxu0 0.0
        %865 = vmatpush1.msra.mxu0 0.0
        %866 = vmatprep.subr.mxu0 0.0
        %867 = vmatpush1.msra.mxu0 0.0
        %868 = vmatprep.subr.mxu0 0.0
        %869 = vmatpush1.msra.mxu0 0.0
        %870 = vmatprep.subr.mxu0 0.0
        %871 = vmatpush1.msra.mxu0 0.0
        %872 = vmatprep.subr.mxu0 0.0
        %873 = vmatpush1.msra.mxu0 0.0
        %874 = vmatprep.subr.mxu0 0.0
        %875 = vmatpush1.msra.mxu0 0.0
        %876 = vmatprep.subr.mxu0 0.0
        %877 = vmatpush1.msra.mxu0 0.0
        %878 = vmatprep.subr.mxu0 0.0
        %879 = vmatpush1.msra.mxu0 0.0
        %880 = vmatprep.subr.mxu0 0.0
        %881 = vmatpush1.msra.mxu0 0.0
        %882 = vmatprep.mubr.f32.mxu0 0.0
        %883 = vmatmul.mubr.f32.gmra.mrb[0].mxu0 %v816
        %v884 = vpop.f32.mrb[0].mxu0
        %v885 = vadd.f32 0.0, %v884
        %v886 = vpop.f32.mrb[0].mxu0
        %887 = vdwg.mxu0
        %888 = vset.pattern.permute.xlu0 3
        %889 = vperm.xlu0 %888, %v524
        %v890 = vpop.permute.xlu0 %889
        %v891 = vlaneseq
        %v892 = vshrl.u32 %v891, 7
        %v893 = vsub.s32 0, %v892
        %v894 = vrot.slane %v890, %v893
        %895 = vset.pattern.permute.xlu0 3
        %896 = vperm.xlu0 %895, %v525
        %v897 = vpop.permute.xlu0 %896
        %v898 = vlaneseq
        %v899 = vshrl.u32 %v898, 7
        %v900 = vsub.s32 0, %v899
        %v901 = vrot.slane %v897, %v900
        %vm902 = vcmp.eq.s32.totalorder %v894, %v566
        %vm903 = vcmp.eq.s32.totalorder %v901, %v573
        %v904 = vsel %vm902, 1, 0
        %v905 = vsel %vm903, 1, 0
        %v906 = vcvt.s32.f32 %v904
        %v907 = vcvt.s32.f32 %v905
        %v910 = vcombine.low %v906, %v907
        %v912 = vunpack.c.l.s4 1966171168
        %v913 = vunpack.c.0.s8 %v912
        %v914 = vlaneseq
        %v915 = vshrl.u32 %v914, 7
        %v916 = vsub.s32 %v913, %v915
        %v917 = vrot.slane %v910, %v916
        %v919 = vunpack.c.l.s4 1966171168
        %v920 = vunpack.c.0.s8 %v919
        %v921 = vlaneseq
        %v922 = vshrl.u32 %v921, 7
        %v923 = vsub.s32 %v920, %v922
        %v924 = vrot.slane %v917, %v923
        %v925 = vsel %vm597, %v924, 0
        %927 = vmatprep.subr.mxu0 0.0
        %928 = vmatpush1.msra.mxu0 %v530
        %929 = vmatprep.subr.mxu0 0.0
        %930 = vmatpush1.msra.mxu0 %v531
        %931 = vmatprep.subr.mxu0 0.0
        %932 = vmatpush1.msra.mxu0 %v532
        %933 = vmatprep.subr.mxu0 0.0
        %934 = vmatpush1.msra.mxu0 %v533
        %935 = vmatprep.subr.mxu0 0.0
        %936 = vmatpush1.msra.mxu0 %v534
        %937 = vmatprep.subr.mxu0 0.0
        %938 = vmatpush1.msra.mxu0 %v535
        %939 = vmatprep.subr.mxu0 0.0
        %940 = vmatpush1.msra.mxu0 %v536
        %941 = vmatprep.subr.mxu0 0.0
        %942 = vmatpush1.msra.mxu0 %v537
        %943 = vmatprep.subr.mxu0 0.0
        %944 = vmatpush1.msra.mxu0 0.0
        %945 = vmatprep.subr.mxu0 0.0
        %946 = vmatpush1.msra.mxu0 0.0
        %947 = vmatprep.subr.mxu0 0.0
        %948 = vmatpush1.msra.mxu0 0.0
        %949 = vmatprep.subr.mxu0 0.0
        %950 = vmatpush1.msra.mxu0 0.0
        %951 = vmatprep.subr.mxu0 0.0
        %952 = vmatpush1.msra.mxu0 0.0
        %953 = vmatprep.subr.mxu0 0.0
        %954 = vmatpush1.msra.mxu0 0.0
        %955 = vmatprep.subr.mxu0 0.0
        %956 = vmatpush1.msra.mxu0 0.0
        %957 = vmatprep.subr.mxu0 0.0
        %958 = vmatpush1.msra.mxu0 0.0
        %959 = vmatprep.subr.mxu0 0.0
        %960 = vmatpush1.msra.mxu0 0.0
        %961 = vmatprep.subr.mxu0 0.0
        %962 = vmatpush1.msra.mxu0 0.0
        %963 = vmatprep.subr.mxu0 0.0
        %964 = vmatpush1.msra.mxu0 0.0
        %965 = vmatprep.subr.mxu0 0.0
        %966 = vmatpush1.msra.mxu0 0.0
        %967 = vmatprep.subr.mxu0 0.0
        %968 = vmatpush1.msra.mxu0 0.0
        %969 = vmatprep.subr.mxu0 0.0
        %970 = vmatpush1.msra.mxu0 0.0
        %971 = vmatprep.subr.mxu0 0.0
        %972 = vmatpush1.msra.mxu0 0.0
        %973 = vmatprep.subr.mxu0 0.0
        %974 = vmatpush1.msra.mxu0 0.0
        %975 = vmatprep.subr.mxu0 0.0
        %976 = vmatpush1.msra.mxu0 0.0
        %977 = vmatprep.subr.mxu0 0.0
        %978 = vmatpush1.msra.mxu0 0.0
        %979 = vmatprep.subr.mxu0 0.0
        %980 = vmatpush1.msra.mxu0 0.0
        %981 = vmatprep.subr.mxu0 0.0
        %982 = vmatpush1.msra.mxu0 0.0
        %983 = vmatprep.subr.mxu0 0.0
        %984 = vmatpush1.msra.mxu0 0.0
        %985 = vmatprep.subr.mxu0 0.0
        %986 = vmatpush1.msra.mxu0 0.0
        %987 = vmatprep.subr.mxu0 0.0
        %988 = vmatpush1.msra.mxu0 0.0
        %989 = vmatprep.subr.mxu0 0.0
        %990 = vmatpush1.msra.mxu0 0.0
        %991 = vmatprep.mubr.f32.mxu0 0.0
        %992 = vmatmul.mubr.f32.gmra.mrb[0].mxu0 %v925
        %v993 = vpop.f32.mrb[0].mxu0
        %v994 = vadd.f32 0.0, %v993
        %v995 = vpop.f32.mrb[0].mxu0
        %996 = vdwg.mxu0
        %997 = vset.pattern.permute.xlu0 4
        %998 = vperm.xlu0 %997, %v524
        %v999 = vpop.permute.xlu0 %998
        %v1000 = vlaneseq
        %v1001 = vshrl.u32 %v1000, 7
        %v1002 = vsub.s32 0, %v1001
        %v1003 = vrot.slane %v999, %v1002
        %1004 = vset.pattern.permute.xlu0 4
        %1005 = vperm.xlu0 %1004, %v525
        %v1006 = vpop.permute.xlu0 %1005
        %v1007 = vlaneseq
        %v1008 = vshrl.u32 %v1007, 7
        %v1009 = vsub.s32 0, %v1008
        %v1010 = vrot.slane %v1006, %v1009
        %vm1011 = vcmp.eq.s32.totalorder %v1003, %v566
        %vm1012 = vcmp.eq.s32.totalorder %v1010, %v573
        %v1013 = vsel %vm1011, 1, 0
        %v1014 = vsel %vm1012, 1, 0
        %v1015 = vcvt.s32.f32 %v1013
        %v1016 = vcvt.s32.f32 %v1014
        %v1019 = vcombine.low %v1015, %v1016
        %v1021 = vunpack.c.l.s4 1966171168
        %v1022 = vunpack.c.0.s8 %v1021
        %v1023 = vlaneseq
        %v1024 = vshrl.u32 %v1023, 7
        %v1025 = vsub.s32 %v1022, %v1024
        %v1026 = vrot.slane %v1019, %v1025
        %v1028 = vunpack.c.l.s4 1966171168
        %v1029 = vunpack.c.0.s8 %v1028
        %v1030 = vlaneseq
        %v1031 = vshrl.u32 %v1030, 7
        %v1032 = vsub.s32 %v1029, %v1031
        %v1033 = vrot.slane %v1026, %v1032
        %v1034 = vsel %vm597, %v1033, 0
        %1036 = vmatprep.subr.mxu0 0.0
        %1037 = vmatpush1.msra.mxu0 %v530
        %1038 = vmatprep.subr.mxu0 0.0
        %1039 = vmatpush1.msra.mxu0 %v531
        %1040 = vmatprep.subr.mxu0 0.0
        %1041 = vmatpush1.msra.mxu0 %v532
        %1042 = vmatprep.subr.mxu0 0.0
        %1043 = vmatpush1.msra.mxu0 %v533
        %1044 = vmatprep.subr.mxu0 0.0
        %1045 = vmatpush1.msra.mxu0 %v534
        %1046 = vmatprep.subr.mxu0 0.0
        %1047 = vmatpush1.msra.mxu0 %v535
        %1048 = vmatprep.subr.mxu0 0.0
        %1049 = vmatpush1.msra.mxu0 %v536
        %1050 = vmatprep.subr.mxu0 0.0
        %1051 = vmatpush1.msra.mxu0 %v537
        %1052 = vmatprep.subr.mxu0 0.0
        %1053 = vmatpush1.msra.mxu0 0.0
        %1054 = vmatprep.subr.mxu0 0.0
        %1055 = vmatpush1.msra.mxu0 0.0
        %1056 = vmatprep.subr.mxu0 0.0
        %1057 = vmatpush1.msra.mxu0 0.0
        %1058 = vmatprep.subr.mxu0 0.0
        %1059 = vmatpush1.msra.mxu0 0.0
        %1060 = vmatprep.subr.mxu0 0.0
        %1061 = vmatpush1.msra.mxu0 0.0
        %1062 = vmatprep.subr.mxu0 0.0
        %1063 = vmatpush1.msra.mxu0 0.0
        %1064 = vmatprep.subr.mxu0 0.0
        %1065 = vmatpush1.msra.mxu0 0.0
        %1066 = vmatprep.subr.mxu0 0.0
        %1067 = vmatpush1.msra.mxu0 0.0
        %1068 = vmatprep.subr.mxu0 0.0
        %1069 = vmatpush1.msra.mxu0 0.0
        %1070 = vmatprep.subr.mxu0 0.0
        %1071 = vmatpush1.msra.mxu0 0.0
        %1072 = vmatprep.subr.mxu0 0.0
        %1073 = vmatpush1.msra.mxu0 0.0
        %1074 = vmatprep.subr.mxu0 0.0
        %1075 = vmatpush1.msra.mxu0 0.0
        %1076 = vmatprep.subr.mxu0 0.0
        %1077 = vmatpush1.msra.mxu0 0.0
        %1078 = vmatprep.subr.mxu0 0.0
        %1079 = vmatpush1.msra.mxu0 0.0
        %1080 = vmatprep.subr.mxu0 0.0
        %1081 = vmatpush1.msra.mxu0 0.0
        %1082 = vmatprep.subr.mxu0 0.0
        %1083 = vmatpush1.msra.mxu0 0.0
        %1084 = vmatprep.subr.mxu0 0.0
        %1085 = vmatpush1.msra.mxu0 0.0
        %1086 = vmatprep.subr.mxu0 0.0
        %1087 = vmatpush1.msra.mxu0 0.0
        %1088 = vmatprep.subr.mxu0 0.0
        %1089 = vmatpush1.msra.mxu0 0.0
        %1090 = vmatprep.subr.mxu0 0.0
        %1091 = vmatpush1.msra.mxu0 0.0
        %1092 = vmatprep.subr.mxu0 0.0
        %1093 = vmatpush1.msra.mxu0 0.0
        %1094 = vmatprep.subr.mxu0 0.0
        %1095 = vmatpush1.msra.mxu0 0.0
        %1096 = vmatprep.subr.mxu0 0.0
        %1097 = vmatpush1.msra.mxu0 0.0
        %1098 = vmatprep.subr.mxu0 0.0
        %1099 = vmatpush1.msra.mxu0 0.0
        %1100 = vmatprep.mubr.f32.mxu0 0.0
        %1101 = vmatmul.mubr.f32.gmra.mrb[0].mxu0 %v1034
        %v1102 = vpop.f32.mrb[0].mxu0
        %v1103 = vadd.f32 0.0, %v1102
        %v1104 = vpop.f32.mrb[0].mxu0
        %1105 = vdwg.mxu0
        %1106 = vset.pattern.permute.xlu0 5
        %1107 = vperm.xlu0 %1106, %v524
        %v1108 = vpop.permute.xlu0 %1107
        %v1109 = vlaneseq
        %v1110 = vshrl.u32 %v1109, 7
        %v1111 = vsub.s32 0, %v1110
        %v1112 = vrot.slane %v1108, %v1111
        %1113 = vset.pattern.permute.xlu0 5
        %1114 = vperm.xlu0 %1113, %v525
        %v1115 = vpop.permute.xlu0 %1114
        %v1116 = vlaneseq
        %v1117 = vshrl.u32 %v1116, 7
        %v1118 = vsub.s32 0, %v1117
        %v1119 = vrot.slane %v1115, %v1118
        %vm1120 = vcmp.eq.s32.totalorder %v1112, %v566
        %vm1121 = vcmp.eq.s32.totalorder %v1119, %v573
        %v1122 = vsel %vm1120, 1, 0
        %v1123 = vsel %vm1121, 1, 0
        %v1124 = vcvt.s32.f32 %v1122
        %v1125 = vcvt.s32.f32 %v1123
        %v1128 = vcombine.low %v1124, %v1125
        %v1130 = vunpack.c.l.s4 1966171168
        %v1131 = vunpack.c.0.s8 %v1130
        %v1132 = vlaneseq
        %v1133 = vshrl.u32 %v1132, 7
        %v1134 = vsub.s32 %v1131, %v1133
        %v1135 = vrot.slane %v1128, %v1134
        %v1137 = vunpack.c.l.s4 1966171168
        %v1138 = vunpack.c.0.s8 %v1137
        %v1139 = vlaneseq
        %v1140 = vshrl.u32 %v1139, 7
        %v1141 = vsub.s32 %v1138, %v1140
        %v1142 = vrot.slane %v1135, %v1141
        %v1143 = vsel %vm597, %v1142, 0
        %1145 = vmatprep.subr.mxu0 0.0
        %1146 = vmatpush1.msra.mxu0 %v530
        %1147 = vmatprep.subr.mxu0 0.0
        %1148 = vmatpush1.msra.mxu0 %v531
        %1149 = vmatprep.subr.mxu0 0.0
        %1150 = vmatpush1.msra.mxu0 %v532
        %1151 = vmatprep.subr.mxu0 0.0
        %1152 = vmatpush1.msra.mxu0 %v533
        %1153 = vmatprep.subr.mxu0 0.0
        %1154 = vmatpush1.msra.mxu0 %v534
        %1155 = vmatprep.subr.mxu0 0.0
        %1156 = vmatpush1.msra.mxu0 %v535
        %1157 = vmatprep.subr.mxu0 0.0
        %1158 = vmatpush1.msra.mxu0 %v536
        %1159 = vmatprep.subr.mxu0 0.0
        %1160 = vmatpush1.msra.mxu0 %v537
        %1161 = vmatprep.subr.mxu0 0.0
        %1162 = vmatpush1.msra.mxu0 0.0
        %1163 = vmatprep.subr.mxu0 0.0
        %1164 = vmatpush1.msra.mxu0 0.0
        %1165 = vmatprep.subr.mxu0 0.0
        %1166 = vmatpush1.msra.mxu0 0.0
        %1167 = vmatprep.subr.mxu0 0.0
        %1168 = vmatpush1.msra.mxu0 0.0
        %1169 = vmatprep.subr.mxu0 0.0
        %1170 = vmatpush1.msra.mxu0 0.0
        %1171 = vmatprep.subr.mxu0 0.0
        %1172 = vmatpush1.msra.mxu0 0.0
        %1173 = vmatprep.subr.mxu0 0.0
        %1174 = vmatpush1.msra.mxu0 0.0
        %1175 = vmatprep.subr.mxu0 0.0
        %1176 = vmatpush1.msra.mxu0 0.0
        %1177 = vmatprep.subr.mxu0 0.0
        %1178 = vmatpush1.msra.mxu0 0.0
        %1179 = vmatprep.subr.mxu0 0.0
        %1180 = vmatpush1.msra.mxu0 0.0
        %1181 = vmatprep.subr.mxu0 0.0
        %1182 = vmatpush1.msra.mxu0 0.0
        %1183 = vmatprep.subr.mxu0 0.0
        %1184 = vmatpush1.msra.mxu0 0.0
        %1185 = vmatprep.subr.mxu0 0.0
        %1186 = vmatpush1.msra.mxu0 0.0
        %1187 = vmatprep.subr.mxu0 0.0
        %1188 = vmatpush1.msra.mxu0 0.0
        %1189 = vmatprep.subr.mxu0 0.0
        %1190 = vmatpush1.msra.mxu0 0.0
        %1191 = vmatprep.subr.mxu0 0.0
        %1192 = vmatpush1.msra.mxu0 0.0
        %1193 = vmatprep.subr.mxu0 0.0
        %1194 = vmatpush1.msra.mxu0 0.0
        %1195 = vmatprep.subr.mxu0 0.0
        %1196 = vmatpush1.msra.mxu0 0.0
        %1197 = vmatprep.subr.mxu0 0.0
        %1198 = vmatpush1.msra.mxu0 0.0
        %1199 = vmatprep.subr.mxu0 0.0
        %1200 = vmatpush1.msra.mxu0 0.0
        %1201 = vmatprep.subr.mxu0 0.0
        %1202 = vmatpush1.msra.mxu0 0.0
        %1203 = vmatprep.subr.mxu0 0.0
        %1204 = vmatpush1.msra.mxu0 0.0
        %1205 = vmatprep.subr.mxu0 0.0
        %1206 = vmatpush1.msra.mxu0 0.0
        %1207 = vmatprep.subr.mxu0 0.0
        %1208 = vmatpush1.msra.mxu0 0.0
        %1209 = vmatprep.mubr.f32.mxu0 0.0
        %1210 = vmatmul.mubr.f32.gmra.mrb[0].mxu0 %v1143
        %v1211 = vpop.f32.mrb[0].mxu0
        %v1212 = vadd.f32 0.0, %v1211
        %v1213 = vpop.f32.mrb[0].mxu0
        %1214 = vdwg.mxu0
        %1215 = vset.pattern.permute.xlu0 6
        %1216 = vperm.xlu0 %1215, %v524
        %v1217 = vpop.permute.xlu0 %1216
        %v1218 = vlaneseq
        %v1219 = vshrl.u32 %v1218, 7
        %v1220 = vsub.s32 0, %v1219
        %v1221 = vrot.slane %v1217, %v1220
        %1222 = vset.pattern.permute.xlu0 6
        %1223 = vperm.xlu0 %1222, %v525
        %v1224 = vpop.permute.xlu0 %1223
        %v1225 = vlaneseq
        %v1226 = vshrl.u32 %v1225, 7
        %v1227 = vsub.s32 0, %v1226
        %v1228 = vrot.slane %v1224, %v1227
        %vm1229 = vcmp.eq.s32.totalorder %v1221, %v566
        %vm1230 = vcmp.eq.s32.totalorder %v1228, %v573
        %v1231 = vsel %vm1229, 1, 0
        %v1232 = vsel %vm1230, 1, 0
        %v1233 = vcvt.s32.f32 %v1231
        %v1234 = vcvt.s32.f32 %v1232
        %v1237 = vcombine.low %v1233, %v1234
        %v1239 = vunpack.c.l.s4 1966171168
        %v1240 = vunpack.c.0.s8 %v1239
        %v1241 = vlaneseq
        %v1242 = vshrl.u32 %v1241, 7
        %v1243 = vsub.s32 %v1240, %v1242
        %v1244 = vrot.slane %v1237, %v1243
        %v1246 = vunpack.c.l.s4 1966171168
        %v1247 = vunpack.c.0.s8 %v1246
        %v1248 = vlaneseq
        %v1249 = vshrl.u32 %v1248, 7
        %v1250 = vsub.s32 %v1247, %v1249
        %v1251 = vrot.slane %v1244, %v1250
        %v1252 = vsel %vm597, %v1251, 0
        %1254 = vmatprep.subr.mxu0 0.0
        %1255 = vmatpush1.msra.mxu0 %v530
        %1256 = vmatprep.subr.mxu0 0.0
        %1257 = vmatpush1.msra.mxu0 %v531
        %1258 = vmatprep.subr.mxu0 0.0
        %1259 = vmatpush1.msra.mxu0 %v532
        %1260 = vmatprep.subr.mxu0 0.0
        %1261 = vmatpush1.msra.mxu0 %v533
        %1262 = vmatprep.subr.mxu0 0.0
        %1263 = vmatpush1.msra.mxu0 %v534
        %1264 = vmatprep.subr.mxu0 0.0
        %1265 = vmatpush1.msra.mxu0 %v535
        %1266 = vmatprep.subr.mxu0 0.0
        %1267 = vmatpush1.msra.mxu0 %v536
        %1268 = vmatprep.subr.mxu0 0.0
        %1269 = vmatpush1.msra.mxu0 %v537
        %1270 = vmatprep.subr.mxu0 0.0
        %1271 = vmatpush1.msra.mxu0 0.0
        %1272 = vmatprep.subr.mxu0 0.0
        %1273 = vmatpush1.msra.mxu0 0.0
        %1274 = vmatprep.subr.mxu0 0.0
        %1275 = vmatpush1.msra.mxu0 0.0
        %1276 = vmatprep.subr.mxu0 0.0
        %1277 = vmatpush1.msra.mxu0 0.0
        %1278 = vmatprep.subr.mxu0 0.0
        %1279 = vmatpush1.msra.mxu0 0.0
        %1280 = vmatprep.subr.mxu0 0.0
        %1281 = vmatpush1.msra.mxu0 0.0
        %1282 = vmatprep.subr.mxu0 0.0
        %1283 = vmatpush1.msra.mxu0 0.0
        %1284 = vmatprep.subr.mxu0 0.0
        %1285 = vmatpush1.msra.mxu0 0.0
        %1286 = vmatprep.subr.mxu0 0.0
        %1287 = vmatpush1.msra.mxu0 0.0
        %1288 = vmatprep.subr.mxu0 0.0
        %1289 = vmatpush1.msra.mxu0 0.0
        %1290 = vmatprep.subr.mxu0 0.0
        %1291 = vmatpush1.msra.mxu0 0.0
        %1292 = vmatprep.subr.mxu0 0.0
        %1293 = vmatpush1.msra.mxu0 0.0
        %1294 = vmatprep.subr.mxu0 0.0
        %1295 = vmatpush1.msra.mxu0 0.0
        %1296 = vmatprep.subr.mxu0 0.0
        %1297 = vmatpush1.msra.mxu0 0.0
        %1298 = vmatprep.subr.mxu0 0.0
        %1299 = vmatpush1.msra.mxu0 0.0
        %1300 = vmatprep.subr.mxu0 0.0
        %1301 = vmatpush1.msra.mxu0 0.0
        %1302 = vmatprep.subr.mxu0 0.0
        %1303 = vmatpush1.msra.mxu0 0.0
        %1304 = vmatprep.subr.mxu0 0.0
        %1305 = vmatpush1.msra.mxu0 0.0
        %1306 = vmatprep.subr.mxu0 0.0
        %1307 = vmatpush1.msra.mxu0 0.0
        %1308 = vmatprep.subr.mxu0 0.0
        %1309 = vmatpush1.msra.mxu0 0.0
        %1310 = vmatprep.subr.mxu0 0.0
        %1311 = vmatpush1.msra.mxu0 0.0
        %1312 = vmatprep.subr.mxu0 0.0
        %1313 = vmatpush1.msra.mxu0 0.0
        %1314 = vmatprep.subr.mxu0 0.0
        %1315 = vmatpush1.msra.mxu0 0.0
        %1316 = vmatprep.subr.mxu0 0.0
        %1317 = vmatpush1.msra.mxu0 0.0
        %1318 = vmatprep.mubr.f32.mxu0 0.0
        %1319 = vmatmul.mubr.f32.gmra.mrb[0].mxu0 %v1252
        %v1320 = vpop.f32.mrb[0].mxu0
        %v1321 = vadd.f32 0.0, %v1320
        %v1322 = vpop.f32.mrb[0].mxu0
        %1323 = vdwg.mxu0
        %1324 = vset.pattern.permute.xlu0 7
        %1325 = vperm.xlu0 %1324, %v524
        %v1326 = vpop.permute.xlu0 %1325
        %v1327 = vlaneseq
        %v1328 = vshrl.u32 %v1327, 7
        %v1329 = vsub.s32 0, %v1328
        %v1330 = vrot.slane %v1326, %v1329
        %1331 = vset.pattern.permute.xlu0 7
        %1332 = vperm.xlu0 %1331, %v525
        %v1333 = vpop.permute.xlu0 %1332
        %v1334 = vlaneseq
        %v1335 = vshrl.u32 %v1334, 7
        %v1336 = vsub.s32 0, %v1335
        %v1337 = vrot.slane %v1333, %v1336
        %vm1338 = vcmp.eq.s32.totalorder %v1330, %v566
        %vm1339 = vcmp.eq.s32.totalorder %v1337, %v573
        %v1340 = vsel %vm1338, 1, 0
        %v1341 = vsel %vm1339, 1, 0
        %v1342 = vcvt.s32.f32 %v1340
        %v1343 = vcvt.s32.f32 %v1341
        %v1346 = vcombine.low %v1342, %v1343
        %v1348 = vunpack.c.l.s4 1966171168
        %v1349 = vunpack.c.0.s8 %v1348
        %v1350 = vlaneseq
        %v1351 = vshrl.u32 %v1350, 7
        %v1352 = vsub.s32 %v1349, %v1351
        %v1353 = vrot.slane %v1346, %v1352
        %v1355 = vunpack.c.l.s4 1966171168
        %v1356 = vunpack.c.0.s8 %v1355
        %v1357 = vlaneseq
        %v1358 = vshrl.u32 %v1357, 7
        %v1359 = vsub.s32 %v1356, %v1358
        %v1360 = vrot.slane %v1353, %v1359
        %v1361 = vsel %vm597, %v1360, 0
        %1363 = vmatprep.subr.mxu0 0.0
        %1364 = vmatpush1.msra.mxu0 %v530
        %1365 = vmatprep.subr.mxu0 0.0
        %1366 = vmatpush1.msra.mxu0 %v531
        %1367 = vmatprep.subr.mxu0 0.0
        %1368 = vmatpush1.msra.mxu0 %v532
        %1369 = vmatprep.subr.mxu0 0.0
        %1370 = vmatpush1.msra.mxu0 %v533
        %1371 = vmatprep.subr.mxu0 0.0
        %1372 = vmatpush1.msra.mxu0 %v534
        %1373 = vmatprep.subr.mxu0 0.0
        %1374 = vmatpush1.msra.mxu0 %v535
        %1375 = vmatprep.subr.mxu0 0.0
        %1376 = vmatpush1.msra.mxu0 %v536
        %1377 = vmatprep.subr.mxu0 0.0
        %1378 = vmatpush1.msra.mxu0 %v537
        %1379 = vmatprep.subr.mxu0 0.0
        %1380 = vmatpush1.msra.mxu0 0.0
        %1381 = vmatprep.subr.mxu0 0.0
        %1382 = vmatpush1.msra.mxu0 0.0
        %1383 = vmatprep.subr.mxu0 0.0
        %1384 = vmatpush1.msra.mxu0 0.0
        %1385 = vmatprep.subr.mxu0 0.0
        %1386 = vmatpush1.msra.mxu0 0.0
        %1387 = vmatprep.subr.mxu0 0.0
        %1388 = vmatpush1.msra.mxu0 0.0
        %1389 = vmatprep.subr.mxu0 0.0
        %1390 = vmatpush1.msra.mxu0 0.0
        %1391 = vmatprep.subr.mxu0 0.0
        %1392 = vmatpush1.msra.mxu0 0.0
        %1393 = vmatprep.subr.mxu0 0.0
        %1394 = vmatpush1.msra.mxu0 0.0
        %1395 = vmatprep.subr.mxu0 0.0
        %1396 = vmatpush1.msra.mxu0 0.0
        %1397 = vmatprep.subr.mxu0 0.0
        %1398 = vmatpush1.msra.mxu0 0.0
        %1399 = vmatprep.subr.mxu0 0.0
        %1400 = vmatpush1.msra.mxu0 0.0
        %1401 = vmatprep.subr.mxu0 0.0
        %1402 = vmatpush1.msra.mxu0 0.0
        %1403 = vmatprep.subr.mxu0 0.0
        %1404 = vmatpush1.msra.mxu0 0.0
        %1405 = vmatprep.subr.mxu0 0.0
        %1406 = vmatpush1.msra.mxu0 0.0
        %1407 = vmatprep.subr.mxu0 0.0
        %1408 = vmatpush1.msra.mxu0 0.0
        %1409 = vmatprep.subr.mxu0 0.0
        %1410 = vmatpush1.msra.mxu0 0.0
        %1411 = vmatprep.subr.mxu0 0.0
        %1412 = vmatpush1.msra.mxu0 0.0
        %1413 = vmatprep.subr.mxu0 0.0
        %1414 = vmatpush1.msra.mxu0 0.0
        %1415 = vmatprep.subr.mxu0 0.0
        %1416 = vmatpush1.msra.mxu0 0.0
        %1417 = vmatprep.subr.mxu0 0.0
        %1418 = vmatpush1.msra.mxu0 0.0
        %1419 = vmatprep.subr.mxu0 0.0
        %1420 = vmatpush1.msra.mxu0 0.0
        %1421 = vmatprep.subr.mxu0 0.0
        %1422 = vmatpush1.msra.mxu0 0.0
        %1423 = vmatprep.subr.mxu0 0.0
        %1424 = vmatpush1.msra.mxu0 0.0
        %1425 = vmatprep.subr.mxu0 0.0
        %1426 = vmatpush1.msra.mxu0 0.0
        %1427 = vmatprep.mubr.f32.mxu0 0.0
        %1428 = vmatmul.mubr.f32.gmra.mrb[0].mxu0 %v1361
        %v1429 = vpop.f32.mrb[0].mxu0
        %v1430 = vadd.f32 0.0, %v1429
        %v1431 = vpop.f32.mrb[0].mxu0
        %1432 = vdwg.mxu0
        %v1433 = vld [vmem:[%s3] sm:$0xff]
        %v1434 = vld [vmem:[%s3 + $0x8] sm:$0xff]
        %v1435 = vld [vmem:[%s3 + $0x10] sm:$0xff]
        %v1436 = vld [vmem:[%s3 + $0x18] sm:$0xff]
        %v1437 = vld [vmem:[%s4] sm:$0xff]
        %v1438 = vld [vmem:[%s4 + $0x8] sm:$0xff]
        %v1439 = vld [vmem:[%s4 + $0x10] sm:$0xff]
        %v1440 = vld [vmem:[%s4 + $0x18] sm:$0xff]
        %v1441 = vld [vmem:[%s5] sm:$0x1]
        %v1442 = vld [vmem:[%s6] sm:$0xff]
        %v1443 = vld [vmem:[%s6 + $0x8] sm:$0xff]
        %v1444 = vld [vmem:[%s6 + $0x10] sm:$0xff]
        %v1445 = vld [vmem:[%s6 + $0x18] sm:$0xff]
        %v1446 = vld [vmem:[#allocation5] sm:$0xff]
        %v1447 = vld [vmem:[#allocation5 + $0x8] sm:$0xff]
        %v1448 = vld [vmem:[#allocation5 + $0x10] sm:$0xff]
        %v1449 = vld [vmem:[#allocation5 + $0x18] sm:$0xff]
        %v1450 = vld [vmem:[%s8] sm:$0x1]
        %v1451 = vld [vmem:[%s514] sm:$0x1]
        %v1452 = vld [vmem:[%s514 + $0x2] sm:$0x1]
        %v1453 = vld [vmem:[%s520] sm:$0x1]
        %v1454 = vld [vmem:[%s520 + $0x2] sm:$0x1]
        %v1455 = vld [vmem:[%s514 + $0x1] sm:$0x1]
        %v1456 = vld [vmem:[%s514 + $0x3] sm:$0x1]
        %v1457 = vld [vmem:[%s520 + $0x1] sm:$0x1]
        %v1458 = vld [vmem:[%s520 + $0x3] sm:$0x1]
        %vm1459 = vcmp.gt.s32.totalorder %v526, 0
        %vm1460 = vcmp.gt.s32.totalorder %v527, 0
        %v1461 = vsel %vm1459, 1, 0
        %v1462 = vsel %vm1460, 1, 0
        %v1463 = vcvt.s32.f32 %v1461
        %v1464 = vcvt.s32.f32 %v1462
        %v1467 = vrot.slane %v1452, 7
        %vm1468 = vcmask 1041409
        %v1469 = vsel %vm1468, %v1467, %v1451
        %vm1470 = vcmask 261120
        %v1471 = vsel %vm1470, %v1469, 0
        %1473 = vmatprep.subr.mxu0 0.0
        %1474 = vmatpush1.msra.mxu0 %v1437
        %1475 = vmatprep.subr.mxu0 0.0
        %1476 = vmatpush1.msra.mxu0 %v1438
        %1477 = vmatprep.subr.mxu0 0.0
        %1478 = vmatpush1.msra.mxu0 %v1439
        %1479 = vmatprep.subr.mxu0 0.0
        %1480 = vmatpush1.msra.mxu0 %v1440
        %1481 = vmatprep.subr.mxu0 0.0
        %1482 = vmatpush1.msra.mxu0 0.0
        %1483 = vmatprep.subr.mxu0 0.0
        %1484 = vmatpush1.msra.mxu0 0.0
        %1485 = vmatprep.subr.mxu0 0.0
        %1486 = vmatpush1.msra.mxu0 0.0
        %1487 = vmatprep.subr.mxu0 0.0
        %1488 = vmatpush1.msra.mxu0 0.0
        %1489 = vmatprep.subr.mxu0 0.0
        %1490 = vmatpush1.msra.mxu0 0.0
        %1491 = vmatprep.subr.mxu0 0.0
        %1492 = vmatpush1.msra.mxu0 0.0
        %1493 = vmatprep.subr.mxu0 0.0
        %1494 = vmatpush1.msra.mxu0 0.0
        %1495 = vmatprep.subr.mxu0 0.0
        %1496 = vmatpush1.msra.mxu0 0.0
        %1497 = vmatprep.subr.mxu0 0.0
        %1498 = vmatpush1.msra.mxu0 0.0
        %1499 = vmatprep.subr.mxu0 0.0
        %1500 = vmatpush1.msra.mxu0 0.0
        %1501 = vmatprep.subr.mxu0 0.0
        %1502 = vmatpush1.msra.mxu0 0.0
        %1503 = vmatprep.subr.mxu0 0.0
        %1504 = vmatpush1.msra.mxu0 0.0
        %1505 = vmatprep.subr.mxu0 0.0
        %1506 = vmatpush1.msra.mxu0 0.0
        %1507 = vmatprep.subr.mxu0 0.0
        %1508 = vmatpush1.msra.mxu0 0.0
        %1509 = vmatprep.subr.mxu0 0.0
        %1510 = vmatpush1.msra.mxu0 0.0
        %1511 = vmatprep.subr.mxu0 0.0
        %1512 = vmatpush1.msra.mxu0 0.0
        %1513 = vmatprep.subr.mxu0 0.0
        %1514 = vmatpush1.msra.mxu0 0.0
        %1515 = vmatprep.subr.mxu0 0.0
        %1516 = vmatpush1.msra.mxu0 0.0
        %1517 = vmatprep.subr.mxu0 0.0
        %1518 = vmatpush1.msra.mxu0 0.0
        %1519 = vmatprep.subr.mxu0 0.0
        %1520 = vmatpush1.msra.mxu0 0.0
        %1521 = vmatprep.subr.mxu0 0.0
        %1522 = vmatpush1.msra.mxu0 0.0
        %1523 = vmatprep.subr.mxu0 0.0
        %1524 = vmatpush1.msra.mxu0 0.0
        %1525 = vmatprep.subr.mxu0 0.0
        %1526 = vmatpush1.msra.mxu0 0.0
        %1527 = vmatprep.subr.mxu0 0.0
        %1528 = vmatpush1.msra.mxu0 0.0
        %1529 = vmatprep.subr.mxu0 0.0
        %1530 = vmatpush1.msra.mxu0 0.0
        %1531 = vmatprep.subr.mxu0 0.0
        %1532 = vmatpush1.msra.mxu0 0.0
        %1533 = vmatprep.subr.mxu0 0.0
        %1534 = vmatpush1.msra.mxu0 0.0
        %1535 = vmatprep.subr.mxu0 0.0
        %1536 = vmatpush1.msra.mxu0 0.0
        %1537 = vmatprep.mubr.f32.mxu0 0.0
        %1538 = vmatmul.mubr.f32.gmra.mrb[0].mxu0 %v1471
        %v1539 = vpop.f32.mrb[0].mxu0
        %v1540 = vadd.f32 0.0, %v1539
        %v1541 = vpop.f32.mrb[0].mxu0
        %1542 = vdwg.mxu0
        %v1544 = vsel %vm1470, %v667, 0
        %1546 = vmatprep.subr.mxu0 0.0
        %1547 = vmatpush1.msra.mxu0 %v1433
        %1548 = vmatprep.subr.mxu0 0.0
        %1549 = vmatpush1.msra.mxu0 %v1434
        %1550 = vmatprep.subr.mxu0 0.0
        %1551 = vmatpush1.msra.mxu0 %v1435
        %1552 = vmatprep.subr.mxu0 0.0
        %1553 = vmatpush1.msra.mxu0 %v1436
        %1554 = vmatprep.subr.mxu0 0.0
        %1555 = vmatpush1.msra.mxu0 0.0
        %1556 = vmatprep.subr.mxu0 0.0
        %1557 = vmatpush1.msra.mxu0 0.0
        %1558 = vmatprep.subr.mxu0 0.0
        %1559 = vmatpush1.msra.mxu0 0.0
        %1560 = vmatprep.subr.mxu0 0.0
        %1561 = vmatpush1.msra.mxu0 0.0
        %1562 = vmatprep.subr.mxu0 0.0
        %1563 = vmatpush1.msra.mxu0 0.0
        %1564 = vmatprep.subr.mxu0 0.0
        %1565 = vmatpush1.msra.mxu0 0.0
        %1566 = vmatprep.subr.mxu0 0.0
        %1567 = vmatpush1.msra.mxu0 0.0
        %1568 = vmatprep.subr.mxu0 0.0
        %1569 = vmatpush1.msra.mxu0 0.0
        %1570 = vmatprep.subr.mxu0 0.0
        %1571 = vmatpush1.msra.mxu0 0.0
        %1572 = vmatprep.subr.mxu0 0.0
        %1573 = vmatpush1.msra.mxu0 0.0
        %1574 = vmatprep.subr.mxu0 0.0
        %1575 = vmatpush1.msra.mxu0 0.0
        %1576 = vmatprep.subr.mxu0 0.0
        %1577 = vmatpush1.msra.mxu0 0.0
        %1578 = vmatprep.subr.mxu0 0.0
        %1579 = vmatpush1.msra.mxu0 0.0
        %1580 = vmatprep.subr.mxu0 0.0
        %1581 = vmatpush1.msra.mxu0 0.0
        %1582 = vmatprep.subr.mxu0 0.0
        %1583 = vmatpush1.msra.mxu0 0.0
        %1584 = vmatprep.subr.mxu0 0.0
        %1585 = vmatpush1.msra.mxu0 0.0
        %1586 = vmatprep.subr.mxu0 0.0
        %1587 = vmatpush1.msra.mxu0 0.0
        %1588 = vmatprep.subr.mxu0 0.0
        %1589 = vmatpush1.msra.mxu0 0.0
        %1590 = vmatprep.subr.mxu0 0.0
        %1591 = vmatpush1.msra.mxu0 0.0
        %1592 = vmatprep.subr.mxu0 0.0
        %1593 = vmatpush1.msra.mxu0 0.0
        %1594 = vmatprep.subr.mxu0 0.0
        %1595 = vmatpush1.msra.mxu0 0.0
        %1596 = vmatprep.subr.mxu0 0.0
        %1597 = vmatpush1.msra.mxu0 0.0
        %1598 = vmatprep.subr.mxu0 0.0
        %1599 = vmatpush1.msra.mxu0 0.0
        %1600 = vmatprep.subr.mxu0 0.0
        %1601 = vmatpush1.msra.mxu0 0.0
        %1602 = vmatprep.subr.mxu0 0.0
        %1603 = vmatpush1.msra.mxu0 0.0
        %1604 = vmatprep.subr.mxu0 0.0
        %1605 = vmatpush1.msra.mxu0 0.0
        %1606 = vmatprep.subr.mxu0 0.0
        %1607 = vmatpush1.msra.mxu0 0.0
        %1608 = vmatprep.subr.mxu0 0.0
        %1609 = vmatpush1.msra.mxu0 0.0
        %1610 = vmatprep.mubr.f32.mxu0 0.0
        %1611 = vmatmul.mubr.f32.gmra.mrb[0].mxu0 %v1544
        %v1612 = vpop.f32.mrb[0].mxu0
        %v1613 = vadd.f32 %v1540, %v1612
        %v1614 = vpop.f32.mrb[0].mxu0
        %1615 = vdwg.mxu0
        %v1617 = vlaneseq
        %v1618 = vshrl.u32 %v1617, 7
        %v1619 = vsub.s32 0, %v1618
        %v1620 = vrot.slane %v1441, %v1619
        %v1622 = vadd.f32 %v1613, %v1620
        %v1623 = vxor.u32 %v1622, 2147483648
        %v1624 = vmul.f32 %v1623, 1.442695
        %v1625 = vpow.pop %v1624
        %v1626 = vadd.f32 %v1625, 1.0
        %v1627 = vrcp.pop %v1626
        %v1628 = vmul.f32 1.0, %v1627
        %v1629 = vtanh.pop %v1622
        %v1632 = vrot.slane %v1454, 7
        %v1633 = vsel %vm1468, %v1632, %v1453
        %1634 = vrot.lane.b32.xlu0 %v1633, 32
        %v1635 = vpop.permute.xlu0 %1634
        %v1637 = vmul.f32 %v1628, %v1635
        %1639 = vrot.lane.b32.xlu0 %v1629, 64
        %v1640 = vpop.permute.xlu0 %1639
        %v1642 = vmul.f32 %v1628, %v1640
        %1644 = vrot.lane.b32.xlu0 %v1642, 32
        %v1645 = vpop.permute.xlu0 %1644
        %v1647 = vadd.f32 %v1637, %v1645
        %v1648 = vtanh.pop %v1647
        %1650 = vrot.lane.b32.xlu0 %v1648, 64
        %v1651 = vpop.permute.xlu0 %1650
        %v1653 = vmul.f32 %v1628, %v1651
        %1655 = vset.pattern.permute.xlu0 0
        %1656 = vperm.xlu0 %1655, %v1463
        %v1657 = vpop.permute.xlu0 %1656
        %v1659 = vlaneseq
        %v1660 = vshrl.u32 %v1659, 7
        %v1661 = vsub.s32 0, %v1660
        %v1662 = vrot.slane %v1657, %v1661
        %1664 = vset.pattern.permute.xlu0 0
        %1665 = vperm.xlu0 %1664, %v1464
        %v1666 = vpop.permute.xlu0 %1665
        %v1668 = vlaneseq
        %v1669 = vshrl.u32 %v1668, 7
        %v1670 = vsub.s32 0, %v1669
        %v1671 = vrot.slane %v1666, %v1670
        %v1674 = vunpack.c.l.s4 1966171168
        %v1675 = vunpack.c.0.s8 %v1674
        %v1676 = vlaneseq
        %v1677 = vshrl.u32 %v1676, 7
        %v1678 = vsub.s32 %v1675, %v1677
        %v1679 = vrot.slane %v1653, %v1678
        %v1680 = vcombine.high %v1679, %v1679
        %v1682 = vunpack.c.l.s4 1966171168
        %v1683 = vunpack.c.0.s8 %v1682
        %v1684 = vlaneseq
        %v1685 = vshrl.u32 %v1684, 7
        %v1686 = vsub.s32 %v1683, %v1685
        %v1687 = vrot.slane %v1679, %v1686
        %v1689 = vunpack.c.l.s4 1966171168
        %v1690 = vunpack.c.0.s8 %v1689
        %v1691 = vlaneseq
        %v1692 = vshrl.u32 %v1691, 7
        %v1693 = vsub.s32 %v1690, %v1692
        %v1694 = vrot.slane %v1680, %v1693
        %1695 = vrot.lane.b32.xlu0 %v1687, 32
        %v1696 = vpop.permute.xlu0 %1695
        %1697 = vrot.lane.b32.xlu0 %v1694, 32
        %v1698 = vpop.permute.xlu0 %1697
        %v1701 = vmul.f32 %v1662, %v1696
        %v1702 = vmul.f32 %v1671, %v1698
        %v1703 = vsub.f32 1.0, %v1463
        %v1704 = vsub.f32 1.0, %v1464
        %1706 = vset.pattern.permute.xlu0 0
        %1707 = vperm.xlu0 %1706, %v1703
        %v1708 = vpop.permute.xlu0 %1707
        %v1710 = vlaneseq
        %v1711 = vshrl.u32 %v1710, 7
        %v1712 = vsub.s32 0, %v1711
        %v1713 = vrot.slane %v1708, %v1712
        %1715 = vset.pattern.permute.xlu0 0
        %1716 = vperm.xlu0 %1715, %v1704
        %v1717 = vpop.permute.xlu0 %1716
        %v1719 = vlaneseq
        %v1720 = vshrl.u32 %v1719, 7
        %v1721 = vsub.s32 0, %v1720
        %v1722 = vrot.slane %v1717, %v1721
        %v1724 = vunpack.c.l.s4 1966171168
        %v1725 = vunpack.c.0.s8 %v1724
        %v1726 = vlaneseq
        %v1727 = vshrl.u32 %v1726, 7
        %v1728 = vsub.s32 %v1725, %v1727
        %v1729 = vrot.slane %v1451, %v1728
        %v1731 = vunpack.c.l.s4 1966171168
        %v1732 = vunpack.c.0.s8 %v1731
        %v1733 = vlaneseq
        %v1734 = vshrl.u32 %v1733, 7
        %v1735 = vsub.s32 %v1732, %v1734
        %v1736 = vrot.slane %v1729, %v1735
        %v1738 = vunpack.c.l.s4 1966171168
        %v1739 = vunpack.c.0.s8 %v1738
        %v1740 = vlaneseq
        %v1741 = vshrl.u32 %v1740, 7
        %v1742 = vsub.s32 %v1739, %v1741
        %v1743 = vrot.slane %v1452, %v1742
        %v1745 = vunpack.c.l.s4 1966171168
        %v1746 = vunpack.c.0.s8 %v1745
        %v1747 = vlaneseq
        %v1748 = vshrl.u32 %v1747, 7
        %v1749 = vsub.s32 %v1746, %v1748
        %v1750 = vrot.slane %v1743, %v1749
        %v1753 = vmul.f32 %v1713, %v1736
        %v1754 = vmul.f32 %v1722, %v1750
        %v1755 = vadd.f32 %v1701, %v1753
        %v1756 = vadd.f32 %v1702, %v1754
        %v1759 = vunpack.c.l.s4 1966171168
        %v1760 = vunpack.c.0.s8 %v1759
        %v1761 = vlaneseq
        %v1762 = vshrl.u32 %v1761, 7
        %v1763 = vsub.s32 %v1760, %v1762
        %v1764 = vrot.slane %v1647, %v1763
        %v1765 = vcombine.high %v1764, %v1764
        %v1767 = vunpack.c.l.s4 1966171168
        %v1768 = vunpack.c.0.s8 %v1767
        %v1769 = vlaneseq
        %v1770 = vshrl.u32 %v1769, 7
        %v1771 = vsub.s32 %v1768, %v1770
        %v1772 = vrot.slane %v1764, %v1771
        %v1774 = vunpack.c.l.s4 1966171168
        %v1775 = vunpack.c.0.s8 %v1774
        %v1776 = vlaneseq
        %v1777 = vshrl.u32 %v1776, 7
        %v1778 = vsub.s32 %v1775, %v1777
        %v1779 = vrot.slane %v1765, %v1778
        %1780 = vrot.lane.b32.xlu0 %v1772, 96
        %v1781 = vpop.permute.xlu0 %1780
        %1782 = vrot.lane.b32.xlu0 %v1779, 96
        %v1783 = vpop.permute.xlu0 %1782
        %v1786 = vmul.f32 %v1662, %v1781
        %v1787 = vmul.f32 %v1671, %v1783
        %v1789 = vunpack.c.l.s4 1966171168
        %v1790 = vunpack.c.0.s8 %v1789
        %v1791 = vlaneseq
        %v1792 = vshrl.u32 %v1791, 7
        %v1793 = vsub.s32 %v1790, %v1792
        %v1794 = vrot.slane %v1453, %v1793
        %v1796 = vunpack.c.l.s4 1966171168
        %v1797 = vunpack.c.0.s8 %v1796
        %v1798 = vlaneseq
        %v1799 = vshrl.u32 %v1798, 7
        %v1800 = vsub.s32 %v1797, %v1799
        %v1801 = vrot.slane %v1794, %v1800
        %v1803 = vunpack.c.l.s4 1966171168
        %v1804 = vunpack.c.0.s8 %v1803
        %v1805 = vlaneseq
        %v1806 = vshrl.u32 %v1805, 7
        %v1807 = vsub.s32 %v1804, %v1806
        %v1808 = vrot.slane %v1454, %v1807
        %v1810 = vunpack.c.l.s4 1966171168
        %v1811 = vunpack.c.0.s8 %v1810
        %v1812 = vlaneseq
        %v1813 = vshrl.u32 %v1812, 7
        %v1814 = vsub.s32 %v1811, %v1813
        %v1815 = vrot.slane %v1808, %v1814
        %v1818 = vmul.f32 %v1713, %v1801
        %v1819 = vmul.f32 %v1722, %v1815
        %v1820 = vadd.f32 %v1786, %v1818
        %v1821 = vadd.f32 %v1787, %v1819
        %vm1822 = vcmask 253952
        %1823 = vst.msk [vmem:[%s496] sm:$0x1] %vm1822, %v1701
        %1824 = vst.msk [vmem:[%s496 + $0x8] sm:$0x1] %vm1822, %v1702
        %vm1825 = vcmp.gt.s32.totalorder %v526, 7
        %vm1826 = vcmp.gt.s32.totalorder %v527, 7
        %v1827 = vsel %vm1825, 1, 0
        %v1828 = vsel %vm1826, 1, 0
        %v1829 = vcvt.s32.f32 %v1827
        %v1830 = vcvt.s32.f32 %v1828
        %v1833 = vrot.slane %v1456, 7
        %v1834 = vsel %vm1468, %v1833, %v1455
        %v1835 = vsel %vm1470, %v1834, 0
        %1837 = vmatprep.subr.mxu0 0.0
        %1838 = vmatpush1.msra.mxu0 %v1446
        %1839 = vmatprep.subr.mxu0 0.0
        %1840 = vmatpush1.msra.mxu0 %v1447
        %1841 = vmatprep.subr.mxu0 0.0
        %1842 = vmatpush1.msra.mxu0 %v1448
        %1843 = vmatprep.subr.mxu0 0.0
        %1844 = vmatpush1.msra.mxu0 %v1449
        %1845 = vmatprep.subr.mxu0 0.0
        %1846 = vmatpush1.msra.mxu0 0.0
        %1847 = vmatprep.subr.mxu0 0.0
        %1848 = vmatpush1.msra.mxu0 0.0
        %1849 = vmatprep.subr.mxu0 0.0
        %1850 = vmatpush1.msra.mxu0 0.0
        %1851 = vmatprep.subr.mxu0 0.0
        %1852 = vmatpush1.msra.mxu0 0.0
        %1853 = vmatprep.subr.mxu0 0.0
        %1854 = vmatpush1.msra.mxu0 0.0
        %1855 = vmatprep.subr.mxu0 0.0
        %1856 = vmatpush1.msra.mxu0 0.0
        %1857 = vmatprep.subr.mxu0 0.0
        %1858 = vmatpush1.msra.mxu0 0.0
        %1859 = vmatprep.subr.mxu0 0.0
        %1860 = vmatpush1.msra.mxu0 0.0
        %1861 = vmatprep.subr.mxu0 0.0
        %1862 = vmatpush1.msra.mxu0 0.0
        %1863 = vmatprep.subr.mxu0 0.0
        %1864 = vmatpush1.msra.mxu0 0.0
        %1865 = vmatprep.subr.mxu0 0.0
        %1866 = vmatpush1.msra.mxu0 0.0
        %1867 = vmatprep.subr.mxu0 0.0
        %1868 = vmatpush1.msra.mxu0 0.0
        %1869 = vmatprep.subr.mxu0 0.0
        %1870 = vmatpush1.msra.mxu0 0.0
        %1871 = vmatprep.subr.mxu0 0.0
        %1872 = vmatpush1.msra.mxu0 0.0
        %1873 = vmatprep.subr.mxu0 0.0
        %1874 = vmatpush1.msra.mxu0 0.0
        %1875 = vmatprep.subr.mxu0 0.0
        %1876 = vmatpush1.msra.mxu0 0.0
        %1877 = vmatprep.subr.mxu0 0.0
        %1878 = vmatpush1.msra.mxu0 0.0
        %1879 = vmatprep.subr.mxu0 0.0
        %1880 = vmatpush1.msra.mxu0 0.0
        %1881 = vmatprep.subr.mxu0 0.0
        %1882 = vmatpush1.msra.mxu0 0.0
        %1883 = vmatprep.subr.mxu0 0.0
        %1884 = vmatpush1.msra.mxu0 0.0
        %1885 = vmatprep.subr.mxu0 0.0
        %1886 = vmatpush1.msra.mxu0 0.0
        %1887 = vmatprep.subr.mxu0 0.0
        %1888 = vmatpush1.msra.mxu0 0.0
        %1889 = vmatprep.subr.mxu0 0.0
        %1890 = vmatpush1.msra.mxu0 0.0
        %1891 = vmatprep.subr.mxu0 0.0
        %1892 = vmatpush1.msra.mxu0 0.0
        %1893 = vmatprep.subr.mxu0 0.0
        %1894 = vmatpush1.msra.mxu0 0.0
        %1895 = vmatprep.subr.mxu0 0.0
        %1896 = vmatpush1.msra.mxu0 0.0
        %1897 = vmatprep.subr.mxu0 0.0
        %1898 = vmatpush1.msra.mxu0 0.0
        %1899 = vmatprep.subr.mxu0 0.0
        %1900 = vmatpush1.msra.mxu0 0.0
        %1901 = vmatprep.mubr.f32.mxu0 0.0
        %1902 = vmatmul.mubr.f32.gmra.mrb[0].mxu0 %v1835
        %v1903 = vpop.f32.mrb[0].mxu0
        %v1904 = vadd.f32 0.0, %v1903
        %v1905 = vpop.f32.mrb[0].mxu0
        %1906 = vdwg.mxu0
        %v1908 = vsel %vm1470, %v1430, 0
        %1910 = vmatprep.subr.mxu0 0.0
        %1911 = vmatpush1.msra.mxu0 %v1442
        %1912 = vmatprep.subr.mxu0 0.0
        %1913 = vmatpush1.msra.mxu0 %v1443
        %1914 = vmatprep.subr.mxu0 0.0
        %1915 = vmatpush1.msra.mxu0 %v1444
        %1916 = vmatprep.subr.mxu0 0.0
        %1917 = vmatpush1.msra.mxu0 %v1445
        %1918 = vmatprep.subr.mxu0 0.0
        %1919 = vmatpush1.msra.mxu0 0.0
        %1920 = vmatprep.subr.mxu0 0.0
        %1921 = vmatpush1.msra.mxu0 0.0
        %1922 = vmatprep.subr.mxu0 0.0
        %1923 = vmatpush1.msra.mxu0 0.0
        %1924 = vmatprep.subr.mxu0 0.0
        %1925 = vmatpush1.msra.mxu0 0.0
        %1926 = vmatprep.subr.mxu0 0.0
        %1927 = vmatpush1.msra.mxu0 0.0
        %1928 = vmatprep.subr.mxu0 0.0
        %1929 = vmatpush1.msra.mxu0 0.0
        %1930 = vmatprep.subr.mxu0 0.0
        %1931 = vmatpush1.msra.mxu0 0.0
        %1932 = vmatprep.subr.mxu0 0.0
        %1933 = vmatpush1.msra.mxu0 0.0
        %1934 = vmatprep.subr.mxu0 0.0
        %1935 = vmatpush1.msra.mxu0 0.0
        %1936 = vmatprep.subr.mxu0 0.0
        %1937 = vmatpush1.msra.mxu0 0.0
        %1938 = vmatprep.subr.mxu0 0.0
        %1939 = vmatpush1.msra.mxu0 0.0
        %1940 = vmatprep.subr.mxu0 0.0
        %1941 = vmatpush1.msra.mxu0 0.0
        %1942 = vmatprep.subr.mxu0 0.0
        %1943 = vmatpush1.msra.mxu0 0.0
        %1944 = vmatprep.subr.mxu0 0.0
        %1945 = vmatpush1.msra.mxu0 0.0
        %1946 = vmatprep.subr.mxu0 0.0
        %1947 = vmatpush1.msra.mxu0 0.0
        %1948 = vmatprep.subr.mxu0 0.0
        %1949 = vmatpush1.msra.mxu0 0.0
        %1950 = vmatprep.subr.mxu0 0.0
        %1951 = vmatpush1.msra.mxu0 0.0
        %1952 = vmatprep.subr.mxu0 0.0
        %1953 = vmatpush1.msra.mxu0 0.0
        %1954 = vmatprep.subr.mxu0 0.0
        %1955 = vmatpush1.msra.mxu0 0.0
        %1956 = vmatprep.subr.mxu0 0.0
        %1957 = vmatpush1.msra.mxu0 0.0
        %1958 = vmatprep.subr.mxu0 0.0
        %1959 = vmatpush1.msra.mxu0 0.0
        %1960 = vmatprep.subr.mxu0 0.0
        %1961 = vmatpush1.msra.mxu0 0.0
        %1962 = vmatprep.subr.mxu0 0.0
        %1963 = vmatpush1.msra.mxu0 0.0
        %1964 = vmatprep.subr.mxu0 0.0
        %1965 = vmatpush1.msra.mxu0 0.0
        %1966 = vmatprep.subr.mxu0 0.0
        %1967 = vmatpush1.msra.mxu0 0.0
        %1968 = vmatprep.subr.mxu0 0.0
        %1969 = vmatpush1.msra.mxu0 0.0
        %1970 = vmatprep.subr.mxu0 0.0
        %1971 = vmatpush1.msra.mxu0 0.0
        %1972 = vmatprep.subr.mxu0 0.0
        %1973 = vmatpush1.msra.mxu0 0.0
        %1974 = vmatprep.mubr.f32.mxu0 0.0
        %1975 = vmatmul.mubr.f32.gmra.mrb[0].mxu0 %v1908
        %v1976 = vpop.f32.mrb[0].mxu0
        %v1977 = vadd.f32 %v1904, %v1976
        %v1978 = vpop.f32.mrb[0].mxu0
        %1979 = vdwg.mxu0
        %v1981 = vlaneseq
        %v1982 = vshrl.u32 %v1981, 7
        %v1983 = vsub.s32 0, %v1982
        %v1984 = vrot.slane %v1450, %v1983
        %v1986 = vadd.f32 %v1977, %v1984
        %v1987 = vxor.u32 %v1986, 2147483648
        %v1988 = vmul.f32 %v1987, 1.442695
        %v1989 = vpow.pop %v1988
        %v1990 = vadd.f32 %v1989, 1.0
        %v1991 = vrcp.pop %v1990
        %v1992 = vmul.f32 1.0, %v1991
        %v1993 = vtanh.pop %v1986
        %v1996 = vrot.slane %v1458, 7
        %v1997 = vsel %vm1468, %v1996, %v1457
        %1998 = vrot.lane.b32.xlu0 %v1997, 32
        %v1999 = vpop.permute.xlu0 %1998
        %v2001 = vmul.f32 %v1992, %v1999
        %2003 = vrot.lane.b32.xlu0 %v1993, 64
        %v2004 = vpop.permute.xlu0 %2003
        %v2006 = vmul.f32 %v1992, %v2004
        %2008 = vrot.lane.b32.xlu0 %v2006, 32
        %v2009 = vpop.permute.xlu0 %2008
        %v2011 = vadd.f32 %v2001, %v2009
        %v2012 = vtanh.pop %v2011
        %2014 = vrot.lane.b32.xlu0 %v2012, 64
        %v2015 = vpop.permute.xlu0 %2014
        %v2017 = vmul.f32 %v1992, %v2015
        %2019 = vset.pattern.permute.xlu0 0
        %2020 = vperm.xlu0 %2019, %v1829
        %v2021 = vpop.permute.xlu0 %2020
        %v2023 = vlaneseq
        %v2024 = vshrl.u32 %v2023, 7
        %v2025 = vsub.s32 0, %v2024
        %v2026 = vrot.slane %v2021, %v2025
        %2028 = vset.pattern.permute.xlu0 0
        %2029 = vperm.xlu0 %2028, %v1830
        %v2030 = vpop.permute.xlu0 %2029
        %v2032 = vlaneseq
        %v2033 = vshrl.u32 %v2032, 7
        %v2034 = vsub.s32 0, %v2033
        %v2035 = vrot.slane %v2030, %v2034
        %v2038 = vunpack.c.l.s4 1966171168
        %v2039 = vunpack.c.0.s8 %v2038
        %v2040 = vlaneseq
        %v2041 = vshrl.u32 %v2040, 7
        %v2042 = vsub.s32 %v2039, %v2041
        %v2043 = vrot.slane %v2017, %v2042
        %v2044 = vcombine.high %v2043, %v2043
        %v2046 = vunpack.c.l.s4 1966171168
        %v2047 = vunpack.c.0.s8 %v2046
        %v2048 = vlaneseq
        %v2049 = vshrl.u32 %v2048, 7
        %v2050 = vsub.s32 %v2047, %v2049
        %v2051 = vrot.slane %v2043, %v2050
        %v2053 = vunpack.c.l.s4 1966171168
        %v2054 = vunpack.c.0.s8 %v2053
        %v2055 = vlaneseq
        %v2056 = vshrl.u32 %v2055, 7
        %v2057 = vsub.s32 %v2054, %v2056
        %v2058 = vrot.slane %v2044, %v2057
        %2059 = vrot.lane.b32.xlu0 %v2051, 32
        %v2060 = vpop.permute.xlu0 %2059
        %2061 = vrot.lane.b32.xlu0 %v2058, 32
        %v2062 = vpop.permute.xlu0 %2061
        %v2065 = vmul.f32 %v2026, %v2060
        %v2066 = vmul.f32 %v2035, %v2062
        %v2067 = vsub.f32 1.0, %v1829
        %v2068 = vsub.f32 1.0, %v1830
        %2070 = vset.pattern.permute.xlu0 0
        %2071 = vperm.xlu0 %2070, %v2067
        %v2072 = vpop.permute.xlu0 %2071
        %v2074 = vlaneseq
        %v2075 = vshrl.u32 %v2074, 7
        %v2076 = vsub.s32 0, %v2075
        %v2077 = vrot.slane %v2072, %v2076
        %2079 = vset.pattern.permute.xlu0 0
        %2080 = vperm.xlu0 %2079, %v2068
        %v2081 = vpop.permute.xlu0 %2080
        %v2083 = vlaneseq
        %v2084 = vshrl.u32 %v2083, 7
        %v2085 = vsub.s32 0, %v2084
        %v2086 = vrot.slane %v2081, %v2085
        %v2088 = vunpack.c.l.s4 1966171168
        %v2089 = vunpack.c.0.s8 %v2088
        %v2090 = vlaneseq
        %v2091 = vshrl.u32 %v2090, 7
        %v2092 = vsub.s32 %v2089, %v2091
        %v2093 = vrot.slane %v1455, %v2092
        %v2095 = vunpack.c.l.s4 1966171168
        %v2096 = vunpack.c.0.s8 %v2095
        %v2097 = vlaneseq
        %v2098 = vshrl.u32 %v2097, 7
        %v2099 = vsub.s32 %v2096, %v2098
        %v2100 = vrot.slane %v2093, %v2099
        %v2102 = vunpack.c.l.s4 1966171168
        %v2103 = vunpack.c.0.s8 %v2102
        %v2104 = vlaneseq
        %v2105 = vshrl.u32 %v2104, 7
        %v2106 = vsub.s32 %v2103, %v2105
        %v2107 = vrot.slane %v1456, %v2106
        %v2109 = vunpack.c.l.s4 1966171168
        %v2110 = vunpack.c.0.s8 %v2109
        %v2111 = vlaneseq
        %v2112 = vshrl.u32 %v2111, 7
        %v2113 = vsub.s32 %v2110, %v2112
        %v2114 = vrot.slane %v2107, %v2113
        %v2117 = vmul.f32 %v2077, %v2100
        %v2118 = vmul.f32 %v2086, %v2114
        %v2119 = vadd.f32 %v2065, %v2117
        %v2120 = vadd.f32 %v2066, %v2118
        %v2123 = vunpack.c.l.s4 1966171168
        %v2124 = vunpack.c.0.s8 %v2123
        %v2125 = vlaneseq
        %v2126 = vshrl.u32 %v2125, 7
        %v2127 = vsub.s32 %v2124, %v2126
        %v2128 = vrot.slane %v2011, %v2127
        %v2129 = vcombine.high %v2128, %v2128
        %v2131 = vunpack.c.l.s4 1966171168
        %v2132 = vunpack.c.0.s8 %v2131
        %v2133 = vlaneseq
        %v2134 = vshrl.u32 %v2133, 7
        %v2135 = vsub.s32 %v2132, %v2134
        %v2136 = vrot.slane %v2128, %v2135
        %v2138 = vunpack.c.l.s4 1966171168
        %v2139 = vunpack.c.0.s8 %v2138
        %v2140 = vlaneseq
        %v2141 = vshrl.u32 %v2140, 7
        %v2142 = vsub.s32 %v2139, %v2141
        %v2143 = vrot.slane %v2129, %v2142
        %2144 = vrot.lane.b32.xlu0 %v2136, 96
        %v2145 = vpop.permute.xlu0 %2144
        %2146 = vrot.lane.b32.xlu0 %v2143, 96
        %v2147 = vpop.permute.xlu0 %2146
        %v2150 = vmul.f32 %v2026, %v2145
        %v2151 = vmul.f32 %v2035, %v2147
        %v2153 = vunpack.c.l.s4 1966171168
        %v2154 = vunpack.c.0.s8 %v2153
        %v2155 = vlaneseq
        %v2156 = vshrl.u32 %v2155, 7
        %v2157 = vsub.s32 %v2154, %v2156
        %v2158 = vrot.slane %v1457, %v2157
        %v2160 = vunpack.c.l.s4 1966171168
        %v2161 = vunpack.c.0.s8 %v2160
        %v2162 = vlaneseq
        %v2163 = vshrl.u32 %v2162, 7
        %v2164 = vsub.s32 %v2161, %v2163
        %v2165 = vrot.slane %v2158, %v2164
        %v2167 = vunpack.c.l.s4 1966171168
        %v2168 = vunpack.c.0.s8 %v2167
        %v2169 = vlaneseq
        %v2170 = vshrl.u32 %v2169, 7
        %v2171 = vsub.s32 %v2168, %v2170
        %v2172 = vrot.slane %v1458, %v2171
        %v2174 = vunpack.c.l.s4 1966171168
        %v2175 = vunpack.c.0.s8 %v2174
        %v2176 = vlaneseq
        %v2177 = vshrl.u32 %v2176, 7
        %v2178 = vsub.s32 %v2175, %v2177
        %v2179 = vrot.slane %v2172, %v2178
        %v2182 = vmul.f32 %v2077, %v2165
        %v2183 = vmul.f32 %v2086, %v2179
        %v2184 = vadd.f32 %v2150, %v2182
        %v2185 = vadd.f32 %v2151, %v2183
        %v2188 = vlaneseq
        %v2189 = vshrl.u32 %v2188, 7
        %v2190 = vsub.s32 0, %v2189
        %v2191 = vrot.slane %v2065, %v2190
        %v2192 = vlaneseq
        %v2193 = vshrl.u32 %v2192, 7
        %v2194 = vsub.s32 0, %v2193
        %v2195 = vrot.slane %v2066, %v2194
        %2196 = vrot.lane.b32.xlu0 %v2191, 32
        %v2197 = vpop.permute.xlu0 %2196
        %2198 = vrot.lane.b32.xlu0 %v2195, 32
        %v2199 = vpop.permute.xlu0 %2198
        %vm2202 = vcmask 516352
        %2203 = vst.msk [vmem:[%s496 + $0x7] sm:$0x1] %vm2202, %v2197
        %2204 = vst.msk [vmem:[%s496 + $0xf] sm:$0x1] %vm2202, %v2199
        %vm2205 = vcmp.gt.s32.totalorder %v526, 1
        %vm2206 = vcmp.gt.s32.totalorder %v527, 1
        %v2207 = vsel %vm2205, 1, 0
        %v2208 = vsel %vm2206, 1, 0
        %v2209 = vcvt.s32.f32 %v2207
        %v2210 = vcvt.s32.f32 %v2208
        %v2213 = vcombine.low %v1755, %v1756
        %v2215 = vunpack.c.l.s4 1966171168
        %v2216 = vunpack.c.0.s8 %v2215
        %v2217 = vlaneseq
        %v2218 = vshrl.u32 %v2217, 7
        %v2219 = vsub.s32 %v2216, %v2218
        %v2220 = vrot.slane %v2213, %v2219
        %v2222 = vunpack.c.l.s4 1966171168
        %v2223 = vunpack.c.0.s8 %v2222
        %v2224 = vlaneseq
        %v2225 = vshrl.u32 %v2224, 7
        %v2226 = vsub.s32 %v2223, %v2225
        %v2227 = vrot.slane %v2220, %v2226
        %v2228 = vsel %vm1470, %v2227, 0
        %2230 = vmatprep.subr.mxu0 0.0
        %2231 = vmatpush1.msra.mxu0 %v1437
        %2232 = vmatprep.subr.mxu0 0.0
        %2233 = vmatpush1.msra.mxu0 %v1438
        %2234 = vmatprep.subr.mxu0 0.0
        %2235 = vmatpush1.msra.mxu0 %v1439
        %2236 = vmatprep.subr.mxu0 0.0
        %2237 = vmatpush1.msra.mxu0 %v1440
        %2238 = vmatprep.subr.mxu0 0.0
        %2239 = vmatpush1.msra.mxu0 0.0
        %2240 = vmatprep.subr.mxu0 0.0
        %2241 = vmatpush1.msra.mxu0 0.0
        %2242 = vmatprep.subr.mxu0 0.0
        %2243 = vmatpush1.msra.mxu0 0.0
        %2244 = vmatprep.subr.mxu0 0.0
        %2245 = vmatpush1.msra.mxu0 0.0
        %2246 = vmatprep.subr.mxu0 0.0
        %2247 = vmatpush1.msra.mxu0 0.0
        %2248 = vmatprep.subr.mxu0 0.0
        %2249 = vmatpush1.msra.mxu0 0.0
        %2250 = vmatprep.subr.mxu0 0.0
        %2251 = vmatpush1.msra.mxu0 0.0
        %2252 = vmatprep.subr.mxu0 0.0
        %2253 = vmatpush1.msra.mxu0 0.0
        %2254 = vmatprep.subr.mxu0 0.0
        %2255 = vmatpush1.msra.mxu0 0.0
        %2256 = vmatprep.subr.mxu0 0.0
        %2257 = vmatpush1.msra.mxu0 0.0
        %2258 = vmatprep.subr.mxu0 0.0
        %2259 = vmatpush1.msra.mxu0 0.0
        %2260 = vmatprep.subr.mxu0 0.0
        %2261 = vmatpush1.msra.mxu0 0.0
        %2262 = vmatprep.subr.mxu0 0.0
        %2263 = vmatpush1.msra.mxu0 0.0
        %2264 = vmatprep.subr.mxu0 0.0
        %2265 = vmatpush1.msra.mxu0 0.0
        %2266 = vmatprep.subr.mxu0 0.0
        %2267 = vmatpush1.msra.mxu0 0.0
        %2268 = vmatprep.subr.mxu0 0.0
        %2269 = vmatpush1.msra.mxu0 0.0
        %2270 = vmatprep.subr.mxu0 0.0
        %2271 = vmatpush1.msra.mxu0 0.0
        %2272 = vmatprep.subr.mxu0 0.0
        %2273 = vmatpush1.msra.mxu0 0.0
        %2274 = vmatprep.subr.mxu0 0.0
        %2275 = vmatpush1.msra.mxu0 0.0
        %2276 = vmatprep.subr.mxu0 0.0
        %2277 = vmatpush1.msra.mxu0 0.0
        %2278 = vmatprep.subr.mxu0 0.0
        %2279 = vmatpush1.msra.mxu0 0.0
        %2280 = vmatprep.subr.mxu0 0.0
        %2281 = vmatpush1.msra.mxu0 0.0
        %2282 = vmatprep.subr.mxu0 0.0
        %2283 = vmatpush1.msra.mxu0 0.0
        %2284 = vmatprep.subr.mxu0 0.0
        %2285 = vmatpush1.msra.mxu0 0.0
        %2286 = vmatprep.subr.mxu0 0.0
        %2287 = vmatpush1.msra.mxu0 0.0
        %2288 = vmatprep.subr.mxu0 0.0
        %2289 = vmatpush1.msra.mxu0 0.0
        %2290 = vmatprep.subr.mxu0 0.0
        %2291 = vmatpush1.msra.mxu0 0.0
        %2292 = vmatprep.subr.mxu0 0.0
        %2293 = vmatpush1.msra.mxu0 0.0
        %2294 = vmatprep.mubr.f32.mxu0 0.0
        %2295 = vmatmul.mubr.f32.gmra.mrb[0].mxu0 %v2228
        %v2296 = vpop.f32.mrb[0].mxu0
        %v2297 = vadd.f32 0.0, %v2296
        %v2298 = vpop.f32.mrb[0].mxu0
        %2299 = vdwg.mxu0
        %v2301 = vsel %vm1470, %v776, 0
        %2303 = vmatprep.subr.mxu0 0.0
        %2304 = vmatpush1.msra.mxu0 %v1433
        %2305 = vmatprep.subr.mxu0 0.0
        %2306 = vmatpush1.msra.mxu0 %v1434
        %2307 = vmatprep.subr.mxu0 0.0
        %2308 = vmatpush1.msra.mxu0 %v1435
        %2309 = vmatprep.subr.mxu0 0.0
        %2310 = vmatpush1.msra.mxu0 %v1436
        %2311 = vmatprep.subr.mxu0 0.0
        %2312 = vmatpush1.msra.mxu0 0.0
        %2313 = vmatprep.subr.mxu0 0.0
        %2314 = vmatpush1.msra.mxu0 0.0
        %2315 = vmatprep.subr.mxu0 0.0
        %2316 = vmatpush1.msra.mxu0 0.0
        %2317 = vmatprep.subr.mxu0 0.0
        %2318 = vmatpush1.msra.mxu0 0.0
        %2319 = vmatprep.subr.mxu0 0.0
        %2320 = vmatpush1.msra.mxu0 0.0
        %2321 = vmatprep.subr.mxu0 0.0
        %2322 = vmatpush1.msra.mxu0 0.0
        %2323 = vmatprep.subr.mxu0 0.0
        %2324 = vmatpush1.msra.mxu0 0.0
        %2325 = vmatprep.subr.mxu0 0.0
        %2326 = vmatpush1.msra.mxu0 0.0
        %2327 = vmatprep.subr.mxu0 0.0
        %2328 = vmatpush1.msra.mxu0 0.0
        %2329 = vmatprep.subr.mxu0 0.0
        %2330 = vmatpush1.msra.mxu0 0.0
        %2331 = vmatprep.subr.mxu0 0.0
        %2332 = vmatpush1.msra.mxu0 0.0
        %2333 = vmatprep.subr.mxu0 0.0
        %2334 = vmatpush1.msra.mxu0 0.0
        %2335 = vmatprep.subr.mxu0 0.0
        %2336 = vmatpush1.msra.mxu0 0.0
        %2337 = vmatprep.subr.mxu0 0.0
        %2338 = vmatpush1.msra.mxu0 0.0
        %2339 = vmatprep.subr.mxu0 0.0
        %2340 = vmatpush1.msra.mxu0 0.0
        %2341 = vmatprep.subr.mxu0 0.0
        %2342 = vmatpush1.msra.mxu0 0.0
        %2343 = vmatprep.subr.mxu0 0.0
        %2344 = vmatpush1.msra.mxu0 0.0
        %2345 = vmatprep.subr.mxu0 0.0
        %2346 = vmatpush1.msra.mxu0 0.0
        %2347 = vmatprep.subr.mxu0 0.0
        %2348 = vmatpush1.msra.mxu0 0.0
        %2349 = vmatprep.subr.mxu0 0.0
        %2350 = vmatpush1.msra.mxu0 0.0
        %2351 = vmatprep.subr.mxu0 0.0
        %2352 = vmatpush1.msra.mxu0 0.0
        %2353 = vmatprep.subr.mxu0 0.0
        %2354 = vmatpush1.msra.mxu0 0.0
        %2355 = vmatprep.subr.mxu0 0.0
        %2356 = vmatpush1.msra.mxu0 0.0
        %2357 = vmatprep.subr.mxu0 0.0
        %2358 = vmatpush1.msra.mxu0 0.0
        %2359 = vmatprep.subr.mxu0 0.0
        %2360 = vmatpush1.msra.mxu0 0.0
        %2361 = vmatprep.subr.mxu0 0.0
        %2362 = vmatpush1.msra.mxu0 0.0
        %2363 = vmatprep.subr.mxu0 0.0
        %2364 = vmatpush1.msra.mxu0 0.0
        %2365 = vmatprep.subr.mxu0 0.0
        %2366 = vmatpush1.msra.mxu0 0.0
        %2367 = vmatprep.mubr.f32.mxu0 0.0
        %2368 = vmatmul.mubr.f32.gmra.mrb[0].mxu0 %v2301
        %v2369 = vpop.f32.mrb[0].mxu0
        %v2370 = vadd.f32 %v2297, %v2369
        %v2371 = vpop.f32.mrb[0].mxu0
        %2372 = vdwg.mxu0
        %v2373 = vadd.f32 %v2370, %v1620
        %v2374 = vxor.u32 %v2373, 2147483648
        %v2375 = vmul.f32 %v2374, 1.442695
        %v2376 = vpow.pop %v2375
        %v2377 = vadd.f32 %v2376, 1.0
        %v2378 = vrcp.pop %v2377
        %v2379 = vmul.f32 1.0, %v2378
        %v2380 = vtanh.pop %v2373
        %v2383 = vcombine.low %v1820, %v1821
        %v2385 = vunpack.c.l.s4 1966171168
        %v2386 = vunpack.c.0.s8 %v2385
        %v2387 = vlaneseq
        %v2388 = vshrl.u32 %v2387, 7
        %v2389 = vsub.s32 %v2386, %v2388
        %v2390 = vrot.slane %v2383, %v2389
        %v2392 = vunpack.c.l.s4 1966171168
        %v2393 = vunpack.c.0.s8 %v2392
        %v2394 = vlaneseq
        %v2395 = vshrl.u32 %v2394, 7
        %v2396 = vsub.s32 %v2393, %v2395
        %v2397 = vrot.slane %v2390, %v2396
        %2398 = vrot.lane.b32.xlu0 %v2397, 32
        %v2399 = vpop.permute.xlu0 %2398
        %v2401 = vmul.f32 %v2379, %v2399
        %2403 = vrot.lane.b32.xlu0 %v2380, 64
        %v2404 = vpop.permute.xlu0 %2403
        %v2406 = vmul.f32 %v2379, %v2404
        %2408 = vrot.lane.b32.xlu0 %v2406, 32
        %v2409 = vpop.permute.xlu0 %2408
        %v2411 = vadd.f32 %v2401, %v2409
        %v2412 = vtanh.pop %v2411
        %2414 = vrot.lane.b32.xlu0 %v2412, 64
        %v2415 = vpop.permute.xlu0 %2414
        %v2417 = vmul.f32 %v2379, %v2415
        %2419 = vset.pattern.permute.xlu0 0
        %2420 = vperm.xlu0 %2419, %v2209
        %v2421 = vpop.permute.xlu0 %2420
        %v2423 = vlaneseq
        %v2424 = vshrl.u32 %v2423, 7
        %v2425 = vsub.s32 0, %v2424
        %v2426 = vrot.slane %v2421, %v2425
        %2428 = vset.pattern.permute.xlu0 0
        %2429 = vperm.xlu0 %2428, %v2210
        %v2430 = vpop.permute.xlu0 %2429
        %v2432 = vlaneseq
        %v2433 = vshrl.u32 %v2432, 7
        %v2434 = vsub.s32 0, %v2433
        %v2435 = vrot.slane %v2430, %v2434
        %v2438 = vunpack.c.l.s4 1966171168
        %v2439 = vunpack.c.0.s8 %v2438
        %v2440 = vlaneseq
        %v2441 = vshrl.u32 %v2440, 7
        %v2442 = vsub.s32 %v2439, %v2441
        %v2443 = vrot.slane %v2417, %v2442
        %v2444 = vcombine.high %v2443, %v2443
        %v2446 = vunpack.c.l.s4 1966171168
        %v2447 = vunpack.c.0.s8 %v2446
        %v2448 = vlaneseq
        %v2449 = vshrl.u32 %v2448, 7
        %v2450 = vsub.s32 %v2447, %v2449
        %v2451 = vrot.slane %v2443, %v2450
        %v2453 = vunpack.c.l.s4 1966171168
        %v2454 = vunpack.c.0.s8 %v2453
        %v2455 = vlaneseq
        %v2456 = vshrl.u32 %v2455, 7
        %v2457 = vsub.s32 %v2454, %v2456
        %v2458 = vrot.slane %v2444, %v2457
        %2459 = vrot.lane.b32.xlu0 %v2451, 32
        %v2460 = vpop.permute.xlu0 %2459
        %2461 = vrot.lane.b32.xlu0 %v2458, 32
        %v2462 = vpop.permute.xlu0 %2461
        %v2465 = vmul.f32 %v2426, %v2460
        %v2466 = vmul.f32 %v2435, %v2462
        %v2467 = vsub.f32 1.0, %v2209
        %v2468 = vsub.f32 1.0, %v2210
        %2470 = vset.pattern.permute.xlu0 0
        %2471 = vperm.xlu0 %2470, %v2467
        %v2472 = vpop.permute.xlu0 %2471
        %v2474 = vlaneseq
        %v2475 = vshrl.u32 %v2474, 7
        %v2476 = vsub.s32 0, %v2475
        %v2477 = vrot.slane %v2472, %v2476
        %2479 = vset.pattern.permute.xlu0 0
        %2480 = vperm.xlu0 %2479, %v2468
        %v2481 = vpop.permute.xlu0 %2480
        %v2483 = vlaneseq
        %v2484 = vshrl.u32 %v2483, 7
        %v2485 = vsub.s32 0, %v2484
        %v2486 = vrot.slane %v2481, %v2485
        %v2487 = vmul.f32 %v2477, %v1755
        %v2488 = vmul.f32 %v2486, %v1756
        %v2489 = vadd.f32 %v2465, %v2487
        %v2490 = vadd.f32 %v2466, %v2488
        %v2493 = vunpack.c.l.s4 1966171168
        %v2494 = vunpack.c.0.s8 %v2493
        %v2495 = vlaneseq
        %v2496 = vshrl.u32 %v2495, 7
        %v2497 = vsub.s32 %v2494, %v2496
        %v2498 = vrot.slane %v2411, %v2497
        %v2499 = vcombine.high %v2498, %v2498
        %v2501 = vunpack.c.l.s4 1966171168
        %v2502 = vunpack.c.0.s8 %v2501
        %v2503 = vlaneseq
        %v2504 = vshrl.u32 %v2503, 7
        %v2505 = vsub.s32 %v2502, %v2504
        %v2506 = vrot.slane %v2498, %v2505
        %v2508 = vunpack.c.l.s4 1966171168
        %v2509 = vunpack.c.0.s8 %v2508
        %v2510 = vlaneseq
        %v2511 = vshrl.u32 %v2510, 7
        %v2512 = vsub.s32 %v2509, %v2511
        %v2513 = vrot.slane %v2499, %v2512
        %2514 = vrot.lane.b32.xlu0 %v2506, 96
        %v2515 = vpop.permute.xlu0 %2514
        %2516 = vrot.lane.b32.xlu0 %v2513, 96
        %v2517 = vpop.permute.xlu0 %2516
        %v2520 = vmul.f32 %v2426, %v2515
        %v2521 = vmul.f32 %v2435, %v2517
        %v2522 = vmul.f32 %v2477, %v1820
        %v2523 = vmul.f32 %v2486, %v1821
        %v2524 = vadd.f32 %v2520, %v2522
        %v2525 = vadd.f32 %v2521, %v2523
        %2526 = vst.msk [vmem:[%s496 + $0x1] sm:$0x1] %vm1822, %v2465
        %2527 = vst.msk [vmem:[%s496 + $0x9] sm:$0x1] %vm1822, %v2466
        %vm2528 = vcmp.gt.s32.totalorder %v526, 6
        %vm2529 = vcmp.gt.s32.totalorder %v527, 6
        %v2530 = vsel %vm2528, 1, 0
        %v2531 = vsel %vm2529, 1, 0
        %v2532 = vcvt.s32.f32 %v2530
        %v2533 = vcvt.s32.f32 %v2531
        %v2536 = vcombine.low %v2119, %v2120
        %v2538 = vunpack.c.l.s4 1966171168
        %v2539 = vunpack.c.0.s8 %v2538
        %v2540 = vlaneseq
        %v2541 = vshrl.u32 %v2540, 7
        %v2542 = vsub.s32 %v2539, %v2541
        %v2543 = vrot.slane %v2536, %v2542
        %v2545 = vunpack.c.l.s4 1966171168
        %v2546 = vunpack.c.0.s8 %v2545
        %v2547 = vlaneseq
        %v2548 = vshrl.u32 %v2547, 7
        %v2549 = vsub.s32 %v2546, %v2548
        %v2550 = vrot.slane %v2543, %v2549
        %v2551 = vsel %vm1470, %v2550, 0
        %2553 = vmatprep.subr.mxu0 0.0
        %2554 = vmatpush1.msra.mxu0 %v1446
        %2555 = vmatprep.subr.mxu0 0.0
        %2556 = vmatpush1.msra.mxu0 %v1447
        %2557 = vmatprep.subr.mxu0 0.0
        %2558 = vmatpush1.msra.mxu0 %v1448
        %2559 = vmatprep.subr.mxu0 0.0
        %2560 = vmatpush1.msra.mxu0 %v1449
        %2561 = vmatprep.subr.mxu0 0.0
        %2562 = vmatpush1.msra.mxu0 0.0
        %2563 = vmatprep.subr.mxu0 0.0
        %2564 = vmatpush1.msra.mxu0 0.0
        %2565 = vmatprep.subr.mxu0 0.0
        %2566 = vmatpush1.msra.mxu0 0.0
        %2567 = vmatprep.subr.mxu0 0.0
        %2568 = vmatpush1.msra.mxu0 0.0
        %2569 = vmatprep.subr.mxu0 0.0
        %2570 = vmatpush1.msra.mxu0 0.0
        %2571 = vmatprep.subr.mxu0 0.0
        %2572 = vmatpush1.msra.mxu0 0.0
        %2573 = vmatprep.subr.mxu0 0.0
        %2574 = vmatpush1.msra.mxu0 0.0
        %2575 = vmatprep.subr.mxu0 0.0
        %2576 = vmatpush1.msra.mxu0 0.0
        %2577 = vmatprep.subr.mxu0 0.0
        %2578 = vmatpush1.msra.mxu0 0.0
        %2579 = vmatprep.subr.mxu0 0.0
        %2580 = vmatpush1.msra.mxu0 0.0
        %2581 = vmatprep.subr.mxu0 0.0
        %2582 = vmatpush1.msra.mxu0 0.0
        %2583 = vmatprep.subr.mxu0 0.0
        %2584 = vmatpush1.msra.mxu0 0.0
        %2585 = vmatprep.subr.mxu0 0.0
        %2586 = vmatpush1.msra.mxu0 0.0
        %2587 = vmatprep.subr.mxu0 0.0
        %2588 = vmatpush1.msra.mxu0 0.0
        %2589 = vmatprep.subr.mxu0 0.0
        %2590 = vmatpush1.msra.mxu0 0.0
        %2591 = vmatprep.subr.mxu0 0.0
        %2592 = vmatpush1.msra.mxu0 0.0
        %2593 = vmatprep.subr.mxu0 0.0
        %2594 = vmatpush1.msra.mxu0 0.0
        %2595 = vmatprep.subr.mxu0 0.0
        %2596 = vmatpush1.msra.mxu0 0.0
        %2597 = vmatprep.subr.mxu0 0.0
        %2598 = vmatpush1.msra.mxu0 0.0
        %2599 = vmatprep.subr.mxu0 0.0
        %2600 = vmatpush1.msra.mxu0 0.0
        %2601 = vmatprep.subr.mxu0 0.0
        %2602 = vmatpush1.msra.mxu0 0.0
        %2603 = vmatprep.subr.mxu0 0.0
        %2604 = vmatpush1.msra.mxu0 0.0
        %2605 = vmatprep.subr.mxu0 0.0
        %2606 = vmatpush1.msra.mxu0 0.0
        %2607 = vmatprep.subr.mxu0 0.0
        %2608 = vmatpush1.msra.mxu0 0.0
        %2609 = vmatprep.subr.mxu0 0.0
        %2610 = vmatpush1.msra.mxu0 0.0
        %2611 = vmatprep.subr.mxu0 0.0
        %2612 = vmatpush1.msra.mxu0 0.0
        %2613 = vmatprep.subr.mxu0 0.0
        %2614 = vmatpush1.msra.mxu0 0.0
        %2615 = vmatprep.subr.mxu0 0.0
        %2616 = vmatpush1.msra.mxu0 0.0
        %2617 = vmatprep.mubr.f32.mxu0 0.0
        %2618 = vmatmul.mubr.f32.gmra.mrb[0].mxu0 %v2551
        %v2619 = vpop.f32.mrb[0].mxu0
        %v2620 = vadd.f32 0.0, %v2619
        %v2621 = vpop.f32.mrb[0].mxu0
        %2622 = vdwg.mxu0
        %v2624 = vsel %vm1470, %v1321, 0
        %2626 = vmatprep.subr.mxu0 0.0
        %2627 = vmatpush1.msra.mxu0 %v1442
        %2628 = vmatprep.subr.mxu0 0.0
        %2629 = vmatpush1.msra.mxu0 %v1443
        %2630 = vmatprep.subr.mxu0 0.0
        %2631 = vmatpush1.msra.mxu0 %v1444
        %2632 = vmatprep.subr.mxu0 0.0
        %2633 = vmatpush1.msra.mxu0 %v1445
        %2634 = vmatprep.subr.mxu0 0.0
        %2635 = vmatpush1.msra.mxu0 0.0
        %2636 = vmatprep.subr.mxu0 0.0
        %2637 = vmatpush1.msra.mxu0 0.0
        %2638 = vmatprep.subr.mxu0 0.0
        %2639 = vmatpush1.msra.mxu0 0.0
        %2640 = vmatprep.subr.mxu0 0.0
        %2641 = vmatpush1.msra.mxu0 0.0
        %2642 = vmatprep.subr.mxu0 0.0
        %2643 = vmatpush1.msra.mxu0 0.0
        %2644 = vmatprep.subr.mxu0 0.0
        %2645 = vmatpush1.msra.mxu0 0.0
        %2646 = vmatprep.subr.mxu0 0.0
        %2647 = vmatpush1.msra.mxu0 0.0
        %2648 = vmatprep.subr.mxu0 0.0
        %2649 = vmatpush1.msra.mxu0 0.0
        %2650 = vmatprep.subr.mxu0 0.0
        %2651 = vmatpush1.msra.mxu0 0.0
        %2652 = vmatprep.subr.mxu0 0.0
        %2653 = vmatpush1.msra.mxu0 0.0
        %2654 = vmatprep.subr.mxu0 0.0
        %2655 = vmatpush1.msra.mxu0 0.0
        %2656 = vmatprep.subr.mxu0 0.0
        %2657 = vmatpush1.msra.mxu0 0.0
        %2658 = vmatprep.subr.mxu0 0.0
        %2659 = vmatpush1.msra.mxu0 0.0
        %2660 = vmatprep.subr.mxu0 0.0
        %2661 = vmatpush1.msra.mxu0 0.0
        %2662 = vmatprep.subr.mxu0 0.0
        %2663 = vmatpush1.msra.mxu0 0.0
        %2664 = vmatprep.subr.mxu0 0.0
        %2665 = vmatpush1.msra.mxu0 0.0
        %2666 = vmatprep.subr.mxu0 0.0
        %2667 = vmatpush1.msra.mxu0 0.0
        %2668 = vmatprep.subr.mxu0 0.0
        %2669 = vmatpush1.msra.mxu0 0.0
        %2670 = vmatprep.subr.mxu0 0.0
        %2671 = vmatpush1.msra.mxu0 0.0
        %2672 = vmatprep.subr.mxu0 0.0
        %2673 = vmatpush1.msra.mxu0 0.0
        %2674 = vmatprep.subr.mxu0 0.0
        %2675 = vmatpush1.msra.mxu0 0.0
        %2676 = vmatprep.subr.mxu0 0.0
        %2677 = vmatpush1.msra.mxu0 0.0
        %2678 = vmatprep.subr.mxu0 0.0
        %2679 = vmatpush1.msra.mxu0 0.0
        %2680 = vmatprep.subr.mxu0 0.0
        %2681 = vmatpush1.msra.mxu0 0.0
        %2682 = vmatprep.subr.mxu0 0.0
        %2683 = vmatpush1.msra.mxu0 0.0
        %2684 = vmatprep.subr.mxu0 0.0
        %2685 = vmatpush1.msra.mxu0 0.0
        %2686 = vmatprep.subr.mxu0 0.0
        %2687 = vmatpush1.msra.mxu0 0.0
        %2688 = vmatprep.subr.mxu0 0.0
        %2689 = vmatpush1.msra.mxu0 0.0
        %2690 = vmatprep.mubr.f32.mxu0 0.0
        %2691 = vmatmul.mubr.f32.gmra.mrb[0].mxu0 %v2624
        %v2692 = vpop.f32.mrb[0].mxu0
        %v2693 = vadd.f32 %v2620, %v2692
        %v2694 = vpop.f32.mrb[0].mxu0
        %2695 = vdwg.mxu0
        %v2696 = vadd.f32 %v2693, %v1984
        %v2697 = vxor.u32 %v2696, 2147483648
        %v2698 = vmul.f32 %v2697, 1.442695
        %v2699 = vpow.pop %v2698
        %v2700 = vadd.f32 %v2699, 1.0
        %v2701 = vrcp.pop %v2700
        %v2702 = vmul.f32 1.0, %v2701
        %v2703 = vtanh.pop %v2696
        %v2706 = vcombine.low %v2184, %v2185
        %v2708 = vunpack.c.l.s4 1966171168
        %v2709 = vunpack.c.0.s8 %v2708
        %v2710 = vlaneseq
        %v2711 = vshrl.u32 %v2710, 7
        %v2712 = vsub.s32 %v2709, %v2711
        %v2713 = vrot.slane %v2706, %v2712
        %v2715 = vunpack.c.l.s4 1966171168
        %v2716 = vunpack.c.0.s8 %v2715
        %v2717 = vlaneseq
        %v2718 = vshrl.u32 %v2717, 7
        %v2719 = vsub.s32 %v2716, %v2718
        %v2720 = vrot.slane %v2713, %v2719
        %2721 = vrot.lane.b32.xlu0 %v2720, 32
        %v2722 = vpop.permute.xlu0 %2721
        %v2724 = vmul.f32 %v2702, %v2722
        %2726 = vrot.lane.b32.xlu0 %v2703, 64
        %v2727 = vpop.permute.xlu0 %2726
        %v2729 = vmul.f32 %v2702, %v2727
        %2731 = vrot.lane.b32.xlu0 %v2729, 32
        %v2732 = vpop.permute.xlu0 %2731
        %v2734 = vadd.f32 %v2724, %v2732
        %v2735 = vtanh.pop %v2734
        %2737 = vrot.lane.b32.xlu0 %v2735, 64
        %v2738 = vpop.permute.xlu0 %2737
        %v2740 = vmul.f32 %v2702, %v2738
        %2742 = vset.pattern.permute.xlu0 0
        %2743 = vperm.xlu0 %2742, %v2532
        %v2744 = vpop.permute.xlu0 %2743
        %v2746 = vlaneseq
        %v2747 = vshrl.u32 %v2746, 7
        %v2748 = vsub.s32 0, %v2747
        %v2749 = vrot.slane %v2744, %v2748
        %2751 = vset.pattern.permute.xlu0 0
        %2752 = vperm.xlu0 %2751, %v2533
        %v2753 = vpop.permute.xlu0 %2752
        %v2755 = vlaneseq
        %v2756 = vshrl.u32 %v2755, 7
        %v2757 = vsub.s32 0, %v2756
        %v2758 = vrot.slane %v2753, %v2757
        %v2761 = vunpack.c.l.s4 1966171168
        %v2762 = vunpack.c.0.s8 %v2761
        %v2763 = vlaneseq
        %v2764 = vshrl.u32 %v2763, 7
        %v2765 = vsub.s32 %v2762, %v2764
        %v2766 = vrot.slane %v2740, %v2765
        %v2767 = vcombine.high %v2766, %v2766
        %v2769 = vunpack.c.l.s4 1966171168
        %v2770 = vunpack.c.0.s8 %v2769
        %v2771 = vlaneseq
        %v2772 = vshrl.u32 %v2771, 7
        %v2773 = vsub.s32 %v2770, %v2772
        %v2774 = vrot.slane %v2766, %v2773
        %v2776 = vunpack.c.l.s4 1966171168
        %v2777 = vunpack.c.0.s8 %v2776
        %v2778 = vlaneseq
        %v2779 = vshrl.u32 %v2778, 7
        %v2780 = vsub.s32 %v2777, %v2779
        %v2781 = vrot.slane %v2767, %v2780
        %2782 = vrot.lane.b32.xlu0 %v2774, 32
        %v2783 = vpop.permute.xlu0 %2782
        %2784 = vrot.lane.b32.xlu0 %v2781, 32
        %v2785 = vpop.permute.xlu0 %2784
        %v2788 = vmul.f32 %v2749, %v2783
        %v2789 = vmul.f32 %v2758, %v2785
        %v2790 = vsub.f32 1.0, %v2532
        %v2791 = vsub.f32 1.0, %v2533
        %2793 = vset.pattern.permute.xlu0 0
        %2794 = vperm.xlu0 %2793, %v2790
        %v2795 = vpop.permute.xlu0 %2794
        %v2797 = vlaneseq
        %v2798 = vshrl.u32 %v2797, 7
        %v2799 = vsub.s32 0, %v2798
        %v2800 = vrot.slane %v2795, %v2799
        %2802 = vset.pattern.permute.xlu0 0
        %2803 = vperm.xlu0 %2802, %v2791
        %v2804 = vpop.permute.xlu0 %2803
        %v2806 = vlaneseq
        %v2807 = vshrl.u32 %v2806, 7
        %v2808 = vsub.s32 0, %v2807
        %v2809 = vrot.slane %v2804, %v2808
        %v2810 = vmul.f32 %v2800, %v2119
        %v2811 = vmul.f32 %v2809, %v2120
        %v2812 = vadd.f32 %v2788, %v2810
        %v2813 = vadd.f32 %v2789, %v2811
        %v2816 = vunpack.c.l.s4 1966171168
        %v2817 = vunpack.c.0.s8 %v2816
        %v2818 = vlaneseq
        %v2819 = vshrl.u32 %v2818, 7
        %v2820 = vsub.s32 %v2817, %v2819
        %v2821 = vrot.slane %v2734, %v2820
        %v2822 = vcombine.high %v2821, %v2821
        %v2824 = vunpack.c.l.s4 1966171168
        %v2825 = vunpack.c.0.s8 %v2824
        %v2826 = vlaneseq
        %v2827 = vshrl.u32 %v2826, 7
        %v2828 = vsub.s32 %v2825, %v2827
        %v2829 = vrot.slane %v2821, %v2828
        %v2831 = vunpack.c.l.s4 1966171168
        %v2832 = vunpack.c.0.s8 %v2831
        %v2833 = vlaneseq
        %v2834 = vshrl.u32 %v2833, 7
        %v2835 = vsub.s32 %v2832, %v2834
        %v2836 = vrot.slane %v2822, %v2835
        %2837 = vrot.lane.b32.xlu0 %v2829, 96
        %v2838 = vpop.permute.xlu0 %2837
        %2839 = vrot.lane.b32.xlu0 %v2836, 96
        %v2840 = vpop.permute.xlu0 %2839
        %v2843 = vmul.f32 %v2749, %v2838
        %v2844 = vmul.f32 %v2758, %v2840
        %v2845 = vmul.f32 %v2800, %v2184
        %v2846 = vmul.f32 %v2809, %v2185
        %v2847 = vadd.f32 %v2843, %v2845
        %v2848 = vadd.f32 %v2844, %v2846
        %v2851 = vlaneseq
        %v2852 = vshrl.u32 %v2851, 7
        %v2853 = vsub.s32 0, %v2852
        %v2854 = vrot.slane %v2788, %v2853
        %v2855 = vlaneseq
        %v2856 = vshrl.u32 %v2855, 7
        %v2857 = vsub.s32 0, %v2856
        %v2858 = vrot.slane %v2789, %v2857
        %2859 = vrot.lane.b32.xlu0 %v2854, 32
        %v2860 = vpop.permute.xlu0 %2859
        %2861 = vrot.lane.b32.xlu0 %v2858, 32
        %v2862 = vpop.permute.xlu0 %2861
        %2865 = vst.msk [vmem:[%s496 + $0x6] sm:$0x1] %vm2202, %v2860
        %2866 = vst.msk [vmem:[%s496 + $0xe] sm:$0x1] %vm2202, %v2862
        %vm2867 = vcmp.gt.s32.totalorder %v526, 2
        %vm2868 = vcmp.gt.s32.totalorder %v527, 2
        %v2869 = vsel %vm2867, 1, 0
        %v2870 = vsel %vm2868, 1, 0
        %v2871 = vcvt.s32.f32 %v2869
        %v2872 = vcvt.s32.f32 %v2870
        %v2875 = vcombine.low %v2489, %v2490
        %v2877 = vunpack.c.l.s4 1966171168
        %v2878 = vunpack.c.0.s8 %v2877
        %v2879 = vlaneseq
        %v2880 = vshrl.u32 %v2879, 7
        %v2881 = vsub.s32 %v2878, %v2880
        %v2882 = vrot.slane %v2875, %v2881
        %v2884 = vunpack.c.l.s4 1966171168
        %v2885 = vunpack.c.0.s8 %v2884
        %v2886 = vlaneseq
        %v2887 = vshrl.u32 %v2886, 7
        %v2888 = vsub.s32 %v2885, %v2887
        %v2889 = vrot.slane %v2882, %v2888
        %v2890 = vsel %vm1470, %v2889, 0
        %2892 = vmatprep.subr.mxu0 0.0
        %2893 = vmatpush1.msra.mxu0 %v1437
        %2894 = vmatprep.subr.mxu0 0.0
        %2895 = vmatpush1.msra.mxu0 %v1438
        %2896 = vmatprep.subr.mxu0 0.0
        %2897 = vmatpush1.msra.mxu0 %v1439
        %2898 = vmatprep.subr.mxu0 0.0
        %2899 = vmatpush1.msra.mxu0 %v1440
        %2900 = vmatprep.subr.mxu0 0.0
        %2901 = vmatpush1.msra.mxu0 0.0
        %2902 = vmatprep.subr.mxu0 0.0
        %2903 = vmatpush1.msra.mxu0 0.0
        %2904 = vmatprep.subr.mxu0 0.0
        %2905 = vmatpush1.msra.mxu0 0.0
        %2906 = vmatprep.subr.mxu0 0.0
        %2907 = vmatpush1.msra.mxu0 0.0
        %2908 = vmatprep.subr.mxu0 0.0
        %2909 = vmatpush1.msra.mxu0 0.0
        %2910 = vmatprep.subr.mxu0 0.0
        %2911 = vmatpush1.msra.mxu0 0.0
        %2912 = vmatprep.subr.mxu0 0.0
        %2913 = vmatpush1.msra.mxu0 0.0
        %2914 = vmatprep.subr.mxu0 0.0
        %2915 = vmatpush1.msra.mxu0 0.0
        %2916 = vmatprep.subr.mxu0 0.0
        %2917 = vmatpush1.msra.mxu0 0.0
        %2918 = vmatprep.subr.mxu0 0.0
        %2919 = vmatpush1.msra.mxu0 0.0
        %2920 = vmatprep.subr.mxu0 0.0
        %2921 = vmatpush1.msra.mxu0 0.0
        %2922 = vmatprep.subr.mxu0 0.0
        %2923 = vmatpush1.msra.mxu0 0.0
        %2924 = vmatprep.subr.mxu0 0.0
        %2925 = vmatpush1.msra.mxu0 0.0
        %2926 = vmatprep.subr.mxu0 0.0
        %2927 = vmatpush1.msra.mxu0 0.0
        %2928 = vmatprep.subr.mxu0 0.0
        %2929 = vmatpush1.msra.mxu0 0.0
        %2930 = vmatprep.subr.mxu0 0.0
        %2931 = vmatpush1.msra.mxu0 0.0
        %2932 = vmatprep.subr.mxu0 0.0
        %2933 = vmatpush1.msra.mxu0 0.0
        %2934 = vmatprep.subr.mxu0 0.0
        %2935 = vmatpush1.msra.mxu0 0.0
        %2936 = vmatprep.subr.mxu0 0.0
        %2937 = vmatpush1.msra.mxu0 0.0
        %2938 = vmatprep.subr.mxu0 0.0
        %2939 = vmatpush1.msra.mxu0 0.0
        %2940 = vmatprep.subr.mxu0 0.0
        %2941 = vmatpush1.msra.mxu0 0.0
        %2942 = vmatprep.subr.mxu0 0.0
        %2943 = vmatpush1.msra.mxu0 0.0
        %2944 = vmatprep.subr.mxu0 0.0
        %2945 = vmatpush1.msra.mxu0 0.0
        %2946 = vmatprep.subr.mxu0 0.0
        %2947 = vmatpush1.msra.mxu0 0.0
        %2948 = vmatprep.subr.mxu0 0.0
        %2949 = vmatpush1.msra.mxu0 0.0
        %2950 = vmatprep.subr.mxu0 0.0
        %2951 = vmatpush1.msra.mxu0 0.0
        %2952 = vmatprep.subr.mxu0 0.0
        %2953 = vmatpush1.msra.mxu0 0.0
        %2954 = vmatprep.subr.mxu0 0.0
        %2955 = vmatpush1.msra.mxu0 0.0
        %2956 = vmatprep.mubr.f32.mxu0 0.0
        %2957 = vmatmul.mubr.f32.gmra.mrb[0].mxu0 %v2890
        %v2958 = vpop.f32.mrb[0].mxu0
        %v2959 = vadd.f32 0.0, %v2958
        %v2960 = vpop.f32.mrb[0].mxu0
        %2961 = vdwg.mxu0
        %v2963 = vsel %vm1470, %v885, 0
        %2965 = vmatprep.subr.mxu0 0.0
        %2966 = vmatpush1.msra.mxu0 %v1433
        %2967 = vmatprep.subr.mxu0 0.0
        %2968 = vmatpush1.msra.mxu0 %v1434
        %2969 = vmatprep.subr.mxu0 0.0
        %2970 = vmatpush1.msra.mxu0 %v1435
        %2971 = vmatprep.subr.mxu0 0.0
        %2972 = vmatpush1.msra.mxu0 %v1436
        %2973 = vmatprep.subr.mxu0 0.0
        %2974 = vmatpush1.msra.mxu0 0.0
        %2975 = vmatprep.subr.mxu0 0.0
        %2976 = vmatpush1.msra.mxu0 0.0
        %2977 = vmatprep.subr.mxu0 0.0
        %2978 = vmatpush1.msra.mxu0 0.0
        %2979 = vmatprep.subr.mxu0 0.0
        %2980 = vmatpush1.msra.mxu0 0.0
        %2981 = vmatprep.subr.mxu0 0.0
        %2982 = vmatpush1.msra.mxu0 0.0
        %2983 = vmatprep.subr.mxu0 0.0
        %2984 = vmatpush1.msra.mxu0 0.0
        %2985 = vmatprep.subr.mxu0 0.0
        %2986 = vmatpush1.msra.mxu0 0.0
        %2987 = vmatprep.subr.mxu0 0.0
        %2988 = vmatpush1.msra.mxu0 0.0
        %2989 = vmatprep.subr.mxu0 0.0
        %2990 = vmatpush1.msra.mxu0 0.0
        %2991 = vmatprep.subr.mxu0 0.0
        %2992 = vmatpush1.msra.mxu0 0.0
        %2993 = vmatprep.subr.mxu0 0.0
        %2994 = vmatpush1.msra.mxu0 0.0
        %2995 = vmatprep.subr.mxu0 0.0
        %2996 = vmatpush1.msra.mxu0 0.0
        %2997 = vmatprep.subr.mxu0 0.0
        %2998 = vmatpush1.msra.mxu0 0.0
        %2999 = vmatprep.subr.mxu0 0.0
        %3000 = vmatpush1.msra.mxu0 0.0
        %3001 = vmatprep.subr.mxu0 0.0
        %3002 = vmatpush1.msra.mxu0 0.0
        %3003 = vmatprep.subr.mxu0 0.0
        %3004 = vmatpush1.msra.mxu0 0.0
        %3005 = vmatprep.subr.mxu0 0.0
        %3006 = vmatpush1.msra.mxu0 0.0
        %3007 = vmatprep.subr.mxu0 0.0
        %3008 = vmatpush1.msra.mxu0 0.0
        %3009 = vmatprep.subr.mxu0 0.0
        %3010 = vmatpush1.msra.mxu0 0.0
        %3011 = vmatprep.subr.mxu0 0.0
        %3012 = vmatpush1.msra.mxu0 0.0
        %3013 = vmatprep.subr.mxu0 0.0
        %3014 = vmatpush1.msra.mxu0 0.0
        %3015 = vmatprep.subr.mxu0 0.0
        %3016 = vmatpush1.msra.mxu0 0.0
        %3017 = vmatprep.subr.mxu0 0.0
        %3018 = vmatpush1.msra.mxu0 0.0
        %3019 = vmatprep.subr.mxu0 0.0
        %3020 = vmatpush1.msra.mxu0 0.0
        %3021 = vmatprep.subr.mxu0 0.0
        %3022 = vmatpush1.msra.mxu0 0.0
        %3023 = vmatprep.subr.mxu0 0.0
        %3024 = vmatpush1.msra.mxu0 0.0
        %3025 = vmatprep.subr.mxu0 0.0
        %3026 = vmatpush1.msra.mxu0 0.0
        %3027 = vmatprep.subr.mxu0 0.0
        %3028 = vmatpush1.msra.mxu0 0.0
        %3029 = vmatprep.mubr.f32.mxu0 0.0
        %3030 = vmatmul.mubr.f32.gmra.mrb[0].mxu0 %v2963
        %v3031 = vpop.f32.mrb[0].mxu0
        %v3032 = vadd.f32 %v2959, %v3031
        %v3033 = vpop.f32.mrb[0].mxu0
        %3034 = vdwg.mxu0
        %v3035 = vadd.f32 %v3032, %v1620
        %v3036 = vxor.u32 %v3035, 2147483648
        %v3037 = vmul.f32 %v3036, 1.442695
        %v3038 = vpow.pop %v3037
        %v3039 = vadd.f32 %v3038, 1.0
        %v3040 = vrcp.pop %v3039
        %v3041 = vmul.f32 1.0, %v3040
        %v3042 = vtanh.pop %v3035
        %v3045 = vcombine.low %v2524, %v2525
        %v3047 = vunpack.c.l.s4 1966171168
        %v3048 = vunpack.c.0.s8 %v3047
        %v3049 = vlaneseq
        %v3050 = vshrl.u32 %v3049, 7
        %v3051 = vsub.s32 %v3048, %v3050
        %v3052 = vrot.slane %v3045, %v3051
        %v3054 = vunpack.c.l.s4 1966171168
        %v3055 = vunpack.c.0.s8 %v3054
        %v3056 = vlaneseq
        %v3057 = vshrl.u32 %v3056, 7
        %v3058 = vsub.s32 %v3055, %v3057
        %v3059 = vrot.slane %v3052, %v3058
        %3060 = vrot.lane.b32.xlu0 %v3059, 32
        %v3061 = vpop.permute.xlu0 %3060
        %v3063 = vmul.f32 %v3041, %v3061
        %3065 = vrot.lane.b32.xlu0 %v3042, 64
        %v3066 = vpop.permute.xlu0 %3065
        %v3068 = vmul.f32 %v3041, %v3066
        %3070 = vrot.lane.b32.xlu0 %v3068, 32
        %v3071 = vpop.permute.xlu0 %3070
        %v3073 = vadd.f32 %v3063, %v3071
        %v3074 = vtanh.pop %v3073
        %3076 = vrot.lane.b32.xlu0 %v3074, 64
        %v3077 = vpop.permute.xlu0 %3076
        %v3079 = vmul.f32 %v3041, %v3077
        %3081 = vset.pattern.permute.xlu0 0
        %3082 = vperm.xlu0 %3081, %v2871
        %v3083 = vpop.permute.xlu0 %3082
        %v3085 = vlaneseq
        %v3086 = vshrl.u32 %v3085, 7
        %v3087 = vsub.s32 0, %v3086
        %v3088 = vrot.slane %v3083, %v3087
        %3090 = vset.pattern.permute.xlu0 0
        %3091 = vperm.xlu0 %3090, %v2872
        %v3092 = vpop.permute.xlu0 %3091
        %v3094 = vlaneseq
        %v3095 = vshrl.u32 %v3094, 7
        %v3096 = vsub.s32 0, %v3095
        %v3097 = vrot.slane %v3092, %v3096
        %v3100 = vunpack.c.l.s4 1966171168
        %v3101 = vunpack.c.0.s8 %v3100
        %v3102 = vlaneseq
        %v3103 = vshrl.u32 %v3102, 7
        %v3104 = vsub.s32 %v3101, %v3103
        %v3105 = vrot.slane %v3079, %v3104
        %v3106 = vcombine.high %v3105, %v3105
        %v3108 = vunpack.c.l.s4 1966171168
        %v3109 = vunpack.c.0.s8 %v3108
        %v3110 = vlaneseq
        %v3111 = vshrl.u32 %v3110, 7
        %v3112 = vsub.s32 %v3109, %v3111
        %v3113 = vrot.slane %v3105, %v3112
        %v3115 = vunpack.c.l.s4 1966171168
        %v3116 = vunpack.c.0.s8 %v3115
        %v3117 = vlaneseq
        %v3118 = vshrl.u32 %v3117, 7
        %v3119 = vsub.s32 %v3116, %v3118
        %v3120 = vrot.slane %v3106, %v3119
        %3121 = vrot.lane.b32.xlu0 %v3113, 32
        %v3122 = vpop.permute.xlu0 %3121
        %3123 = vrot.lane.b32.xlu0 %v3120, 32
        %v3124 = vpop.permute.xlu0 %3123
        %v3127 = vmul.f32 %v3088, %v3122
        %v3128 = vmul.f32 %v3097, %v3124
        %v3129 = vsub.f32 1.0, %v2871
        %v3130 = vsub.f32 1.0, %v2872
        %3132 = vset.pattern.permute.xlu0 0
        %3133 = vperm.xlu0 %3132, %v3129
        %v3134 = vpop.permute.xlu0 %3133
        %v3136 = vlaneseq
        %v3137 = vshrl.u32 %v3136, 7
        %v3138 = vsub.s32 0, %v3137
        %v3139 = vrot.slane %v3134, %v3138
        %3141 = vset.pattern.permute.xlu0 0
        %3142 = vperm.xlu0 %3141, %v3130
        %v3143 = vpop.permute.xlu0 %3142
        %v3145 = vlaneseq
        %v3146 = vshrl.u32 %v3145, 7
        %v3147 = vsub.s32 0, %v3146
        %v3148 = vrot.slane %v3143, %v3147
        %v3149 = vmul.f32 %v3139, %v2489
        %v3150 = vmul.f32 %v3148, %v2490
        %v3151 = vadd.f32 %v3127, %v3149
        %v3152 = vadd.f32 %v3128, %v3150
        %v3155 = vunpack.c.l.s4 1966171168
        %v3156 = vunpack.c.0.s8 %v3155
        %v3157 = vlaneseq
        %v3158 = vshrl.u32 %v3157, 7
        %v3159 = vsub.s32 %v3156, %v3158
        %v3160 = vrot.slane %v3073, %v3159
        %v3161 = vcombine.high %v3160, %v3160
        %v3163 = vunpack.c.l.s4 1966171168
        %v3164 = vunpack.c.0.s8 %v3163
        %v3165 = vlaneseq
        %v3166 = vshrl.u32 %v3165, 7
        %v3167 = vsub.s32 %v3164, %v3166
        %v3168 = vrot.slane %v3160, %v3167
        %v3170 = vunpack.c.l.s4 1966171168
        %v3171 = vunpack.c.0.s8 %v3170
        %v3172 = vlaneseq
        %v3173 = vshrl.u32 %v3172, 7
        %v3174 = vsub.s32 %v3171, %v3173
        %v3175 = vrot.slane %v3161, %v3174
        %3176 = vrot.lane.b32.xlu0 %v3168, 96
        %v3177 = vpop.permute.xlu0 %3176
        %3178 = vrot.lane.b32.xlu0 %v3175, 96
        %v3179 = vpop.permute.xlu0 %3178
        %v3182 = vmul.f32 %v3088, %v3177
        %v3183 = vmul.f32 %v3097, %v3179
        %v3184 = vmul.f32 %v3139, %v2524
        %v3185 = vmul.f32 %v3148, %v2525
        %v3186 = vadd.f32 %v3182, %v3184
        %v3187 = vadd.f32 %v3183, %v3185
        %3188 = vst.msk [vmem:[%s496 + $0x2] sm:$0x1] %vm1822, %v3127
        %3189 = vst.msk [vmem:[%s496 + $0xa] sm:$0x1] %vm1822, %v3128
        %vm3190 = vcmp.gt.s32.totalorder %v526, 5
        %vm3191 = vcmp.gt.s32.totalorder %v527, 5
        %v3192 = vsel %vm3190, 1, 0
        %v3193 = vsel %vm3191, 1, 0
        %v3194 = vcvt.s32.f32 %v3192
        %v3195 = vcvt.s32.f32 %v3193
        %v3198 = vcombine.low %v2812, %v2813
        %v3200 = vunpack.c.l.s4 1966171168
        %v3201 = vunpack.c.0.s8 %v3200
        %v3202 = vlaneseq
        %v3203 = vshrl.u32 %v3202, 7
        %v3204 = vsub.s32 %v3201, %v3203
        %v3205 = vrot.slane %v3198, %v3204
        %v3207 = vunpack.c.l.s4 1966171168
        %v3208 = vunpack.c.0.s8 %v3207
        %v3209 = vlaneseq
        %v3210 = vshrl.u32 %v3209, 7
        %v3211 = vsub.s32 %v3208, %v3210
        %v3212 = vrot.slane %v3205, %v3211
        %v3213 = vsel %vm1470, %v3212, 0
        %3215 = vmatprep.subr.mxu0 0.0
        %3216 = vmatpush1.msra.mxu0 %v1446
        %3217 = vmatprep.subr.mxu0 0.0
        %3218 = vmatpush1.msra.mxu0 %v1447
        %3219 = vmatprep.subr.mxu0 0.0
        %3220 = vmatpush1.msra.mxu0 %v1448
        %3221 = vmatprep.subr.mxu0 0.0
        %3222 = vmatpush1.msra.mxu0 %v1449
        %3223 = vmatprep.subr.mxu0 0.0
        %3224 = vmatpush1.msra.mxu0 0.0
        %3225 = vmatprep.subr.mxu0 0.0
        %3226 = vmatpush1.msra.mxu0 0.0
        %3227 = vmatprep.subr.mxu0 0.0
        %3228 = vmatpush1.msra.mxu0 0.0
        %3229 = vmatprep.subr.mxu0 0.0
        %3230 = vmatpush1.msra.mxu0 0.0
        %3231 = vmatprep.subr.mxu0 0.0
        %3232 = vmatpush1.msra.mxu0 0.0
        %3233 = vmatprep.subr.mxu0 0.0
        %3234 = vmatpush1.msra.mxu0 0.0
        %3235 = vmatprep.subr.mxu0 0.0
        %3236 = vmatpush1.msra.mxu0 0.0
        %3237 = vmatprep.subr.mxu0 0.0
        %3238 = vmatpush1.msra.mxu0 0.0
        %3239 = vmatprep.subr.mxu0 0.0
        %3240 = vmatpush1.msra.mxu0 0.0
        %3241 = vmatprep.subr.mxu0 0.0
        %3242 = vmatpush1.msra.mxu0 0.0
        %3243 = vmatprep.subr.mxu0 0.0
        %3244 = vmatpush1.msra.mxu0 0.0
        %3245 = vmatprep.subr.mxu0 0.0
        %3246 = vmatpush1.msra.mxu0 0.0
        %3247 = vmatprep.subr.mxu0 0.0
        %3248 = vmatpush1.msra.mxu0 0.0
        %3249 = vmatprep.subr.mxu0 0.0
        %3250 = vmatpush1.msra.mxu0 0.0
        %3251 = vmatprep.subr.mxu0 0.0
        %3252 = vmatpush1.msra.mxu0 0.0
        %3253 = vmatprep.subr.mxu0 0.0
        %3254 = vmatpush1.msra.mxu0 0.0
        %3255 = vmatprep.subr.mxu0 0.0
        %3256 = vmatpush1.msra.mxu0 0.0
        %3257 = vmatprep.subr.mxu0 0.0
        %3258 = vmatpush1.msra.mxu0 0.0
        %3259 = vmatprep.subr.mxu0 0.0
        %3260 = vmatpush1.msra.mxu0 0.0
        %3261 = vmatprep.subr.mxu0 0.0
        %3262 = vmatpush1.msra.mxu0 0.0
        %3263 = vmatprep.subr.mxu0 0.0
        %3264 = vmatpush1.msra.mxu0 0.0
        %3265 = vmatprep.subr.mxu0 0.0
        %3266 = vmatpush1.msra.mxu0 0.0
        %3267 = vmatprep.subr.mxu0 0.0
        %3268 = vmatpush1.msra.mxu0 0.0
        %3269 = vmatprep.subr.mxu0 0.0
        %3270 = vmatpush1.msra.mxu0 0.0
        %3271 = vmatprep.subr.mxu0 0.0
        %3272 = vmatpush1.msra.mxu0 0.0
        %3273 = vmatprep.subr.mxu0 0.0
        %3274 = vmatpush1.msra.mxu0 0.0
        %3275 = vmatprep.subr.mxu0 0.0
        %3276 = vmatpush1.msra.mxu0 0.0
        %3277 = vmatprep.subr.mxu0 0.0
        %3278 = vmatpush1.msra.mxu0 0.0
        %3279 = vmatprep.mubr.f32.mxu0 0.0
        %3280 = vmatmul.mubr.f32.gmra.mrb[0].mxu0 %v3213
        %v3281 = vpop.f32.mrb[0].mxu0
        %v3282 = vadd.f32 0.0, %v3281
        %v3283 = vpop.f32.mrb[0].mxu0
        %3284 = vdwg.mxu0
        %v3286 = vsel %vm1470, %v1212, 0
        %3288 = vmatprep.subr.mxu0 0.0
        %3289 = vmatpush1.msra.mxu0 %v1442
        %3290 = vmatprep.subr.mxu0 0.0
        %3291 = vmatpush1.msra.mxu0 %v1443
        %3292 = vmatprep.subr.mxu0 0.0
        %3293 = vmatpush1.msra.mxu0 %v1444
        %3294 = vmatprep.subr.mxu0 0.0
        %3295 = vmatpush1.msra.mxu0 %v1445
        %3296 = vmatprep.subr.mxu0 0.0
        %3297 = vmatpush1.msra.mxu0 0.0
        %3298 = vmatprep.subr.mxu0 0.0
        %3299 = vmatpush1.msra.mxu0 0.0
        %3300 = vmatprep.subr.mxu0 0.0
        %3301 = vmatpush1.msra.mxu0 0.0
        %3302 = vmatprep.subr.mxu0 0.0
        %3303 = vmatpush1.msra.mxu0 0.0
        %3304 = vmatprep.subr.mxu0 0.0
        %3305 = vmatpush1.msra.mxu0 0.0
        %3306 = vmatprep.subr.mxu0 0.0
        %3307 = vmatpush1.msra.mxu0 0.0
        %3308 = vmatprep.subr.mxu0 0.0
        %3309 = vmatpush1.msra.mxu0 0.0
        %3310 = vmatprep.subr.mxu0 0.0
        %3311 = vmatpush1.msra.mxu0 0.0
        %3312 = vmatprep.subr.mxu0 0.0
        %3313 = vmatpush1.msra.mxu0 0.0
        %3314 = vmatprep.subr.mxu0 0.0
        %3315 = vmatpush1.msra.mxu0 0.0
        %3316 = vmatprep.subr.mxu0 0.0
        %3317 = vmatpush1.msra.mxu0 0.0
        %3318 = vmatprep.subr.mxu0 0.0
        %3319 = vmatpush1.msra.mxu0 0.0
        %3320 = vmatprep.subr.mxu0 0.0
        %3321 = vmatpush1.msra.mxu0 0.0
        %3322 = vmatprep.subr.mxu0 0.0
        %3323 = vmatpush1.msra.mxu0 0.0
        %3324 = vmatprep.subr.mxu0 0.0
        %3325 = vmatpush1.msra.mxu0 0.0
        %3326 = vmatprep.subr.mxu0 0.0
        %3327 = vmatpush1.msra.mxu0 0.0
        %3328 = vmatprep.subr.mxu0 0.0
        %3329 = vmatpush1.msra.mxu0 0.0
        %3330 = vmatprep.subr.mxu0 0.0
        %3331 = vmatpush1.msra.mxu0 0.0
        %3332 = vmatprep.subr.mxu0 0.0
        %3333 = vmatpush1.msra.mxu0 0.0
        %3334 = vmatprep.subr.mxu0 0.0
        %3335 = vmatpush1.msra.mxu0 0.0
        %3336 = vmatprep.subr.mxu0 0.0
        %3337 = vmatpush1.msra.mxu0 0.0
        %3338 = vmatprep.subr.mxu0 0.0
        %3339 = vmatpush1.msra.mxu0 0.0
        %3340 = vmatprep.subr.mxu0 0.0
        %3341 = vmatpush1.msra.mxu0 0.0
        %3342 = vmatprep.subr.mxu0 0.0
        %3343 = vmatpush1.msra.mxu0 0.0
        %3344 = vmatprep.subr.mxu0 0.0
        %3345 = vmatpush1.msra.mxu0 0.0
        %3346 = vmatprep.subr.mxu0 0.0
        %3347 = vmatpush1.msra.mxu0 0.0
        %3348 = vmatprep.subr.mxu0 0.0
        %3349 = vmatpush1.msra.mxu0 0.0
        %3350 = vmatprep.subr.mxu0 0.0
        %3351 = vmatpush1.msra.mxu0 0.0
        %3352 = vmatprep.mubr.f32.mxu0 0.0
        %3353 = vmatmul.mubr.f32.gmra.mrb[0].mxu0 %v3286
        %v3354 = vpop.f32.mrb[0].mxu0
        %v3355 = vadd.f32 %v3282, %v3354
        %v3356 = vpop.f32.mrb[0].mxu0
        %3357 = vdwg.mxu0
        %v3358 = vadd.f32 %v3355, %v1984
        %v3359 = vxor.u32 %v3358, 2147483648
        %v3360 = vmul.f32 %v3359, 1.442695
        %v3361 = vpow.pop %v3360
        %v3362 = vadd.f32 %v3361, 1.0
        %v3363 = vrcp.pop %v3362
        %v3364 = vmul.f32 1.0, %v3363
        %v3365 = vtanh.pop %v3358
        %v3368 = vcombine.low %v2847, %v2848
        %v3370 = vunpack.c.l.s4 1966171168
        %v3371 = vunpack.c.0.s8 %v3370
        %v3372 = vlaneseq
        %v3373 = vshrl.u32 %v3372, 7
        %v3374 = vsub.s32 %v3371, %v3373
        %v3375 = vrot.slane %v3368, %v3374
        %v3377 = vunpack.c.l.s4 1966171168
        %v3378 = vunpack.c.0.s8 %v3377
        %v3379 = vlaneseq
        %v3380 = vshrl.u32 %v3379, 7
        %v3381 = vsub.s32 %v3378, %v3380
        %v3382 = vrot.slane %v3375, %v3381
        %3383 = vrot.lane.b32.xlu0 %v3382, 32
        %v3384 = vpop.permute.xlu0 %3383
        %v3386 = vmul.f32 %v3364, %v3384
        %3388 = vrot.lane.b32.xlu0 %v3365, 64
        %v3389 = vpop.permute.xlu0 %3388
        %v3391 = vmul.f32 %v3364, %v3389
        %3393 = vrot.lane.b32.xlu0 %v3391, 32
        %v3394 = vpop.permute.xlu0 %3393
        %v3396 = vadd.f32 %v3386, %v3394
        %v3397 = vtanh.pop %v3396
        %3399 = vrot.lane.b32.xlu0 %v3397, 64
        %v3400 = vpop.permute.xlu0 %3399
        %v3402 = vmul.f32 %v3364, %v3400
        %3404 = vset.pattern.permute.xlu0 0
        %3405 = vperm.xlu0 %3404, %v3194
        %v3406 = vpop.permute.xlu0 %3405
        %v3408 = vlaneseq
        %v3409 = vshrl.u32 %v3408, 7
        %v3410 = vsub.s32 0, %v3409
        %v3411 = vrot.slane %v3406, %v3410
        %3413 = vset.pattern.permute.xlu0 0
        %3414 = vperm.xlu0 %3413, %v3195
        %v3415 = vpop.permute.xlu0 %3414
        %v3417 = vlaneseq
        %v3418 = vshrl.u32 %v3417, 7
        %v3419 = vsub.s32 0, %v3418
        %v3420 = vrot.slane %v3415, %v3419
        %v3423 = vunpack.c.l.s4 1966171168
        %v3424 = vunpack.c.0.s8 %v3423
        %v3425 = vlaneseq
        %v3426 = vshrl.u32 %v3425, 7
        %v3427 = vsub.s32 %v3424, %v3426
        %v3428 = vrot.slane %v3402, %v3427
        %v3429 = vcombine.high %v3428, %v3428
        %v3431 = vunpack.c.l.s4 1966171168
        %v3432 = vunpack.c.0.s8 %v3431
        %v3433 = vlaneseq
        %v3434 = vshrl.u32 %v3433, 7
        %v3435 = vsub.s32 %v3432, %v3434
        %v3436 = vrot.slane %v3428, %v3435
        %v3438 = vunpack.c.l.s4 1966171168
        %v3439 = vunpack.c.0.s8 %v3438
        %v3440 = vlaneseq
        %v3441 = vshrl.u32 %v3440, 7
        %v3442 = vsub.s32 %v3439, %v3441
        %v3443 = vrot.slane %v3429, %v3442
        %3444 = vrot.lane.b32.xlu0 %v3436, 32
        %v3445 = vpop.permute.xlu0 %3444
        %3446 = vrot.lane.b32.xlu0 %v3443, 32
        %v3447 = vpop.permute.xlu0 %3446
        %v3450 = vmul.f32 %v3411, %v3445
        %v3451 = vmul.f32 %v3420, %v3447
        %v3452 = vsub.f32 1.0, %v3194
        %v3453 = vsub.f32 1.0, %v3195
        %3455 = vset.pattern.permute.xlu0 0
        %3456 = vperm.xlu0 %3455, %v3452
        %v3457 = vpop.permute.xlu0 %3456
        %v3459 = vlaneseq
        %v3460 = vshrl.u32 %v3459, 7
        %v3461 = vsub.s32 0, %v3460
        %v3462 = vrot.slane %v3457, %v3461
        %3464 = vset.pattern.permute.xlu0 0
        %3465 = vperm.xlu0 %3464, %v3453
        %v3466 = vpop.permute.xlu0 %3465
        %v3468 = vlaneseq
        %v3469 = vshrl.u32 %v3468, 7
        %v3470 = vsub.s32 0, %v3469
        %v3471 = vrot.slane %v3466, %v3470
        %v3472 = vmul.f32 %v3462, %v2812
        %v3473 = vmul.f32 %v3471, %v2813
        %v3474 = vadd.f32 %v3450, %v3472
        %v3475 = vadd.f32 %v3451, %v3473
        %v3478 = vunpack.c.l.s4 1966171168
        %v3479 = vunpack.c.0.s8 %v3478
        %v3480 = vlaneseq
        %v3481 = vshrl.u32 %v3480, 7
        %v3482 = vsub.s32 %v3479, %v3481
        %v3483 = vrot.slane %v3396, %v3482
        %v3484 = vcombine.high %v3483, %v3483
        %v3486 = vunpack.c.l.s4 1966171168
        %v3487 = vunpack.c.0.s8 %v3486
        %v3488 = vlaneseq
        %v3489 = vshrl.u32 %v3488, 7
        %v3490 = vsub.s32 %v3487, %v3489
        %v3491 = vrot.slane %v3483, %v3490
        %v3493 = vunpack.c.l.s4 1966171168
        %v3494 = vunpack.c.0.s8 %v3493
        %v3495 = vlaneseq
        %v3496 = vshrl.u32 %v3495, 7
        %v3497 = vsub.s32 %v3494, %v3496
        %v3498 = vrot.slane %v3484, %v3497
        %3499 = vrot.lane.b32.xlu0 %v3491, 96
        %v3500 = vpop.permute.xlu0 %3499
        %3501 = vrot.lane.b32.xlu0 %v3498, 96
        %v3502 = vpop.permute.xlu0 %3501
        %v3505 = vmul.f32 %v3411, %v3500
        %v3506 = vmul.f32 %v3420, %v3502
        %v3507 = vmul.f32 %v3462, %v2847
        %v3508 = vmul.f32 %v3471, %v2848
        %v3509 = vadd.f32 %v3505, %v3507
        %v3510 = vadd.f32 %v3506, %v3508
        %v3513 = vlaneseq
        %v3514 = vshrl.u32 %v3513, 7
        %v3515 = vsub.s32 0, %v3514
        %v3516 = vrot.slane %v3450, %v3515
        %v3517 = vlaneseq
        %v3518 = vshrl.u32 %v3517, 7
        %v3519 = vsub.s32 0, %v3518
        %v3520 = vrot.slane %v3451, %v3519
        %3521 = vrot.lane.b32.xlu0 %v3516, 32
        %v3522 = vpop.permute.xlu0 %3521
        %3523 = vrot.lane.b32.xlu0 %v3520, 32
        %v3524 = vpop.permute.xlu0 %3523
        %3527 = vst.msk [vmem:[%s496 + $0x5] sm:$0x1] %vm2202, %v3522
        %3528 = vst.msk [vmem:[%s496 + $0xd] sm:$0x1] %vm2202, %v3524
        %vm3529 = vcmp.gt.s32.totalorder %v526, 3
        %vm3530 = vcmp.gt.s32.totalorder %v527, 3
        %v3531 = vsel %vm3529, 1, 0
        %v3532 = vsel %vm3530, 1, 0
        %v3533 = vcvt.s32.f32 %v3531
        %v3534 = vcvt.s32.f32 %v3532
        %v3537 = vcombine.low %v3151, %v3152
        %v3539 = vunpack.c.l.s4 1966171168
        %v3540 = vunpack.c.0.s8 %v3539
        %v3541 = vlaneseq
        %v3542 = vshrl.u32 %v3541, 7
        %v3543 = vsub.s32 %v3540, %v3542
        %v3544 = vrot.slane %v3537, %v3543
        %v3546 = vunpack.c.l.s4 1966171168
        %v3547 = vunpack.c.0.s8 %v3546
        %v3548 = vlaneseq
        %v3549 = vshrl.u32 %v3548, 7
        %v3550 = vsub.s32 %v3547, %v3549
        %v3551 = vrot.slane %v3544, %v3550
        %v3552 = vsel %vm1470, %v3551, 0
        %3554 = vmatprep.subr.mxu0 0.0
        %3555 = vmatpush1.msra.mxu0 %v1437
        %3556 = vmatprep.subr.mxu0 0.0
        %3557 = vmatpush1.msra.mxu0 %v1438
        %3558 = vmatprep.subr.mxu0 0.0
        %3559 = vmatpush1.msra.mxu0 %v1439
        %3560 = vmatprep.subr.mxu0 0.0
        %3561 = vmatpush1.msra.mxu0 %v1440
        %3562 = vmatprep.subr.mxu0 0.0
        %3563 = vmatpush1.msra.mxu0 0.0
        %3564 = vmatprep.subr.mxu0 0.0
        %3565 = vmatpush1.msra.mxu0 0.0
        %3566 = vmatprep.subr.mxu0 0.0
        %3567 = vmatpush1.msra.mxu0 0.0
        %3568 = vmatprep.subr.mxu0 0.0
        %3569 = vmatpush1.msra.mxu0 0.0
        %3570 = vmatprep.subr.mxu0 0.0
        %3571 = vmatpush1.msra.mxu0 0.0
        %3572 = vmatprep.subr.mxu0 0.0
        %3573 = vmatpush1.msra.mxu0 0.0
        %3574 = vmatprep.subr.mxu0 0.0
        %3575 = vmatpush1.msra.mxu0 0.0
        %3576 = vmatprep.subr.mxu0 0.0
        %3577 = vmatpush1.msra.mxu0 0.0
        %3578 = vmatprep.subr.mxu0 0.0
        %3579 = vmatpush1.msra.mxu0 0.0
        %3580 = vmatprep.subr.mxu0 0.0
        %3581 = vmatpush1.msra.mxu0 0.0
        %3582 = vmatprep.subr.mxu0 0.0
        %3583 = vmatpush1.msra.mxu0 0.0
        %3584 = vmatprep.subr.mxu0 0.0
        %3585 = vmatpush1.msra.mxu0 0.0
        %3586 = vmatprep.subr.mxu0 0.0
        %3587 = vmatpush1.msra.mxu0 0.0
        %3588 = vmatprep.subr.mxu0 0.0
        %3589 = vmatpush1.msra.mxu0 0.0
        %3590 = vmatprep.subr.mxu0 0.0
        %3591 = vmatpush1.msra.mxu0 0.0
        %3592 = vmatprep.subr.mxu0 0.0
        %3593 = vmatpush1.msra.mxu0 0.0
        %3594 = vmatprep.subr.mxu0 0.0
        %3595 = vmatpush1.msra.mxu0 0.0
        %3596 = vmatprep.subr.mxu0 0.0
        %3597 = vmatpush1.msra.mxu0 0.0
        %3598 = vmatprep.subr.mxu0 0.0
        %3599 = vmatpush1.msra.mxu0 0.0
        %3600 = vmatprep.subr.mxu0 0.0
        %3601 = vmatpush1.msra.mxu0 0.0
        %3602 = vmatprep.subr.mxu0 0.0
        %3603 = vmatpush1.msra.mxu0 0.0
        %3604 = vmatprep.subr.mxu0 0.0
        %3605 = vmatpush1.msra.mxu0 0.0
        %3606 = vmatprep.subr.mxu0 0.0
        %3607 = vmatpush1.msra.mxu0 0.0
        %3608 = vmatprep.subr.mxu0 0.0
        %3609 = vmatpush1.msra.mxu0 0.0
        %3610 = vmatprep.subr.mxu0 0.0
        %3611 = vmatpush1.msra.mxu0 0.0
        %3612 = vmatprep.subr.mxu0 0.0
        %3613 = vmatpush1.msra.mxu0 0.0
        %3614 = vmatprep.subr.mxu0 0.0
        %3615 = vmatpush1.msra.mxu0 0.0
        %3616 = vmatprep.subr.mxu0 0.0
        %3617 = vmatpush1.msra.mxu0 0.0
        %3618 = vmatprep.mubr.f32.mxu0 0.0
        %3619 = vmatmul.mubr.f32.gmra.mrb[0].mxu0 %v3552
        %v3620 = vpop.f32.mrb[0].mxu0
        %v3621 = vadd.f32 0.0, %v3620
        %v3622 = vpop.f32.mrb[0].mxu0
        %3623 = vdwg.mxu0
        %v3625 = vsel %vm1470, %v994, 0
        %3627 = vmatprep.subr.mxu0 0.0
        %3628 = vmatpush1.msra.mxu0 %v1433
        %3629 = vmatprep.subr.mxu0 0.0
        %3630 = vmatpush1.msra.mxu0 %v1434
        %3631 = vmatprep.subr.mxu0 0.0
        %3632 = vmatpush1.msra.mxu0 %v1435
        %3633 = vmatprep.subr.mxu0 0.0
        %3634 = vmatpush1.msra.mxu0 %v1436
        %3635 = vmatprep.subr.mxu0 0.0
        %3636 = vmatpush1.msra.mxu0 0.0
        %3637 = vmatprep.subr.mxu0 0.0
        %3638 = vmatpush1.msra.mxu0 0.0
        %3639 = vmatprep.subr.mxu0 0.0
        %3640 = vmatpush1.msra.mxu0 0.0
        %3641 = vmatprep.subr.mxu0 0.0
        %3642 = vmatpush1.msra.mxu0 0.0
        %3643 = vmatprep.subr.mxu0 0.0
        %3644 = vmatpush1.msra.mxu0 0.0
        %3645 = vmatprep.subr.mxu0 0.0
        %3646 = vmatpush1.msra.mxu0 0.0
        %3647 = vmatprep.subr.mxu0 0.0
        %3648 = vmatpush1.msra.mxu0 0.0
        %3649 = vmatprep.subr.mxu0 0.0
        %3650 = vmatpush1.msra.mxu0 0.0
        %3651 = vmatprep.subr.mxu0 0.0
        %3652 = vmatpush1.msra.mxu0 0.0
        %3653 = vmatprep.subr.mxu0 0.0
        %3654 = vmatpush1.msra.mxu0 0.0
        %3655 = vmatprep.subr.mxu0 0.0
        %3656 = vmatpush1.msra.mxu0 0.0
        %3657 = vmatprep.subr.mxu0 0.0
        %3658 = vmatpush1.msra.mxu0 0.0
        %3659 = vmatprep.subr.mxu0 0.0
        %3660 = vmatpush1.msra.mxu0 0.0
        %3661 = vmatprep.subr.mxu0 0.0
        %3662 = vmatpush1.msra.mxu0 0.0
        %3663 = vmatprep.subr.mxu0 0.0
        %3664 = vmatpush1.msra.mxu0 0.0
        %3665 = vmatprep.subr.mxu0 0.0
        %3666 = vmatpush1.msra.mxu0 0.0
        %3667 = vmatprep.subr.mxu0 0.0
        %3668 = vmatpush1.msra.mxu0 0.0
        %3669 = vmatprep.subr.mxu0 0.0
        %3670 = vmatpush1.msra.mxu0 0.0
        %3671 = vmatprep.subr.mxu0 0.0
        %3672 = vmatpush1.msra.mxu0 0.0
        %3673 = vmatprep.subr.mxu0 0.0
        %3674 = vmatpush1.msra.mxu0 0.0
        %3675 = vmatprep.subr.mxu0 0.0
        %3676 = vmatpush1.msra.mxu0 0.0
        %3677 = vmatprep.subr.mxu0 0.0
        %3678 = vmatpush1.msra.mxu0 0.0
        %3679 = vmatprep.subr.mxu0 0.0
        %3680 = vmatpush1.msra.mxu0 0.0
        %3681 = vmatprep.subr.mxu0 0.0
        %3682 = vmatpush1.msra.mxu0 0.0
        %3683 = vmatprep.subr.mxu0 0.0
        %3684 = vmatpush1.msra.mxu0 0.0
        %3685 = vmatprep.subr.mxu0 0.0
        %3686 = vmatpush1.msra.mxu0 0.0
        %3687 = vmatprep.subr.mxu0 0.0
        %3688 = vmatpush1.msra.mxu0 0.0
        %3689 = vmatprep.subr.mxu0 0.0
        %3690 = vmatpush1.msra.mxu0 0.0
        %3691 = vmatprep.mubr.f32.mxu0 0.0
        %3692 = vmatmul.mubr.f32.gmra.mrb[0].mxu0 %v3625
        %v3693 = vpop.f32.mrb[0].mxu0
        %v3694 = vadd.f32 %v3621, %v3693
        %v3695 = vpop.f32.mrb[0].mxu0
        %3696 = vdwg.mxu0
        %v3697 = vadd.f32 %v3694, %v1620
        %v3698 = vxor.u32 %v3697, 2147483648
        %v3699 = vmul.f32 %v3698, 1.442695
        %v3700 = vpow.pop %v3699
        %v3701 = vadd.f32 %v3700, 1.0
        %v3702 = vrcp.pop %v3701
        %v3703 = vmul.f32 1.0, %v3702
        %v3704 = vtanh.pop %v3697
        %v3707 = vcombine.low %v3186, %v3187
        %v3709 = vunpack.c.l.s4 1966171168
        %v3710 = vunpack.c.0.s8 %v3709
        %v3711 = vlaneseq
        %v3712 = vshrl.u32 %v3711, 7
        %v3713 = vsub.s32 %v3710, %v3712
        %v3714 = vrot.slane %v3707, %v3713
        %v3716 = vunpack.c.l.s4 1966171168
        %v3717 = vunpack.c.0.s8 %v3716
        %v3718 = vlaneseq
        %v3719 = vshrl.u32 %v3718, 7
        %v3720 = vsub.s32 %v3717, %v3719
        %v3721 = vrot.slane %v3714, %v3720
        %3722 = vrot.lane.b32.xlu0 %v3721, 32
        %v3723 = vpop.permute.xlu0 %3722
        %v3725 = vmul.f32 %v3703, %v3723
        %3727 = vrot.lane.b32.xlu0 %v3704, 64
        %v3728 = vpop.permute.xlu0 %3727
        %v3730 = vmul.f32 %v3703, %v3728
        %3732 = vrot.lane.b32.xlu0 %v3730, 32
        %v3733 = vpop.permute.xlu0 %3732
        %v3735 = vadd.f32 %v3725, %v3733
        %v3736 = vtanh.pop %v3735
        %3738 = vrot.lane.b32.xlu0 %v3736, 64
        %v3739 = vpop.permute.xlu0 %3738
        %v3741 = vmul.f32 %v3703, %v3739
        %3743 = vset.pattern.permute.xlu0 0
        %3744 = vperm.xlu0 %3743, %v3533
        %v3745 = vpop.permute.xlu0 %3744
        %v3747 = vlaneseq
        %v3748 = vshrl.u32 %v3747, 7
        %v3749 = vsub.s32 0, %v3748
        %v3750 = vrot.slane %v3745, %v3749
        %3752 = vset.pattern.permute.xlu0 0
        %3753 = vperm.xlu0 %3752, %v3534
        %v3754 = vpop.permute.xlu0 %3753
        %v3756 = vlaneseq
        %v3757 = vshrl.u32 %v3756, 7
        %v3758 = vsub.s32 0, %v3757
        %v3759 = vrot.slane %v3754, %v3758
        %v3762 = vunpack.c.l.s4 1966171168
        %v3763 = vunpack.c.0.s8 %v3762
        %v3764 = vlaneseq
        %v3765 = vshrl.u32 %v3764, 7
        %v3766 = vsub.s32 %v3763, %v3765
        %v3767 = vrot.slane %v3741, %v3766
        %v3768 = vcombine.high %v3767, %v3767
        %v3770 = vunpack.c.l.s4 1966171168
        %v3771 = vunpack.c.0.s8 %v3770
        %v3772 = vlaneseq
        %v3773 = vshrl.u32 %v3772, 7
        %v3774 = vsub.s32 %v3771, %v3773
        %v3775 = vrot.slane %v3767, %v3774
        %v3777 = vunpack.c.l.s4 1966171168
        %v3778 = vunpack.c.0.s8 %v3777
        %v3779 = vlaneseq
        %v3780 = vshrl.u32 %v3779, 7
        %v3781 = vsub.s32 %v3778, %v3780
        %v3782 = vrot.slane %v3768, %v3781
        %3783 = vrot.lane.b32.xlu0 %v3775, 32
        %v3784 = vpop.permute.xlu0 %3783
        %3785 = vrot.lane.b32.xlu0 %v3782, 32
        %v3786 = vpop.permute.xlu0 %3785
        %v3789 = vmul.f32 %v3750, %v3784
        %v3790 = vmul.f32 %v3759, %v3786
        %v3791 = vsub.f32 1.0, %v3533
        %v3792 = vsub.f32 1.0, %v3534
        %3794 = vset.pattern.permute.xlu0 0
        %3795 = vperm.xlu0 %3794, %v3791
        %v3796 = vpop.permute.xlu0 %3795
        %v3798 = vlaneseq
        %v3799 = vshrl.u32 %v3798, 7
        %v3800 = vsub.s32 0, %v3799
        %v3801 = vrot.slane %v3796, %v3800
        %3803 = vset.pattern.permute.xlu0 0
        %3804 = vperm.xlu0 %3803, %v3792
        %v3805 = vpop.permute.xlu0 %3804
        %v3807 = vlaneseq
        %v3808 = vshrl.u32 %v3807, 7
        %v3809 = vsub.s32 0, %v3808
        %v3810 = vrot.slane %v3805, %v3809
        %v3811 = vmul.f32 %v3801, %v3151
        %v3812 = vmul.f32 %v3810, %v3152
        %v3813 = vadd.f32 %v3789, %v3811
        %v3814 = vadd.f32 %v3790, %v3812
        %v3817 = vunpack.c.l.s4 1966171168
        %v3818 = vunpack.c.0.s8 %v3817
        %v3819 = vlaneseq
        %v3820 = vshrl.u32 %v3819, 7
        %v3821 = vsub.s32 %v3818, %v3820
        %v3822 = vrot.slane %v3735, %v3821
        %v3823 = vcombine.high %v3822, %v3822
        %v3825 = vunpack.c.l.s4 1966171168
        %v3826 = vunpack.c.0.s8 %v3825
        %v3827 = vlaneseq
        %v3828 = vshrl.u32 %v3827, 7
        %v3829 = vsub.s32 %v3826, %v3828
        %v3830 = vrot.slane %v3822, %v3829
        %v3832 = vunpack.c.l.s4 1966171168
        %v3833 = vunpack.c.0.s8 %v3832
        %v3834 = vlaneseq
        %v3835 = vshrl.u32 %v3834, 7
        %v3836 = vsub.s32 %v3833, %v3835
        %v3837 = vrot.slane %v3823, %v3836
        %3838 = vrot.lane.b32.xlu0 %v3830, 96
        %v3839 = vpop.permute.xlu0 %3838
        %3840 = vrot.lane.b32.xlu0 %v3837, 96
        %v3841 = vpop.permute.xlu0 %3840
        %v3844 = vmul.f32 %v3750, %v3839
        %v3845 = vmul.f32 %v3759, %v3841
        %v3846 = vmul.f32 %v3801, %v3186
        %v3847 = vmul.f32 %v3810, %v3187
        %v3848 = vadd.f32 %v3844, %v3846
        %v3849 = vadd.f32 %v3845, %v3847
        %3850 = vst.msk [vmem:[%s496 + $0x3] sm:$0x1] %vm1822, %v3789
        %3851 = vst.msk [vmem:[%s496 + $0xb] sm:$0x1] %vm1822, %v3790
        %vm3852 = vcmp.gt.s32.totalorder %v526, 4
        %vm3853 = vcmp.gt.s32.totalorder %v527, 4
        %v3854 = vsel %vm3852, 1, 0
        %v3855 = vsel %vm3853, 1, 0
        %v3856 = vcvt.s32.f32 %v3854
        %v3857 = vcvt.s32.f32 %v3855
        %v3860 = vcombine.low %v3474, %v3475
        %v3862 = vunpack.c.l.s4 1966171168
        %v3863 = vunpack.c.0.s8 %v3862
        %v3864 = vlaneseq
        %v3865 = vshrl.u32 %v3864, 7
        %v3866 = vsub.s32 %v3863, %v3865
        %v3867 = vrot.slane %v3860, %v3866
        %v3869 = vunpack.c.l.s4 1966171168
        %v3870 = vunpack.c.0.s8 %v3869
        %v3871 = vlaneseq
        %v3872 = vshrl.u32 %v3871, 7
        %v3873 = vsub.s32 %v3870, %v3872
        %v3874 = vrot.slane %v3867, %v3873
        %v3875 = vsel %vm1470, %v3874, 0
        %3877 = vmatprep.subr.mxu0 0.0
        %3878 = vmatpush1.msra.mxu0 %v1446
        %3879 = vmatprep.subr.mxu0 0.0
        %3880 = vmatpush1.msra.mxu0 %v1447
        %3881 = vmatprep.subr.mxu0 0.0
        %3882 = vmatpush1.msra.mxu0 %v1448
        %3883 = vmatprep.subr.mxu0 0.0
        %3884 = vmatpush1.msra.mxu0 %v1449
        %3885 = vmatprep.subr.mxu0 0.0
        %3886 = vmatpush1.msra.mxu0 0.0
        %3887 = vmatprep.subr.mxu0 0.0
        %3888 = vmatpush1.msra.mxu0 0.0
        %3889 = vmatprep.subr.mxu0 0.0
        %3890 = vmatpush1.msra.mxu0 0.0
        %3891 = vmatprep.subr.mxu0 0.0
        %3892 = vmatpush1.msra.mxu0 0.0
        %3893 = vmatprep.subr.mxu0 0.0
        %3894 = vmatpush1.msra.mxu0 0.0
        %3895 = vmatprep.subr.mxu0 0.0
        %3896 = vmatpush1.msra.mxu0 0.0
        %3897 = vmatprep.subr.mxu0 0.0
        %3898 = vmatpush1.msra.mxu0 0.0
        %3899 = vmatprep.subr.mxu0 0.0
        %3900 = vmatpush1.msra.mxu0 0.0
        %3901 = vmatprep.subr.mxu0 0.0
        %3902 = vmatpush1.msra.mxu0 0.0
        %3903 = vmatprep.subr.mxu0 0.0
        %3904 = vmatpush1.msra.mxu0 0.0
        %3905 = vmatprep.subr.mxu0 0.0
        %3906 = vmatpush1.msra.mxu0 0.0
        %3907 = vmatprep.subr.mxu0 0.0
        %3908 = vmatpush1.msra.mxu0 0.0
        %3909 = vmatprep.subr.mxu0 0.0
        %3910 = vmatpush1.msra.mxu0 0.0
        %3911 = vmatprep.subr.mxu0 0.0
        %3912 = vmatpush1.msra.mxu0 0.0
        %3913 = vmatprep.subr.mxu0 0.0
        %3914 = vmatpush1.msra.mxu0 0.0
        %3915 = vmatprep.subr.mxu0 0.0
        %3916 = vmatpush1.msra.mxu0 0.0
        %3917 = vmatprep.subr.mxu0 0.0
        %3918 = vmatpush1.msra.mxu0 0.0
        %3919 = vmatprep.subr.mxu0 0.0
        %3920 = vmatpush1.msra.mxu0 0.0
        %3921 = vmatprep.subr.mxu0 0.0
        %3922 = vmatpush1.msra.mxu0 0.0
        %3923 = vmatprep.subr.mxu0 0.0
        %3924 = vmatpush1.msra.mxu0 0.0
        %3925 = vmatprep.subr.mxu0 0.0
        %3926 = vmatpush1.msra.mxu0 0.0
        %3927 = vmatprep.subr.mxu0 0.0
        %3928 = vmatpush1.msra.mxu0 0.0
        %3929 = vmatprep.subr.mxu0 0.0
        %3930 = vmatpush1.msra.mxu0 0.0
        %3931 = vmatprep.subr.mxu0 0.0
        %3932 = vmatpush1.msra.mxu0 0.0
        %3933 = vmatprep.subr.mxu0 0.0
        %3934 = vmatpush1.msra.mxu0 0.0
        %3935 = vmatprep.subr.mxu0 0.0
        %3936 = vmatpush1.msra.mxu0 0.0
        %3937 = vmatprep.subr.mxu0 0.0
        %3938 = vmatpush1.msra.mxu0 0.0
        %3939 = vmatprep.subr.mxu0 0.0
        %3940 = vmatpush1.msra.mxu0 0.0
        %3941 = vmatprep.mubr.f32.mxu0 0.0
        %3942 = vmatmul.mubr.f32.gmra.mrb[0].mxu0 %v3875
        %v3943 = vpop.f32.mrb[0].mxu0
        %v3944 = vadd.f32 0.0, %v3943
        %v3945 = vpop.f32.mrb[0].mxu0
        %3946 = vdwg.mxu0
        %v3948 = vsel %vm1470, %v1103, 0
        %3950 = vmatprep.subr.mxu0 0.0
        %3951 = vmatpush1.msra.mxu0 %v1442
        %3952 = vmatprep.subr.mxu0 0.0
        %3953 = vmatpush1.msra.mxu0 %v1443
        %3954 = vmatprep.subr.mxu0 0.0
        %3955 = vmatpush1.msra.mxu0 %v1444
        %3956 = vmatprep.subr.mxu0 0.0
        %3957 = vmatpush1.msra.mxu0 %v1445
        %3958 = vmatprep.subr.mxu0 0.0
        %3959 = vmatpush1.msra.mxu0 0.0
        %3960 = vmatprep.subr.mxu0 0.0
        %3961 = vmatpush1.msra.mxu0 0.0
        %3962 = vmatprep.subr.mxu0 0.0
        %3963 = vmatpush1.msra.mxu0 0.0
        %3964 = vmatprep.subr.mxu0 0.0
        %3965 = vmatpush1.msra.mxu0 0.0
        %3966 = vmatprep.subr.mxu0 0.0
        %3967 = vmatpush1.msra.mxu0 0.0
        %3968 = vmatprep.subr.mxu0 0.0
        %3969 = vmatpush1.msra.mxu0 0.0
        %3970 = vmatprep.subr.mxu0 0.0
        %3971 = vmatpush1.msra.mxu0 0.0
        %3972 = vmatprep.subr.mxu0 0.0
        %3973 = vmatpush1.msra.mxu0 0.0
        %3974 = vmatprep.subr.mxu0 0.0
        %3975 = vmatpush1.msra.mxu0 0.0
        %3976 = vmatprep.subr.mxu0 0.0
        %3977 = vmatpush1.msra.mxu0 0.0
        %3978 = vmatprep.subr.mxu0 0.0
        %3979 = vmatpush1.msra.mxu0 0.0
        %3980 = vmatprep.subr.mxu0 0.0
        %3981 = vmatpush1.msra.mxu0 0.0
        %3982 = vmatprep.subr.mxu0 0.0
        %3983 = vmatpush1.msra.mxu0 0.0
        %3984 = vmatprep.subr.mxu0 0.0
        %3985 = vmatpush1.msra.mxu0 0.0
        %3986 = vmatprep.subr.mxu0 0.0
        %3987 = vmatpush1.msra.mxu0 0.0
        %3988 = vmatprep.subr.mxu0 0.0
        %3989 = vmatpush1.msra.mxu0 0.0
        %3990 = vmatprep.subr.mxu0 0.0
        %3991 = vmatpush1.msra.mxu0 0.0
        %3992 = vmatprep.subr.mxu0 0.0
        %3993 = vmatpush1.msra.mxu0 0.0
        %3994 = vmatprep.subr.mxu0 0.0
        %3995 = vmatpush1.msra.mxu0 0.0
        %3996 = vmatprep.subr.mxu0 0.0
        %3997 = vmatpush1.msra.mxu0 0.0
        %3998 = vmatprep.subr.mxu0 0.0
        %3999 = vmatpush1.msra.mxu0 0.0
        %4000 = vmatprep.subr.mxu0 0.0
        %4001 = vmatpush1.msra.mxu0 0.0
        %4002 = vmatprep.subr.mxu0 0.0
        %4003 = vmatpush1.msra.mxu0 0.0
        %4004 = vmatprep.subr.mxu0 0.0
        %4005 = vmatpush1.msra.mxu0 0.0
        %4006 = vmatprep.subr.mxu0 0.0
        %4007 = vmatpush1.msra.mxu0 0.0
        %4008 = vmatprep.subr.mxu0 0.0
        %4009 = vmatpush1.msra.mxu0 0.0
        %4010 = vmatprep.subr.mxu0 0.0
        %4011 = vmatpush1.msra.mxu0 0.0
        %4012 = vmatprep.subr.mxu0 0.0
        %4013 = vmatpush1.msra.mxu0 0.0
        %4014 = vmatprep.mubr.f32.mxu0 0.0
        %4015 = vmatmul.mubr.f32.gmra.mrb[0].mxu0 %v3948
        %v4016 = vpop.f32.mrb[0].mxu0
        %v4017 = vadd.f32 %v3944, %v4016
        %v4018 = vpop.f32.mrb[0].mxu0
        %4019 = vdwg.mxu0
        %v4020 = vadd.f32 %v4017, %v1984
        %v4021 = vxor.u32 %v4020, 2147483648
        %v4022 = vmul.f32 %v4021, 1.442695
        %v4023 = vpow.pop %v4022
        %v4024 = vadd.f32 %v4023, 1.0
        %v4025 = vrcp.pop %v4024
        %v4026 = vmul.f32 1.0, %v4025
        %v4027 = vtanh.pop %v4020
        %v4030 = vcombine.low %v3509, %v3510
        %v4032 = vunpack.c.l.s4 1966171168
        %v4033 = vunpack.c.0.s8 %v4032
        %v4034 = vlaneseq
        %v4035 = vshrl.u32 %v4034, 7
        %v4036 = vsub.s32 %v4033, %v4035
        %v4037 = vrot.slane %v4030, %v4036
        %v4039 = vunpack.c.l.s4 1966171168
        %v4040 = vunpack.c.0.s8 %v4039
        %v4041 = vlaneseq
        %v4042 = vshrl.u32 %v4041, 7
        %v4043 = vsub.s32 %v4040, %v4042
        %v4044 = vrot.slane %v4037, %v4043
        %4045 = vrot.lane.b32.xlu0 %v4044, 32
        %v4046 = vpop.permute.xlu0 %4045
        %v4048 = vmul.f32 %v4026, %v4046
        %4050 = vrot.lane.b32.xlu0 %v4027, 64
        %v4051 = vpop.permute.xlu0 %4050
        %v4053 = vmul.f32 %v4026, %v4051
        %4055 = vrot.lane.b32.xlu0 %v4053, 32
        %v4056 = vpop.permute.xlu0 %4055
        %v4058 = vadd.f32 %v4048, %v4056
        %v4059 = vtanh.pop %v4058
        %4061 = vrot.lane.b32.xlu0 %v4059, 64
        %v4062 = vpop.permute.xlu0 %4061
        %v4064 = vmul.f32 %v4026, %v4062
        %4066 = vset.pattern.permute.xlu0 0
        %4067 = vperm.xlu0 %4066, %v3856
        %v4068 = vpop.permute.xlu0 %4067
        %v4070 = vlaneseq
        %v4071 = vshrl.u32 %v4070, 7
        %v4072 = vsub.s32 0, %v4071
        %v4073 = vrot.slane %v4068, %v4072
        %4075 = vset.pattern.permute.xlu0 0
        %4076 = vperm.xlu0 %4075, %v3857
        %v4077 = vpop.permute.xlu0 %4076
        %v4079 = vlaneseq
        %v4080 = vshrl.u32 %v4079, 7
        %v4081 = vsub.s32 0, %v4080
        %v4082 = vrot.slane %v4077, %v4081
        %v4085 = vunpack.c.l.s4 1966171168
        %v4086 = vunpack.c.0.s8 %v4085
        %v4087 = vlaneseq
        %v4088 = vshrl.u32 %v4087, 7
        %v4089 = vsub.s32 %v4086, %v4088
        %v4090 = vrot.slane %v4064, %v4089
        %v4091 = vcombine.high %v4090, %v4090
        %v4093 = vunpack.c.l.s4 1966171168
        %v4094 = vunpack.c.0.s8 %v4093
        %v4095 = vlaneseq
        %v4096 = vshrl.u32 %v4095, 7
        %v4097 = vsub.s32 %v4094, %v4096
        %v4098 = vrot.slane %v4090, %v4097
        %v4100 = vunpack.c.l.s4 1966171168
        %v4101 = vunpack.c.0.s8 %v4100
        %v4102 = vlaneseq
        %v4103 = vshrl.u32 %v4102, 7
        %v4104 = vsub.s32 %v4101, %v4103
        %v4105 = vrot.slane %v4091, %v4104
        %4106 = vrot.lane.b32.xlu0 %v4098, 32
        %v4107 = vpop.permute.xlu0 %4106
        %4108 = vrot.lane.b32.xlu0 %v4105, 32
        %v4109 = vpop.permute.xlu0 %4108
        %v4112 = vmul.f32 %v4073, %v4107
        %v4113 = vmul.f32 %v4082, %v4109
        %v4114 = vsub.f32 1.0, %v3856
        %v4115 = vsub.f32 1.0, %v3857
        %4117 = vset.pattern.permute.xlu0 0
        %4118 = vperm.xlu0 %4117, %v4114
        %v4119 = vpop.permute.xlu0 %4118
        %v4121 = vlaneseq
        %v4122 = vshrl.u32 %v4121, 7
        %v4123 = vsub.s32 0, %v4122
        %v4124 = vrot.slane %v4119, %v4123
        %4126 = vset.pattern.permute.xlu0 0
        %4127 = vperm.xlu0 %4126, %v4115
        %v4128 = vpop.permute.xlu0 %4127
        %v4130 = vlaneseq
        %v4131 = vshrl.u32 %v4130, 7
        %v4132 = vsub.s32 0, %v4131
        %v4133 = vrot.slane %v4128, %v4132
        %v4134 = vmul.f32 %v4124, %v3474
        %v4135 = vmul.f32 %v4133, %v3475
        %v4136 = vadd.f32 %v4112, %v4134
        %v4137 = vadd.f32 %v4113, %v4135
        %v4140 = vunpack.c.l.s4 1966171168
        %v4141 = vunpack.c.0.s8 %v4140
        %v4142 = vlaneseq
        %v4143 = vshrl.u32 %v4142, 7
        %v4144 = vsub.s32 %v4141, %v4143
        %v4145 = vrot.slane %v4058, %v4144
        %v4146 = vcombine.high %v4145, %v4145
        %v4148 = vunpack.c.l.s4 1966171168
        %v4149 = vunpack.c.0.s8 %v4148
        %v4150 = vlaneseq
        %v4151 = vshrl.u32 %v4150, 7
        %v4152 = vsub.s32 %v4149, %v4151
        %v4153 = vrot.slane %v4145, %v4152
        %v4155 = vunpack.c.l.s4 1966171168
        %v4156 = vunpack.c.0.s8 %v4155
        %v4157 = vlaneseq
        %v4158 = vshrl.u32 %v4157, 7
        %v4159 = vsub.s32 %v4156, %v4158
        %v4160 = vrot.slane %v4146, %v4159
        %4161 = vrot.lane.b32.xlu0 %v4153, 96
        %v4162 = vpop.permute.xlu0 %4161
        %4163 = vrot.lane.b32.xlu0 %v4160, 96
        %v4164 = vpop.permute.xlu0 %4163
        %v4167 = vmul.f32 %v4073, %v4162
        %v4168 = vmul.f32 %v4082, %v4164
        %v4169 = vmul.f32 %v4124, %v3509
        %v4170 = vmul.f32 %v4133, %v3510
        %v4171 = vadd.f32 %v4167, %v4169
        %v4172 = vadd.f32 %v4168, %v4170
        %v4175 = vlaneseq
        %v4176 = vshrl.u32 %v4175, 7
        %v4177 = vsub.s32 0, %v4176
        %v4178 = vrot.slane %v4112, %v4177
        %v4179 = vlaneseq
        %v4180 = vshrl.u32 %v4179, 7
        %v4181 = vsub.s32 0, %v4180
        %v4182 = vrot.slane %v4113, %v4181
        %4183 = vrot.lane.b32.xlu0 %v4178, 32
        %v4184 = vpop.permute.xlu0 %4183
        %4185 = vrot.lane.b32.xlu0 %v4182, 32
        %v4186 = vpop.permute.xlu0 %4185
        %4189 = vst.msk [vmem:[%s496 + $0x4] sm:$0x1] %vm2202, %v4184
        %4190 = vst.msk [vmem:[%s496 + $0xc] sm:$0x1] %vm2202, %v4186
        %v4193 = vcombine.low %v3813, %v3814
        %v4195 = vunpack.c.l.s4 1966171168
        %v4196 = vunpack.c.0.s8 %v4195
        %v4197 = vlaneseq
        %v4198 = vshrl.u32 %v4197, 7
        %v4199 = vsub.s32 %v4196, %v4198
        %v4200 = vrot.slane %v4193, %v4199
        %v4202 = vunpack.c.l.s4 1966171168
        %v4203 = vunpack.c.0.s8 %v4202
        %v4204 = vlaneseq
        %v4205 = vshrl.u32 %v4204, 7
        %v4206 = vsub.s32 %v4203, %v4205
        %v4207 = vrot.slane %v4200, %v4206
        %v4208 = vsel %vm1470, %v4207, 0
        %4210 = vmatprep.subr.mxu0 0.0
        %4211 = vmatpush1.msra.mxu0 %v1437
        %4212 = vmatprep.subr.mxu0 0.0
        %4213 = vmatpush1.msra.mxu0 %v1438
        %4214 = vmatprep.subr.mxu0 0.0
        %4215 = vmatpush1.msra.mxu0 %v1439
        %4216 = vmatprep.subr.mxu0 0.0
        %4217 = vmatpush1.msra.mxu0 %v1440
        %4218 = vmatprep.subr.mxu0 0.0
        %4219 = vmatpush1.msra.mxu0 0.0
        %4220 = vmatprep.subr.mxu0 0.0
        %4221 = vmatpush1.msra.mxu0 0.0
        %4222 = vmatprep.subr.mxu0 0.0
        %4223 = vmatpush1.msra.mxu0 0.0
        %4224 = vmatprep.subr.mxu0 0.0
        %4225 = vmatpush1.msra.mxu0 0.0
        %4226 = vmatprep.subr.mxu0 0.0
        %4227 = vmatpush1.msra.mxu0 0.0
        %4228 = vmatprep.subr.mxu0 0.0
        %4229 = vmatpush1.msra.mxu0 0.0
        %4230 = vmatprep.subr.mxu0 0.0
        %4231 = vmatpush1.msra.mxu0 0.0
        %4232 = vmatprep.subr.mxu0 0.0
        %4233 = vmatpush1.msra.mxu0 0.0
        %4234 = vmatprep.subr.mxu0 0.0
        %4235 = vmatpush1.msra.mxu0 0.0
        %4236 = vmatprep.subr.mxu0 0.0
        %4237 = vmatpush1.msra.mxu0 0.0
        %4238 = vmatprep.subr.mxu0 0.0
        %4239 = vmatpush1.msra.mxu0 0.0
        %4240 = vmatprep.subr.mxu0 0.0
        %4241 = vmatpush1.msra.mxu0 0.0
        %4242 = vmatprep.subr.mxu0 0.0
        %4243 = vmatpush1.msra.mxu0 0.0
        %4244 = vmatprep.subr.mxu0 0.0
        %4245 = vmatpush1.msra.mxu0 0.0
        %4246 = vmatprep.subr.mxu0 0.0
        %4247 = vmatpush1.msra.mxu0 0.0
        %4248 = vmatprep.subr.mxu0 0.0
        %4249 = vmatpush1.msra.mxu0 0.0
        %4250 = vmatprep.subr.mxu0 0.0
        %4251 = vmatpush1.msra.mxu0 0.0
        %4252 = vmatprep.subr.mxu0 0.0
        %4253 = vmatpush1.msra.mxu0 0.0
        %4254 = vmatprep.subr.mxu0 0.0
        %4255 = vmatpush1.msra.mxu0 0.0
        %4256 = vmatprep.subr.mxu0 0.0
        %4257 = vmatpush1.msra.mxu0 0.0
        %4258 = vmatprep.subr.mxu0 0.0
        %4259 = vmatpush1.msra.mxu0 0.0
        %4260 = vmatprep.subr.mxu0 0.0
        %4261 = vmatpush1.msra.mxu0 0.0
        %4262 = vmatprep.subr.mxu0 0.0
        %4263 = vmatpush1.msra.mxu0 0.0
        %4264 = vmatprep.subr.mxu0 0.0
        %4265 = vmatpush1.msra.mxu0 0.0
        %4266 = vmatprep.subr.mxu0 0.0
        %4267 = vmatpush1.msra.mxu0 0.0
        %4268 = vmatprep.subr.mxu0 0.0
        %4269 = vmatpush1.msra.mxu0 0.0
        %4270 = vmatprep.subr.mxu0 0.0
        %4271 = vmatpush1.msra.mxu0 0.0
        %4272 = vmatprep.subr.mxu0 0.0
        %4273 = vmatpush1.msra.mxu0 0.0
        %4274 = vmatprep.mubr.f32.mxu0 0.0
        %4275 = vmatmul.mubr.f32.gmra.mrb[0].mxu0 %v4208
        %v4276 = vpop.f32.mrb[0].mxu0
        %v4277 = vadd.f32 0.0, %v4276
        %v4278 = vpop.f32.mrb[0].mxu0
        %4279 = vdwg.mxu0
        %4280 = vmatprep.subr.mxu0 0.0
        %4281 = vmatpush1.msra.mxu0 %v1433
        %4282 = vmatprep.subr.mxu0 0.0
        %4283 = vmatpush1.msra.mxu0 %v1434
        %4284 = vmatprep.subr.mxu0 0.0
        %4285 = vmatpush1.msra.mxu0 %v1435
        %4286 = vmatprep.subr.mxu0 0.0
        %4287 = vmatpush1.msra.mxu0 %v1436
        %4288 = vmatprep.subr.mxu0 0.0
        %4289 = vmatpush1.msra.mxu0 0.0
        %4290 = vmatprep.subr.mxu0 0.0
        %4291 = vmatpush1.msra.mxu0 0.0
        %4292 = vmatprep.subr.mxu0 0.0
        %4293 = vmatpush1.msra.mxu0 0.0
        %4294 = vmatprep.subr.mxu0 0.0
        %4295 = vmatpush1.msra.mxu0 0.0
        %4296 = vmatprep.subr.mxu0 0.0
        %4297 = vmatpush1.msra.mxu0 0.0
        %4298 = vmatprep.subr.mxu0 0.0
        %4299 = vmatpush1.msra.mxu0 0.0
        %4300 = vmatprep.subr.mxu0 0.0
        %4301 = vmatpush1.msra.mxu0 0.0
        %4302 = vmatprep.subr.mxu0 0.0
        %4303 = vmatpush1.msra.mxu0 0.0
        %4304 = vmatprep.subr.mxu0 0.0
        %4305 = vmatpush1.msra.mxu0 0.0
        %4306 = vmatprep.subr.mxu0 0.0
        %4307 = vmatpush1.msra.mxu0 0.0
        %4308 = vmatprep.subr.mxu0 0.0
        %4309 = vmatpush1.msra.mxu0 0.0
        %4310 = vmatprep.subr.mxu0 0.0
        %4311 = vmatpush1.msra.mxu0 0.0
        %4312 = vmatprep.subr.mxu0 0.0
        %4313 = vmatpush1.msra.mxu0 0.0
        %4314 = vmatprep.subr.mxu0 0.0
        %4315 = vmatpush1.msra.mxu0 0.0
        %4316 = vmatprep.subr.mxu0 0.0
        %4317 = vmatpush1.msra.mxu0 0.0
        %4318 = vmatprep.subr.mxu0 0.0
        %4319 = vmatpush1.msra.mxu0 0.0
        %4320 = vmatprep.subr.mxu0 0.0
        %4321 = vmatpush1.msra.mxu0 0.0
        %4322 = vmatprep.subr.mxu0 0.0
        %4323 = vmatpush1.msra.mxu0 0.0
        %4324 = vmatprep.subr.mxu0 0.0
        %4325 = vmatpush1.msra.mxu0 0.0
        %4326 = vmatprep.subr.mxu0 0.0
        %4327 = vmatpush1.msra.mxu0 0.0
        %4328 = vmatprep.subr.mxu0 0.0
        %4329 = vmatpush1.msra.mxu0 0.0
        %4330 = vmatprep.subr.mxu0 0.0
        %4331 = vmatpush1.msra.mxu0 0.0
        %4332 = vmatprep.subr.mxu0 0.0
        %4333 = vmatpush1.msra.mxu0 0.0
        %4334 = vmatprep.subr.mxu0 0.0
        %4335 = vmatpush1.msra.mxu0 0.0
        %4336 = vmatprep.subr.mxu0 0.0
        %4337 = vmatpush1.msra.mxu0 0.0
        %4338 = vmatprep.subr.mxu0 0.0
        %4339 = vmatpush1.msra.mxu0 0.0
        %4340 = vmatprep.subr.mxu0 0.0
        %4341 = vmatpush1.msra.mxu0 0.0
        %4342 = vmatprep.subr.mxu0 0.0
        %4343 = vmatpush1.msra.mxu0 0.0
        %4344 = vmatprep.mubr.f32.mxu0 0.0
        %4345 = vmatmul.mubr.f32.gmra.mrb[0].mxu0 %v3948
        %v4346 = vpop.f32.mrb[0].mxu0
        %v4347 = vadd.f32 %v4277, %v4346
        %v4348 = vpop.f32.mrb[0].mxu0
        %4349 = vdwg.mxu0
        %v4350 = vadd.f32 %v4347, %v1620
        %v4351 = vxor.u32 %v4350, 2147483648
        %v4352 = vmul.f32 %v4351, 1.442695
        %v4353 = vpow.pop %v4352
        %v4354 = vadd.f32 %v4353, 1.0
        %v4355 = vrcp.pop %v4354
        %v4356 = vmul.f32 1.0, %v4355
        %v4357 = vtanh.pop %v4350
        %v4360 = vcombine.low %v3848, %v3849
        %v4362 = vunpack.c.l.s4 1966171168
        %v4363 = vunpack.c.0.s8 %v4362
        %v4364 = vlaneseq
        %v4365 = vshrl.u32 %v4364, 7
        %v4366 = vsub.s32 %v4363, %v4365
        %v4367 = vrot.slane %v4360, %v4366
        %v4369 = vunpack.c.l.s4 1966171168
        %v4370 = vunpack.c.0.s8 %v4369
        %v4371 = vlaneseq
        %v4372 = vshrl.u32 %v4371, 7
        %v4373 = vsub.s32 %v4370, %v4372
        %v4374 = vrot.slane %v4367, %v4373
        %4375 = vrot.lane.b32.xlu0 %v4374, 32
        %v4376 = vpop.permute.xlu0 %4375
        %v4378 = vmul.f32 %v4356, %v4376
        %4380 = vrot.lane.b32.xlu0 %v4357, 64
        %v4381 = vpop.permute.xlu0 %4380
        %v4383 = vmul.f32 %v4356, %v4381
        %4385 = vrot.lane.b32.xlu0 %v4383, 32
        %v4386 = vpop.permute.xlu0 %4385
        %v4388 = vadd.f32 %v4378, %v4386
        %v4389 = vtanh.pop %v4388
        %4391 = vrot.lane.b32.xlu0 %v4389, 64
        %v4392 = vpop.permute.xlu0 %4391
        %v4394 = vmul.f32 %v4356, %v4392
        %v4397 = vunpack.c.l.s4 1966171168
        %v4398 = vunpack.c.0.s8 %v4397
        %v4399 = vlaneseq
        %v4400 = vshrl.u32 %v4399, 7
        %v4401 = vsub.s32 %v4398, %v4400
        %v4402 = vrot.slane %v4394, %v4401
        %v4403 = vcombine.high %v4402, %v4402
        %v4405 = vunpack.c.l.s4 1966171168
        %v4406 = vunpack.c.0.s8 %v4405
        %v4407 = vlaneseq
        %v4408 = vshrl.u32 %v4407, 7
        %v4409 = vsub.s32 %v4406, %v4408
        %v4410 = vrot.slane %v4402, %v4409
        %v4412 = vunpack.c.l.s4 1966171168
        %v4413 = vunpack.c.0.s8 %v4412
        %v4414 = vlaneseq
        %v4415 = vshrl.u32 %v4414, 7
        %v4416 = vsub.s32 %v4413, %v4415
        %v4417 = vrot.slane %v4403, %v4416
        %4418 = vrot.lane.b32.xlu0 %v4410, 32
        %v4419 = vpop.permute.xlu0 %4418
        %4420 = vrot.lane.b32.xlu0 %v4417, 32
        %v4421 = vpop.permute.xlu0 %4420
        %v4424 = vmul.f32 %v4073, %v4419
        %v4425 = vmul.f32 %v4082, %v4421
        %v4426 = vmul.f32 %v4124, %v3813
        %v4427 = vmul.f32 %v4133, %v3814
        %v4428 = vadd.f32 %v4424, %v4426
        %v4429 = vadd.f32 %v4425, %v4427
        %v4432 = vunpack.c.l.s4 1966171168
        %v4433 = vunpack.c.0.s8 %v4432
        %v4434 = vlaneseq
        %v4435 = vshrl.u32 %v4434, 7
        %v4436 = vsub.s32 %v4433, %v4435
        %v4437 = vrot.slane %v4388, %v4436
        %v4438 = vcombine.high %v4437, %v4437
        %v4440 = vunpack.c.l.s4 1966171168
        %v4441 = vunpack.c.0.s8 %v4440
        %v4442 = vlaneseq
        %v4443 = vshrl.u32 %v4442, 7
        %v4444 = vsub.s32 %v4441, %v4443
        %v4445 = vrot.slane %v4437, %v4444
        %v4447 = vunpack.c.l.s4 1966171168
        %v4448 = vunpack.c.0.s8 %v4447
        %v4449 = vlaneseq
        %v4450 = vshrl.u32 %v4449, 7
        %v4451 = vsub.s32 %v4448, %v4450
        %v4452 = vrot.slane %v4438, %v4451
        %4453 = vrot.lane.b32.xlu0 %v4445, 96
        %v4454 = vpop.permute.xlu0 %4453
        %4455 = vrot.lane.b32.xlu0 %v4452, 96
        %v4456 = vpop.permute.xlu0 %4455
        %v4459 = vmul.f32 %v4073, %v4454
        %v4460 = vmul.f32 %v4082, %v4456
        %v4461 = vmul.f32 %v4124, %v3848
        %v4462 = vmul.f32 %v4133, %v3849
        %v4463 = vadd.f32 %v4459, %v4461
        %v4464 = vadd.f32 %v4460, %v4462
        %4465 = vst.msk [vmem:[%s496 + $0x4] sm:$0x1] %vm1822, %v4424
        %4466 = vst.msk [vmem:[%s496 + $0xc] sm:$0x1] %vm1822, %v4425
        %v4469 = vcombine.low %v4136, %v4137
        %v4471 = vunpack.c.l.s4 1966171168
        %v4472 = vunpack.c.0.s8 %v4471
        %v4473 = vlaneseq
        %v4474 = vshrl.u32 %v4473, 7
        %v4475 = vsub.s32 %v4472, %v4474
        %v4476 = vrot.slane %v4469, %v4475
        %v4478 = vunpack.c.l.s4 1966171168
        %v4479 = vunpack.c.0.s8 %v4478
        %v4480 = vlaneseq
        %v4481 = vshrl.u32 %v4480, 7
        %v4482 = vsub.s32 %v4479, %v4481
        %v4483 = vrot.slane %v4476, %v4482
        %v4484 = vsel %vm1470, %v4483, 0
        %4486 = vmatprep.subr.mxu0 0.0
        %4487 = vmatpush1.msra.mxu0 %v1446
        %4488 = vmatprep.subr.mxu0 0.0
        %4489 = vmatpush1.msra.mxu0 %v1447
        %4490 = vmatprep.subr.mxu0 0.0
        %4491 = vmatpush1.msra.mxu0 %v1448
        %4492 = vmatprep.subr.mxu0 0.0
        %4493 = vmatpush1.msra.mxu0 %v1449
        %4494 = vmatprep.subr.mxu0 0.0
        %4495 = vmatpush1.msra.mxu0 0.0
        %4496 = vmatprep.subr.mxu0 0.0
        %4497 = vmatpush1.msra.mxu0 0.0
        %4498 = vmatprep.subr.mxu0 0.0
        %4499 = vmatpush1.msra.mxu0 0.0
        %4500 = vmatprep.subr.mxu0 0.0
        %4501 = vmatpush1.msra.mxu0 0.0
        %4502 = vmatprep.subr.mxu0 0.0
        %4503 = vmatpush1.msra.mxu0 0.0
        %4504 = vmatprep.subr.mxu0 0.0
        %4505 = vmatpush1.msra.mxu0 0.0
        %4506 = vmatprep.subr.mxu0 0.0
        %4507 = vmatpush1.msra.mxu0 0.0
        %4508 = vmatprep.subr.mxu0 0.0
        %4509 = vmatpush1.msra.mxu0 0.0
        %4510 = vmatprep.subr.mxu0 0.0
        %4511 = vmatpush1.msra.mxu0 0.0
        %4512 = vmatprep.subr.mxu0 0.0
        %4513 = vmatpush1.msra.mxu0 0.0
        %4514 = vmatprep.subr.mxu0 0.0
        %4515 = vmatpush1.msra.mxu0 0.0
        %4516 = vmatprep.subr.mxu0 0.0
        %4517 = vmatpush1.msra.mxu0 0.0
        %4518 = vmatprep.subr.mxu0 0.0
        %4519 = vmatpush1.msra.mxu0 0.0
        %4520 = vmatprep.subr.mxu0 0.0
        %4521 = vmatpush1.msra.mxu0 0.0
        %4522 = vmatprep.subr.mxu0 0.0
        %4523 = vmatpush1.msra.mxu0 0.0
        %4524 = vmatprep.subr.mxu0 0.0
        %4525 = vmatpush1.msra.mxu0 0.0
        %4526 = vmatprep.subr.mxu0 0.0
        %4527 = vmatpush1.msra.mxu0 0.0
        %4528 = vmatprep.subr.mxu0 0.0
        %4529 = vmatpush1.msra.mxu0 0.0
        %4530 = vmatprep.subr.mxu0 0.0
        %4531 = vmatpush1.msra.mxu0 0.0
        %4532 = vmatprep.subr.mxu0 0.0
        %4533 = vmatpush1.msra.mxu0 0.0
        %4534 = vmatprep.subr.mxu0 0.0
        %4535 = vmatpush1.msra.mxu0 0.0
        %4536 = vmatprep.subr.mxu0 0.0
        %4537 = vmatpush1.msra.mxu0 0.0
        %4538 = vmatprep.subr.mxu0 0.0
        %4539 = vmatpush1.msra.mxu0 0.0
        %4540 = vmatprep.subr.mxu0 0.0
        %4541 = vmatpush1.msra.mxu0 0.0
        %4542 = vmatprep.subr.mxu0 0.0
        %4543 = vmatpush1.msra.mxu0 0.0
        %4544 = vmatprep.subr.mxu0 0.0
        %4545 = vmatpush1.msra.mxu0 0.0
        %4546 = vmatprep.subr.mxu0 0.0
        %4547 = vmatpush1.msra.mxu0 0.0
        %4548 = vmatprep.subr.mxu0 0.0
        %4549 = vmatpush1.msra.mxu0 0.0
        %4550 = vmatprep.mubr.f32.mxu0 0.0
        %4551 = vmatmul.mubr.f32.gmra.mrb[0].mxu0 %v4484
        %v4552 = vpop.f32.mrb[0].mxu0
        %v4553 = vadd.f32 0.0, %v4552
        %v4554 = vpop.f32.mrb[0].mxu0
        %4555 = vdwg.mxu0
        %4556 = vmatprep.subr.mxu0 0.0
        %4557 = vmatpush1.msra.mxu0 %v1442
        %4558 = vmatprep.subr.mxu0 0.0
        %4559 = vmatpush1.msra.mxu0 %v1443
        %4560 = vmatprep.subr.mxu0 0.0
        %4561 = vmatpush1.msra.mxu0 %v1444
        %4562 = vmatprep.subr.mxu0 0.0
        %4563 = vmatpush1.msra.mxu0 %v1445
        %4564 = vmatprep.subr.mxu0 0.0
        %4565 = vmatpush1.msra.mxu0 0.0
        %4566 = vmatprep.subr.mxu0 0.0
        %4567 = vmatpush1.msra.mxu0 0.0
        %4568 = vmatprep.subr.mxu0 0.0
        %4569 = vmatpush1.msra.mxu0 0.0
        %4570 = vmatprep.subr.mxu0 0.0
        %4571 = vmatpush1.msra.mxu0 0.0
        %4572 = vmatprep.subr.mxu0 0.0
        %4573 = vmatpush1.msra.mxu0 0.0
        %4574 = vmatprep.subr.mxu0 0.0
        %4575 = vmatpush1.msra.mxu0 0.0
        %4576 = vmatprep.subr.mxu0 0.0
        %4577 = vmatpush1.msra.mxu0 0.0
        %4578 = vmatprep.subr.mxu0 0.0
        %4579 = vmatpush1.msra.mxu0 0.0
        %4580 = vmatprep.subr.mxu0 0.0
        %4581 = vmatpush1.msra.mxu0 0.0
        %4582 = vmatprep.subr.mxu0 0.0
        %4583 = vmatpush1.msra.mxu0 0.0
        %4584 = vmatprep.subr.mxu0 0.0
        %4585 = vmatpush1.msra.mxu0 0.0
        %4586 = vmatprep.subr.mxu0 0.0
        %4587 = vmatpush1.msra.mxu0 0.0
        %4588 = vmatprep.subr.mxu0 0.0
        %4589 = vmatpush1.msra.mxu0 0.0
        %4590 = vmatprep.subr.mxu0 0.0
        %4591 = vmatpush1.msra.mxu0 0.0
        %4592 = vmatprep.subr.mxu0 0.0
        %4593 = vmatpush1.msra.mxu0 0.0
        %4594 = vmatprep.subr.mxu0 0.0
        %4595 = vmatpush1.msra.mxu0 0.0
        %4596 = vmatprep.subr.mxu0 0.0
        %4597 = vmatpush1.msra.mxu0 0.0
        %4598 = vmatprep.subr.mxu0 0.0
        %4599 = vmatpush1.msra.mxu0 0.0
        %4600 = vmatprep.subr.mxu0 0.0
        %4601 = vmatpush1.msra.mxu0 0.0
        %4602 = vmatprep.subr.mxu0 0.0
        %4603 = vmatpush1.msra.mxu0 0.0
        %4604 = vmatprep.subr.mxu0 0.0
        %4605 = vmatpush1.msra.mxu0 0.0
        %4606 = vmatprep.subr.mxu0 0.0
        %4607 = vmatpush1.msra.mxu0 0.0
        %4608 = vmatprep.subr.mxu0 0.0
        %4609 = vmatpush1.msra.mxu0 0.0
        %4610 = vmatprep.subr.mxu0 0.0
        %4611 = vmatpush1.msra.mxu0 0.0
        %4612 = vmatprep.subr.mxu0 0.0
        %4613 = vmatpush1.msra.mxu0 0.0
        %4614 = vmatprep.subr.mxu0 0.0
        %4615 = vmatpush1.msra.mxu0 0.0
        %4616 = vmatprep.subr.mxu0 0.0
        %4617 = vmatpush1.msra.mxu0 0.0
        %4618 = vmatprep.subr.mxu0 0.0
        %4619 = vmatpush1.msra.mxu0 0.0
        %4620 = vmatprep.mubr.f32.mxu0 0.0
        %4621 = vmatmul.mubr.f32.gmra.mrb[0].mxu0 %v3625
        %v4622 = vpop.f32.mrb[0].mxu0
        %v4623 = vadd.f32 %v4553, %v4622
        %v4624 = vpop.f32.mrb[0].mxu0
        %4625 = vdwg.mxu0
        %v4626 = vadd.f32 %v4623, %v1984
        %v4627 = vxor.u32 %v4626, 2147483648
        %v4628 = vmul.f32 %v4627, 1.442695
        %v4629 = vpow.pop %v4628
        %v4630 = vadd.f32 %v4629, 1.0
        %v4631 = vrcp.pop %v4630
        %v4632 = vmul.f32 1.0, %v4631
        %v4633 = vtanh.pop %v4626
        %v4636 = vcombine.low %v4171, %v4172
        %v4638 = vunpack.c.l.s4 1966171168
        %v4639 = vunpack.c.0.s8 %v4638
        %v4640 = vlaneseq
        %v4641 = vshrl.u32 %v4640, 7
        %v4642 = vsub.s32 %v4639, %v4641
        %v4643 = vrot.slane %v4636, %v4642
        %v4645 = vunpack.c.l.s4 1966171168
        %v4646 = vunpack.c.0.s8 %v4645
        %v4647 = vlaneseq
        %v4648 = vshrl.u32 %v4647, 7
        %v4649 = vsub.s32 %v4646, %v4648
        %v4650 = vrot.slane %v4643, %v4649
        %4651 = vrot.lane.b32.xlu0 %v4650, 32
        %v4652 = vpop.permute.xlu0 %4651
        %v4654 = vmul.f32 %v4632, %v4652
        %4656 = vrot.lane.b32.xlu0 %v4633, 64
        %v4657 = vpop.permute.xlu0 %4656
        %v4659 = vmul.f32 %v4632, %v4657
        %4661 = vrot.lane.b32.xlu0 %v4659, 32
        %v4662 = vpop.permute.xlu0 %4661
        %v4664 = vadd.f32 %v4654, %v4662
        %v4665 = vtanh.pop %v4664
        %4667 = vrot.lane.b32.xlu0 %v4665, 64
        %v4668 = vpop.permute.xlu0 %4667
        %v4670 = vmul.f32 %v4632, %v4668
        %v4673 = vunpack.c.l.s4 1966171168
        %v4674 = vunpack.c.0.s8 %v4673
        %v4675 = vlaneseq
        %v4676 = vshrl.u32 %v4675, 7
        %v4677 = vsub.s32 %v4674, %v4676
        %v4678 = vrot.slane %v4670, %v4677
        %v4679 = vcombine.high %v4678, %v4678
        %v4681 = vunpack.c.l.s4 1966171168
        %v4682 = vunpack.c.0.s8 %v4681
        %v4683 = vlaneseq
        %v4684 = vshrl.u32 %v4683, 7
        %v4685 = vsub.s32 %v4682, %v4684
        %v4686 = vrot.slane %v4678, %v4685
        %v4688 = vunpack.c.l.s4 1966171168
        %v4689 = vunpack.c.0.s8 %v4688
        %v4690 = vlaneseq
        %v4691 = vshrl.u32 %v4690, 7
        %v4692 = vsub.s32 %v4689, %v4691
        %v4693 = vrot.slane %v4679, %v4692
        %4694 = vrot.lane.b32.xlu0 %v4686, 32
        %v4695 = vpop.permute.xlu0 %4694
        %4696 = vrot.lane.b32.xlu0 %v4693, 32
        %v4697 = vpop.permute.xlu0 %4696
        %v4700 = vmul.f32 %v3750, %v4695
        %v4701 = vmul.f32 %v3759, %v4697
        %v4702 = vmul.f32 %v3801, %v4136
        %v4703 = vmul.f32 %v3810, %v4137
        %v4704 = vadd.f32 %v4700, %v4702
        %v4705 = vadd.f32 %v4701, %v4703
        %v4708 = vunpack.c.l.s4 1966171168
        %v4709 = vunpack.c.0.s8 %v4708
        %v4710 = vlaneseq
        %v4711 = vshrl.u32 %v4710, 7
        %v4712 = vsub.s32 %v4709, %v4711
        %v4713 = vrot.slane %v4664, %v4712
        %v4714 = vcombine.high %v4713, %v4713
        %v4716 = vunpack.c.l.s4 1966171168
        %v4717 = vunpack.c.0.s8 %v4716
        %v4718 = vlaneseq
        %v4719 = vshrl.u32 %v4718, 7
        %v4720 = vsub.s32 %v4717, %v4719
        %v4721 = vrot.slane %v4713, %v4720
        %v4723 = vunpack.c.l.s4 1966171168
        %v4724 = vunpack.c.0.s8 %v4723
        %v4725 = vlaneseq
        %v4726 = vshrl.u32 %v4725, 7
        %v4727 = vsub.s32 %v4724, %v4726
        %v4728 = vrot.slane %v4714, %v4727
        %4729 = vrot.lane.b32.xlu0 %v4721, 96
        %v4730 = vpop.permute.xlu0 %4729
        %4731 = vrot.lane.b32.xlu0 %v4728, 96
        %v4732 = vpop.permute.xlu0 %4731
        %v4735 = vmul.f32 %v3750, %v4730
        %v4736 = vmul.f32 %v3759, %v4732
        %v4737 = vmul.f32 %v3801, %v4171
        %v4738 = vmul.f32 %v3810, %v4172
        %v4739 = vadd.f32 %v4735, %v4737
        %v4740 = vadd.f32 %v4736, %v4738
        %v4743 = vlaneseq
        %v4744 = vshrl.u32 %v4743, 7
        %v4745 = vsub.s32 0, %v4744
        %v4746 = vrot.slane %v4700, %v4745
        %v4747 = vlaneseq
        %v4748 = vshrl.u32 %v4747, 7
        %v4749 = vsub.s32 0, %v4748
        %v4750 = vrot.slane %v4701, %v4749
        %4751 = vrot.lane.b32.xlu0 %v4746, 32
        %v4752 = vpop.permute.xlu0 %4751
        %4753 = vrot.lane.b32.xlu0 %v4750, 32
        %v4754 = vpop.permute.xlu0 %4753
        %4757 = vst.msk [vmem:[%s496 + $0x3] sm:$0x1] %vm2202, %v4752
        %4758 = vst.msk [vmem:[%s496 + $0xb] sm:$0x1] %vm2202, %v4754
        %v4761 = vcombine.low %v4428, %v4429
        %v4763 = vunpack.c.l.s4 1966171168
        %v4764 = vunpack.c.0.s8 %v4763
        %v4765 = vlaneseq
        %v4766 = vshrl.u32 %v4765, 7
        %v4767 = vsub.s32 %v4764, %v4766
        %v4768 = vrot.slane %v4761, %v4767
        %v4770 = vunpack.c.l.s4 1966171168
        %v4771 = vunpack.c.0.s8 %v4770
        %v4772 = vlaneseq
        %v4773 = vshrl.u32 %v4772, 7
        %v4774 = vsub.s32 %v4771, %v4773
        %v4775 = vrot.slane %v4768, %v4774
        %v4776 = vsel %vm1470, %v4775, 0
        %4778 = vmatprep.subr.mxu0 0.0
        %4779 = vmatpush1.msra.mxu0 %v1437
        %4780 = vmatprep.subr.mxu0 0.0
        %4781 = vmatpush1.msra.mxu0 %v1438
        %4782 = vmatprep.subr.mxu0 0.0
        %4783 = vmatpush1.msra.mxu0 %v1439
        %4784 = vmatprep.subr.mxu0 0.0
        %4785 = vmatpush1.msra.mxu0 %v1440
        %4786 = vmatprep.subr.mxu0 0.0
        %4787 = vmatpush1.msra.mxu0 0.0
        %4788 = vmatprep.subr.mxu0 0.0
        %4789 = vmatpush1.msra.mxu0 0.0
        %4790 = vmatprep.subr.mxu0 0.0
        %4791 = vmatpush1.msra.mxu0 0.0
        %4792 = vmatprep.subr.mxu0 0.0
        %4793 = vmatpush1.msra.mxu0 0.0
        %4794 = vmatprep.subr.mxu0 0.0
        %4795 = vmatpush1.msra.mxu0 0.0
        %4796 = vmatprep.subr.mxu0 0.0
        %4797 = vmatpush1.msra.mxu0 0.0
        %4798 = vmatprep.subr.mxu0 0.0
        %4799 = vmatpush1.msra.mxu0 0.0
        %4800 = vmatprep.subr.mxu0 0.0
        %4801 = vmatpush1.msra.mxu0 0.0
        %4802 = vmatprep.subr.mxu0 0.0
        %4803 = vmatpush1.msra.mxu0 0.0
        %4804 = vmatprep.subr.mxu0 0.0
        %4805 = vmatpush1.msra.mxu0 0.0
        %4806 = vmatprep.subr.mxu0 0.0
        %4807 = vmatpush1.msra.mxu0 0.0
        %4808 = vmatprep.subr.mxu0 0.0
        %4809 = vmatpush1.msra.mxu0 0.0
        %4810 = vmatprep.subr.mxu0 0.0
        %4811 = vmatpush1.msra.mxu0 0.0
        %4812 = vmatprep.subr.mxu0 0.0
        %4813 = vmatpush1.msra.mxu0 0.0
        %4814 = vmatprep.subr.mxu0 0.0
        %4815 = vmatpush1.msra.mxu0 0.0
        %4816 = vmatprep.subr.mxu0 0.0
        %4817 = vmatpush1.msra.mxu0 0.0
        %4818 = vmatprep.subr.mxu0 0.0
        %4819 = vmatpush1.msra.mxu0 0.0
        %4820 = vmatprep.subr.mxu0 0.0
        %4821 = vmatpush1.msra.mxu0 0.0
        %4822 = vmatprep.subr.mxu0 0.0
        %4823 = vmatpush1.msra.mxu0 0.0
        %4824 = vmatprep.subr.mxu0 0.0
        %4825 = vmatpush1.msra.mxu0 0.0
        %4826 = vmatprep.subr.mxu0 0.0
        %4827 = vmatpush1.msra.mxu0 0.0
        %4828 = vmatprep.subr.mxu0 0.0
        %4829 = vmatpush1.msra.mxu0 0.0
        %4830 = vmatprep.subr.mxu0 0.0
        %4831 = vmatpush1.msra.mxu0 0.0
        %4832 = vmatprep.subr.mxu0 0.0
        %4833 = vmatpush1.msra.mxu0 0.0
        %4834 = vmatprep.subr.mxu0 0.0
        %4835 = vmatpush1.msra.mxu0 0.0
        %4836 = vmatprep.subr.mxu0 0.0
        %4837 = vmatpush1.msra.mxu0 0.0
        %4838 = vmatprep.subr.mxu0 0.0
        %4839 = vmatpush1.msra.mxu0 0.0
        %4840 = vmatprep.subr.mxu0 0.0
        %4841 = vmatpush1.msra.mxu0 0.0
        %4842 = vmatprep.mubr.f32.mxu0 0.0
        %4843 = vmatmul.mubr.f32.gmra.mrb[0].mxu0 %v4776
        %v4844 = vpop.f32.mrb[0].mxu0
        %v4845 = vadd.f32 0.0, %v4844
        %v4846 = vpop.f32.mrb[0].mxu0
        %4847 = vdwg.mxu0
        %4848 = vmatprep.subr.mxu0 0.0
        %4849 = vmatpush1.msra.mxu0 %v1433
        %4850 = vmatprep.subr.mxu0 0.0
        %4851 = vmatpush1.msra.mxu0 %v1434
        %4852 = vmatprep.subr.mxu0 0.0
        %4853 = vmatpush1.msra.mxu0 %v1435
        %4854 = vmatprep.subr.mxu0 0.0
        %4855 = vmatpush1.msra.mxu0 %v1436
        %4856 = vmatprep.subr.mxu0 0.0
        %4857 = vmatpush1.msra.mxu0 0.0
        %4858 = vmatprep.subr.mxu0 0.0
        %4859 = vmatpush1.msra.mxu0 0.0
        %4860 = vmatprep.subr.mxu0 0.0
        %4861 = vmatpush1.msra.mxu0 0.0
        %4862 = vmatprep.subr.mxu0 0.0
        %4863 = vmatpush1.msra.mxu0 0.0
        %4864 = vmatprep.subr.mxu0 0.0
        %4865 = vmatpush1.msra.mxu0 0.0
        %4866 = vmatprep.subr.mxu0 0.0
        %4867 = vmatpush1.msra.mxu0 0.0
        %4868 = vmatprep.subr.mxu0 0.0
        %4869 = vmatpush1.msra.mxu0 0.0
        %4870 = vmatprep.subr.mxu0 0.0
        %4871 = vmatpush1.msra.mxu0 0.0
        %4872 = vmatprep.subr.mxu0 0.0
        %4873 = vmatpush1.msra.mxu0 0.0
        %4874 = vmatprep.subr.mxu0 0.0
        %4875 = vmatpush1.msra.mxu0 0.0
        %4876 = vmatprep.subr.mxu0 0.0
        %4877 = vmatpush1.msra.mxu0 0.0
        %4878 = vmatprep.subr.mxu0 0.0
        %4879 = vmatpush1.msra.mxu0 0.0
        %4880 = vmatprep.subr.mxu0 0.0
        %4881 = vmatpush1.msra.mxu0 0.0
        %4882 = vmatprep.subr.mxu0 0.0
        %4883 = vmatpush1.msra.mxu0 0.0
        %4884 = vmatprep.subr.mxu0 0.0
        %4885 = vmatpush1.msra.mxu0 0.0
        %4886 = vmatprep.subr.mxu0 0.0
        %4887 = vmatpush1.msra.mxu0 0.0
        %4888 = vmatprep.subr.mxu0 0.0
        %4889 = vmatpush1.msra.mxu0 0.0
        %4890 = vmatprep.subr.mxu0 0.0
        %4891 = vmatpush1.msra.mxu0 0.0
        %4892 = vmatprep.subr.mxu0 0.0
        %4893 = vmatpush1.msra.mxu0 0.0
        %4894 = vmatprep.subr.mxu0 0.0
        %4895 = vmatpush1.msra.mxu0 0.0
        %4896 = vmatprep.subr.mxu0 0.0
        %4897 = vmatpush1.msra.mxu0 0.0
        %4898 = vmatprep.subr.mxu0 0.0
        %4899 = vmatpush1.msra.mxu0 0.0
        %4900 = vmatprep.subr.mxu0 0.0
        %4901 = vmatpush1.msra.mxu0 0.0
        %4902 = vmatprep.subr.mxu0 0.0
        %4903 = vmatpush1.msra.mxu0 0.0
        %4904 = vmatprep.subr.mxu0 0.0
        %4905 = vmatpush1.msra.mxu0 0.0
        %4906 = vmatprep.subr.mxu0 0.0
        %4907 = vmatpush1.msra.mxu0 0.0
        %4908 = vmatprep.subr.mxu0 0.0
        %4909 = vmatpush1.msra.mxu0 0.0
        %4910 = vmatprep.subr.mxu0 0.0
        %4911 = vmatpush1.msra.mxu0 0.0
        %4912 = vmatprep.mubr.f32.mxu0 0.0
        %4913 = vmatmul.mubr.f32.gmra.mrb[0].mxu0 %v3286
        %v4914 = vpop.f32.mrb[0].mxu0
        %v4915 = vadd.f32 %v4845, %v4914
        %v4916 = vpop.f32.mrb[0].mxu0
        %4917 = vdwg.mxu0
        %v4918 = vadd.f32 %v4915, %v1620
        %v4919 = vxor.u32 %v4918, 2147483648
        %v4920 = vmul.f32 %v4919, 1.442695
        %v4921 = vpow.pop %v4920
        %v4922 = vadd.f32 %v4921, 1.0
        %v4923 = vrcp.pop %v4922
        %v4924 = vmul.f32 1.0, %v4923
        %v4925 = vtanh.pop %v4918
        %v4928 = vcombine.low %v4463, %v4464
        %v4930 = vunpack.c.l.s4 1966171168
        %v4931 = vunpack.c.0.s8 %v4930
        %v4932 = vlaneseq
        %v4933 = vshrl.u32 %v4932, 7
        %v4934 = vsub.s32 %v4931, %v4933
        %v4935 = vrot.slane %v4928, %v4934
        %v4937 = vunpack.c.l.s4 1966171168
        %v4938 = vunpack.c.0.s8 %v4937
        %v4939 = vlaneseq
        %v4940 = vshrl.u32 %v4939, 7
        %v4941 = vsub.s32 %v4938, %v4940
        %v4942 = vrot.slane %v4935, %v4941
        %4943 = vrot.lane.b32.xlu0 %v4942, 32
        %v4944 = vpop.permute.xlu0 %4943
        %v4946 = vmul.f32 %v4924, %v4944
        %4948 = vrot.lane.b32.xlu0 %v4925, 64
        %v4949 = vpop.permute.xlu0 %4948
        %v4951 = vmul.f32 %v4924, %v4949
        %4953 = vrot.lane.b32.xlu0 %v4951, 32
        %v4954 = vpop.permute.xlu0 %4953
        %v4956 = vadd.f32 %v4946, %v4954
        %v4957 = vtanh.pop %v4956
        %4959 = vrot.lane.b32.xlu0 %v4957, 64
        %v4960 = vpop.permute.xlu0 %4959
        %v4962 = vmul.f32 %v4924, %v4960
        %v4965 = vunpack.c.l.s4 1966171168
        %v4966 = vunpack.c.0.s8 %v4965
        %v4967 = vlaneseq
        %v4968 = vshrl.u32 %v4967, 7
        %v4969 = vsub.s32 %v4966, %v4968
        %v4970 = vrot.slane %v4962, %v4969
        %v4971 = vcombine.high %v4970, %v4970
        %v4973 = vunpack.c.l.s4 1966171168
        %v4974 = vunpack.c.0.s8 %v4973
        %v4975 = vlaneseq
        %v4976 = vshrl.u32 %v4975, 7
        %v4977 = vsub.s32 %v4974, %v4976
        %v4978 = vrot.slane %v4970, %v4977
        %v4980 = vunpack.c.l.s4 1966171168
        %v4981 = vunpack.c.0.s8 %v4980
        %v4982 = vlaneseq
        %v4983 = vshrl.u32 %v4982, 7
        %v4984 = vsub.s32 %v4981, %v4983
        %v4985 = vrot.slane %v4971, %v4984
        %4986 = vrot.lane.b32.xlu0 %v4978, 32
        %v4987 = vpop.permute.xlu0 %4986
        %4988 = vrot.lane.b32.xlu0 %v4985, 32
        %v4989 = vpop.permute.xlu0 %4988
        %v4992 = vmul.f32 %v3411, %v4987
        %v4993 = vmul.f32 %v3420, %v4989
        %v4994 = vmul.f32 %v3462, %v4428
        %v4995 = vmul.f32 %v3471, %v4429
        %v4996 = vadd.f32 %v4992, %v4994
        %v4997 = vadd.f32 %v4993, %v4995
        %v5000 = vunpack.c.l.s4 1966171168
        %v5001 = vunpack.c.0.s8 %v5000
        %v5002 = vlaneseq
        %v5003 = vshrl.u32 %v5002, 7
        %v5004 = vsub.s32 %v5001, %v5003
        %v5005 = vrot.slane %v4956, %v5004
        %v5006 = vcombine.high %v5005, %v5005
        %v5008 = vunpack.c.l.s4 1966171168
        %v5009 = vunpack.c.0.s8 %v5008
        %v5010 = vlaneseq
        %v5011 = vshrl.u32 %v5010, 7
        %v5012 = vsub.s32 %v5009, %v5011
        %v5013 = vrot.slane %v5005, %v5012
        %v5015 = vunpack.c.l.s4 1966171168
        %v5016 = vunpack.c.0.s8 %v5015
        %v5017 = vlaneseq
        %v5018 = vshrl.u32 %v5017, 7
        %v5019 = vsub.s32 %v5016, %v5018
        %v5020 = vrot.slane %v5006, %v5019
        %5021 = vrot.lane.b32.xlu0 %v5013, 96
        %v5022 = vpop.permute.xlu0 %5021
        %5023 = vrot.lane.b32.xlu0 %v5020, 96
        %v5024 = vpop.permute.xlu0 %5023
        %v5027 = vmul.f32 %v3411, %v5022
        %v5028 = vmul.f32 %v3420, %v5024
        %v5029 = vmul.f32 %v3462, %v4463
        %v5030 = vmul.f32 %v3471, %v4464
        %v5031 = vadd.f32 %v5027, %v5029
        %v5032 = vadd.f32 %v5028, %v5030
        %5033 = vst.msk [vmem:[%s496 + $0x5] sm:$0x1] %vm1822, %v4992
        %5034 = vst.msk [vmem:[%s496 + $0xd] sm:$0x1] %vm1822, %v4993
        %v5037 = vcombine.low %v4704, %v4705
        %v5039 = vunpack.c.l.s4 1966171168
        %v5040 = vunpack.c.0.s8 %v5039
        %v5041 = vlaneseq
        %v5042 = vshrl.u32 %v5041, 7
        %v5043 = vsub.s32 %v5040, %v5042
        %v5044 = vrot.slane %v5037, %v5043
        %v5046 = vunpack.c.l.s4 1966171168
        %v5047 = vunpack.c.0.s8 %v5046
        %v5048 = vlaneseq
        %v5049 = vshrl.u32 %v5048, 7
        %v5050 = vsub.s32 %v5047, %v5049
        %v5051 = vrot.slane %v5044, %v5050
        %v5052 = vsel %vm1470, %v5051, 0
        %5054 = vmatprep.subr.mxu0 0.0
        %5055 = vmatpush1.msra.mxu0 %v1446
        %5056 = vmatprep.subr.mxu0 0.0
        %5057 = vmatpush1.msra.mxu0 %v1447
        %5058 = vmatprep.subr.mxu0 0.0
        %5059 = vmatpush1.msra.mxu0 %v1448
        %5060 = vmatprep.subr.mxu0 0.0
        %5061 = vmatpush1.msra.mxu0 %v1449
        %5062 = vmatprep.subr.mxu0 0.0
        %5063 = vmatpush1.msra.mxu0 0.0
        %5064 = vmatprep.subr.mxu0 0.0
        %5065 = vmatpush1.msra.mxu0 0.0
        %5066 = vmatprep.subr.mxu0 0.0
        %5067 = vmatpush1.msra.mxu0 0.0
        %5068 = vmatprep.subr.mxu0 0.0
        %5069 = vmatpush1.msra.mxu0 0.0
        %5070 = vmatprep.subr.mxu0 0.0
        %5071 = vmatpush1.msra.mxu0 0.0
        %5072 = vmatprep.subr.mxu0 0.0
        %5073 = vmatpush1.msra.mxu0 0.0
        %5074 = vmatprep.subr.mxu0 0.0
        %5075 = vmatpush1.msra.mxu0 0.0
        %5076 = vmatprep.subr.mxu0 0.0
        %5077 = vmatpush1.msra.mxu0 0.0
        %5078 = vmatprep.subr.mxu0 0.0
        %5079 = vmatpush1.msra.mxu0 0.0
        %5080 = vmatprep.subr.mxu0 0.0
        %5081 = vmatpush1.msra.mxu0 0.0
        %5082 = vmatprep.subr.mxu0 0.0
        %5083 = vmatpush1.msra.mxu0 0.0
        %5084 = vmatprep.subr.mxu0 0.0
        %5085 = vmatpush1.msra.mxu0 0.0
        %5086 = vmatprep.subr.mxu0 0.0
        %5087 = vmatpush1.msra.mxu0 0.0
        %5088 = vmatprep.subr.mxu0 0.0
        %5089 = vmatpush1.msra.mxu0 0.0
        %5090 = vmatprep.subr.mxu0 0.0
        %5091 = vmatpush1.msra.mxu0 0.0
        %5092 = vmatprep.subr.mxu0 0.0
        %5093 = vmatpush1.msra.mxu0 0.0
        %5094 = vmatprep.subr.mxu0 0.0
        %5095 = vmatpush1.msra.mxu0 0.0
        %5096 = vmatprep.subr.mxu0 0.0
        %5097 = vmatpush1.msra.mxu0 0.0
        %5098 = vmatprep.subr.mxu0 0.0
        %5099 = vmatpush1.msra.mxu0 0.0
        %5100 = vmatprep.subr.mxu0 0.0
        %5101 = vmatpush1.msra.mxu0 0.0
        %5102 = vmatprep.subr.mxu0 0.0
        %5103 = vmatpush1.msra.mxu0 0.0
        %5104 = vmatprep.subr.mxu0 0.0
        %5105 = vmatpush1.msra.mxu0 0.0
        %5106 = vmatprep.subr.mxu0 0.0
        %5107 = vmatpush1.msra.mxu0 0.0
        %5108 = vmatprep.subr.mxu0 0.0
        %5109 = vmatpush1.msra.mxu0 0.0
        %5110 = vmatprep.subr.mxu0 0.0
        %5111 = vmatpush1.msra.mxu0 0.0
        %5112 = vmatprep.subr.mxu0 0.0
        %5113 = vmatpush1.msra.mxu0 0.0
        %5114 = vmatprep.subr.mxu0 0.0
        %5115 = vmatpush1.msra.mxu0 0.0
        %5116 = vmatprep.subr.mxu0 0.0
        %5117 = vmatpush1.msra.mxu0 0.0
        %5118 = vmatprep.mubr.f32.mxu0 0.0
        %5119 = vmatmul.mubr.f32.gmra.mrb[0].mxu0 %v5052
        %v5120 = vpop.f32.mrb[0].mxu0
        %v5121 = vadd.f32 0.0, %v5120
        %v5122 = vpop.f32.mrb[0].mxu0
        %5123 = vdwg.mxu0
        %5124 = vmatprep.subr.mxu0 0.0
        %5125 = vmatpush1.msra.mxu0 %v1442
        %5126 = vmatprep.subr.mxu0 0.0
        %5127 = vmatpush1.msra.mxu0 %v1443
        %5128 = vmatprep.subr.mxu0 0.0
        %5129 = vmatpush1.msra.mxu0 %v1444
        %5130 = vmatprep.subr.mxu0 0.0
        %5131 = vmatpush1.msra.mxu0 %v1445
        %5132 = vmatprep.subr.mxu0 0.0
        %5133 = vmatpush1.msra.mxu0 0.0
        %5134 = vmatprep.subr.mxu0 0.0
        %5135 = vmatpush1.msra.mxu0 0.0
        %5136 = vmatprep.subr.mxu0 0.0
        %5137 = vmatpush1.msra.mxu0 0.0
        %5138 = vmatprep.subr.mxu0 0.0
        %5139 = vmatpush1.msra.mxu0 0.0
        %5140 = vmatprep.subr.mxu0 0.0
        %5141 = vmatpush1.msra.mxu0 0.0
        %5142 = vmatprep.subr.mxu0 0.0
        %5143 = vmatpush1.msra.mxu0 0.0
        %5144 = vmatprep.subr.mxu0 0.0
        %5145 = vmatpush1.msra.mxu0 0.0
        %5146 = vmatprep.subr.mxu0 0.0
        %5147 = vmatpush1.msra.mxu0 0.0
        %5148 = vmatprep.subr.mxu0 0.0
        %5149 = vmatpush1.msra.mxu0 0.0
        %5150 = vmatprep.subr.mxu0 0.0
        %5151 = vmatpush1.msra.mxu0 0.0
        %5152 = vmatprep.subr.mxu0 0.0
        %5153 = vmatpush1.msra.mxu0 0.0
        %5154 = vmatprep.subr.mxu0 0.0
        %5155 = vmatpush1.msra.mxu0 0.0
        %5156 = vmatprep.subr.mxu0 0.0
        %5157 = vmatpush1.msra.mxu0 0.0
        %5158 = vmatprep.subr.mxu0 0.0
        %5159 = vmatpush1.msra.mxu0 0.0
        %5160 = vmatprep.subr.mxu0 0.0
        %5161 = vmatpush1.msra.mxu0 0.0
        %5162 = vmatprep.subr.mxu0 0.0
        %5163 = vmatpush1.msra.mxu0 0.0
        %5164 = vmatprep.subr.mxu0 0.0
        %5165 = vmatpush1.msra.mxu0 0.0
        %5166 = vmatprep.subr.mxu0 0.0
        %5167 = vmatpush1.msra.mxu0 0.0
        %5168 = vmatprep.subr.mxu0 0.0
        %5169 = vmatpush1.msra.mxu0 0.0
        %5170 = vmatprep.subr.mxu0 0.0
        %5171 = vmatpush1.msra.mxu0 0.0
        %5172 = vmatprep.subr.mxu0 0.0
        %5173 = vmatpush1.msra.mxu0 0.0
        %5174 = vmatprep.subr.mxu0 0.0
        %5175 = vmatpush1.msra.mxu0 0.0
        %5176 = vmatprep.subr.mxu0 0.0
        %5177 = vmatpush1.msra.mxu0 0.0
        %5178 = vmatprep.subr.mxu0 0.0
        %5179 = vmatpush1.msra.mxu0 0.0
        %5180 = vmatprep.subr.mxu0 0.0
        %5181 = vmatpush1.msra.mxu0 0.0
        %5182 = vmatprep.subr.mxu0 0.0
        %5183 = vmatpush1.msra.mxu0 0.0
        %5184 = vmatprep.subr.mxu0 0.0
        %5185 = vmatpush1.msra.mxu0 0.0
        %5186 = vmatprep.subr.mxu0 0.0
        %5187 = vmatpush1.msra.mxu0 0.0
        %5188 = vmatprep.mubr.f32.mxu0 0.0
        %5189 = vmatmul.mubr.f32.gmra.mrb[0].mxu0 %v2963
        %v5190 = vpop.f32.mrb[0].mxu0
        %v5191 = vadd.f32 %v5121, %v5190
        %v5192 = vpop.f32.mrb[0].mxu0
        %5193 = vdwg.mxu0
        %v5194 = vadd.f32 %v5191, %v1984
        %v5195 = vxor.u32 %v5194, 2147483648
        %v5196 = vmul.f32 %v5195, 1.442695
        %v5197 = vpow.pop %v5196
        %v5198 = vadd.f32 %v5197, 1.0
        %v5199 = vrcp.pop %v5198
        %v5200 = vmul.f32 1.0, %v5199
        %v5201 = vtanh.pop %v5194
        %v5204 = vcombine.low %v4739, %v4740
        %v5206 = vunpack.c.l.s4 1966171168
        %v5207 = vunpack.c.0.s8 %v5206
        %v5208 = vlaneseq
        %v5209 = vshrl.u32 %v5208, 7
        %v5210 = vsub.s32 %v5207, %v5209
        %v5211 = vrot.slane %v5204, %v5210
        %v5213 = vunpack.c.l.s4 1966171168
        %v5214 = vunpack.c.0.s8 %v5213
        %v5215 = vlaneseq
        %v5216 = vshrl.u32 %v5215, 7
        %v5217 = vsub.s32 %v5214, %v5216
        %v5218 = vrot.slane %v5211, %v5217
        %5219 = vrot.lane.b32.xlu0 %v5218, 32
        %v5220 = vpop.permute.xlu0 %5219
        %v5222 = vmul.f32 %v5200, %v5220
        %5224 = vrot.lane.b32.xlu0 %v5201, 64
        %v5225 = vpop.permute.xlu0 %5224
        %v5227 = vmul.f32 %v5200, %v5225
        %5229 = vrot.lane.b32.xlu0 %v5227, 32
        %v5230 = vpop.permute.xlu0 %5229
        %v5232 = vadd.f32 %v5222, %v5230
        %v5233 = vtanh.pop %v5232
        %5235 = vrot.lane.b32.xlu0 %v5233, 64
        %v5236 = vpop.permute.xlu0 %5235
        %v5238 = vmul.f32 %v5200, %v5236
        %v5241 = vunpack.c.l.s4 1966171168
        %v5242 = vunpack.c.0.s8 %v5241
        %v5243 = vlaneseq
        %v5244 = vshrl.u32 %v5243, 7
        %v5245 = vsub.s32 %v5242, %v5244
        %v5246 = vrot.slane %v5238, %v5245
        %v5247 = vcombine.high %v5246, %v5246
        %v5249 = vunpack.c.l.s4 1966171168
        %v5250 = vunpack.c.0.s8 %v5249
        %v5251 = vlaneseq
        %v5252 = vshrl.u32 %v5251, 7
        %v5253 = vsub.s32 %v5250, %v5252
        %v5254 = vrot.slane %v5246, %v5253
        %v5256 = vunpack.c.l.s4 1966171168
        %v5257 = vunpack.c.0.s8 %v5256
        %v5258 = vlaneseq
        %v5259 = vshrl.u32 %v5258, 7
        %v5260 = vsub.s32 %v5257, %v5259
        %v5261 = vrot.slane %v5247, %v5260
        %5262 = vrot.lane.b32.xlu0 %v5254, 32
        %v5263 = vpop.permute.xlu0 %5262
        %5264 = vrot.lane.b32.xlu0 %v5261, 32
        %v5265 = vpop.permute.xlu0 %5264
        %v5268 = vmul.f32 %v3088, %v5263
        %v5269 = vmul.f32 %v3097, %v5265
        %v5270 = vmul.f32 %v3139, %v4704
        %v5271 = vmul.f32 %v3148, %v4705
        %v5272 = vadd.f32 %v5268, %v5270
        %v5273 = vadd.f32 %v5269, %v5271
        %v5276 = vunpack.c.l.s4 1966171168
        %v5277 = vunpack.c.0.s8 %v5276
        %v5278 = vlaneseq
        %v5279 = vshrl.u32 %v5278, 7
        %v5280 = vsub.s32 %v5277, %v5279
        %v5281 = vrot.slane %v5232, %v5280
        %v5282 = vcombine.high %v5281, %v5281
        %v5284 = vunpack.c.l.s4 1966171168
        %v5285 = vunpack.c.0.s8 %v5284
        %v5286 = vlaneseq
        %v5287 = vshrl.u32 %v5286, 7
        %v5288 = vsub.s32 %v5285, %v5287
        %v5289 = vrot.slane %v5281, %v5288
        %v5291 = vunpack.c.l.s4 1966171168
        %v5292 = vunpack.c.0.s8 %v5291
        %v5293 = vlaneseq
        %v5294 = vshrl.u32 %v5293, 7
        %v5295 = vsub.s32 %v5292, %v5294
        %v5296 = vrot.slane %v5282, %v5295
        %5297 = vrot.lane.b32.xlu0 %v5289, 96
        %v5298 = vpop.permute.xlu0 %5297
        %5299 = vrot.lane.b32.xlu0 %v5296, 96
        %v5300 = vpop.permute.xlu0 %5299
        %v5303 = vmul.f32 %v3088, %v5298
        %v5304 = vmul.f32 %v3097, %v5300
        %v5305 = vmul.f32 %v3139, %v4739
        %v5306 = vmul.f32 %v3148, %v4740
        %v5307 = vadd.f32 %v5303, %v5305
        %v5308 = vadd.f32 %v5304, %v5306
        %v5311 = vlaneseq
        %v5312 = vshrl.u32 %v5311, 7
        %v5313 = vsub.s32 0, %v5312
        %v5314 = vrot.slane %v5268, %v5313
        %v5315 = vlaneseq
        %v5316 = vshrl.u32 %v5315, 7
        %v5317 = vsub.s32 0, %v5316
        %v5318 = vrot.slane %v5269, %v5317
        %5319 = vrot.lane.b32.xlu0 %v5314, 32
        %v5320 = vpop.permute.xlu0 %5319
        %5321 = vrot.lane.b32.xlu0 %v5318, 32
        %v5322 = vpop.permute.xlu0 %5321
        %5325 = vst.msk [vmem:[%s496 + $0x2] sm:$0x1] %vm2202, %v5320
        %5326 = vst.msk [vmem:[%s496 + $0xa] sm:$0x1] %vm2202, %v5322
        %v5329 = vcombine.low %v4996, %v4997
        %v5331 = vunpack.c.l.s4 1966171168
        %v5332 = vunpack.c.0.s8 %v5331
        %v5333 = vlaneseq
        %v5334 = vshrl.u32 %v5333, 7
        %v5335 = vsub.s32 %v5332, %v5334
        %v5336 = vrot.slane %v5329, %v5335
        %v5338 = vunpack.c.l.s4 1966171168
        %v5339 = vunpack.c.0.s8 %v5338
        %v5340 = vlaneseq
        %v5341 = vshrl.u32 %v5340, 7
        %v5342 = vsub.s32 %v5339, %v5341
        %v5343 = vrot.slane %v5336, %v5342
        %v5344 = vsel %vm1470, %v5343, 0
        %5346 = vmatprep.subr.mxu0 0.0
        %5347 = vmatpush1.msra.mxu0 %v1437
        %5348 = vmatprep.subr.mxu0 0.0
        %5349 = vmatpush1.msra.mxu0 %v1438
        %5350 = vmatprep.subr.mxu0 0.0
        %5351 = vmatpush1.msra.mxu0 %v1439
        %5352 = vmatprep.subr.mxu0 0.0
        %5353 = vmatpush1.msra.mxu0 %v1440
        %5354 = vmatprep.subr.mxu0 0.0
        %5355 = vmatpush1.msra.mxu0 0.0
        %5356 = vmatprep.subr.mxu0 0.0
        %5357 = vmatpush1.msra.mxu0 0.0
        %5358 = vmatprep.subr.mxu0 0.0
        %5359 = vmatpush1.msra.mxu0 0.0
        %5360 = vmatprep.subr.mxu0 0.0
        %5361 = vmatpush1.msra.mxu0 0.0
        %5362 = vmatprep.subr.mxu0 0.0
        %5363 = vmatpush1.msra.mxu0 0.0
        %5364 = vmatprep.subr.mxu0 0.0
        %5365 = vmatpush1.msra.mxu0 0.0
        %5366 = vmatprep.subr.mxu0 0.0
        %5367 = vmatpush1.msra.mxu0 0.0
        %5368 = vmatprep.subr.mxu0 0.0
        %5369 = vmatpush1.msra.mxu0 0.0
        %5370 = vmatprep.subr.mxu0 0.0
        %5371 = vmatpush1.msra.mxu0 0.0
        %5372 = vmatprep.subr.mxu0 0.0
        %5373 = vmatpush1.msra.mxu0 0.0
        %5374 = vmatprep.subr.mxu0 0.0
        %5375 = vmatpush1.msra.mxu0 0.0
        %5376 = vmatprep.subr.mxu0 0.0
        %5377 = vmatpush1.msra.mxu0 0.0
        %5378 = vmatprep.subr.mxu0 0.0
        %5379 = vmatpush1.msra.mxu0 0.0
        %5380 = vmatprep.subr.mxu0 0.0
        %5381 = vmatpush1.msra.mxu0 0.0
        %5382 = vmatprep.subr.mxu0 0.0
        %5383 = vmatpush1.msra.mxu0 0.0
        %5384 = vmatprep.subr.mxu0 0.0
        %5385 = vmatpush1.msra.mxu0 0.0
        %5386 = vmatprep.subr.mxu0 0.0
        %5387 = vmatpush1.msra.mxu0 0.0
        %5388 = vmatprep.subr.mxu0 0.0
        %5389 = vmatpush1.msra.mxu0 0.0
        %5390 = vmatprep.subr.mxu0 0.0
        %5391 = vmatpush1.msra.mxu0 0.0
        %5392 = vmatprep.subr.mxu0 0.0
        %5393 = vmatpush1.msra.mxu0 0.0
        %5394 = vmatprep.subr.mxu0 0.0
        %5395 = vmatpush1.msra.mxu0 0.0
        %5396 = vmatprep.subr.mxu0 0.0
        %5397 = vmatpush1.msra.mxu0 0.0
        %5398 = vmatprep.subr.mxu0 0.0
        %5399 = vmatpush1.msra.mxu0 0.0
        %5400 = vmatprep.subr.mxu0 0.0
        %5401 = vmatpush1.msra.mxu0 0.0
        %5402 = vmatprep.subr.mxu0 0.0
        %5403 = vmatpush1.msra.mxu0 0.0
        %5404 = vmatprep.subr.mxu0 0.0
        %5405 = vmatpush1.msra.mxu0 0.0
        %5406 = vmatprep.subr.mxu0 0.0
        %5407 = vmatpush1.msra.mxu0 0.0
        %5408 = vmatprep.subr.mxu0 0.0
        %5409 = vmatpush1.msra.mxu0 0.0
        %5410 = vmatprep.mubr.f32.mxu0 0.0
        %5411 = vmatmul.mubr.f32.gmra.mrb[0].mxu0 %v5344
        %v5412 = vpop.f32.mrb[0].mxu0
        %v5413 = vadd.f32 0.0, %v5412
        %v5414 = vpop.f32.mrb[0].mxu0
        %5415 = vdwg.mxu0
        %5416 = vmatprep.subr.mxu0 0.0
        %5417 = vmatpush1.msra.mxu0 %v1433
        %5418 = vmatprep.subr.mxu0 0.0
        %5419 = vmatpush1.msra.mxu0 %v1434
        %5420 = vmatprep.subr.mxu0 0.0
        %5421 = vmatpush1.msra.mxu0 %v1435
        %5422 = vmatprep.subr.mxu0 0.0
        %5423 = vmatpush1.msra.mxu0 %v1436
        %5424 = vmatprep.subr.mxu0 0.0
        %5425 = vmatpush1.msra.mxu0 0.0
        %5426 = vmatprep.subr.mxu0 0.0
        %5427 = vmatpush1.msra.mxu0 0.0
        %5428 = vmatprep.subr.mxu0 0.0
        %5429 = vmatpush1.msra.mxu0 0.0
        %5430 = vmatprep.subr.mxu0 0.0
        %5431 = vmatpush1.msra.mxu0 0.0
        %5432 = vmatprep.subr.mxu0 0.0
        %5433 = vmatpush1.msra.mxu0 0.0
        %5434 = vmatprep.subr.mxu0 0.0
        %5435 = vmatpush1.msra.mxu0 0.0
        %5436 = vmatprep.subr.mxu0 0.0
        %5437 = vmatpush1.msra.mxu0 0.0
        %5438 = vmatprep.subr.mxu0 0.0
        %5439 = vmatpush1.msra.mxu0 0.0
        %5440 = vmatprep.subr.mxu0 0.0
        %5441 = vmatpush1.msra.mxu0 0.0
        %5442 = vmatprep.subr.mxu0 0.0
        %5443 = vmatpush1.msra.mxu0 0.0
        %5444 = vmatprep.subr.mxu0 0.0
        %5445 = vmatpush1.msra.mxu0 0.0
        %5446 = vmatprep.subr.mxu0 0.0
        %5447 = vmatpush1.msra.mxu0 0.0
        %5448 = vmatprep.subr.mxu0 0.0
        %5449 = vmatpush1.msra.mxu0 0.0
        %5450 = vmatprep.subr.mxu0 0.0
        %5451 = vmatpush1.msra.mxu0 0.0
        %5452 = vmatprep.subr.mxu0 0.0
        %5453 = vmatpush1.msra.mxu0 0.0
        %5454 = vmatprep.subr.mxu0 0.0
        %5455 = vmatpush1.msra.mxu0 0.0
        %5456 = vmatprep.subr.mxu0 0.0
        %5457 = vmatpush1.msra.mxu0 0.0
        %5458 = vmatprep.subr.mxu0 0.0
        %5459 = vmatpush1.msra.mxu0 0.0
        %5460 = vmatprep.subr.mxu0 0.0
        %5461 = vmatpush1.msra.mxu0 0.0
        %5462 = vmatprep.subr.mxu0 0.0
        %5463 = vmatpush1.msra.mxu0 0.0
        %5464 = vmatprep.subr.mxu0 0.0
        %5465 = vmatpush1.msra.mxu0 0.0
        %5466 = vmatprep.subr.mxu0 0.0
        %5467 = vmatpush1.msra.mxu0 0.0
        %5468 = vmatprep.subr.mxu0 0.0
        %5469 = vmatpush1.msra.mxu0 0.0
        %5470 = vmatprep.subr.mxu0 0.0
        %5471 = vmatpush1.msra.mxu0 0.0
        %5472 = vmatprep.subr.mxu0 0.0
        %5473 = vmatpush1.msra.mxu0 0.0
        %5474 = vmatprep.subr.mxu0 0.0
        %5475 = vmatpush1.msra.mxu0 0.0
        %5476 = vmatprep.subr.mxu0 0.0
        %5477 = vmatpush1.msra.mxu0 0.0
        %5478 = vmatprep.subr.mxu0 0.0
        %5479 = vmatpush1.msra.mxu0 0.0
        %5480 = vmatprep.mubr.f32.mxu0 0.0
        %5481 = vmatmul.mubr.f32.gmra.mrb[0].mxu0 %v2624
        %v5482 = vpop.f32.mrb[0].mxu0
        %v5483 = vadd.f32 %v5413, %v5482
        %v5484 = vpop.f32.mrb[0].mxu0
        %5485 = vdwg.mxu0
        %v5486 = vadd.f32 %v5483, %v1620
        %v5487 = vxor.u32 %v5486, 2147483648
        %v5488 = vmul.f32 %v5487, 1.442695
        %v5489 = vpow.pop %v5488
        %v5490 = vadd.f32 %v5489, 1.0
        %v5491 = vrcp.pop %v5490
        %v5492 = vmul.f32 1.0, %v5491
        %v5493 = vtanh.pop %v5486
        %v5496 = vcombine.low %v5031, %v5032
        %v5498 = vunpack.c.l.s4 1966171168
        %v5499 = vunpack.c.0.s8 %v5498
        %v5500 = vlaneseq
        %v5501 = vshrl.u32 %v5500, 7
        %v5502 = vsub.s32 %v5499, %v5501
        %v5503 = vrot.slane %v5496, %v5502
        %v5505 = vunpack.c.l.s4 1966171168
        %v5506 = vunpack.c.0.s8 %v5505
        %v5507 = vlaneseq
        %v5508 = vshrl.u32 %v5507, 7
        %v5509 = vsub.s32 %v5506, %v5508
        %v5510 = vrot.slane %v5503, %v5509
        %5511 = vrot.lane.b32.xlu0 %v5510, 32
        %v5512 = vpop.permute.xlu0 %5511
        %v5514 = vmul.f32 %v5492, %v5512
        %5516 = vrot.lane.b32.xlu0 %v5493, 64
        %v5517 = vpop.permute.xlu0 %5516
        %v5519 = vmul.f32 %v5492, %v5517
        %5521 = vrot.lane.b32.xlu0 %v5519, 32
        %v5522 = vpop.permute.xlu0 %5521
        %v5524 = vadd.f32 %v5514, %v5522
        %v5525 = vtanh.pop %v5524
        %5527 = vrot.lane.b32.xlu0 %v5525, 64
        %v5528 = vpop.permute.xlu0 %5527
        %v5530 = vmul.f32 %v5492, %v5528
        %v5533 = vunpack.c.l.s4 1966171168
        %v5534 = vunpack.c.0.s8 %v5533
        %v5535 = vlaneseq
        %v5536 = vshrl.u32 %v5535, 7
        %v5537 = vsub.s32 %v5534, %v5536
        %v5538 = vrot.slane %v5530, %v5537
        %v5539 = vcombine.high %v5538, %v5538
        %v5541 = vunpack.c.l.s4 1966171168
        %v5542 = vunpack.c.0.s8 %v5541
        %v5543 = vlaneseq
        %v5544 = vshrl.u32 %v5543, 7
        %v5545 = vsub.s32 %v5542, %v5544
        %v5546 = vrot.slane %v5538, %v5545
        %v5548 = vunpack.c.l.s4 1966171168
        %v5549 = vunpack.c.0.s8 %v5548
        %v5550 = vlaneseq
        %v5551 = vshrl.u32 %v5550, 7
        %v5552 = vsub.s32 %v5549, %v5551
        %v5553 = vrot.slane %v5539, %v5552
        %5554 = vrot.lane.b32.xlu0 %v5546, 32
        %v5555 = vpop.permute.xlu0 %5554
        %5556 = vrot.lane.b32.xlu0 %v5553, 32
        %v5557 = vpop.permute.xlu0 %5556
        %v5560 = vmul.f32 %v2749, %v5555
        %v5561 = vmul.f32 %v2758, %v5557
        %v5562 = vmul.f32 %v2800, %v4996
        %v5563 = vmul.f32 %v2809, %v4997
        %v5564 = vadd.f32 %v5560, %v5562
        %v5565 = vadd.f32 %v5561, %v5563
        %v5568 = vunpack.c.l.s4 1966171168
        %v5569 = vunpack.c.0.s8 %v5568
        %v5570 = vlaneseq
        %v5571 = vshrl.u32 %v5570, 7
        %v5572 = vsub.s32 %v5569, %v5571
        %v5573 = vrot.slane %v5524, %v5572
        %v5574 = vcombine.high %v5573, %v5573
        %v5576 = vunpack.c.l.s4 1966171168
        %v5577 = vunpack.c.0.s8 %v5576
        %v5578 = vlaneseq
        %v5579 = vshrl.u32 %v5578, 7
        %v5580 = vsub.s32 %v5577, %v5579
        %v5581 = vrot.slane %v5573, %v5580
        %v5583 = vunpack.c.l.s4 1966171168
        %v5584 = vunpack.c.0.s8 %v5583
        %v5585 = vlaneseq
        %v5586 = vshrl.u32 %v5585, 7
        %v5587 = vsub.s32 %v5584, %v5586
        %v5588 = vrot.slane %v5574, %v5587
        %5589 = vrot.lane.b32.xlu0 %v5581, 96
        %v5590 = vpop.permute.xlu0 %5589
        %5591 = vrot.lane.b32.xlu0 %v5588, 96
        %v5592 = vpop.permute.xlu0 %5591
        %v5595 = vmul.f32 %v2749, %v5590
        %v5596 = vmul.f32 %v2758, %v5592
        %v5597 = vmul.f32 %v2800, %v5031
        %v5598 = vmul.f32 %v2809, %v5032
        %v5599 = vadd.f32 %v5595, %v5597
        %v5600 = vadd.f32 %v5596, %v5598
        %5601 = vst.msk [vmem:[%s496 + $0x6] sm:$0x1] %vm1822, %v5560
        %5602 = vst.msk [vmem:[%s496 + $0xe] sm:$0x1] %vm1822, %v5561
        %v5605 = vcombine.low %v5272, %v5273
        %v5607 = vunpack.c.l.s4 1966171168
        %v5608 = vunpack.c.0.s8 %v5607
        %v5609 = vlaneseq
        %v5610 = vshrl.u32 %v5609, 7
        %v5611 = vsub.s32 %v5608, %v5610
        %v5612 = vrot.slane %v5605, %v5611
        %v5614 = vunpack.c.l.s4 1966171168
        %v5615 = vunpack.c.0.s8 %v5614
        %v5616 = vlaneseq
        %v5617 = vshrl.u32 %v5616, 7
        %v5618 = vsub.s32 %v5615, %v5617
        %v5619 = vrot.slane %v5612, %v5618
        %v5620 = vsel %vm1470, %v5619, 0
        %5622 = vmatprep.subr.mxu0 0.0
        %5623 = vmatpush1.msra.mxu0 %v1446
        %5624 = vmatprep.subr.mxu0 0.0
        %5625 = vmatpush1.msra.mxu0 %v1447
        %5626 = vmatprep.subr.mxu0 0.0
        %5627 = vmatpush1.msra.mxu0 %v1448
        %5628 = vmatprep.subr.mxu0 0.0
        %5629 = vmatpush1.msra.mxu0 %v1449
        %5630 = vmatprep.subr.mxu0 0.0
        %5631 = vmatpush1.msra.mxu0 0.0
        %5632 = vmatprep.subr.mxu0 0.0
        %5633 = vmatpush1.msra.mxu0 0.0
        %5634 = vmatprep.subr.mxu0 0.0
        %5635 = vmatpush1.msra.mxu0 0.0
        %5636 = vmatprep.subr.mxu0 0.0
        %5637 = vmatpush1.msra.mxu0 0.0
        %5638 = vmatprep.subr.mxu0 0.0
        %5639 = vmatpush1.msra.mxu0 0.0
        %5640 = vmatprep.subr.mxu0 0.0
        %5641 = vmatpush1.msra.mxu0 0.0
        %5642 = vmatprep.subr.mxu0 0.0
        %5643 = vmatpush1.msra.mxu0 0.0
        %5644 = vmatprep.subr.mxu0 0.0
        %5645 = vmatpush1.msra.mxu0 0.0
        %5646 = vmatprep.subr.mxu0 0.0
        %5647 = vmatpush1.msra.mxu0 0.0
        %5648 = vmatprep.subr.mxu0 0.0
        %5649 = vmatpush1.msra.mxu0 0.0
        %5650 = vmatprep.subr.mxu0 0.0
        %5651 = vmatpush1.msra.mxu0 0.0
        %5652 = vmatprep.subr.mxu0 0.0
        %5653 = vmatpush1.msra.mxu0 0.0
        %5654 = vmatprep.subr.mxu0 0.0
        %5655 = vmatpush1.msra.mxu0 0.0
        %5656 = vmatprep.subr.mxu0 0.0
        %5657 = vmatpush1.msra.mxu0 0.0
        %5658 = vmatprep.subr.mxu0 0.0
        %5659 = vmatpush1.msra.mxu0 0.0
        %5660 = vmatprep.subr.mxu0 0.0
        %5661 = vmatpush1.msra.mxu0 0.0
        %5662 = vmatprep.subr.mxu0 0.0
        %5663 = vmatpush1.msra.mxu0 0.0
        %5664 = vmatprep.subr.mxu0 0.0
        %5665 = vmatpush1.msra.mxu0 0.0
        %5666 = vmatprep.subr.mxu0 0.0
        %5667 = vmatpush1.msra.mxu0 0.0
        %5668 = vmatprep.subr.mxu0 0.0
        %5669 = vmatpush1.msra.mxu0 0.0
        %5670 = vmatprep.subr.mxu0 0.0
        %5671 = vmatpush1.msra.mxu0 0.0
        %5672 = vmatprep.subr.mxu0 0.0
        %5673 = vmatpush1.msra.mxu0 0.0
        %5674 = vmatprep.subr.mxu0 0.0
        %5675 = vmatpush1.msra.mxu0 0.0
        %5676 = vmatprep.subr.mxu0 0.0
        %5677 = vmatpush1.msra.mxu0 0.0
        %5678 = vmatprep.subr.mxu0 0.0
        %5679 = vmatpush1.msra.mxu0 0.0
        %5680 = vmatprep.subr.mxu0 0.0
        %5681 = vmatpush1.msra.mxu0 0.0
        %5682 = vmatprep.subr.mxu0 0.0
        %5683 = vmatpush1.msra.mxu0 0.0
        %5684 = vmatprep.subr.mxu0 0.0
        %5685 = vmatpush1.msra.mxu0 0.0
        %5686 = vmatprep.mubr.f32.mxu0 0.0
        %5687 = vmatmul.mubr.f32.gmra.mrb[0].mxu0 %v5620
        %v5688 = vpop.f32.mrb[0].mxu0
        %v5689 = vadd.f32 0.0, %v5688
        %v5690 = vpop.f32.mrb[0].mxu0
        %5691 = vdwg.mxu0
        %5692 = vmatprep.subr.mxu0 0.0
        %5693 = vmatpush1.msra.mxu0 %v1442
        %5694 = vmatprep.subr.mxu0 0.0
        %5695 = vmatpush1.msra.mxu0 %v1443
        %5696 = vmatprep.subr.mxu0 0.0
        %5697 = vmatpush1.msra.mxu0 %v1444
        %5698 = vmatprep.subr.mxu0 0.0
        %5699 = vmatpush1.msra.mxu0 %v1445
        %5700 = vmatprep.subr.mxu0 0.0
        %5701 = vmatpush1.msra.mxu0 0.0
        %5702 = vmatprep.subr.mxu0 0.0
        %5703 = vmatpush1.msra.mxu0 0.0
        %5704 = vmatprep.subr.mxu0 0.0
        %5705 = vmatpush1.msra.mxu0 0.0
        %5706 = vmatprep.subr.mxu0 0.0
        %5707 = vmatpush1.msra.mxu0 0.0
        %5708 = vmatprep.subr.mxu0 0.0
        %5709 = vmatpush1.msra.mxu0 0.0
        %5710 = vmatprep.subr.mxu0 0.0
        %5711 = vmatpush1.msra.mxu0 0.0
        %5712 = vmatprep.subr.mxu0 0.0
        %5713 = vmatpush1.msra.mxu0 0.0
        %5714 = vmatprep.subr.mxu0 0.0
        %5715 = vmatpush1.msra.mxu0 0.0
        %5716 = vmatprep.subr.mxu0 0.0
        %5717 = vmatpush1.msra.mxu0 0.0
        %5718 = vmatprep.subr.mxu0 0.0
        %5719 = vmatpush1.msra.mxu0 0.0
        %5720 = vmatprep.subr.mxu0 0.0
        %5721 = vmatpush1.msra.mxu0 0.0
        %5722 = vmatprep.subr.mxu0 0.0
        %5723 = vmatpush1.msra.mxu0 0.0
        %5724 = vmatprep.subr.mxu0 0.0
        %5725 = vmatpush1.msra.mxu0 0.0
        %5726 = vmatprep.subr.mxu0 0.0
        %5727 = vmatpush1.msra.mxu0 0.0
        %5728 = vmatprep.subr.mxu0 0.0
        %5729 = vmatpush1.msra.mxu0 0.0
        %5730 = vmatprep.subr.mxu0 0.0
        %5731 = vmatpush1.msra.mxu0 0.0
        %5732 = vmatprep.subr.mxu0 0.0
        %5733 = vmatpush1.msra.mxu0 0.0
        %5734 = vmatprep.subr.mxu0 0.0
        %5735 = vmatpush1.msra.mxu0 0.0
        %5736 = vmatprep.subr.mxu0 0.0
        %5737 = vmatpush1.msra.mxu0 0.0
        %5738 = vmatprep.subr.mxu0 0.0
        %5739 = vmatpush1.msra.mxu0 0.0
        %5740 = vmatprep.subr.mxu0 0.0
        %5741 = vmatpush1.msra.mxu0 0.0
        %5742 = vmatprep.subr.mxu0 0.0
        %5743 = vmatpush1.msra.mxu0 0.0
        %5744 = vmatprep.subr.mxu0 0.0
        %5745 = vmatpush1.msra.mxu0 0.0
        %5746 = vmatprep.subr.mxu0 0.0
        %5747 = vmatpush1.msra.mxu0 0.0
        %5748 = vmatprep.subr.mxu0 0.0
        %5749 = vmatpush1.msra.mxu0 0.0
        %5750 = vmatprep.subr.mxu0 0.0
        %5751 = vmatpush1.msra.mxu0 0.0
        %5752 = vmatprep.subr.mxu0 0.0
        %5753 = vmatpush1.msra.mxu0 0.0
        %5754 = vmatprep.subr.mxu0 0.0
        %5755 = vmatpush1.msra.mxu0 0.0
        %5756 = vmatprep.mubr.f32.mxu0 0.0
        %5757 = vmatmul.mubr.f32.gmra.mrb[0].mxu0 %v2301
        %v5758 = vpop.f32.mrb[0].mxu0
        %v5759 = vadd.f32 %v5689, %v5758
        %v5760 = vpop.f32.mrb[0].mxu0
        %5761 = vdwg.mxu0
        %v5762 = vadd.f32 %v5759, %v1984
        %v5763 = vxor.u32 %v5762, 2147483648
        %v5764 = vmul.f32 %v5763, 1.442695
        %v5765 = vpow.pop %v5764
        %v5766 = vadd.f32 %v5765, 1.0
        %v5767 = vrcp.pop %v5766
        %v5768 = vmul.f32 1.0, %v5767
        %v5769 = vtanh.pop %v5762
        %v5772 = vcombine.low %v5307, %v5308
        %v5774 = vunpack.c.l.s4 1966171168
        %v5775 = vunpack.c.0.s8 %v5774
        %v5776 = vlaneseq
        %v5777 = vshrl.u32 %v5776, 7
        %v5778 = vsub.s32 %v5775, %v5777
        %v5779 = vrot.slane %v5772, %v5778
        %v5781 = vunpack.c.l.s4 1966171168
        %v5782 = vunpack.c.0.s8 %v5781
        %v5783 = vlaneseq
        %v5784 = vshrl.u32 %v5783, 7
        %v5785 = vsub.s32 %v5782, %v5784
        %v5786 = vrot.slane %v5779, %v5785
        %5787 = vrot.lane.b32.xlu0 %v5786, 32
        %v5788 = vpop.permute.xlu0 %5787
        %v5790 = vmul.f32 %v5768, %v5788
        %5792 = vrot.lane.b32.xlu0 %v5769, 64
        %v5793 = vpop.permute.xlu0 %5792
        %v5795 = vmul.f32 %v5768, %v5793
        %5797 = vrot.lane.b32.xlu0 %v5795, 32
        %v5798 = vpop.permute.xlu0 %5797
        %v5800 = vadd.f32 %v5790, %v5798
        %v5801 = vtanh.pop %v5800
        %5803 = vrot.lane.b32.xlu0 %v5801, 64
        %v5804 = vpop.permute.xlu0 %5803
        %v5806 = vmul.f32 %v5768, %v5804
        %v5809 = vunpack.c.l.s4 1966171168
        %v5810 = vunpack.c.0.s8 %v5809
        %v5811 = vlaneseq
        %v5812 = vshrl.u32 %v5811, 7
        %v5813 = vsub.s32 %v5810, %v5812
        %v5814 = vrot.slane %v5806, %v5813
        %v5815 = vcombine.high %v5814, %v5814
        %v5817 = vunpack.c.l.s4 1966171168
        %v5818 = vunpack.c.0.s8 %v5817
        %v5819 = vlaneseq
        %v5820 = vshrl.u32 %v5819, 7
        %v5821 = vsub.s32 %v5818, %v5820
        %v5822 = vrot.slane %v5814, %v5821
        %v5824 = vunpack.c.l.s4 1966171168
        %v5825 = vunpack.c.0.s8 %v5824
        %v5826 = vlaneseq
        %v5827 = vshrl.u32 %v5826, 7
        %v5828 = vsub.s32 %v5825, %v5827
        %v5829 = vrot.slane %v5815, %v5828
        %5830 = vrot.lane.b32.xlu0 %v5822, 32
        %v5831 = vpop.permute.xlu0 %5830
        %5832 = vrot.lane.b32.xlu0 %v5829, 32
        %v5833 = vpop.permute.xlu0 %5832
        %v5836 = vmul.f32 %v2426, %v5831
        %v5837 = vmul.f32 %v2435, %v5833
        %v5838 = vmul.f32 %v2477, %v5272
        %v5839 = vmul.f32 %v2486, %v5273
        %v5840 = vadd.f32 %v5836, %v5838
        %v5841 = vadd.f32 %v5837, %v5839
        %v5844 = vunpack.c.l.s4 1966171168
        %v5845 = vunpack.c.0.s8 %v5844
        %v5846 = vlaneseq
        %v5847 = vshrl.u32 %v5846, 7
        %v5848 = vsub.s32 %v5845, %v5847
        %v5849 = vrot.slane %v5800, %v5848
        %v5850 = vcombine.high %v5849, %v5849
        %v5852 = vunpack.c.l.s4 1966171168
        %v5853 = vunpack.c.0.s8 %v5852
        %v5854 = vlaneseq
        %v5855 = vshrl.u32 %v5854, 7
        %v5856 = vsub.s32 %v5853, %v5855
        %v5857 = vrot.slane %v5849, %v5856
        %v5859 = vunpack.c.l.s4 1966171168
        %v5860 = vunpack.c.0.s8 %v5859
        %v5861 = vlaneseq
        %v5862 = vshrl.u32 %v5861, 7
        %v5863 = vsub.s32 %v5860, %v5862
        %v5864 = vrot.slane %v5850, %v5863
        %5865 = vrot.lane.b32.xlu0 %v5857, 96
        %v5866 = vpop.permute.xlu0 %5865
        %5867 = vrot.lane.b32.xlu0 %v5864, 96
        %v5868 = vpop.permute.xlu0 %5867
        %v5871 = vmul.f32 %v2426, %v5866
        %v5872 = vmul.f32 %v2435, %v5868
        %v5873 = vmul.f32 %v2477, %v5307
        %v5874 = vmul.f32 %v2486, %v5308
        %v5875 = vadd.f32 %v5871, %v5873
        %v5876 = vadd.f32 %v5872, %v5874
        %v5879 = vlaneseq
        %v5880 = vshrl.u32 %v5879, 7
        %v5881 = vsub.s32 0, %v5880
        %v5882 = vrot.slane %v5836, %v5881
        %v5883 = vlaneseq
        %v5884 = vshrl.u32 %v5883, 7
        %v5885 = vsub.s32 0, %v5884
        %v5886 = vrot.slane %v5837, %v5885
        %5887 = vrot.lane.b32.xlu0 %v5882, 32
        %v5888 = vpop.permute.xlu0 %5887
        %5889 = vrot.lane.b32.xlu0 %v5886, 32
        %v5890 = vpop.permute.xlu0 %5889
        %5893 = vst.msk [vmem:[%s496 + $0x1] sm:$0x1] %vm2202, %v5888
        %5894 = vst.msk [vmem:[%s496 + $0x9] sm:$0x1] %vm2202, %v5890
        %v5897 = vcombine.low %v5564, %v5565
        %v5899 = vunpack.c.l.s4 1966171168
        %v5900 = vunpack.c.0.s8 %v5899
        %v5901 = vlaneseq
        %v5902 = vshrl.u32 %v5901, 7
        %v5903 = vsub.s32 %v5900, %v5902
        %v5904 = vrot.slane %v5897, %v5903
        %v5906 = vunpack.c.l.s4 1966171168
        %v5907 = vunpack.c.0.s8 %v5906
        %v5908 = vlaneseq
        %v5909 = vshrl.u32 %v5908, 7
        %v5910 = vsub.s32 %v5907, %v5909
        %v5911 = vrot.slane %v5904, %v5910
        %v5912 = vsel %vm1470, %v5911, 0
        %5914 = vmatprep.subr.mxu0 0.0
        %5915 = vmatpush1.msra.mxu0 %v1437
        %5916 = vmatprep.subr.mxu0 0.0
        %5917 = vmatpush1.msra.mxu0 %v1438
        %5918 = vmatprep.subr.mxu0 0.0
        %5919 = vmatpush1.msra.mxu0 %v1439
        %5920 = vmatprep.subr.mxu0 0.0
        %5921 = vmatpush1.msra.mxu0 %v1440
        %5922 = vmatprep.subr.mxu0 0.0
        %5923 = vmatpush1.msra.mxu0 0.0
        %5924 = vmatprep.subr.mxu0 0.0
        %5925 = vmatpush1.msra.mxu0 0.0
        %5926 = vmatprep.subr.mxu0 0.0
        %5927 = vmatpush1.msra.mxu0 0.0
        %5928 = vmatprep.subr.mxu0 0.0
        %5929 = vmatpush1.msra.mxu0 0.0
        %5930 = vmatprep.subr.mxu0 0.0
        %5931 = vmatpush1.msra.mxu0 0.0
        %5932 = vmatprep.subr.mxu0 0.0
        %5933 = vmatpush1.msra.mxu0 0.0
        %5934 = vmatprep.subr.mxu0 0.0
        %5935 = vmatpush1.msra.mxu0 0.0
        %5936 = vmatprep.subr.mxu0 0.0
        %5937 = vmatpush1.msra.mxu0 0.0
        %5938 = vmatprep.subr.mxu0 0.0
        %5939 = vmatpush1.msra.mxu0 0.0
        %5940 = vmatprep.subr.mxu0 0.0
        %5941 = vmatpush1.msra.mxu0 0.0
        %5942 = vmatprep.subr.mxu0 0.0
        %5943 = vmatpush1.msra.mxu0 0.0
        %5944 = vmatprep.subr.mxu0 0.0
        %5945 = vmatpush1.msra.mxu0 0.0
        %5946 = vmatprep.subr.mxu0 0.0
        %5947 = vmatpush1.msra.mxu0 0.0
        %5948 = vmatprep.subr.mxu0 0.0
        %5949 = vmatpush1.msra.mxu0 0.0
        %5950 = vmatprep.subr.mxu0 0.0
        %5951 = vmatpush1.msra.mxu0 0.0
        %5952 = vmatprep.subr.mxu0 0.0
        %5953 = vmatpush1.msra.mxu0 0.0
        %5954 = vmatprep.subr.mxu0 0.0
        %5955 = vmatpush1.msra.mxu0 0.0
        %5956 = vmatprep.subr.mxu0 0.0
        %5957 = vmatpush1.msra.mxu0 0.0
        %5958 = vmatprep.subr.mxu0 0.0
        %5959 = vmatpush1.msra.mxu0 0.0
        %5960 = vmatprep.subr.mxu0 0.0
        %5961 = vmatpush1.msra.mxu0 0.0
        %5962 = vmatprep.subr.mxu0 0.0
        %5963 = vmatpush1.msra.mxu0 0.0
        %5964 = vmatprep.subr.mxu0 0.0
        %5965 = vmatpush1.msra.mxu0 0.0
        %5966 = vmatprep.subr.mxu0 0.0
        %5967 = vmatpush1.msra.mxu0 0.0
        %5968 = vmatprep.subr.mxu0 0.0
        %5969 = vmatpush1.msra.mxu0 0.0
        %5970 = vmatprep.subr.mxu0 0.0
        %5971 = vmatpush1.msra.mxu0 0.0
        %5972 = vmatprep.subr.mxu0 0.0
        %5973 = vmatpush1.msra.mxu0 0.0
        %5974 = vmatprep.subr.mxu0 0.0
        %5975 = vmatpush1.msra.mxu0 0.0
        %5976 = vmatprep.subr.mxu0 0.0
        %5977 = vmatpush1.msra.mxu0 0.0
        %5978 = vmatprep.mubr.f32.mxu0 0.0
        %5979 = vmatmul.mubr.f32.gmra.mrb[0].mxu0 %v5912
        %v5980 = vpop.f32.mrb[0].mxu0
        %v5981 = vadd.f32 0.0, %v5980
        %v5982 = vpop.f32.mrb[0].mxu0
        %5983 = vdwg.mxu0
        %5984 = vmatprep.subr.mxu0 0.0
        %5985 = vmatpush1.msra.mxu0 %v1433
        %5986 = vmatprep.subr.mxu0 0.0
        %5987 = vmatpush1.msra.mxu0 %v1434
        %5988 = vmatprep.subr.mxu0 0.0
        %5989 = vmatpush1.msra.mxu0 %v1435
        %5990 = vmatprep.subr.mxu0 0.0
        %5991 = vmatpush1.msra.mxu0 %v1436
        %5992 = vmatprep.subr.mxu0 0.0
        %5993 = vmatpush1.msra.mxu0 0.0
        %5994 = vmatprep.subr.mxu0 0.0
        %5995 = vmatpush1.msra.mxu0 0.0
        %5996 = vmatprep.subr.mxu0 0.0
        %5997 = vmatpush1.msra.mxu0 0.0
        %5998 = vmatprep.subr.mxu0 0.0
        %5999 = vmatpush1.msra.mxu0 0.0
        %6000 = vmatprep.subr.mxu0 0.0
        %6001 = vmatpush1.msra.mxu0 0.0
        %6002 = vmatprep.subr.mxu0 0.0
        %6003 = vmatpush1.msra.mxu0 0.0
        %6004 = vmatprep.subr.mxu0 0.0
        %6005 = vmatpush1.msra.mxu0 0.0
        %6006 = vmatprep.subr.mxu0 0.0
        %6007 = vmatpush1.msra.mxu0 0.0
        %6008 = vmatprep.subr.mxu0 0.0
        %6009 = vmatpush1.msra.mxu0 0.0
        %6010 = vmatprep.subr.mxu0 0.0
        %6011 = vmatpush1.msra.mxu0 0.0
        %6012 = vmatprep.subr.mxu0 0.0
        %6013 = vmatpush1.msra.mxu0 0.0
        %6014 = vmatprep.subr.mxu0 0.0
        %6015 = vmatpush1.msra.mxu0 0.0
        %6016 = vmatprep.subr.mxu0 0.0
        %6017 = vmatpush1.msra.mxu0 0.0
        %6018 = vmatprep.subr.mxu0 0.0
        %6019 = vmatpush1.msra.mxu0 0.0
        %6020 = vmatprep.subr.mxu0 0.0
        %6021 = vmatpush1.msra.mxu0 0.0
        %6022 = vmatprep.subr.mxu0 0.0
        %6023 = vmatpush1.msra.mxu0 0.0
        %6024 = vmatprep.subr.mxu0 0.0
        %6025 = vmatpush1.msra.mxu0 0.0
        %6026 = vmatprep.subr.mxu0 0.0
        %6027 = vmatpush1.msra.mxu0 0.0
        %6028 = vmatprep.subr.mxu0 0.0
        %6029 = vmatpush1.msra.mxu0 0.0
        %6030 = vmatprep.subr.mxu0 0.0
        %6031 = vmatpush1.msra.mxu0 0.0
        %6032 = vmatprep.subr.mxu0 0.0
        %6033 = vmatpush1.msra.mxu0 0.0
        %6034 = vmatprep.subr.mxu0 0.0
        %6035 = vmatpush1.msra.mxu0 0.0
        %6036 = vmatprep.subr.mxu0 0.0
        %6037 = vmatpush1.msra.mxu0 0.0
        %6038 = vmatprep.subr.mxu0 0.0
        %6039 = vmatpush1.msra.mxu0 0.0
        %6040 = vmatprep.subr.mxu0 0.0
        %6041 = vmatpush1.msra.mxu0 0.0
        %6042 = vmatprep.subr.mxu0 0.0
        %6043 = vmatpush1.msra.mxu0 0.0
        %6044 = vmatprep.subr.mxu0 0.0
        %6045 = vmatpush1.msra.mxu0 0.0
        %6046 = vmatprep.subr.mxu0 0.0
        %6047 = vmatpush1.msra.mxu0 0.0
        %6048 = vmatprep.mubr.f32.mxu0 0.0
        %6049 = vmatmul.mubr.f32.gmra.mrb[0].mxu0 %v1908
        %v6050 = vpop.f32.mrb[0].mxu0
        %v6051 = vadd.f32 %v5981, %v6050
        %v6052 = vpop.f32.mrb[0].mxu0
        %6053 = vdwg.mxu0
        %v6054 = vadd.f32 %v6051, %v1620
        %v6055 = vxor.u32 %v6054, 2147483648
        %v6056 = vmul.f32 %v6055, 1.442695
        %v6057 = vpow.pop %v6056
        %v6058 = vadd.f32 %v6057, 1.0
        %v6059 = vrcp.pop %v6058
        %v6060 = vmul.f32 1.0, %v6059
        %v6061 = vtanh.pop %v6054
        %v6064 = vcombine.low %v5599, %v5600
        %v6066 = vunpack.c.l.s4 1966171168
        %v6067 = vunpack.c.0.s8 %v6066
        %v6068 = vlaneseq
        %v6069 = vshrl.u32 %v6068, 7
        %v6070 = vsub.s32 %v6067, %v6069
        %v6071 = vrot.slane %v6064, %v6070
        %v6073 = vunpack.c.l.s4 1966171168
        %v6074 = vunpack.c.0.s8 %v6073
        %v6075 = vlaneseq
        %v6076 = vshrl.u32 %v6075, 7
        %v6077 = vsub.s32 %v6074, %v6076
        %v6078 = vrot.slane %v6071, %v6077
        %6079 = vrot.lane.b32.xlu0 %v6078, 32
        %v6080 = vpop.permute.xlu0 %6079
        %v6082 = vmul.f32 %v6060, %v6080
        %6084 = vrot.lane.b32.xlu0 %v6061, 64
        %v6085 = vpop.permute.xlu0 %6084
        %v6087 = vmul.f32 %v6060, %v6085
        %6089 = vrot.lane.b32.xlu0 %v6087, 32
        %v6090 = vpop.permute.xlu0 %6089
        %v6092 = vadd.f32 %v6082, %v6090
        %v6093 = vtanh.pop %v6092
        %6095 = vrot.lane.b32.xlu0 %v6093, 64
        %v6096 = vpop.permute.xlu0 %6095
        %v6098 = vmul.f32 %v6060, %v6096
        %v6101 = vunpack.c.l.s4 1966171168
        %v6102 = vunpack.c.0.s8 %v6101
        %v6103 = vlaneseq
        %v6104 = vshrl.u32 %v6103, 7
        %v6105 = vsub.s32 %v6102, %v6104
        %v6106 = vrot.slane %v6098, %v6105
        %v6107 = vcombine.high %v6106, %v6106
        %v6109 = vunpack.c.l.s4 1966171168
        %v6110 = vunpack.c.0.s8 %v6109
        %v6111 = vlaneseq
        %v6112 = vshrl.u32 %v6111, 7
        %v6113 = vsub.s32 %v6110, %v6112
        %v6114 = vrot.slane %v6106, %v6113
        %v6116 = vunpack.c.l.s4 1966171168
        %v6117 = vunpack.c.0.s8 %v6116
        %v6118 = vlaneseq
        %v6119 = vshrl.u32 %v6118, 7
        %v6120 = vsub.s32 %v6117, %v6119
        %v6121 = vrot.slane %v6107, %v6120
        %6122 = vrot.lane.b32.xlu0 %v6114, 32
        %v6123 = vpop.permute.xlu0 %6122
        %6124 = vrot.lane.b32.xlu0 %v6121, 32
        %v6125 = vpop.permute.xlu0 %6124
        %v6128 = vmul.f32 %v2026, %v6123
        %v6129 = vmul.f32 %v2035, %v6125
        %v6130 = vmul.f32 %v2077, %v5564
        %v6131 = vmul.f32 %v2086, %v5565
        %v6132 = vadd.f32 %v6128, %v6130
        %v6133 = vadd.f32 %v6129, %v6131
        %6134 = vst.msk [vmem:[%s496 + $0x7] sm:$0x1] %vm1822, %v6128
        %6135 = vst.msk [vmem:[%s496 + $0xf] sm:$0x1] %vm1822, %v6129
        %v6138 = vcombine.low %v5840, %v5841
        %v6140 = vunpack.c.l.s4 1966171168
        %v6141 = vunpack.c.0.s8 %v6140
        %v6142 = vlaneseq
        %v6143 = vshrl.u32 %v6142, 7
        %v6144 = vsub.s32 %v6141, %v6143
        %v6145 = vrot.slane %v6138, %v6144
        %v6147 = vunpack.c.l.s4 1966171168
        %v6148 = vunpack.c.0.s8 %v6147
        %v6149 = vlaneseq
        %v6150 = vshrl.u32 %v6149, 7
        %v6151 = vsub.s32 %v6148, %v6150
        %v6152 = vrot.slane %v6145, %v6151
        %v6153 = vsel %vm1470, %v6152, 0
        %6155 = vmatprep.subr.mxu0 0.0
        %6156 = vmatpush1.msra.mxu0 %v1446
        %6157 = vmatprep.subr.mxu0 0.0
        %6158 = vmatpush1.msra.mxu0 %v1447
        %6159 = vmatprep.subr.mxu0 0.0
        %6160 = vmatpush1.msra.mxu0 %v1448
        %6161 = vmatprep.subr.mxu0 0.0
        %6162 = vmatpush1.msra.mxu0 %v1449
        %6163 = vmatprep.subr.mxu0 0.0
        %6164 = vmatpush1.msra.mxu0 0.0
        %6165 = vmatprep.subr.mxu0 0.0
        %6166 = vmatpush1.msra.mxu0 0.0
        %6167 = vmatprep.subr.mxu0 0.0
        %6168 = vmatpush1.msra.mxu0 0.0
        %6169 = vmatprep.subr.mxu0 0.0
        %6170 = vmatpush1.msra.mxu0 0.0
        %6171 = vmatprep.subr.mxu0 0.0
        %6172 = vmatpush1.msra.mxu0 0.0
        %6173 = vmatprep.subr.mxu0 0.0
        %6174 = vmatpush1.msra.mxu0 0.0
        %6175 = vmatprep.subr.mxu0 0.0
        %6176 = vmatpush1.msra.mxu0 0.0
        %6177 = vmatprep.subr.mxu0 0.0
        %6178 = vmatpush1.msra.mxu0 0.0
        %6179 = vmatprep.subr.mxu0 0.0
        %6180 = vmatpush1.msra.mxu0 0.0
        %6181 = vmatprep.subr.mxu0 0.0
        %6182 = vmatpush1.msra.mxu0 0.0
        %6183 = vmatprep.subr.mxu0 0.0
        %6184 = vmatpush1.msra.mxu0 0.0
        %6185 = vmatprep.subr.mxu0 0.0
        %6186 = vmatpush1.msra.mxu0 0.0
        %6187 = vmatprep.subr.mxu0 0.0
        %6188 = vmatpush1.msra.mxu0 0.0
        %6189 = vmatprep.subr.mxu0 0.0
        %6190 = vmatpush1.msra.mxu0 0.0
        %6191 = vmatprep.subr.mxu0 0.0
        %6192 = vmatpush1.msra.mxu0 0.0
        %6193 = vmatprep.subr.mxu0 0.0
        %6194 = vmatpush1.msra.mxu0 0.0
        %6195 = vmatprep.subr.mxu0 0.0
        %6196 = vmatpush1.msra.mxu0 0.0
        %6197 = vmatprep.subr.mxu0 0.0
        %6198 = vmatpush1.msra.mxu0 0.0
        %6199 = vmatprep.subr.mxu0 0.0
        %6200 = vmatpush1.msra.mxu0 0.0
        %6201 = vmatprep.subr.mxu0 0.0
        %6202 = vmatpush1.msra.mxu0 0.0
        %6203 = vmatprep.subr.mxu0 0.0
        %6204 = vmatpush1.msra.mxu0 0.0
        %6205 = vmatprep.subr.mxu0 0.0
        %6206 = vmatpush1.msra.mxu0 0.0
        %6207 = vmatprep.subr.mxu0 0.0
        %6208 = vmatpush1.msra.mxu0 0.0
        %6209 = vmatprep.subr.mxu0 0.0
        %6210 = vmatpush1.msra.mxu0 0.0
        %6211 = vmatprep.subr.mxu0 0.0
        %6212 = vmatpush1.msra.mxu0 0.0
        %6213 = vmatprep.subr.mxu0 0.0
        %6214 = vmatpush1.msra.mxu0 0.0
        %6215 = vmatprep.subr.mxu0 0.0
        %6216 = vmatpush1.msra.mxu0 0.0
        %6217 = vmatprep.subr.mxu0 0.0
        %6218 = vmatpush1.msra.mxu0 0.0
        %6219 = vmatprep.mubr.f32.mxu0 0.0
        %6220 = vmatmul.mubr.f32.gmra.mrb[0].mxu0 %v6153
        %v6221 = vpop.f32.mrb[0].mxu0
        %v6222 = vadd.f32 0.0, %v6221
        %v6223 = vpop.f32.mrb[0].mxu0
        %6224 = vdwg.mxu0
        %6225 = vmatprep.subr.mxu0 0.0
        %6226 = vmatpush1.msra.mxu0 %v1442
        %6227 = vmatprep.subr.mxu0 0.0
        %6228 = vmatpush1.msra.mxu0 %v1443
        %6229 = vmatprep.subr.mxu0 0.0
        %6230 = vmatpush1.msra.mxu0 %v1444
        %6231 = vmatprep.subr.mxu0 0.0
        %6232 = vmatpush1.msra.mxu0 %v1445
        %6233 = vmatprep.subr.mxu0 0.0
        %6234 = vmatpush1.msra.mxu0 0.0
        %6235 = vmatprep.subr.mxu0 0.0
        %6236 = vmatpush1.msra.mxu0 0.0
        %6237 = vmatprep.subr.mxu0 0.0
        %6238 = vmatpush1.msra.mxu0 0.0
        %6239 = vmatprep.subr.mxu0 0.0
        %6240 = vmatpush1.msra.mxu0 0.0
        %6241 = vmatprep.subr.mxu0 0.0
        %6242 = vmatpush1.msra.mxu0 0.0
        %6243 = vmatprep.subr.mxu0 0.0
        %6244 = vmatpush1.msra.mxu0 0.0
        %6245 = vmatprep.subr.mxu0 0.0
        %6246 = vmatpush1.msra.mxu0 0.0
        %6247 = vmatprep.subr.mxu0 0.0
        %6248 = vmatpush1.msra.mxu0 0.0
        %6249 = vmatprep.subr.mxu0 0.0
        %6250 = vmatpush1.msra.mxu0 0.0
        %6251 = vmatprep.subr.mxu0 0.0
        %6252 = vmatpush1.msra.mxu0 0.0
        %6253 = vmatprep.subr.mxu0 0.0
        %6254 = vmatpush1.msra.mxu0 0.0
        %6255 = vmatprep.subr.mxu0 0.0
        %6256 = vmatpush1.msra.mxu0 0.0
        %6257 = vmatprep.subr.mxu0 0.0
        %6258 = vmatpush1.msra.mxu0 0.0
        %6259 = vmatprep.subr.mxu0 0.0
        %6260 = vmatpush1.msra.mxu0 0.0
        %6261 = vmatprep.subr.mxu0 0.0
        %6262 = vmatpush1.msra.mxu0 0.0
        %6263 = vmatprep.subr.mxu0 0.0
        %6264 = vmatpush1.msra.mxu0 0.0
        %6265 = vmatprep.subr.mxu0 0.0
        %6266 = vmatpush1.msra.mxu0 0.0
        %6267 = vmatprep.subr.mxu0 0.0
        %6268 = vmatpush1.msra.mxu0 0.0
        %6269 = vmatprep.subr.mxu0 0.0
        %6270 = vmatpush1.msra.mxu0 0.0
        %6271 = vmatprep.subr.mxu0 0.0
        %6272 = vmatpush1.msra.mxu0 0.0
        %6273 = vmatprep.subr.mxu0 0.0
        %6274 = vmatpush1.msra.mxu0 0.0
        %6275 = vmatprep.subr.mxu0 0.0
        %6276 = vmatpush1.msra.mxu0 0.0
        %6277 = vmatprep.subr.mxu0 0.0
        %6278 = vmatpush1.msra.mxu0 0.0
        %6279 = vmatprep.subr.mxu0 0.0
        %6280 = vmatpush1.msra.mxu0 0.0
        %6281 = vmatprep.subr.mxu0 0.0
        %6282 = vmatpush1.msra.mxu0 0.0
        %6283 = vmatprep.subr.mxu0 0.0
        %6284 = vmatpush1.msra.mxu0 0.0
        %6285 = vmatprep.subr.mxu0 0.0
        %6286 = vmatpush1.msra.mxu0 0.0
        %6287 = vmatprep.subr.mxu0 0.0
        %6288 = vmatpush1.msra.mxu0 0.0
        %6289 = vmatprep.mubr.f32.mxu0 0.0
        %6290 = vmatmul.mubr.f32.gmra.mrb[0].mxu0 %v1544
        %v6291 = vpop.f32.mrb[0].mxu0
        %v6292 = vadd.f32 %v6222, %v6291
        %v6293 = vpop.f32.mrb[0].mxu0
        %6294 = vdwg.mxu0
        %v6295 = vadd.f32 %v6292, %v1984
        %v6296 = vxor.u32 %v6295, 2147483648
        %v6297 = vmul.f32 %v6296, 1.442695
        %v6298 = vpow.pop %v6297
        %v6299 = vadd.f32 %v6298, 1.0
        %v6300 = vrcp.pop %v6299
        %v6301 = vmul.f32 1.0, %v6300
        %v6302 = vtanh.pop %v6295
        %v6305 = vcombine.low %v5875, %v5876
        %v6307 = vunpack.c.l.s4 1966171168
        %v6308 = vunpack.c.0.s8 %v6307
        %v6309 = vlaneseq
        %v6310 = vshrl.u32 %v6309, 7
        %v6311 = vsub.s32 %v6308, %v6310
        %v6312 = vrot.slane %v6305, %v6311
        %v6314 = vunpack.c.l.s4 1966171168
        %v6315 = vunpack.c.0.s8 %v6314
        %v6316 = vlaneseq
        %v6317 = vshrl.u32 %v6316, 7
        %v6318 = vsub.s32 %v6315, %v6317
        %v6319 = vrot.slane %v6312, %v6318
        %6320 = vrot.lane.b32.xlu0 %v6319, 32
        %v6321 = vpop.permute.xlu0 %6320
        %v6323 = vmul.f32 %v6301, %v6321
        %6325 = vrot.lane.b32.xlu0 %v6302, 64
        %v6326 = vpop.permute.xlu0 %6325
        %v6328 = vmul.f32 %v6301, %v6326
        %6330 = vrot.lane.b32.xlu0 %v6328, 32
        %v6331 = vpop.permute.xlu0 %6330
        %v6333 = vadd.f32 %v6323, %v6331
        %v6334 = vtanh.pop %v6333
        %6336 = vrot.lane.b32.xlu0 %v6334, 64
        %v6337 = vpop.permute.xlu0 %6336
        %v6339 = vmul.f32 %v6301, %v6337
        %v6342 = vunpack.c.l.s4 1966171168
        %v6343 = vunpack.c.0.s8 %v6342
        %v6344 = vlaneseq
        %v6345 = vshrl.u32 %v6344, 7
        %v6346 = vsub.s32 %v6343, %v6345
        %v6347 = vrot.slane %v6339, %v6346
        %v6348 = vcombine.high %v6347, %v6347
        %v6350 = vunpack.c.l.s4 1966171168
        %v6351 = vunpack.c.0.s8 %v6350
        %v6352 = vlaneseq
        %v6353 = vshrl.u32 %v6352, 7
        %v6354 = vsub.s32 %v6351, %v6353
        %v6355 = vrot.slane %v6347, %v6354
        %v6357 = vunpack.c.l.s4 1966171168
        %v6358 = vunpack.c.0.s8 %v6357
        %v6359 = vlaneseq
        %v6360 = vshrl.u32 %v6359, 7
        %v6361 = vsub.s32 %v6358, %v6360
        %v6362 = vrot.slane %v6348, %v6361
        %6363 = vrot.lane.b32.xlu0 %v6355, 32
        %v6364 = vpop.permute.xlu0 %6363
        %6365 = vrot.lane.b32.xlu0 %v6362, 32
        %v6366 = vpop.permute.xlu0 %6365
        %v6369 = vmul.f32 %v1662, %v6364
        %v6370 = vmul.f32 %v1671, %v6366
        %v6371 = vmul.f32 %v1713, %v5840
        %v6372 = vmul.f32 %v1722, %v5841
        %v6373 = vadd.f32 %v6369, %v6371
        %v6374 = vadd.f32 %v6370, %v6372
        %v6377 = vlaneseq
        %v6378 = vshrl.u32 %v6377, 7
        %v6379 = vsub.s32 0, %v6378
        %v6380 = vrot.slane %v6369, %v6379
        %v6381 = vlaneseq
        %v6382 = vshrl.u32 %v6381, 7
        %v6383 = vsub.s32 0, %v6382
        %v6384 = vrot.slane %v6370, %v6383
        %6385 = vrot.lane.b32.xlu0 %v6380, 32
        %v6386 = vpop.permute.xlu0 %6385
        %6387 = vrot.lane.b32.xlu0 %v6384, 32
        %v6388 = vpop.permute.xlu0 %6387
        %6391 = vst.msk [vmem:[%s496] sm:$0x1] %vm2202, %v6386
        %6392 = vst.msk [vmem:[%s496 + $0x8] sm:$0x1] %vm2202, %v6388
        %6393 = vst.msk [vmem:[%s503] sm:$0x1] %vm1822, %v6132
        %6394 = vst.msk [vmem:[%s503 + $0x1] sm:$0x1] %vm1822, %v6133
        %v6397 = vlaneseq
        %v6398 = vshrl.u32 %v6397, 7
        %v6399 = vsub.s32 0, %v6398
        %v6400 = vrot.slane %v6373, %v6399
        %v6401 = vlaneseq
        %v6402 = vshrl.u32 %v6401, 7
        %v6403 = vsub.s32 0, %v6402
        %v6404 = vrot.slane %v6374, %v6403
        %6405 = vrot.lane.b32.xlu0 %v6400, 32
        %v6406 = vpop.permute.xlu0 %6405
        %6407 = vrot.lane.b32.xlu0 %v6404, 32
        %v6408 = vpop.permute.xlu0 %6407
        %6411 = vst.msk [vmem:[%s503] sm:$0x1] %vm2202, %v6406
        %6412 = vst.msk [vmem:[%s503 + $0x1] sm:$0x1] %vm2202, %v6408
        %s6413 = sand.u32 %s293, 1
        %s6414 = scalar_lea.sflag [#allocation4], %s6413
        %s6415 = sand.u32 %s293, 1
        %s6416 = smul.addr %s6415, 16
        %s6417 = scalar_lea.vmem [#allocation7], %s6416
        %s6418 = sand.u32 %s319, 1
        %s6419 = scalar_lea.sflag [#allocation9], %s6418
        %s6420 = sand.u32 %s319, 1
        %s6421 = smul.addr %s6420, 2
        %s6422 = scalar_lea.vmem [#allocation8], %s6421
        // Predicated region
        $region73: #{tpu_custom_call.1} parent=63 // pred_check
          %p6423 = pneg %p303
        $region74: #{tpu_custom_call.1} parent=63 // pred_check_branch
          %6425 = sbr.rel (%p6423) target = $region76
        $region75: #{tpu_custom_call.1} parent=63 // pred_region
          %s6426 = smul.u32 2, %s34
          %s6428 = ssub.s32 256, 256
          %6429 = vsyncadd %s6414, %s6428
          %s6430 = smul.addr %s6426, 128
          %s6431 = scalar_lea.hbm %s11, %s6430
          %s6432 = sshll.u32 %s6417, 4
          %s6433 = int_to_ptr.vmem [resolvable:$true] %s6432
          %6438 = dma.vmem_to_hbm [thread:$0]  %s6433, 256, %s6431, %s6414, 128, 128, 8
        $region76: #{tpu_custom_call.1} parent=63 // pred_fallthru
          _
        // Predicated region
        $region77: #{tpu_custom_call.1} parent=63 // pred_check
          %p6439 = pneg %p329
        $region78: #{tpu_custom_call.1} parent=63 // pred_check_branch
          %6441 = sbr.rel (%p6439) target = $region80
        $region79: #{tpu_custom_call.1} parent=63 // pred_region
          %s6442 = smul.u32 2, %s34
          %s6444 = ssub.s32 32, 32
          %6445 = vsyncadd %s6419, %s6444
          %s6446 = smul.addr %s6442, 16
          %s6447 = scalar_lea.hbm %s12, %s6446
          %s6448 = sshll.u32 %s6422, 4
          %s6449 = int_to_ptr.vmem [resolvable:$true] %s6448
          %6454 = dma.vmem_to_hbm [thread:$0]  %s6449, 32, %s6447, %s6419, 16, 16, 1
        $region80: #{tpu_custom_call.1} parent=63 // pred_fallthru
          _
      $region64: #{tpu_custom_call.1} parent=5 // pred_fallthru
        _
      %p6455 = scmp.le.s32.totalorder 2, %s29
      // Predicated region
      $region81: #{tpu_custom_call.1} parent=5 // pred_check
        %p6456 = pneg %p6455
      $region82: #{tpu_custom_call.1} parent=5 // pred_check_branch
        %6458 = sbr.rel (%p6456) target = $region84
      $region83: #{tpu_custom_call.1} parent=5 // pred_region
        %s6459 = ssub.s32 %s29, 2
        // Predicated region
        $region85: #{tpu_custom_call.1} parent=83 // pred_check
          %p6460 = pneg %p309
        $region86: #{tpu_custom_call.1} parent=83 // pred_check_branch
          %6462 = sbr.rel (%p6460) target = $region88
        $region87: #{tpu_custom_call.1} parent=83 // pred_region
          %s6463 = sand.u32 %s294, 1
          %s6464 = scalar_lea.sflag [#allocation4], %s6463
          %s6465 = sand.u32 %s294, 1
          %s6466 = smul.addr %s6465, 16
          %s6467 = scalar_lea.vmem [#allocation7], %s6466
          %6468 = dma.done %s6464, 256
        $region88: #{tpu_custom_call.1} parent=83 // pred_fallthru
          _
        // Predicated region
        $region89: #{tpu_custom_call.1} parent=83 // pred_check
          %p6469 = pneg %p335
        $region90: #{tpu_custom_call.1} parent=83 // pred_check_branch
          %6471 = sbr.rel (%p6469) target = $region92
        $region91: #{tpu_custom_call.1} parent=83 // pred_region
          %s6472 = sand.u32 %s320, 1
          %s6473 = scalar_lea.sflag [#allocation9], %s6472
          %s6474 = sand.u32 %s320, 1
          %s6475 = smul.addr %s6474, 2
          %s6476 = scalar_lea.vmem [#allocation8], %s6475
          %6477 = dma.done %s6473, 32
        $region92: #{tpu_custom_call.1} parent=83 // pred_fallthru
          _
      $region84: #{tpu_custom_call.1} parent=5 // pred_fallthru
        _
    $region6: #{tpu_custom_call.1} parent=1 // loop_footer
      %s33 = sadd.s32 1, %s29
    $region7: #{tpu_custom_call.1} parent=1 // loop_footer_branch
      %28 = sbr.rel target = $region3
    $region8: #{tpu_custom_call.1} parent=1 // loop_exit
      _
    %6478 = vsyncpa [#allocation3], 1
    %s6479 = scalar_lea.sflag [#allocation3], 1
    %6480 = vsyncpa %s6479, 1
    %6481 = vsyncpa [#allocation6], 1
    %6482 = vsyncpa [#allocation4], 1
    %s6483 = scalar_lea.sflag [#allocation4], 1
    %6484 = vsyncpa %s6483, 1
    %6485 = vsyncpa [#allocation9], 1
    %s6486 = scalar_lea.sflag [#allocation9], 1
    %6487 = vsyncpa %s6486, 1

</llo_original>
